<compile_context>
chip_gen: v6e
topology: v6e:2x2x1
jax: 0.10.0
libtpu: 0.0.40
codegen_flags: <defaults>
</compile_context>

<pallas_src>
import functools

import jax
import jax.numpy as jnp
from jax import lax
from jax.experimental import pallas as pl
from jax.experimental.pallas import tpu as pltpu

# FunnelConfig(d_model=192, n_head=16, d_head=6, attention_type='relative_shift',
#              separate_cls=False); layer_norm_eps = 1e-9 (HF default).
D_MODEL = 192
N_HEAD = 16
D_HEAD = 6
LN_EPS = 1e-9
INF = 1e6
SCALE = 1.0 / (D_HEAD ** 0.5)


# -----------------------------------------------------------------------------
# Glue: Funnel relative position embeddings for block 0 ("relative_shift").
# Mirrors FunnelAttentionStructure.get_position_embeds (sin/cos dropout = identity).
# -----------------------------------------------------------------------------
def funnel_position_embeds_block0(seq_len: int, d_model: int) -> jnp.ndarray:
    freq_seq = jnp.arange(d_model // 2, dtype=jnp.float32)
    inv_freq = 1.0 / (10000.0 ** (freq_seq / (d_model // 2)))
    rel_pos_id = jnp.arange(-2 * seq_len, 2 * seq_len, dtype=jnp.float32)
    sinusoid = rel_pos_id[:, None] * inv_freq[None, :]
    pos_embed = jnp.concatenate([jnp.sin(sinusoid), jnp.cos(sinusoid)], axis=-1)
    # relative_pos(pos=arange(S), stride=1) -> [S, S-1, ..., -(S-1)]; add zero_offset=2S
    rel_pos = jnp.arange(seq_len, -seq_len, -1) + 2 * seq_len
    return pos_embed[rel_pos]          # (2*S, d_model); row t <-> relative distance S - t


def _pick_batch_block(batch: int, seq_len: int) -> int:
    """Batch block so TB*S rows feed the MXU densely, keeping >=2 grid steps if possible."""
    divisors = [d for d in range(1, batch + 1) if batch % d == 0]
    target = max(1, 128 // max(seq_len, 1))
    fitting = [d for d in divisors if d <= target] or [1]
    tb = max(fitting)
    two_step = [d for d in fitting if batch // d >= 2]
    if batch > 1 and batch // tb < 2 and two_step:
        tb = max(two_step)             # prefer >= 2 grid steps (v7x has 2 TensorCores)
    return tb


# -----------------------------------------------------------------------------
# Pallas kernel: one grid step = a block of `batch_block` batch elements, fully in VMEM.
# -----------------------------------------------------------------------------
def _funnel_attn_kernel(x_ref, mb_ref, wq_ref, wk_ref, bk_ref, wv_ref, bv_ref,
                        qcb_ref, qpb_ref, r_ref, rk_ref, g_ref, wp_ref, bp_ref,
                        gamma_ref, beta_ref, o_ref, *, seq_len, batch_block):
    S, TB = seq_len, batch_block
    H, DH, D = N_HEAD, D_HEAD, D_MODEL
    M = TB * S
    f32 = jnp.float32

    xf = x_ref[...].reshape(M, D)                                            # (M, D)

    # Packed, lane-dense projections.  SCALE is folded into wq; k/v biases are packed.
    q = jnp.dot(xf, wq_ref[...], preferred_element_type=f32)                 # (M, H*DH)
    k = jnp.dot(xf, wk_ref[...], preferred_element_type=f32) + bk_ref[...]   # (M, H*DH)
    v = jnp.dot(xf, wv_ref[...], preferred_element_type=f32) + bv_ref[...]   # (M, H*DH)
    r_head = jnp.dot(r_ref[...], rk_ref[...], preferred_element_type=f32)    # (2S, H*DH)

    qc = q + qcb_ref[...]              # q*scale + r_w_bias*scale   (content query)
    qp = q + qpb_ref[...]              # q*scale + r_r_bias*scale   (position query)

    g = g_ref[...]                     # (S, 2S, S) structural rel-shift selector

    def split_heads(a):                # (rows, H*DH) -> (H, rows, DH) via static lane slices
        return jnp.stack([a[:, n * DH:(n + 1) * DH] for n in range(H)], axis=0)

    r_h = split_heads(r_head)          # (H, 2S, DH)

    av_rows = []
    for b in range(TB):                # static, small (one batch element per iteration)
        rows = slice(b * S, (b + 1) * S)
        qc_h = split_heads(qc[rows])   # (H, S, DH)
        qp_h = split_heads(qp[rows])
        k_h = split_heads(k[rows])
        v_h = split_heads(v[rows])

        # content score, head-batched: content[h,i,j] = sum_e qc[h,i,e] k[h,j,e]
        content = lax.dot_general(qc_h, k_h, (((2,), (2,)), ((0,), (0,))),
                                  preferred_element_type=f32)                # (H, S, S)
        # raw positional score vs all 2S relative positions
        pos_raw = lax.dot_general(qp_h, r_h, (((2,), (2,)), ((0,), (0,))),
                                  preferred_element_type=f32)                # (H, S, 2S)
        # relative shift for all heads at once: pos[h,i,j] = pos_raw[h,i,S+j-i]
        pr_i = pltpu.einshape("hit->iht", pos_raw)                           # (S, H, 2S)
        pos_i = lax.dot_general(pr_i, g, (((2,), (1,)), ((0,), (0,))),
                                preferred_element_type=f32)                  # (S, H, S)
        pos = pltpu.einshape("ihj->hij", pos_i)                              # (H, S, S)

        # token-type term is 0 (token_type_ids=None); no cls_mask (separate_cls=False)
        score = content + pos + mb_ref[b].reshape(1, 1, S)                   # (H, S, S)
        score = score - jnp.max(score, axis=-1, keepdims=True)
        e = jnp.exp(score)
        prob = e * pl.reciprocal(jnp.sum(e, axis=-1, keepdims=True), approx=True)

        # attention output, head-batched: av[h,i,e] = sum_j prob[h,i,j] v[h,j,e]
        av = lax.dot_general(prob, v_h, (((2,), (1,)), ((0,), (0,))),
                             preferred_element_type=f32)                     # (H, S, DH)
        av_rows.append(jnp.concatenate([av[n] for n in range(H)], axis=-1))  # (S, H*DH)

    av_all = av_rows[0] if TB == 1 else jnp.concatenate(av_rows, axis=0)     # (M, H*DH)

    # single packed post_proj + residual + LayerNorm
    attn_out = jnp.dot(av_all, wp_ref[...], preferred_element_type=f32) + bp_ref[...]
    y = xf + attn_out
    mean = jnp.mean(y, axis=-1, keepdims=True)
    var = jnp.mean(jnp.square(y - mean), axis=-1, keepdims=True)
    y_n = (y - mean) * lax.rsqrt(var + LN_EPS)
    out = y_n * gamma_ref[...] + beta_ref[...]
    o_ref[...] = out.reshape(TB, S, D).astype(o_ref.dtype)


# -----------------------------------------------------------------------------
# Wrapper: parameter packing (glue) + pallas_call
# -----------------------------------------------------------------------------
def funnel_attention_pallas(x, mask, p):
    B, S, D = x.shape
    assert D == D_MODEL
    H, DH = N_HEAD, D_HEAD
    HD = H * DH
    f32 = jnp.float32

    # packed weights (heads along lanes, ordered n*DH + e); scale folded into q projection
    wq = (p["wq"].T * SCALE).astype(f32)          # (D, H*DH)
    wk = p["wk"].T.astype(f32)                    # (D, H*DH)
    wv = p["wv"].T.astype(f32)                    # (D, H*DH)
    bk = p["bk"].reshape(1, HD)
    bv = p["bv"].reshape(1, HD)
    qcb = (p["r_w_bias"] * SCALE).reshape(1, HD)  # content-query bias (already scaled)
    qpb = (p["r_r_bias"] * SCALE).reshape(1, HD)  # position-query bias (already scaled)
    rk = p["r_kernel"].reshape(D, HD)             # r_kernel[d, n, e] -> (D, H*DH)
    wp = p["wp"].T                                # post_proj, (H*DH, D)
    bp = p["bp"].reshape(1, D)
    gamma = p["ln_w"].reshape(1, D)
    beta = p["ln_b"].reshape(1, D)

    r = funnel_position_embeds_block0(S, D)       # (2S, D)

    # structural one-hot for HF _relative_shift_gather(shift=1): G[i,t,j] = (t == S + j - i)
    ii = jnp.arange(S)[:, None, None]
    tt = jnp.arange(2 * S)[None, :, None]
    jj = jnp.arange(S)[None, None, :]
    shift_mat = (tt == S + jj - ii).astype(f32)   # (S, 2S, S)

    mask_bias = (-INF) * (1.0 - mask.astype(f32)).reshape(B, 1, S)

    TB = _pick_batch_block(B, S)
    assert B % TB == 0
    grid = (B // TB,)

    def full(shape):
        nd = len(shape)
        return pl.BlockSpec(shape, lambda i: (0,) * nd)

    kernel = functools.partial(_funnel_attn_kernel, seq_len=S, batch_block=TB)
    return pl.pallas_call(
        kernel,
        out_shape=jax.ShapeDtypeStruct((B, S, D), jnp.float32),
        grid=grid,
        in_specs=[
            pl.BlockSpec((TB, S, D), lambda i: (i, 0, 0)),   # x
            pl.BlockSpec((TB, 1, S), lambda i: (i, 0, 0)),   # mask bias (-1e6 * (1-mask))
            full((D, HD)),                                   # q weight (scale folded)
            full((D, HD)),                                   # k weight
            full((1, HD)),                                   # k bias
            full((D, HD)),                                   # v weight
            full((1, HD)),                                   # v bias
            full((1, HD)),                                   # r_w_bias * scale
            full((1, HD)),                                   # r_r_bias * scale
            full((2 * S, D)),                                # relative position embeddings
            full((D, HD)),                                   # r_kernel (packed)
            full((S, 2 * S, S)),                             # rel-shift selector
            full((HD, D)),                                   # post_proj weight
            full((1, D)),                                    # post_proj bias
            full((1, D)),                                    # layer_norm weight
            full((1, D)),                                    # layer_norm bias
        ],
        out_specs=pl.BlockSpec((TB, S, D), lambda i: (i, 0, 0)),
        compiler_params=pltpu.CompilerParams(dimension_semantics=("parallel",)),
    )(x, mask_bias, wq, wk, bk, wv, bv, qcb, qpb, r, rk, shift_mat, wp, bp, gamma, beta)


# -----------------------------------------------------------------------------
# Deterministic parameters (PyTorch-shaped) + pure-JAX reference for verification
# -----------------------------------------------------------------------------
def make_params(key):
    H96 = N_HEAD * D_HEAD
    ks = jax.random.split(key, 12)
    n = lambda k, shape, s: s * jax.random.normal(k, shape, jnp.float32)
    return dict(
        wq=n(ks[0], (H96, D_MODEL), 0.05),      # q_head: Linear(d_model, H*DH, bias=False)
        wk=n(ks[1], (H96, D_MODEL), 0.05),      # k_head
        bk=n(ks[2], (H96,), 0.02),
        wv=n(ks[3], (H96, D_MODEL), 0.05),      # v_head
        bv=n(ks[4], (H96,), 0.02),
        r_w_bias=n(ks[5], (N_HEAD, D_HEAD), 0.1),
        r_r_bias=n(ks[6], (N_HEAD, D_HEAD), 0.1),
        r_kernel=n(ks[7], (D_MODEL, N_HEAD, D_HEAD), 0.05),
        wp=n(ks[8], (D_MODEL, H96), 0.05),      # post_proj: Linear(H*DH, d_model)
        bp=n(ks[9], (D_MODEL,), 0.02),
        ln_w=1.0 + n(ks[10], (D_MODEL,), 0.05),
        ln_b=n(ks[11], (D_MODEL,), 0.05),
    )


def funnel_attention_reference(x, mask, p):
    B, S, D = x.shape
    H, DH = N_HEAD, D_HEAD
    r = funnel_position_embeds_block0(S, D)
    q = (x @ p["wq"].T).reshape(B, S, H, DH) * SCALE
    k = (x @ p["wk"].T + p["bk"]).reshape(B, S, H, DH)
    v = (x @ p["wv"].T + p["bv"]).reshape(B, S, H, DH)
    content = jnp.einsum("bind,bjnd->bnij", q + p["r_w_bias"] * SCALE, k)
    r_head = jnp.einsum("td,dnh->tnh", r, p["r_kernel"])
    pos_raw = jnp.einsum("binh,tnh->bnit", q + p["r_r_bias"] * SCALE, r_head)
    # _relative_shift_gather(shift=1): out[..., i, j] = pos_raw[..., i, S + j - i]
    idx = S + jnp.arange(S)[None, :] - jnp.arange(S)[:, None]
    pos = jnp.take_along_axis(pos_raw, jnp.broadcast_to(idx, (B, H, S, S)), axis=-1)
    score = content + pos - INF * (1.0 - mask[:, None, None, :].astype(jnp.float32))
    prob = jax.nn.softmax(score, axis=-1)
    av = jnp.einsum("bnij,bjnd->bind", prob, v).reshape(B, S, H * DH)
    attn_out = av @ p["wp"].T + p["bp"]
    y = x + attn_out
    mean = y.mean(-1, keepdims=True)
    var = ((y - mean) ** 2).mean(-1, keepdims=True)
    return (y - mean) / jnp.sqrt(var + LN_EPS) * p["ln_w"] + p["ln_b"]


if __name__ == "__main__":
    B, S = 2, 16
    key = jax.random.PRNGKey(0)
    kx, kparam = jax.random.split(key)
    x = jax.random.normal(kx, (B, S, D_MODEL), jnp.float32)
    mask0 = jnp.ones((B, S), jnp.float32).at[1, S - 3:].set(0.0)  # mask a few keys in batch 1
    params = make_params(kparam)

    out = jax.jit(funnel_attention_pallas)(x, mask0, params)
    out = jax.block_until_ready(out)
    assert out.shape == (B, S, D_MODEL) and out.dtype == jnp.float32

    ref = funnel_attention_reference(x, mask0, params)
    max_err = float(jnp.max(jnp.abs(out - ref)))
    assert max_err < 1e-2, f"kernel/reference mismatch, max abs err = {max_err}"
    print("KERNEL_OK")
</pallas_src>

<mosaic_0001>
module attributes {stable_mosaic.version = 11 : i64} {
  func.func @_funnel_attn_kernel(%arg0: i32, %arg1: memref<1x16x192xf32, #tpu.memory_space<vmem>>, %arg2: memref<1x1x16xf32, #tpu.memory_space<vmem>>, %arg3: memref<192x96xf32, #tpu.memory_space<vmem>>, %arg4: memref<192x96xf32, #tpu.memory_space<vmem>>, %arg5: memref<1x96xf32, #tpu.memory_space<vmem>>, %arg6: memref<192x96xf32, #tpu.memory_space<vmem>>, %arg7: memref<1x96xf32, #tpu.memory_space<vmem>>, %arg8: memref<1x96xf32, #tpu.memory_space<vmem>>, %arg9: memref<1x96xf32, #tpu.memory_space<vmem>>, %arg10: memref<32x192xf32, #tpu.memory_space<vmem>>, %arg11: memref<192x96xf32, #tpu.memory_space<vmem>>, %arg12: memref<16x32x16xf32, #tpu.memory_space<vmem>>, %arg13: memref<96x192xf32, #tpu.memory_space<vmem>>, %arg14: memref<1x192xf32, #tpu.memory_space<vmem>>, %arg15: memref<1x192xf32, #tpu.memory_space<vmem>>, %arg16: memref<1x192xf32, #tpu.memory_space<vmem>>, %arg17: memref<1x16x192xf32, #tpu.memory_space<vmem>>) attributes {dimension_semantics = [#tpu.dimension_semantics<parallel>], iteration_bounds = array<i64: 2>, scalar_prefetch = 0 : i64, scratch_operands = 0 : i64, tpu.core_type = #tpu.core_type<tc>, window_params = [{transform_indices = @transform_0, window_bounds = array<i64: 1, 16, 192>}, {transform_indices = @transform_1, window_bounds = array<i64: 1, 1, 16>}, {pipeline_mode = #tpu.pipeline_mode<synchronous>, transform_indices = @transform_2, window_bounds = array<i64: 192, 96>}, {pipeline_mode = #tpu.pipeline_mode<synchronous>, transform_indices = @transform_3, window_bounds = array<i64: 192, 96>}, {pipeline_mode = #tpu.pipeline_mode<synchronous>, transform_indices = @transform_4, window_bounds = array<i64: 1, 96>}, {pipeline_mode = #tpu.pipeline_mode<synchronous>, transform_indices = @transform_5, window_bounds = array<i64: 192, 96>}, {pipeline_mode = #tpu.pipeline_mode<synchronous>, transform_indices = @transform_6, window_bounds = array<i64: 1, 96>}, {pipeline_mode = #tpu.pipeline_mode<synchronous>, transform_indices = @transform_7, window_bounds = array<i64: 1, 96>}, {pipeline_mode = #tpu.pipeline_mode<synchronous>, transform_indices = @transform_8, window_bounds = array<i64: 1, 96>}, {pipeline_mode = #tpu.pipeline_mode<synchronous>, transform_indices = @transform_9, window_bounds = array<i64: 32, 192>}, {pipeline_mode = #tpu.pipeline_mode<synchronous>, transform_indices = @transform_10, window_bounds = array<i64: 192, 96>}, {pipeline_mode = #tpu.pipeline_mode<synchronous>, transform_indices = @transform_11, window_bounds = array<i64: 16, 32, 16>}, {pipeline_mode = #tpu.pipeline_mode<synchronous>, transform_indices = @transform_12, window_bounds = array<i64: 96, 192>}, {pipeline_mode = #tpu.pipeline_mode<synchronous>, transform_indices = @transform_13, window_bounds = array<i64: 1, 192>}, {pipeline_mode = #tpu.pipeline_mode<synchronous>, transform_indices = @transform_14, window_bounds = array<i64: 1, 192>}, {pipeline_mode = #tpu.pipeline_mode<synchronous>, transform_indices = @transform_15, window_bounds = array<i64: 1, 192>}, {transform_indices = @transform_16, window_bounds = array<i64: 1, 16, 192>}]} {
    %c0 = arith.constant 0 : index
    %c0_0 = arith.constant 0 : index
    %c0_1 = arith.constant 0 : index
    %0 = vector.load %arg1[%c0, %c0_0, %c0_1] : memref<1x16x192xf32, #tpu.memory_space<vmem>>, vector<1x16x192xf32>
    %1 = vector.shape_cast %0 : vector<1x16x192xf32> to vector<16x192xf32>
    %c0_2 = arith.constant 0 : index
    %c0_3 = arith.constant 0 : index
    %2 = vector.load %arg3[%c0_2, %c0_3] : memref<192x96xf32, #tpu.memory_space<vmem>>, vector<192x96xf32>
    %cst = arith.constant dense<0.000000e+00> : vector<16x96xf32>
    %3 = tpu.matmul %1, %2, %cst {dimension_numbers = #tpu.dot_dimension_numbers<[1], [0], [0], [1], [0, 0, 1, 1], [], []>} : vector<16x192xf32>, vector<192x96xf32>, vector<16x96xf32> -> vector<16x96xf32>
    %c0_4 = arith.constant 0 : index
    %c0_5 = arith.constant 0 : index
    %4 = vector.load %arg4[%c0_4, %c0_5] : memref<192x96xf32, #tpu.memory_space<vmem>>, vector<192x96xf32>
    %cst_6 = arith.constant dense<0.000000e+00> : vector<16x96xf32>
    %5 = tpu.matmul %1, %4, %cst_6 {dimension_numbers = #tpu.dot_dimension_numbers<[1], [0], [0], [1], [0, 0, 1, 1], [], []>} : vector<16x192xf32>, vector<192x96xf32>, vector<16x96xf32> -> vector<16x96xf32>
    %c0_7 = arith.constant 0 : index
    %c0_8 = arith.constant 0 : index
    %6 = vector.load %arg5[%c0_7, %c0_8] : memref<1x96xf32, #tpu.memory_space<vmem>>, vector<1x96xf32>
    %7 = vector.broadcast %6 : vector<1x96xf32> to vector<16x96xf32>
    %8 = arith.addf %5, %7 : vector<16x96xf32>
    %c0_9 = arith.constant 0 : index
    %c0_10 = arith.constant 0 : index
    %9 = vector.load %arg6[%c0_9, %c0_10] : memref<192x96xf32, #tpu.memory_space<vmem>>, vector<192x96xf32>
    %cst_11 = arith.constant dense<0.000000e+00> : vector<16x96xf32>
    %10 = tpu.matmul %1, %9, %cst_11 {dimension_numbers = #tpu.dot_dimension_numbers<[1], [0], [0], [1], [0, 0, 1, 1], [], []>} : vector<16x192xf32>, vector<192x96xf32>, vector<16x96xf32> -> vector<16x96xf32>
    %c0_12 = arith.constant 0 : index
    %c0_13 = arith.constant 0 : index
    %11 = vector.load %arg7[%c0_12, %c0_13] : memref<1x96xf32, #tpu.memory_space<vmem>>, vector<1x96xf32>
    %12 = vector.broadcast %11 : vector<1x96xf32> to vector<16x96xf32>
    %13 = arith.addf %10, %12 : vector<16x96xf32>
    %c0_14 = arith.constant 0 : index
    %c0_15 = arith.constant 0 : index
    %14 = vector.load %arg10[%c0_14, %c0_15] : memref<32x192xf32, #tpu.memory_space<vmem>>, vector<32x192xf32>
    %c0_16 = arith.constant 0 : index
    %c0_17 = arith.constant 0 : index
    %15 = vector.load %arg11[%c0_16, %c0_17] : memref<192x96xf32, #tpu.memory_space<vmem>>, vector<192x96xf32>
    %cst_18 = arith.constant dense<0.000000e+00> : vector<32x96xf32>
    %16 = tpu.matmul %14, %15, %cst_18 {dimension_numbers = #tpu.dot_dimension_numbers<[1], [0], [0], [1], [0, 0, 1, 1], [], []>} : vector<32x192xf32>, vector<192x96xf32>, vector<32x96xf32> -> vector<32x96xf32>
    %c0_19 = arith.constant 0 : index
    %c0_20 = arith.constant 0 : index
    %17 = vector.load %arg8[%c0_19, %c0_20] : memref<1x96xf32, #tpu.memory_space<vmem>>, vector<1x96xf32>
    %18 = vector.broadcast %17 : vector<1x96xf32> to vector<16x96xf32>
    %19 = arith.addf %3, %18 : vector<16x96xf32>
    %c0_21 = arith.constant 0 : index
    %c0_22 = arith.constant 0 : index
    %20 = vector.load %arg9[%c0_21, %c0_22] : memref<1x96xf32, #tpu.memory_space<vmem>>, vector<1x96xf32>
    %21 = vector.broadcast %20 : vector<1x96xf32> to vector<16x96xf32>
    %22 = arith.addf %3, %21 : vector<16x96xf32>
    %c0_23 = arith.constant 0 : index
    %c0_24 = arith.constant 0 : index
    %c0_25 = arith.constant 0 : index
    %23 = vector.load %arg12[%c0_23, %c0_24, %c0_25] : memref<16x32x16xf32, #tpu.memory_space<vmem>>, vector<16x32x16xf32>
    %24 = vector.extract_strided_slice %16 {offsets = [0, 0], sizes = [32, 6], strides = [1, 1]} : vector<32x96xf32> to vector<32x6xf32>
    %25 = vector.extract_strided_slice %16 {offsets = [0, 6], sizes = [32, 6], strides = [1, 1]} : vector<32x96xf32> to vector<32x6xf32>
    %26 = vector.extract_strided_slice %16 {offsets = [0, 12], sizes = [32, 6], strides = [1, 1]} : vector<32x96xf32> to vector<32x6xf32>
    %27 = vector.extract_strided_slice %16 {offsets = [0, 18], sizes = [32, 6], strides = [1, 1]} : vector<32x96xf32> to vector<32x6xf32>
    %28 = vector.extract_strided_slice %16 {offsets = [0, 24], sizes = [32, 6], strides = [1, 1]} : vector<32x96xf32> to vector<32x6xf32>
    %29 = vector.extract_strided_slice %16 {offsets = [0, 30], sizes = [32, 6], strides = [1, 1]} : vector<32x96xf32> to vector<32x6xf32>
    %30 = vector.extract_strided_slice %16 {offsets = [0, 36], sizes = [32, 6], strides = [1, 1]} : vector<32x96xf32> to vector<32x6xf32>
    %31 = vector.extract_strided_slice %16 {offsets = [0, 42], sizes = [32, 6], strides = [1, 1]} : vector<32x96xf32> to vector<32x6xf32>
    %32 = vector.extract_strided_slice %16 {offsets = [0, 48], sizes = [32, 6], strides = [1, 1]} : vector<32x96xf32> to vector<32x6xf32>
    %33 = vector.extract_strided_slice %16 {offsets = [0, 54], sizes = [32, 6], strides = [1, 1]} : vector<32x96xf32> to vector<32x6xf32>
    %34 = vector.extract_strided_slice %16 {offsets = [0, 60], sizes = [32, 6], strides = [1, 1]} : vector<32x96xf32> to vector<32x6xf32>
    %35 = vector.extract_strided_slice %16 {offsets = [0, 66], sizes = [32, 6], strides = [1, 1]} : vector<32x96xf32> to vector<32x6xf32>
    %36 = vector.extract_strided_slice %16 {offsets = [0, 72], sizes = [32, 6], strides = [1, 1]} : vector<32x96xf32> to vector<32x6xf32>
    %37 = vector.extract_strided_slice %16 {offsets = [0, 78], sizes = [32, 6], strides = [1, 1]} : vector<32x96xf32> to vector<32x6xf32>
    %38 = vector.extract_strided_slice %16 {offsets = [0, 84], sizes = [32, 6], strides = [1, 1]} : vector<32x96xf32> to vector<32x6xf32>
    %39 = vector.extract_strided_slice %16 {offsets = [0, 90], sizes = [32, 6], strides = [1, 1]} : vector<32x96xf32> to vector<32x6xf32>
    %40 = vector.shape_cast %24 : vector<32x6xf32> to vector<1x32x6xf32>
    %41 = vector.shape_cast %25 : vector<32x6xf32> to vector<1x32x6xf32>
    %42 = vector.shape_cast %26 : vector<32x6xf32> to vector<1x32x6xf32>
    %43 = vector.shape_cast %27 : vector<32x6xf32> to vector<1x32x6xf32>
    %44 = vector.shape_cast %28 : vector<32x6xf32> to vector<1x32x6xf32>
    %45 = vector.shape_cast %29 : vector<32x6xf32> to vector<1x32x6xf32>
    %46 = vector.shape_cast %30 : vector<32x6xf32> to vector<1x32x6xf32>
    %47 = vector.shape_cast %31 : vector<32x6xf32> to vector<1x32x6xf32>
    %48 = vector.shape_cast %32 : vector<32x6xf32> to vector<1x32x6xf32>
    %49 = vector.shape_cast %33 : vector<32x6xf32> to vector<1x32x6xf32>
    %50 = vector.shape_cast %34 : vector<32x6xf32> to vector<1x32x6xf32>
    %51 = vector.shape_cast %35 : vector<32x6xf32> to vector<1x32x6xf32>
    %52 = vector.shape_cast %36 : vector<32x6xf32> to vector<1x32x6xf32>
    %53 = vector.shape_cast %37 : vector<32x6xf32> to vector<1x32x6xf32>
    %54 = vector.shape_cast %38 : vector<32x6xf32> to vector<1x32x6xf32>
    %55 = vector.shape_cast %39 : vector<32x6xf32> to vector<1x32x6xf32>
    %56 = tpu.concatenate %40, %41, %42, %43, %44, %45, %46, %47, %48, %49, %50, %51, %52, %53, %54, %55 in 0 : vector<1x32x6xf32>, vector<1x32x6xf32>, vector<1x32x6xf32>, vector<1x32x6xf32>, vector<1x32x6xf32>, vector<1x32x6xf32>, vector<1x32x6xf32>, vector<1x32x6xf32>, vector<1x32x6xf32>, vector<1x32x6xf32>, vector<1x32x6xf32>, vector<1x32x6xf32>, vector<1x32x6xf32>, vector<1x32x6xf32>, vector<1x32x6xf32>, vector<1x32x6xf32> -> vector<16x32x6xf32>
    %57 = vector.extract_strided_slice %19 {offsets = [0, 0], sizes = [16, 6], strides = [1, 1]} : vector<16x96xf32> to vector<16x6xf32>
    %58 = vector.extract_strided_slice %19 {offsets = [0, 6], sizes = [16, 6], strides = [1, 1]} : vector<16x96xf32> to vector<16x6xf32>
    %59 = vector.extract_strided_slice %19 {offsets = [0, 12], sizes = [16, 6], strides = [1, 1]} : vector<16x96xf32> to vector<16x6xf32>
    %60 = vector.extract_strided_slice %19 {offsets = [0, 18], sizes = [16, 6], strides = [1, 1]} : vector<16x96xf32> to vector<16x6xf32>
    %61 = vector.extract_strided_slice %19 {offsets = [0, 24], sizes = [16, 6], strides = [1, 1]} : vector<16x96xf32> to vector<16x6xf32>
    %62 = vector.extract_strided_slice %19 {offsets = [0, 30], sizes = [16, 6], strides = [1, 1]} : vector<16x96xf32> to vector<16x6xf32>
    %63 = vector.extract_strided_slice %19 {offsets = [0, 36], sizes = [16, 6], strides = [1, 1]} : vector<16x96xf32> to vector<16x6xf32>
    %64 = vector.extract_strided_slice %19 {offsets = [0, 42], sizes = [16, 6], strides = [1, 1]} : vector<16x96xf32> to vector<16x6xf32>
    %65 = vector.extract_strided_slice %19 {offsets = [0, 48], sizes = [16, 6], strides = [1, 1]} : vector<16x96xf32> to vector<16x6xf32>
    %66 = vector.extract_strided_slice %19 {offsets = [0, 54], sizes = [16, 6], strides = [1, 1]} : vector<16x96xf32> to vector<16x6xf32>
    %67 = vector.extract_strided_slice %19 {offsets = [0, 60], sizes = [16, 6], strides = [1, 1]} : vector<16x96xf32> to vector<16x6xf32>
    %68 = vector.extract_strided_slice %19 {offsets = [0, 66], sizes = [16, 6], strides = [1, 1]} : vector<16x96xf32> to vector<16x6xf32>
    %69 = vector.extract_strided_slice %19 {offsets = [0, 72], sizes = [16, 6], strides = [1, 1]} : vector<16x96xf32> to vector<16x6xf32>
    %70 = vector.extract_strided_slice %19 {offsets = [0, 78], sizes = [16, 6], strides = [1, 1]} : vector<16x96xf32> to vector<16x6xf32>
    %71 = vector.extract_strided_slice %19 {offsets = [0, 84], sizes = [16, 6], strides = [1, 1]} : vector<16x96xf32> to vector<16x6xf32>
    %72 = vector.extract_strided_slice %19 {offsets = [0, 90], sizes = [16, 6], strides = [1, 1]} : vector<16x96xf32> to vector<16x6xf32>
    %73 = vector.shape_cast %57 : vector<16x6xf32> to vector<1x16x6xf32>
    %74 = vector.shape_cast %58 : vector<16x6xf32> to vector<1x16x6xf32>
    %75 = vector.shape_cast %59 : vector<16x6xf32> to vector<1x16x6xf32>
    %76 = vector.shape_cast %60 : vector<16x6xf32> to vector<1x16x6xf32>
    %77 = vector.shape_cast %61 : vector<16x6xf32> to vector<1x16x6xf32>
    %78 = vector.shape_cast %62 : vector<16x6xf32> to vector<1x16x6xf32>
    %79 = vector.shape_cast %63 : vector<16x6xf32> to vector<1x16x6xf32>
    %80 = vector.shape_cast %64 : vector<16x6xf32> to vector<1x16x6xf32>
    %81 = vector.shape_cast %65 : vector<16x6xf32> to vector<1x16x6xf32>
    %82 = vector.shape_cast %66 : vector<16x6xf32> to vector<1x16x6xf32>
    %83 = vector.shape_cast %67 : vector<16x6xf32> to vector<1x16x6xf32>
    %84 = vector.shape_cast %68 : vector<16x6xf32> to vector<1x16x6xf32>
    %85 = vector.shape_cast %69 : vector<16x6xf32> to vector<1x16x6xf32>
    %86 = vector.shape_cast %70 : vector<16x6xf32> to vector<1x16x6xf32>
    %87 = vector.shape_cast %71 : vector<16x6xf32> to vector<1x16x6xf32>
    %88 = vector.shape_cast %72 : vector<16x6xf32> to vector<1x16x6xf32>
    %89 = tpu.concatenate %73, %74, %75, %76, %77, %78, %79, %80, %81, %82, %83, %84, %85, %86, %87, %88 in 0 : vector<1x16x6xf32>, vector<1x16x6xf32>, vector<1x16x6xf32>, vector<1x16x6xf32>, vector<1x16x6xf32>, vector<1x16x6xf32>, vector<1x16x6xf32>, vector<1x16x6xf32>, vector<1x16x6xf32>, vector<1x16x6xf32>, vector<1x16x6xf32>, vector<1x16x6xf32>, vector<1x16x6xf32>, vector<1x16x6xf32>, vector<1x16x6xf32>, vector<1x16x6xf32> -> vector<16x16x6xf32>
    %90 = vector.extract_strided_slice %22 {offsets = [0, 0], sizes = [16, 6], strides = [1, 1]} : vector<16x96xf32> to vector<16x6xf32>
    %91 = vector.extract_strided_slice %22 {offsets = [0, 6], sizes = [16, 6], strides = [1, 1]} : vector<16x96xf32> to vector<16x6xf32>
    %92 = vector.extract_strided_slice %22 {offsets = [0, 12], sizes = [16, 6], strides = [1, 1]} : vector<16x96xf32> to vector<16x6xf32>
    %93 = vector.extract_strided_slice %22 {offsets = [0, 18], sizes = [16, 6], strides = [1, 1]} : vector<16x96xf32> to vector<16x6xf32>
    %94 = vector.extract_strided_slice %22 {offsets = [0, 24], sizes = [16, 6], strides = [1, 1]} : vector<16x96xf32> to vector<16x6xf32>
    %95 = vector.extract_strided_slice %22 {offsets = [0, 30], sizes = [16, 6], strides = [1, 1]} : vector<16x96xf32> to vector<16x6xf32>
    %96 = vector.extract_strided_slice %22 {offsets = [0, 36], sizes = [16, 6], strides = [1, 1]} : vector<16x96xf32> to vector<16x6xf32>
    %97 = vector.extract_strided_slice %22 {offsets = [0, 42], sizes = [16, 6], strides = [1, 1]} : vector<16x96xf32> to vector<16x6xf32>
    %98 = vector.extract_strided_slice %22 {offsets = [0, 48], sizes = [16, 6], strides = [1, 1]} : vector<16x96xf32> to vector<16x6xf32>
    %99 = vector.extract_strided_slice %22 {offsets = [0, 54], sizes = [16, 6], strides = [1, 1]} : vector<16x96xf32> to vector<16x6xf32>
    %100 = vector.extract_strided_slice %22 {offsets = [0, 60], sizes = [16, 6], strides = [1, 1]} : vector<16x96xf32> to vector<16x6xf32>
    %101 = vector.extract_strided_slice %22 {offsets = [0, 66], sizes = [16, 6], strides = [1, 1]} : vector<16x96xf32> to vector<16x6xf32>
    %102 = vector.extract_strided_slice %22 {offsets = [0, 72], sizes = [16, 6], strides = [1, 1]} : vector<16x96xf32> to vector<16x6xf32>
    %103 = vector.extract_strided_slice %22 {offsets = [0, 78], sizes = [16, 6], strides = [1, 1]} : vector<16x96xf32> to vector<16x6xf32>
    %104 = vector.extract_strided_slice %22 {offsets = [0, 84], sizes = [16, 6], strides = [1, 1]} : vector<16x96xf32> to vector<16x6xf32>
    %105 = vector.extract_strided_slice %22 {offsets = [0, 90], sizes = [16, 6], strides = [1, 1]} : vector<16x96xf32> to vector<16x6xf32>
    %106 = vector.shape_cast %90 : vector<16x6xf32> to vector<1x16x6xf32>
    %107 = vector.shape_cast %91 : vector<16x6xf32> to vector<1x16x6xf32>
    %108 = vector.shape_cast %92 : vector<16x6xf32> to vector<1x16x6xf32>
    %109 = vector.shape_cast %93 : vector<16x6xf32> to vector<1x16x6xf32>
    %110 = vector.shape_cast %94 : vector<16x6xf32> to vector<1x16x6xf32>
    %111 = vector.shape_cast %95 : vector<16x6xf32> to vector<1x16x6xf32>
    %112 = vector.shape_cast %96 : vector<16x6xf32> to vector<1x16x6xf32>
    %113 = vector.shape_cast %97 : vector<16x6xf32> to vector<1x16x6xf32>
    %114 = vector.shape_cast %98 : vector<16x6xf32> to vector<1x16x6xf32>
    %115 = vector.shape_cast %99 : vector<16x6xf32> to vector<1x16x6xf32>
    %116 = vector.shape_cast %100 : vector<16x6xf32> to vector<1x16x6xf32>
    %117 = vector.shape_cast %101 : vector<16x6xf32> to vector<1x16x6xf32>
    %118 = vector.shape_cast %102 : vector<16x6xf32> to vector<1x16x6xf32>
    %119 = vector.shape_cast %103 : vector<16x6xf32> to vector<1x16x6xf32>
    %120 = vector.shape_cast %104 : vector<16x6xf32> to vector<1x16x6xf32>
    %121 = vector.shape_cast %105 : vector<16x6xf32> to vector<1x16x6xf32>
    %122 = tpu.concatenate %106, %107, %108, %109, %110, %111, %112, %113, %114, %115, %116, %117, %118, %119, %120, %121 in 0 : vector<1x16x6xf32>, vector<1x16x6xf32>, vector<1x16x6xf32>, vector<1x16x6xf32>, vector<1x16x6xf32>, vector<1x16x6xf32>, vector<1x16x6xf32>, vector<1x16x6xf32>, vector<1x16x6xf32>, vector<1x16x6xf32>, vector<1x16x6xf32>, vector<1x16x6xf32>, vector<1x16x6xf32>, vector<1x16x6xf32>, vector<1x16x6xf32>, vector<1x16x6xf32> -> vector<16x16x6xf32>
    %123 = vector.extract_strided_slice %8 {offsets = [0, 0], sizes = [16, 6], strides = [1, 1]} : vector<16x96xf32> to vector<16x6xf32>
    %124 = vector.extract_strided_slice %8 {offsets = [0, 6], sizes = [16, 6], strides = [1, 1]} : vector<16x96xf32> to vector<16x6xf32>
    %125 = vector.extract_strided_slice %8 {offsets = [0, 12], sizes = [16, 6], strides = [1, 1]} : vector<16x96xf32> to vector<16x6xf32>
    %126 = vector.extract_strided_slice %8 {offsets = [0, 18], sizes = [16, 6], strides = [1, 1]} : vector<16x96xf32> to vector<16x6xf32>
    %127 = vector.extract_strided_slice %8 {offsets = [0, 24], sizes = [16, 6], strides = [1, 1]} : vector<16x96xf32> to vector<16x6xf32>
    %128 = vector.extract_strided_slice %8 {offsets = [0, 30], sizes = [16, 6], strides = [1, 1]} : vector<16x96xf32> to vector<16x6xf32>
    %129 = vector.extract_strided_slice %8 {offsets = [0, 36], sizes = [16, 6], strides = [1, 1]} : vector<16x96xf32> to vector<16x6xf32>
    %130 = vector.extract_strided_slice %8 {offsets = [0, 42], sizes = [16, 6], strides = [1, 1]} : vector<16x96xf32> to vector<16x6xf32>
    %131 = vector.extract_strided_slice %8 {offsets = [0, 48], sizes = [16, 6], strides = [1, 1]} : vector<16x96xf32> to vector<16x6xf32>
    %132 = vector.extract_strided_slice %8 {offsets = [0, 54], sizes = [16, 6], strides = [1, 1]} : vector<16x96xf32> to vector<16x6xf32>
    %133 = vector.extract_strided_slice %8 {offsets = [0, 60], sizes = [16, 6], strides = [1, 1]} : vector<16x96xf32> to vector<16x6xf32>
    %134 = vector.extract_strided_slice %8 {offsets = [0, 66], sizes = [16, 6], strides = [1, 1]} : vector<16x96xf32> to vector<16x6xf32>
    %135 = vector.extract_strided_slice %8 {offsets = [0, 72], sizes = [16, 6], strides = [1, 1]} : vector<16x96xf32> to vector<16x6xf32>
    %136 = vector.extract_strided_slice %8 {offsets = [0, 78], sizes = [16, 6], strides = [1, 1]} : vector<16x96xf32> to vector<16x6xf32>
    %137 = vector.extract_strided_slice %8 {offsets = [0, 84], sizes = [16, 6], strides = [1, 1]} : vector<16x96xf32> to vector<16x6xf32>
    %138 = vector.extract_strided_slice %8 {offsets = [0, 90], sizes = [16, 6], strides = [1, 1]} : vector<16x96xf32> to vector<16x6xf32>
    %139 = vector.shape_cast %123 : vector<16x6xf32> to vector<1x16x6xf32>
    %140 = vector.shape_cast %124 : vector<16x6xf32> to vector<1x16x6xf32>
    %141 = vector.shape_cast %125 : vector<16x6xf32> to vector<1x16x6xf32>
    %142 = vector.shape_cast %126 : vector<16x6xf32> to vector<1x16x6xf32>
    %143 = vector.shape_cast %127 : vector<16x6xf32> to vector<1x16x6xf32>
    %144 = vector.shape_cast %128 : vector<16x6xf32> to vector<1x16x6xf32>
    %145 = vector.shape_cast %129 : vector<16x6xf32> to vector<1x16x6xf32>
    %146 = vector.shape_cast %130 : vector<16x6xf32> to vector<1x16x6xf32>
    %147 = vector.shape_cast %131 : vector<16x6xf32> to vector<1x16x6xf32>
    %148 = vector.shape_cast %132 : vector<16x6xf32> to vector<1x16x6xf32>
    %149 = vector.shape_cast %133 : vector<16x6xf32> to vector<1x16x6xf32>
    %150 = vector.shape_cast %134 : vector<16x6xf32> to vector<1x16x6xf32>
    %151 = vector.shape_cast %135 : vector<16x6xf32> to vector<1x16x6xf32>
    %152 = vector.shape_cast %136 : vector<16x6xf32> to vector<1x16x6xf32>
    %153 = vector.shape_cast %137 : vector<16x6xf32> to vector<1x16x6xf32>
    %154 = vector.shape_cast %138 : vector<16x6xf32> to vector<1x16x6xf32>
    %155 = tpu.concatenate %139, %140, %141, %142, %143, %144, %145, %146, %147, %148, %149, %150, %151, %152, %153, %154 in 0 : vector<1x16x6xf32>, vector<1x16x6xf32>, vector<1x16x6xf32>, vector<1x16x6xf32>, vector<1x16x6xf32>, vector<1x16x6xf32>, vector<1x16x6xf32>, vector<1x16x6xf32>, vector<1x16x6xf32>, vector<1x16x6xf32>, vector<1x16x6xf32>, vector<1x16x6xf32>, vector<1x16x6xf32>, vector<1x16x6xf32>, vector<1x16x6xf32>, vector<1x16x6xf32> -> vector<16x16x6xf32>
    %156 = vector.extract_strided_slice %13 {offsets = [0, 0], sizes = [16, 6], strides = [1, 1]} : vector<16x96xf32> to vector<16x6xf32>
    %157 = vector.extract_strided_slice %13 {offsets = [0, 6], sizes = [16, 6], strides = [1, 1]} : vector<16x96xf32> to vector<16x6xf32>
    %158 = vector.extract_strided_slice %13 {offsets = [0, 12], sizes = [16, 6], strides = [1, 1]} : vector<16x96xf32> to vector<16x6xf32>
    %159 = vector.extract_strided_slice %13 {offsets = [0, 18], sizes = [16, 6], strides = [1, 1]} : vector<16x96xf32> to vector<16x6xf32>
    %160 = vector.extract_strided_slice %13 {offsets = [0, 24], sizes = [16, 6], strides = [1, 1]} : vector<16x96xf32> to vector<16x6xf32>
    %161 = vector.extract_strided_slice %13 {offsets = [0, 30], sizes = [16, 6], strides = [1, 1]} : vector<16x96xf32> to vector<16x6xf32>
    %162 = vector.extract_strided_slice %13 {offsets = [0, 36], sizes = [16, 6], strides = [1, 1]} : vector<16x96xf32> to vector<16x6xf32>
    %163 = vector.extract_strided_slice %13 {offsets = [0, 42], sizes = [16, 6], strides = [1, 1]} : vector<16x96xf32> to vector<16x6xf32>
    %164 = vector.extract_strided_slice %13 {offsets = [0, 48], sizes = [16, 6], strides = [1, 1]} : vector<16x96xf32> to vector<16x6xf32>
    %165 = vector.extract_strided_slice %13 {offsets = [0, 54], sizes = [16, 6], strides = [1, 1]} : vector<16x96xf32> to vector<16x6xf32>
    %166 = vector.extract_strided_slice %13 {offsets = [0, 60], sizes = [16, 6], strides = [1, 1]} : vector<16x96xf32> to vector<16x6xf32>
    %167 = vector.extract_strided_slice %13 {offsets = [0, 66], sizes = [16, 6], strides = [1, 1]} : vector<16x96xf32> to vector<16x6xf32>
    %168 = vector.extract_strided_slice %13 {offsets = [0, 72], sizes = [16, 6], strides = [1, 1]} : vector<16x96xf32> to vector<16x6xf32>
    %169 = vector.extract_strided_slice %13 {offsets = [0, 78], sizes = [16, 6], strides = [1, 1]} : vector<16x96xf32> to vector<16x6xf32>
    %170 = vector.extract_strided_slice %13 {offsets = [0, 84], sizes = [16, 6], strides = [1, 1]} : vector<16x96xf32> to vector<16x6xf32>
    %171 = vector.extract_strided_slice %13 {offsets = [0, 90], sizes = [16, 6], strides = [1, 1]} : vector<16x96xf32> to vector<16x6xf32>
    %172 = vector.shape_cast %156 : vector<16x6xf32> to vector<1x16x6xf32>
    %173 = vector.shape_cast %157 : vector<16x6xf32> to vector<1x16x6xf32>
    %174 = vector.shape_cast %158 : vector<16x6xf32> to vector<1x16x6xf32>
    %175 = vector.shape_cast %159 : vector<16x6xf32> to vector<1x16x6xf32>
    %176 = vector.shape_cast %160 : vector<16x6xf32> to vector<1x16x6xf32>
    %177 = vector.shape_cast %161 : vector<16x6xf32> to vector<1x16x6xf32>
    %178 = vector.shape_cast %162 : vector<16x6xf32> to vector<1x16x6xf32>
    %179 = vector.shape_cast %163 : vector<16x6xf32> to vector<1x16x6xf32>
    %180 = vector.shape_cast %164 : vector<16x6xf32> to vector<1x16x6xf32>
    %181 = vector.shape_cast %165 : vector<16x6xf32> to vector<1x16x6xf32>
    %182 = vector.shape_cast %166 : vector<16x6xf32> to vector<1x16x6xf32>
    %183 = vector.shape_cast %167 : vector<16x6xf32> to vector<1x16x6xf32>
    %184 = vector.shape_cast %168 : vector<16x6xf32> to vector<1x16x6xf32>
    %185 = vector.shape_cast %169 : vector<16x6xf32> to vector<1x16x6xf32>
    %186 = vector.shape_cast %170 : vector<16x6xf32> to vector<1x16x6xf32>
    %187 = vector.shape_cast %171 : vector<16x6xf32> to vector<1x16x6xf32>
    %188 = tpu.concatenate %172, %173, %174, %175, %176, %177, %178, %179, %180, %181, %182, %183, %184, %185, %186, %187 in 0 : vector<1x16x6xf32>, vector<1x16x6xf32>, vector<1x16x6xf32>, vector<1x16x6xf32>, vector<1x16x6xf32>, vector<1x16x6xf32>, vector<1x16x6xf32>, vector<1x16x6xf32>, vector<1x16x6xf32>, vector<1x16x6xf32>, vector<1x16x6xf32>, vector<1x16x6xf32>, vector<1x16x6xf32>, vector<1x16x6xf32>, vector<1x16x6xf32>, vector<1x16x6xf32> -> vector<16x16x6xf32>
    %cst_26 = arith.constant dense<0.000000e+00> : vector<16x16x16xf32>
    %189 = tpu.matmul %89, %155, %cst_26 {dimension_numbers = #tpu.dot_dimension_numbers<[2], [2], [1], [1], [0, 0, 0, 1, 1, 1], [0], [0]>} : vector<16x16x6xf32>, vector<16x16x6xf32>, vector<16x16x16xf32> -> vector<16x16x16xf32>
    %cst_27 = arith.constant dense<0.000000e+00> : vector<16x16x32xf32>
    %190 = tpu.matmul %122, %56, %cst_27 {dimension_numbers = #tpu.dot_dimension_numbers<[2], [2], [1], [1], [0, 0, 0, 1, 1, 1], [0], [0]>} : vector<16x16x6xf32>, vector<16x32x6xf32>, vector<16x16x32xf32> -> vector<16x16x32xf32>
    %191 = tpu.transpose %190, [1, 0, 2] : vector<16x16x32xf32> -> vector<16x16x32xf32>
    %cst_28 = arith.constant dense<0.000000e+00> : vector<16x16x16xf32>
    %192 = tpu.matmul %191, %23, %cst_28 {dimension_numbers = #tpu.dot_dimension_numbers<[2], [1], [1], [2], [0, 0, 0, 1, 1, 2], [0], [0]>} : vector<16x16x32xf32>, vector<16x32x16xf32>, vector<16x16x16xf32> -> vector<16x16x16xf32>
    %193 = tpu.transpose %192, [1, 0, 2] : vector<16x16x16xf32> -> vector<16x16x16xf32>
    %194 = arith.addf %189, %193 : vector<16x16x16xf32>
    %c0_29 = arith.constant 0 : index
    %c0_30 = arith.constant 0 : index
    %c0_31 = arith.constant 0 : index
    %195 = vector.load %arg2[%c0_29, %c0_30, %c0_31] : memref<1x1x16xf32, #tpu.memory_space<vmem>>, vector<1x1x16xf32>
    %196 = vector.shape_cast %195 : vector<1x1x16xf32> to vector<1x16xf32>
    %197 = vector.shape_cast %196 : vector<1x16xf32> to vector<1x1x16xf32>
    %198 = vector.broadcast %197 : vector<1x1x16xf32> to vector<16x16x16xf32>
    %199 = arith.addf %194, %198 : vector<16x16x16xf32>
    %cst_32 = arith.constant dense<0xFF800000> : vector<16x16xf32>
    %200 = vector.multi_reduction <maximumf>, %199, %cst_32 [2] : vector<16x16x16xf32> to vector<16x16xf32>
    %201 = vector.shape_cast %200 : vector<16x16xf32> to vector<16x16x1xf32>
    %202 = vector.broadcast %201 : vector<16x16x1xf32> to vector<16x16x16xf32>
    %203 = arith.subf %199, %202 : vector<16x16x16xf32>
    %204 = math.exp %203 : vector<16x16x16xf32>
    %cst_33 = arith.constant dense<0.000000e+00> : vector<16x16xf32>
    %205 = vector.multi_reduction <add>, %204, %cst_33 [2] : vector<16x16x16xf32> to vector<16x16xf32>
    %206 = vector.shape_cast %205 : vector<16x16xf32> to vector<16x16x1xf32>
    %207 = tpu.reciprocal %206 {approx = true} : vector<16x16x1xf32> -> vector<16x16x1xf32>
    %208 = vector.broadcast %207 : vector<16x16x1xf32> to vector<16x16x16xf32>
    %209 = arith.mulf %204, %208 : vector<16x16x16xf32>
    %cst_34 = arith.constant dense<0.000000e+00> : vector<16x16x6xf32>
    %210 = tpu.matmul %209, %188, %cst_34 {dimension_numbers = #tpu.dot_dimension_numbers<[2], [1], [1], [2], [0, 0, 0, 1, 1, 2], [0], [0]>} : vector<16x16x16xf32>, vector<16x16x6xf32>, vector<16x16x6xf32> -> vector<16x16x6xf32>
    %211 = vector.extract_strided_slice %210 {offsets = [0, 0, 0], sizes = [1, 16, 6], strides = [1, 1, 1]} : vector<16x16x6xf32> to vector<1x16x6xf32>
    %212 = vector.shape_cast %211 : vector<1x16x6xf32> to vector<16x6xf32>
    %213 = vector.extract_strided_slice %210 {offsets = [1, 0, 0], sizes = [1, 16, 6], strides = [1, 1, 1]} : vector<16x16x6xf32> to vector<1x16x6xf32>
    %214 = vector.shape_cast %213 : vector<1x16x6xf32> to vector<16x6xf32>
    %215 = vector.extract_strided_slice %210 {offsets = [2, 0, 0], sizes = [1, 16, 6], strides = [1, 1, 1]} : vector<16x16x6xf32> to vector<1x16x6xf32>
    %216 = vector.shape_cast %215 : vector<1x16x6xf32> to vector<16x6xf32>
    %217 = vector.extract_strided_slice %210 {offsets = [3, 0, 0], sizes = [1, 16, 6], strides = [1, 1, 1]} : vector<16x16x6xf32> to vector<1x16x6xf32>
    %218 = vector.shape_cast %217 : vector<1x16x6xf32> to vector<16x6xf32>
    %219 = vector.extract_strided_slice %210 {offsets = [4, 0, 0], sizes = [1, 16, 6], strides = [1, 1, 1]} : vector<16x16x6xf32> to vector<1x16x6xf32>
    %220 = vector.shape_cast %219 : vector<1x16x6xf32> to vector<16x6xf32>
    %221 = vector.extract_strided_slice %210 {offsets = [5, 0, 0], sizes = [1, 16, 6], strides = [1, 1, 1]} : vector<16x16x6xf32> to vector<1x16x6xf32>
    %222 = vector.shape_cast %221 : vector<1x16x6xf32> to vector<16x6xf32>
    %223 = vector.extract_strided_slice %210 {offsets = [6, 0, 0], sizes = [1, 16, 6], strides = [1, 1, 1]} : vector<16x16x6xf32> to vector<1x16x6xf32>
    %224 = vector.shape_cast %223 : vector<1x16x6xf32> to vector<16x6xf32>
    %225 = vector.extract_strided_slice %210 {offsets = [7, 0, 0], sizes = [1, 16, 6], strides = [1, 1, 1]} : vector<16x16x6xf32> to vector<1x16x6xf32>
    %226 = vector.shape_cast %225 : vector<1x16x6xf32> to vector<16x6xf32>
    %227 = vector.extract_strided_slice %210 {offsets = [8, 0, 0], sizes = [1, 16, 6], strides = [1, 1, 1]} : vector<16x16x6xf32> to vector<1x16x6xf32>
    %228 = vector.shape_cast %227 : vector<1x16x6xf32> to vector<16x6xf32>
    %229 = vector.extract_strided_slice %210 {offsets = [9, 0, 0], sizes = [1, 16, 6], strides = [1, 1, 1]} : vector<16x16x6xf32> to vector<1x16x6xf32>
    %230 = vector.shape_cast %229 : vector<1x16x6xf32> to vector<16x6xf32>
    %231 = vector.extract_strided_slice %210 {offsets = [10, 0, 0], sizes = [1, 16, 6], strides = [1, 1, 1]} : vector<16x16x6xf32> to vector<1x16x6xf32>
    %232 = vector.shape_cast %231 : vector<1x16x6xf32> to vector<16x6xf32>
    %233 = vector.extract_strided_slice %210 {offsets = [11, 0, 0], sizes = [1, 16, 6], strides = [1, 1, 1]} : vector<16x16x6xf32> to vector<1x16x6xf32>
    %234 = vector.shape_cast %233 : vector<1x16x6xf32> to vector<16x6xf32>
    %235 = vector.extract_strided_slice %210 {offsets = [12, 0, 0], sizes = [1, 16, 6], strides = [1, 1, 1]} : vector<16x16x6xf32> to vector<1x16x6xf32>
    %236 = vector.shape_cast %235 : vector<1x16x6xf32> to vector<16x6xf32>
    %237 = vector.extract_strided_slice %210 {offsets = [13, 0, 0], sizes = [1, 16, 6], strides = [1, 1, 1]} : vector<16x16x6xf32> to vector<1x16x6xf32>
    %238 = vector.shape_cast %237 : vector<1x16x6xf32> to vector<16x6xf32>
    %239 = vector.extract_strided_slice %210 {offsets = [14, 0, 0], sizes = [1, 16, 6], strides = [1, 1, 1]} : vector<16x16x6xf32> to vector<1x16x6xf32>
    %240 = vector.shape_cast %239 : vector<1x16x6xf32> to vector<16x6xf32>
    %241 = vector.extract_strided_slice %210 {offsets = [15, 0, 0], sizes = [1, 16, 6], strides = [1, 1, 1]} : vector<16x16x6xf32> to vector<1x16x6xf32>
    %242 = vector.shape_cast %241 : vector<1x16x6xf32> to vector<16x6xf32>
    %243 = tpu.concatenate %212, %214, %216, %218, %220, %222, %224, %226, %228, %230, %232, %234, %236, %238, %240, %242 in 1 : vector<16x6xf32>, vector<16x6xf32>, vector<16x6xf32>, vector<16x6xf32>, vector<16x6xf32>, vector<16x6xf32>, vector<16x6xf32>, vector<16x6xf32>, vector<16x6xf32>, vector<16x6xf32>, vector<16x6xf32>, vector<16x6xf32>, vector<16x6xf32>, vector<16x6xf32>, vector<16x6xf32>, vector<16x6xf32> -> vector<16x96xf32>
    %c0_35 = arith.constant 0 : index
    %c0_36 = arith.constant 0 : index
    %244 = vector.load %arg13[%c0_35, %c0_36] : memref<96x192xf32, #tpu.memory_space<vmem>>, vector<96x192xf32>
    %cst_37 = arith.constant dense<0.000000e+00> : vector<16x192xf32>
    %245 = tpu.matmul %243, %244, %cst_37 {dimension_numbers = #tpu.dot_dimension_numbers<[1], [0], [0], [1], [0, 0, 1, 1], [], []>} : vector<16x96xf32>, vector<96x192xf32>, vector<16x192xf32> -> vector<16x192xf32>
    %c0_38 = arith.constant 0 : index
    %c0_39 = arith.constant 0 : index
    %246 = vector.load %arg14[%c0_38, %c0_39] : memref<1x192xf32, #tpu.memory_space<vmem>>, vector<1x192xf32>
    %247 = vector.broadcast %246 : vector<1x192xf32> to vector<16x192xf32>
    %248 = arith.addf %245, %247 : vector<16x192xf32>
    %249 = arith.addf %1, %248 : vector<16x192xf32>
    %cst_40 = arith.constant dense<0.000000e+00> : vector<16xf32>
    %250 = vector.multi_reduction <add>, %249, %cst_40 [1] : vector<16x192xf32> to vector<16xf32>
    %251 = vector.shape_cast %250 : vector<16xf32> to vector<16x1xf32>
    %cst_41 = arith.constant 1.920000e+02 : f32
    %252 = vector.broadcast %cst_41 : f32 to vector<16x1xf32>
    %253 = arith.divf %251, %252 : vector<16x1xf32>
    %254 = vector.broadcast %253 : vector<16x1xf32> to vector<16x192xf32>
    %255 = arith.subf %249, %254 : vector<16x192xf32>
    %256 = arith.mulf %255, %255 : vector<16x192xf32>
    %cst_42 = arith.constant dense<0.000000e+00> : vector<16xf32>
    %257 = vector.multi_reduction <add>, %256, %cst_42 [1] : vector<16x192xf32> to vector<16xf32>
    %258 = vector.shape_cast %257 : vector<16xf32> to vector<16x1xf32>
    %cst_43 = arith.constant 1.920000e+02 : f32
    %259 = vector.broadcast %cst_43 : f32 to vector<16x1xf32>
    %260 = arith.divf %258, %259 : vector<16x1xf32>
    %261 = vector.broadcast %253 : vector<16x1xf32> to vector<16x192xf32>
    %262 = arith.subf %249, %261 : vector<16x192xf32>
    %cst_44 = arith.constant 9.99999971E-10 : f32
    %263 = vector.broadcast %cst_44 : f32 to vector<16x1xf32>
    %264 = arith.addf %260, %263 : vector<16x1xf32>
    %265 = math.rsqrt %264 : vector<16x1xf32>
    %266 = vector.broadcast %265 : vector<16x1xf32> to vector<16x192xf32>
    %267 = arith.mulf %262, %266 : vector<16x192xf32>
    %c0_45 = arith.constant 0 : index
    %c0_46 = arith.constant 0 : index
    %268 = vector.load %arg15[%c0_45, %c0_46] : memref<1x192xf32, #tpu.memory_space<vmem>>, vector<1x192xf32>
    %269 = vector.broadcast %268 : vector<1x192xf32> to vector<16x192xf32>
    %270 = arith.mulf %267, %269 : vector<16x192xf32>
    %c0_47 = arith.constant 0 : index
    %c0_48 = arith.constant 0 : index
    %271 = vector.load %arg16[%c0_47, %c0_48] : memref<1x192xf32, #tpu.memory_space<vmem>>, vector<1x192xf32>
    %272 = vector.broadcast %271 : vector<1x192xf32> to vector<16x192xf32>
    %273 = arith.addf %270, %272 : vector<16x192xf32>
    %274 = vector.shape_cast %273 : vector<16x192xf32> to vector<1x16x192xf32>
    %c0_49 = arith.constant 0 : index
    %c0_50 = arith.constant 0 : index
    %c0_51 = arith.constant 0 : index
    %275 = vector.load %arg17[%c0_49, %c0_50, %c0_51] : memref<1x16x192xf32, #tpu.memory_space<vmem>>, vector<1x16x192xf32>
    tpu.vector_store %arg17[%c0_49, %c0_50, %c0_51], %274 {strides = array<i32>} : memref<1x16x192xf32, #tpu.memory_space<vmem>>, vector<1x16x192xf32>,
    return
  }
  func.func @transform_0(%arg0: i32) -> (i32, i32, i32) {
    %c0_i32 = arith.constant 0 : i32
    %c0_i32_0 = arith.constant 0 : i32
    %c0_i32_1 = arith.constant 0 : i32
    return %arg0, %c0_i32, %c0_i32_0 : i32, i32, i32
  }
  func.func @transform_1(%arg0: i32) -> (i32, i32, i32) {
    %c0_i32 = arith.constant 0 : i32
    %c0_i32_0 = arith.constant 0 : i32
    %c0_i32_1 = arith.constant 0 : i32
    return %arg0, %c0_i32, %c0_i32_0 : i32, i32, i32
  }
  func.func @transform_2(%arg0: i32) -> (i32, i32) {
    %c0_i32 = arith.constant 0 : i32
    %c0_i32_0 = arith.constant 0 : i32
    %c0_i32_1 = arith.constant 0 : i32
    return %c0_i32, %c0_i32_0 : i32, i32
  }
  func.func @transform_3(%arg0: i32) -> (i32, i32) {
    %c0_i32 = arith.constant 0 : i32
    %c0_i32_0 = arith.constant 0 : i32
    %c0_i32_1 = arith.constant 0 : i32
    return %c0_i32, %c0_i32_0 : i32, i32
  }
  func.func @transform_4(%arg0: i32) -> (i32, i32) {
    %c0_i32 = arith.constant 0 : i32
    %c0_i32_0 = arith.constant 0 : i32
    %c0_i32_1 = arith.constant 0 : i32
    return %c0_i32, %c0_i32_0 : i32, i32
  }
  func.func @transform_5(%arg0: i32) -> (i32, i32) {
    %c0_i32 = arith.constant 0 : i32
    %c0_i32_0 = arith.constant 0 : i32
    %c0_i32_1 = arith.constant 0 : i32
    return %c0_i32, %c0_i32_0 : i32, i32
  }
  func.func @transform_6(%arg0: i32) -> (i32, i32) {
    %c0_i32 = arith.constant 0 : i32
    %c0_i32_0 = arith.constant 0 : i32
    %c0_i32_1 = arith.constant 0 : i32
    return %c0_i32, %c0_i32_0 : i32, i32
  }
  func.func @transform_7(%arg0: i32) -> (i32, i32) {
    %c0_i32 = arith.constant 0 : i32
    %c0_i32_0 = arith.constant 0 : i32
    %c0_i32_1 = arith.constant 0 : i32
    return %c0_i32, %c0_i32_0 : i32, i32
  }
  func.func @transform_8(%arg0: i32) -> (i32, i32) {
    %c0_i32 = arith.constant 0 : i32
    %c0_i32_0 = arith.constant 0 : i32
    %c0_i32_1 = arith.constant 0 : i32
    return %c0_i32, %c0_i32_0 : i32, i32
  }
  func.func @transform_9(%arg0: i32) -> (i32, i32) {
    %c0_i32 = arith.constant 0 : i32
    %c0_i32_0 = arith.constant 0 : i32
    %c0_i32_1 = arith.constant 0 : i32
    return %c0_i32, %c0_i32_0 : i32, i32
  }
  func.func @transform_10(%arg0: i32) -> (i32, i32) {
    %c0_i32 = arith.constant 0 : i32
    %c0_i32_0 = arith.constant 0 : i32
    %c0_i32_1 = arith.constant 0 : i32
    return %c0_i32, %c0_i32_0 : i32, i32
  }
  func.func @transform_11(%arg0: i32) -> (i32, i32, i32) {
    %c0_i32 = arith.constant 0 : i32
    %c0_i32_0 = arith.constant 0 : i32
    %c0_i32_1 = arith.constant 0 : i32
    %c0_i32_2 = arith.constant 0 : i32
    return %c0_i32, %c0_i32_0, %c0_i32_1 : i32, i32, i32
  }
  func.func @transform_12(%arg0: i32) -> (i32, i32) {
    %c0_i32 = arith.constant 0 : i32
    %c0_i32_0 = arith.constant 0 : i32
    %c0_i32_1 = arith.constant 0 : i32
    return %c0_i32, %c0_i32_0 : i32, i32
  }
  func.func @transform_13(%arg0: i32) -> (i32, i32) {
    %c0_i32 = arith.constant 0 : i32
    %c0_i32_0 = arith.constant 0 : i32
    %c0_i32_1 = arith.constant 0 : i32
    return %c0_i32, %c0_i32_0 : i32, i32
  }
  func.func @transform_14(%arg0: i32) -> (i32, i32) {
    %c0_i32 = arith.constant 0 : i32
    %c0_i32_0 = arith.constant 0 : i32
    %c0_i32_1 = arith.constant 0 : i32
    return %c0_i32, %c0_i32_0 : i32, i32
  }
  func.func @transform_15(%arg0: i32) -> (i32, i32) {
    %c0_i32 = arith.constant 0 : i32
    %c0_i32_0 = arith.constant 0 : i32
    %c0_i32_1 = arith.constant 0 : i32
    return %c0_i32, %c0_i32_0 : i32, i32
  }
  func.func @transform_16(%arg0: i32) -> (i32, i32, i32) {
    %c0_i32 = arith.constant 0 : i32
    %c0_i32_0 = arith.constant 0 : i32
    %c0_i32_1 = arith.constant 0 : i32
    return %arg0, %c0_i32, %c0_i32_0 : i32, i32, i32
  }
}

</mosaic_0001>

<llo_original>
// kernel: funnel_attention_pallas.1
$region0: #{funnel_attention_pallas.1}
  #allocation0 [shape = 'u32[]', space=smem, size = 0x4, offset = 0x4, fixed_abs, tag = 'smem constant byte address 0x4 - core index']
  #allocation1 [shape = 'u32[144,128]{1,0:T(1,128)}', space=vmem, size = 0x12000, scoped, tag = 'internal scratch']
  %s0 = inlined_call_operand.vmem [shape: f32[2,16,192], index: 0, kind: input, shape index: {}]
  %s1 = inlined_call_operand.vmem [shape: f32[2,1,16], index: 1, kind: input, shape index: {}]
  %s2 = inlined_call_operand.vmem [shape: f32[192,96], index: 2, kind: input, shape index: {}]
  %s3 = inlined_call_operand.vmem [shape: f32[192,96], index: 3, kind: input, shape index: {}]
  %s4 = inlined_call_operand.vmem [shape: f32[1,96], index: 4, kind: input, shape index: {}]
  %s5 = inlined_call_operand.vmem [shape: f32[192,96], index: 5, kind: input, shape index: {}]
  %s6 = inlined_call_operand.vmem [shape: f32[1,96], index: 6, kind: input, shape index: {}]
  %s7 = inlined_call_operand.vmem [shape: f32[1,96], index: 7, kind: input, shape index: {}]
  %s8 = inlined_call_operand.vmem [shape: f32[1,96], index: 8, kind: input, shape index: {}]
  %s9 = inlined_call_operand.vmem [shape: f32[32,192], index: 9, kind: input, shape index: {}]
  %s10 = inlined_call_operand.vmem [shape: f32[192,96], index: 10, kind: input, shape index: {}]
  %s11 = inlined_call_operand.vmem [shape: f32[16,32,16], index: 11, kind: input, shape index: {}]
  %s12 = inlined_call_operand.vmem [shape: f32[96,192], index: 12, kind: input, shape index: {}]
  %s13 = inlined_call_operand.vmem [shape: f32[1,192], index: 13, kind: input, shape index: {}]
  %s14 = inlined_call_operand.vmem [shape: f32[1,192], index: 14, kind: input, shape index: {}]
  %s15 = inlined_call_operand.vmem [shape: f32[1,192], index: 15, kind: input, shape index: {}]
  %s16 = inlined_call_operand.hbm [shape: f32[2,16,192], index: 16, kind: output, shape index: {}]
  %s17 = sld [smem:[#allocation0]]
  $region97: #{funnel_attention_pallas.1} parent=0
    _
  %s19 = ssub.s32 1, %s17
  %s20 = scalar_select 0, %s19, %s17
  $region1: #{funnel_attention_pallas.1} parent=0
    #allocation2 [shape = 'u8[32768]{0}', space=vmem, size = 0x8000, scoped, tag = 'output window, operand 0']
    #allocation3 [shape = 's32[2]{0}', space=sflag, size = 0x8, scoped, tag = 'scoped memory for funnel_attention_pallas.1']
    %21 = vsyncpa [#allocation3], 0
    %s22 = scalar_lea.sflag [#allocation3], 1
    %23 = vsyncpa %s22, 0
    loop: start=0, step=1, limit=4
    $region2: #{funnel_attention_pallas.1} parent=1 // loop_pre_header
      _
    $region3: #{funnel_attention_pallas.1} parent=1 // loop_header
      %s25 = sphi 0, %s29
      %p26 = scmp.ge.s32.totalorder %s25, 4
      %s35 = sphi 0, %s37
      %s38 = sphi 0, %s35
      %s39 = sphi 0, %s38
      %s55 = sphi 0, %s39
      %s61 = sphi 0, %s63
      %s64 = sphi 0, %s61
      %s65 = sphi 0, %s64
      %s81 = sphi 0, %s65
      %s85 = sphi 0, %s85
      %s87 = sphi 0, %s85
      %s88 = sphi 0, %s87
      %s102 = sphi 0, %s88
      %s106 = sphi 0, %s106
      %s108 = sphi 0, %s106
      %s109 = sphi 0, %s108
      %s123 = sphi 0, %s109
      %s127 = sphi 0, %s127
      %s129 = sphi 0, %s127
      %s130 = sphi 0, %s129
      %s144 = sphi 0, %s130
      %s148 = sphi 0, %s148
      %s150 = sphi 0, %s148
      %s151 = sphi 0, %s150
      %s165 = sphi 0, %s151
      %s169 = sphi 0, %s169
      %s171 = sphi 0, %s169
      %s172 = sphi 0, %s171
      %s186 = sphi 0, %s172
      %s190 = sphi 0, %s190
      %s192 = sphi 0, %s190
      %s193 = sphi 0, %s192
      %s207 = sphi 0, %s193
      %s211 = sphi 0, %s211
      %s213 = sphi 0, %s211
      %s214 = sphi 0, %s213
      %s228 = sphi 0, %s214
      %s232 = sphi 0, %s232
      %s234 = sphi 0, %s232
      %s235 = sphi 0, %s234
      %s249 = sphi 0, %s235
      %s253 = sphi 0, %s253
      %s255 = sphi 0, %s253
      %s256 = sphi 0, %s255
      %s270 = sphi 0, %s256
      %s274 = sphi 0, %s274
      %s276 = sphi 0, %s274
      %s277 = sphi 0, %s276
      %s291 = sphi 0, %s277
      %s295 = sphi 0, %s295
      %s297 = sphi 0, %s295
      %s298 = sphi 0, %s297
      %s312 = sphi 0, %s298
      %s316 = sphi 0, %s316
      %s318 = sphi 0, %s316
      %s319 = sphi 0, %s318
      %s333 = sphi 0, %s319
      %s337 = sphi 0, %s337
      %s339 = sphi 0, %s337
      %s340 = sphi 0, %s339
      %s354 = sphi 0, %s340
      %s358 = sphi 0, %s358
      %s360 = sphi 0, %s358
      %s361 = sphi 0, %s360
      %s375 = sphi 0, %s361
      %s381 = sphi 0, %s383
      %s384 = sphi 0, %s381
      %s385 = sphi 0, %s384
      %s401 = sphi 0, %s385
    $region4: #{funnel_attention_pallas.1} parent=1 // loop_header_branch
      %28 = sbr.rel (%p26) target = $region8
    $region5: #{funnel_attention_pallas.1} parent=1 // loop_body
      %s30 = ssub.s32 %s25, 1
      %s31 = ssub.s32 %s25, 2
      %s32 = sadd.s32 %s25, 1
      %s33 = ssub.s32 %s25, %s32
      %p34 = scmp.eq.s32.totalorder %s33, 0
      %s36 = sadd.s32 %s35, 1
      %s37 = scalar_select %p34, %s35, %s36
      %p40 = pneg %p34
      %p41 = scmp.eq.s32.totalorder %s25, 1
      %p42 = por %p40, %p41
      %p43 = scmp.ne.s32.totalorder %s35, %s38
      %p44 = scmp.eq.s32.totalorder %s25, 0
      %p45 = por %p43, %p44
      %p46 = scmp.ne.s32.totalorder %s35, %s38
      %p47 = scmp.eq.s32.totalorder %s30, 1
      %p48 = por %p46, %p47
      %p49 = scmp.ne.s32.totalorder %s38, %s39
      %p50 = scmp.eq.s32.totalorder %s30, 0
      %p51 = por %p49, %p50
      %p52 = scmp.ne.s32.totalorder %s38, %s39
      %p53 = scmp.eq.s32.totalorder %s31, 1
      %p54 = por %p52, %p53
      %p56 = scmp.ne.s32.totalorder %s39, %s55
      %p57 = scmp.eq.s32.totalorder %s31, 0
      %p58 = por %p56, %p57
      %s59 = ssub.s32 %s25, %s32
      %p60 = scmp.eq.s32.totalorder %s59, 0
      %s62 = sadd.s32 %s61, 1
      %s63 = scalar_select %p60, %s61, %s62
      %p66 = pneg %p60
      %p67 = scmp.eq.s32.totalorder %s25, 1
      %p68 = por %p66, %p67
      %p69 = scmp.ne.s32.totalorder %s61, %s64
      %p70 = scmp.eq.s32.totalorder %s25, 0
      %p71 = por %p69, %p70
      %p72 = scmp.ne.s32.totalorder %s61, %s64
      %p73 = scmp.eq.s32.totalorder %s30, 1
      %p74 = por %p72, %p73
      %p75 = scmp.ne.s32.totalorder %s64, %s65
      %p76 = scmp.eq.s32.totalorder %s30, 0
      %p77 = por %p75, %p76
      %p78 = scmp.ne.s32.totalorder %s64, %s65
      %p79 = scmp.eq.s32.totalorder %s31, 1
      %p80 = por %p78, %p79
      %p82 = scmp.ne.s32.totalorder %s65, %s81
      %p83 = scmp.eq.s32.totalorder %s31, 0
      %p84 = por %p82, %p83
      %s86 = sadd.s32 %s85, 1
      %p89 = scmp.eq.s32.totalorder %s25, 1
      %p90 = scmp.ne.s32.totalorder %s85, %s87
      %p91 = scmp.eq.s32.totalorder %s25, 0
      %p92 = por %p90, %p91
      %p93 = scmp.ne.s32.totalorder %s85, %s87
      %p94 = scmp.eq.s32.totalorder %s30, 1
      %p95 = por %p93, %p94
      %p96 = scmp.ne.s32.totalorder %s87, %s88
      %p97 = scmp.eq.s32.totalorder %s30, 0
      %p98 = por %p96, %p97
      %p99 = scmp.ne.s32.totalorder %s87, %s88
      %p100 = scmp.eq.s32.totalorder %s31, 1
      %p101 = por %p99, %p100
      %p103 = scmp.ne.s32.totalorder %s88, %s102
      %p104 = scmp.eq.s32.totalorder %s31, 0
      %p105 = por %p103, %p104
      %s107 = sadd.s32 %s106, 1
      %p110 = scmp.eq.s32.totalorder %s25, 1
      %p111 = scmp.ne.s32.totalorder %s106, %s108
      %p112 = scmp.eq.s32.totalorder %s25, 0
      %p113 = por %p111, %p112
      %p114 = scmp.ne.s32.totalorder %s106, %s108
      %p115 = scmp.eq.s32.totalorder %s30, 1
      %p116 = por %p114, %p115
      %p117 = scmp.ne.s32.totalorder %s108, %s109
      %p118 = scmp.eq.s32.totalorder %s30, 0
      %p119 = por %p117, %p118
      %p120 = scmp.ne.s32.totalorder %s108, %s109
      %p121 = scmp.eq.s32.totalorder %s31, 1
      %p122 = por %p120, %p121
      %p124 = scmp.ne.s32.totalorder %s109, %s123
      %p125 = scmp.eq.s32.totalorder %s31, 0
      %p126 = por %p124, %p125
      %s128 = sadd.s32 %s127, 1
      %p131 = scmp.eq.s32.totalorder %s25, 1
      %p132 = scmp.ne.s32.totalorder %s127, %s129
      %p133 = scmp.eq.s32.totalorder %s25, 0
      %p134 = por %p132, %p133
      %p135 = scmp.ne.s32.totalorder %s127, %s129
      %p136 = scmp.eq.s32.totalorder %s30, 1
      %p137 = por %p135, %p136
      %p138 = scmp.ne.s32.totalorder %s129, %s130
      %p139 = scmp.eq.s32.totalorder %s30, 0
      %p140 = por %p138, %p139
      %p141 = scmp.ne.s32.totalorder %s129, %s130
      %p142 = scmp.eq.s32.totalorder %s31, 1
      %p143 = por %p141, %p142
      %p145 = scmp.ne.s32.totalorder %s130, %s144
      %p146 = scmp.eq.s32.totalorder %s31, 0
      %p147 = por %p145, %p146
      %s149 = sadd.s32 %s148, 1
      %p152 = scmp.eq.s32.totalorder %s25, 1
      %p153 = scmp.ne.s32.totalorder %s148, %s150
      %p154 = scmp.eq.s32.totalorder %s25, 0
      %p155 = por %p153, %p154
      %p156 = scmp.ne.s32.totalorder %s148, %s150
      %p157 = scmp.eq.s32.totalorder %s30, 1
      %p158 = por %p156, %p157
      %p159 = scmp.ne.s32.totalorder %s150, %s151
      %p160 = scmp.eq.s32.totalorder %s30, 0
      %p161 = por %p159, %p160
      %p162 = scmp.ne.s32.totalorder %s150, %s151
      %p163 = scmp.eq.s32.totalorder %s31, 1
      %p164 = por %p162, %p163
      %p166 = scmp.ne.s32.totalorder %s151, %s165
      %p167 = scmp.eq.s32.totalorder %s31, 0
      %p168 = por %p166, %p167
      %s170 = sadd.s32 %s169, 1
      %p173 = scmp.eq.s32.totalorder %s25, 1
      %p174 = scmp.ne.s32.totalorder %s169, %s171
      %p175 = scmp.eq.s32.totalorder %s25, 0
      %p176 = por %p174, %p175
      %p177 = scmp.ne.s32.totalorder %s169, %s171
      %p178 = scmp.eq.s32.totalorder %s30, 1
      %p179 = por %p177, %p178
      %p180 = scmp.ne.s32.totalorder %s171, %s172
      %p181 = scmp.eq.s32.totalorder %s30, 0
      %p182 = por %p180, %p181
      %p183 = scmp.ne.s32.totalorder %s171, %s172
      %p184 = scmp.eq.s32.totalorder %s31, 1
      %p185 = por %p183, %p184
      %p187 = scmp.ne.s32.totalorder %s172, %s186
      %p188 = scmp.eq.s32.totalorder %s31, 0
      %p189 = por %p187, %p188
      %s191 = sadd.s32 %s190, 1
      %p194 = scmp.eq.s32.totalorder %s25, 1
      %p195 = scmp.ne.s32.totalorder %s190, %s192
      %p196 = scmp.eq.s32.totalorder %s25, 0
      %p197 = por %p195, %p196
      %p198 = scmp.ne.s32.totalorder %s190, %s192
      %p199 = scmp.eq.s32.totalorder %s30, 1
      %p200 = por %p198, %p199
      %p201 = scmp.ne.s32.totalorder %s192, %s193
      %p202 = scmp.eq.s32.totalorder %s30, 0
      %p203 = por %p201, %p202
      %p204 = scmp.ne.s32.totalorder %s192, %s193
      %p205 = scmp.eq.s32.totalorder %s31, 1
      %p206 = por %p204, %p205
      %p208 = scmp.ne.s32.totalorder %s193, %s207
      %p209 = scmp.eq.s32.totalorder %s31, 0
      %p210 = por %p208, %p209
      %s212 = sadd.s32 %s211, 1
      %p215 = scmp.eq.s32.totalorder %s25, 1
      %p216 = scmp.ne.s32.totalorder %s211, %s213
      %p217 = scmp.eq.s32.totalorder %s25, 0
      %p218 = por %p216, %p217
      %p219 = scmp.ne.s32.totalorder %s211, %s213
      %p220 = scmp.eq.s32.totalorder %s30, 1
      %p221 = por %p219, %p220
      %p222 = scmp.ne.s32.totalorder %s213, %s214
      %p223 = scmp.eq.s32.totalorder %s30, 0
      %p224 = por %p222, %p223
      %p225 = scmp.ne.s32.totalorder %s213, %s214
      %p226 = scmp.eq.s32.totalorder %s31, 1
      %p227 = por %p225, %p226
      %p229 = scmp.ne.s32.totalorder %s214, %s228
      %p230 = scmp.eq.s32.totalorder %s31, 0
      %p231 = por %p229, %p230
      %s233 = sadd.s32 %s232, 1
      %p236 = scmp.eq.s32.totalorder %s25, 1
      %p237 = scmp.ne.s32.totalorder %s232, %s234
      %p238 = scmp.eq.s32.totalorder %s25, 0
      %p239 = por %p237, %p238
      %p240 = scmp.ne.s32.totalorder %s232, %s234
      %p241 = scmp.eq.s32.totalorder %s30, 1
      %p242 = por %p240, %p241
      %p243 = scmp.ne.s32.totalorder %s234, %s235
      %p244 = scmp.eq.s32.totalorder %s30, 0
      %p245 = por %p243, %p244
      %p246 = scmp.ne.s32.totalorder %s234, %s235
      %p247 = scmp.eq.s32.totalorder %s31, 1
      %p248 = por %p246, %p247
      %p250 = scmp.ne.s32.totalorder %s235, %s249
      %p251 = scmp.eq.s32.totalorder %s31, 0
      %p252 = por %p250, %p251
      %s254 = sadd.s32 %s253, 1
      %p257 = scmp.eq.s32.totalorder %s25, 1
      %p258 = scmp.ne.s32.totalorder %s253, %s255
      %p259 = scmp.eq.s32.totalorder %s25, 0
      %p260 = por %p258, %p259
      %p261 = scmp.ne.s32.totalorder %s253, %s255
      %p262 = scmp.eq.s32.totalorder %s30, 1
      %p263 = por %p261, %p262
      %p264 = scmp.ne.s32.totalorder %s255, %s256
      %p265 = scmp.eq.s32.totalorder %s30, 0
      %p266 = por %p264, %p265
      %p267 = scmp.ne.s32.totalorder %s255, %s256
      %p268 = scmp.eq.s32.totalorder %s31, 1
      %p269 = por %p267, %p268
      %p271 = scmp.ne.s32.totalorder %s256, %s270
      %p272 = scmp.eq.s32.totalorder %s31, 0
      %p273 = por %p271, %p272
      %s275 = sadd.s32 %s274, 1
      %p278 = scmp.eq.s32.totalorder %s25, 1
      %p279 = scmp.ne.s32.totalorder %s274, %s276
      %p280 = scmp.eq.s32.totalorder %s25, 0
      %p281 = por %p279, %p280
      %p282 = scmp.ne.s32.totalorder %s274, %s276
      %p283 = scmp.eq.s32.totalorder %s30, 1
      %p284 = por %p282, %p283
      %p285 = scmp.ne.s32.totalorder %s276, %s277
      %p286 = scmp.eq.s32.totalorder %s30, 0
      %p287 = por %p285, %p286
      %p288 = scmp.ne.s32.totalorder %s276, %s277
      %p289 = scmp.eq.s32.totalorder %s31, 1
      %p290 = por %p288, %p289
      %p292 = scmp.ne.s32.totalorder %s277, %s291
      %p293 = scmp.eq.s32.totalorder %s31, 0
      %p294 = por %p292, %p293
      %s296 = sadd.s32 %s295, 1
      %p299 = scmp.eq.s32.totalorder %s25, 1
      %p300 = scmp.ne.s32.totalorder %s295, %s297
      %p301 = scmp.eq.s32.totalorder %s25, 0
      %p302 = por %p300, %p301
      %p303 = scmp.ne.s32.totalorder %s295, %s297
      %p304 = scmp.eq.s32.totalorder %s30, 1
      %p305 = por %p303, %p304
      %p306 = scmp.ne.s32.totalorder %s297, %s298
      %p307 = scmp.eq.s32.totalorder %s30, 0
      %p308 = por %p306, %p307
      %p309 = scmp.ne.s32.totalorder %s297, %s298
      %p310 = scmp.eq.s32.totalorder %s31, 1
      %p311 = por %p309, %p310
      %p313 = scmp.ne.s32.totalorder %s298, %s312
      %p314 = scmp.eq.s32.totalorder %s31, 0
      %p315 = por %p313, %p314
      %s317 = sadd.s32 %s316, 1
      %p320 = scmp.eq.s32.totalorder %s25, 1
      %p321 = scmp.ne.s32.totalorder %s316, %s318
      %p322 = scmp.eq.s32.totalorder %s25, 0
      %p323 = por %p321, %p322
      %p324 = scmp.ne.s32.totalorder %s316, %s318
      %p325 = scmp.eq.s32.totalorder %s30, 1
      %p326 = por %p324, %p325
      %p327 = scmp.ne.s32.totalorder %s318, %s319
      %p328 = scmp.eq.s32.totalorder %s30, 0
      %p329 = por %p327, %p328
      %p330 = scmp.ne.s32.totalorder %s318, %s319
      %p331 = scmp.eq.s32.totalorder %s31, 1
      %p332 = por %p330, %p331
      %p334 = scmp.ne.s32.totalorder %s319, %s333
      %p335 = scmp.eq.s32.totalorder %s31, 0
      %p336 = por %p334, %p335
      %s338 = sadd.s32 %s337, 1
      %p341 = scmp.eq.s32.totalorder %s25, 1
      %p342 = scmp.ne.s32.totalorder %s337, %s339
      %p343 = scmp.eq.s32.totalorder %s25, 0
      %p344 = por %p342, %p343
      %p345 = scmp.ne.s32.totalorder %s337, %s339
      %p346 = scmp.eq.s32.totalorder %s30, 1
      %p347 = por %p345, %p346
      %p348 = scmp.ne.s32.totalorder %s339, %s340
      %p349 = scmp.eq.s32.totalorder %s30, 0
      %p350 = por %p348, %p349
      %p351 = scmp.ne.s32.totalorder %s339, %s340
      %p352 = scmp.eq.s32.totalorder %s31, 1
      %p353 = por %p351, %p352
      %p355 = scmp.ne.s32.totalorder %s340, %s354
      %p356 = scmp.eq.s32.totalorder %s31, 0
      %p357 = por %p355, %p356
      %s359 = sadd.s32 %s358, 1
      %p362 = scmp.eq.s32.totalorder %s25, 1
      %p363 = scmp.ne.s32.totalorder %s358, %s360
      %p364 = scmp.eq.s32.totalorder %s25, 0
      %p365 = por %p363, %p364
      %p366 = scmp.ne.s32.totalorder %s358, %s360
      %p367 = scmp.eq.s32.totalorder %s30, 1
      %p368 = por %p366, %p367
      %p369 = scmp.ne.s32.totalorder %s360, %s361
      %p370 = scmp.eq.s32.totalorder %s30, 0
      %p371 = por %p369, %p370
      %p372 = scmp.ne.s32.totalorder %s360, %s361
      %p373 = scmp.eq.s32.totalorder %s31, 1
      %p374 = por %p372, %p373
      %p376 = scmp.ne.s32.totalorder %s361, %s375
      %p377 = scmp.eq.s32.totalorder %s31, 0
      %p378 = por %p376, %p377
      %s379 = ssub.s32 %s25, %s32
      %p380 = scmp.eq.s32.totalorder %s379, 0
      %s382 = sadd.s32 %s381, 1
      %s383 = scalar_select %p380, %s381, %s382
      %p386 = pneg %p380
      %p387 = scmp.eq.s32.totalorder %s25, 1
      %p388 = por %p386, %p387
      %p389 = scmp.ne.s32.totalorder %s381, %s384
      %p390 = scmp.eq.s32.totalorder %s25, 0
      %p391 = por %p389, %p390
      %p392 = scmp.ne.s32.totalorder %s381, %s384
      %p393 = scmp.eq.s32.totalorder %s30, 1
      %p394 = por %p392, %p393
      %p395 = scmp.ne.s32.totalorder %s384, %s385
      %p396 = scmp.eq.s32.totalorder %s30, 0
      %p397 = por %p395, %p396
      %p398 = scmp.ne.s32.totalorder %s384, %s385
      %p399 = scmp.eq.s32.totalorder %s31, 1
      %p400 = por %p398, %p399
      %p402 = scmp.ne.s32.totalorder %s385, %s401
      %p403 = scmp.eq.s32.totalorder %s31, 0
      %p404 = por %p402, %p403
      %p405 = scmp.le.s32.totalorder 1, %s25
      %p406 = scmp.lt.s32.totalorder %s25, 3
      %p407 = pnand %p405, %p406
      %p408 = pneg %p407
      // Predicated region
      $region9: #{funnel_attention_pallas.1} parent=5 // pred_check
        _
      $region10: #{funnel_attention_pallas.1} parent=5 // pred_check_branch
        %410 = sbr.rel (%p407) target = $region12
      $region11: #{funnel_attention_pallas.1} parent=5 // pred_region
        %s411 = ssub.s32 %s25, 1
        // Predicated region
        $region13: #{funnel_attention_pallas.1} parent=11 // pred_check
          %p412 = pneg %p98
        $region14: #{funnel_attention_pallas.1} parent=11 // pred_check_branch
          %414 = sbr.rel (%p412) target = $region16
        $region15: #{funnel_attention_pallas.1} parent=11 // pred_region
          _
        $region16: #{funnel_attention_pallas.1} parent=11 // pred_fallthru
          _
        // Predicated region
        $region17: #{funnel_attention_pallas.1} parent=11 // pred_check
          %p415 = pneg %p119
        $region18: #{funnel_attention_pallas.1} parent=11 // pred_check_branch
          %417 = sbr.rel (%p415) target = $region20
        $region19: #{funnel_attention_pallas.1} parent=11 // pred_region
          _
        $region20: #{funnel_attention_pallas.1} parent=11 // pred_fallthru
          _
        // Predicated region
        $region21: #{funnel_attention_pallas.1} parent=11 // pred_check
          %p418 = pneg %p140
        $region22: #{funnel_attention_pallas.1} parent=11 // pred_check_branch
          %420 = sbr.rel (%p418) target = $region24
        $region23: #{funnel_attention_pallas.1} parent=11 // pred_region
          _
        $region24: #{funnel_attention_pallas.1} parent=11 // pred_fallthru
          _
        // Predicated region
        $region25: #{funnel_attention_pallas.1} parent=11 // pred_check
          %p421 = pneg %p161
        $region26: #{funnel_attention_pallas.1} parent=11 // pred_check_branch
          %423 = sbr.rel (%p421) target = $region28
        $region27: #{funnel_attention_pallas.1} parent=11 // pred_region
          _
        $region28: #{funnel_attention_pallas.1} parent=11 // pred_fallthru
          _
        // Predicated region
        $region29: #{funnel_attention_pallas.1} parent=11 // pred_check
          %p424 = pneg %p182
        $region30: #{funnel_attention_pallas.1} parent=11 // pred_check_branch
          %426 = sbr.rel (%p424) target = $region32
        $region31: #{funnel_attention_pallas.1} parent=11 // pred_region
          _
        $region32: #{funnel_attention_pallas.1} parent=11 // pred_fallthru
          _
        // Predicated region
        $region33: #{funnel_attention_pallas.1} parent=11 // pred_check
          %p427 = pneg %p203
        $region34: #{funnel_attention_pallas.1} parent=11 // pred_check_branch
          %429 = sbr.rel (%p427) target = $region36
        $region35: #{funnel_attention_pallas.1} parent=11 // pred_region
          _
        $region36: #{funnel_attention_pallas.1} parent=11 // pred_fallthru
          _
        // Predicated region
        $region37: #{funnel_attention_pallas.1} parent=11 // pred_check
          %p430 = pneg %p224
        $region38: #{funnel_attention_pallas.1} parent=11 // pred_check_branch
          %432 = sbr.rel (%p430) target = $region40
        $region39: #{funnel_attention_pallas.1} parent=11 // pred_region
          _
        $region40: #{funnel_attention_pallas.1} parent=11 // pred_fallthru
          _
        // Predicated region
        $region41: #{funnel_attention_pallas.1} parent=11 // pred_check
          %p433 = pneg %p245
        $region42: #{funnel_attention_pallas.1} parent=11 // pred_check_branch
          %435 = sbr.rel (%p433) target = $region44
        $region43: #{funnel_attention_pallas.1} parent=11 // pred_region
          _
        $region44: #{funnel_attention_pallas.1} parent=11 // pred_fallthru
          _
        // Predicated region
        $region45: #{funnel_attention_pallas.1} parent=11 // pred_check
          %p436 = pneg %p266
        $region46: #{funnel_attention_pallas.1} parent=11 // pred_check_branch
          %438 = sbr.rel (%p436) target = $region48
        $region47: #{funnel_attention_pallas.1} parent=11 // pred_region
          _
        $region48: #{funnel_attention_pallas.1} parent=11 // pred_fallthru
          _
        // Predicated region
        $region49: #{funnel_attention_pallas.1} parent=11 // pred_check
          %p439 = pneg %p287
        $region50: #{funnel_attention_pallas.1} parent=11 // pred_check_branch
          %441 = sbr.rel (%p439) target = $region52
        $region51: #{funnel_attention_pallas.1} parent=11 // pred_region
          _
        $region52: #{funnel_attention_pallas.1} parent=11 // pred_fallthru
          _
        // Predicated region
        $region53: #{funnel_attention_pallas.1} parent=11 // pred_check
          %p442 = pneg %p308
        $region54: #{funnel_attention_pallas.1} parent=11 // pred_check_branch
          %444 = sbr.rel (%p442) target = $region56
        $region55: #{funnel_attention_pallas.1} parent=11 // pred_region
          _
        $region56: #{funnel_attention_pallas.1} parent=11 // pred_fallthru
          _
        // Predicated region
        $region57: #{funnel_attention_pallas.1} parent=11 // pred_check
          %p445 = pneg %p329
        $region58: #{funnel_attention_pallas.1} parent=11 // pred_check_branch
          %447 = sbr.rel (%p445) target = $region60
        $region59: #{funnel_attention_pallas.1} parent=11 // pred_region
          _
        $region60: #{funnel_attention_pallas.1} parent=11 // pred_fallthru
          _
        // Predicated region
        $region61: #{funnel_attention_pallas.1} parent=11 // pred_check
          %p448 = pneg %p350
        $region62: #{funnel_attention_pallas.1} parent=11 // pred_check_branch
          %450 = sbr.rel (%p448) target = $region64
        $region63: #{funnel_attention_pallas.1} parent=11 // pred_region
          _
        $region64: #{funnel_attention_pallas.1} parent=11 // pred_fallthru
          _
        // Predicated region
        $region65: #{funnel_attention_pallas.1} parent=11 // pred_check
          %p451 = pneg %p371
        $region66: #{funnel_attention_pallas.1} parent=11 // pred_check_branch
          %453 = sbr.rel (%p451) target = $region68
        $region67: #{funnel_attention_pallas.1} parent=11 // pred_region
          _
        $region68: #{funnel_attention_pallas.1} parent=11 // pred_fallthru
          _
      $region12: #{funnel_attention_pallas.1} parent=5 // pred_fallthru
        _
      %p454 = scmp.lt.s32.totalorder %s25, 2
      // Predicated region
      $region69: #{funnel_attention_pallas.1} parent=5 // pred_check
        %p455 = pneg %p454
      $region70: #{funnel_attention_pallas.1} parent=5 // pred_check_branch
        %457 = sbr.rel (%p455) target = $region72
      $region71: #{funnel_attention_pallas.1} parent=5 // pred_region
        // Predicated region
        $region73: #{funnel_attention_pallas.1} parent=71 // pred_check
          %p458 = pneg %p45
        $region74: #{funnel_attention_pallas.1} parent=71 // pred_check_branch
          %460 = sbr.rel (%p458) target = $region76
        $region75: #{funnel_attention_pallas.1} parent=71 // pred_region
          %p461 = scmp.lt.s32.totalorder %s25, 1
          %s462 = scalar_select %p461, %s25, 1
          %s463 = smul.addr %s462, 4
          %s464 = smul.addr %s463, 8
          %s465 = scalar_lea.vmem %s0, %s464
        $region76: #{funnel_attention_pallas.1} parent=71 // pred_fallthru
          _
        // Predicated region
        $region77: #{funnel_attention_pallas.1} parent=71 // pred_check
          %p466 = pneg %p71
        $region78: #{funnel_attention_pallas.1} parent=71 // pred_check_branch
          %468 = sbr.rel (%p466) target = $region80
        $region79: #{funnel_attention_pallas.1} parent=71 // pred_region
          %p469 = scmp.lt.s32.totalorder %s25, 1
          %s470 = scalar_select %p469, %s25, 1
          %s471 = scalar_lea.vmem %s1, %s470
        $region80: #{funnel_attention_pallas.1} parent=71 // pred_fallthru
          _
      $region72: #{funnel_attention_pallas.1} parent=5 // pred_fallthru
        _
      %p472 = scmp.le.s32.totalorder 1, %s25
      %p473 = scmp.lt.s32.totalorder %s25, 3
      %p474 = pnand %p472, %p473
      %p475 = pneg %p474
      // Predicated region
      $region81: #{funnel_attention_pallas.1} parent=5 // pred_check
        _
      $region82: #{funnel_attention_pallas.1} parent=5 // pred_check_branch
        %477 = sbr.rel (%p474) target = $region84
      $region83: #{funnel_attention_pallas.1} parent=5 // pred_region
        %s478 = ssub.s32 %s25, 1
        %p479 = scmp.lt.s32.totalorder %s30, 1
        %s480 = scalar_select %p479, %s30, 1
        %s481 = smul.addr %s480, 4
        %s482 = smul.addr %s481, 8
        %s483 = scalar_lea.vmem %s0, %s482
        %p484 = pneg %p51
        %p485 = pneg %p48
        %p486 = scmp.lt.s32.totalorder %s30, 1
        %s487 = scalar_select %p486, %s30, 1
        %s488 = scalar_lea.vmem %s1, %s487
        %p489 = pneg %p77
        %p490 = pneg %p74
        %p491 = pneg %p98
        %p492 = pneg %p95
        %p493 = pneg %p119
        %p494 = pneg %p116
        %p495 = pneg %p140
        %p496 = pneg %p137
        %p497 = pneg %p161
        %p498 = pneg %p158
        %p499 = pneg %p182
        %p500 = pneg %p179
        %p501 = pneg %p203
        %p502 = pneg %p200
        %p503 = pneg %p224
        %p504 = pneg %p221
        %p505 = pneg %p245
        %p506 = pneg %p242
        %p507 = pneg %p266
        %p508 = pneg %p263
        %p509 = pneg %p287
        %p510 = pneg %p284
        %p511 = pneg %p308
        %p512 = pneg %p305
        %p513 = pneg %p329
        %p514 = pneg %p326
        %p515 = pneg %p350
        %p516 = pneg %p347
        %p517 = pneg %p371
        %p518 = pneg %p368
        %p519 = pneg %p397
        %p520 = pneg %p394
        %s521 = sand.u32 %s384, 1
        %s522 = scalar_lea.sflag [#allocation3], %s521
        %s523 = sand.u32 %s384, 1
        %s524 = smul.addr %s523, 32
        %s525 = scalar_lea.vmem [#allocation2], %s524
        %p526 = scmp.lt.s32.totalorder %s30, 1
        %s527 = scalar_select %p526, %s30, 1
        %s528 = smul.addr %s527, 4
        %s529 = smul.addr %s528, 8
        %s530 = scalar_lea.vmem %s0, %s529
        %p531 = scmp.lt.s32.totalorder %s30, 1
        %s532 = scalar_select %p531, %s30, 1
        %s533 = scalar_lea.vmem %s1, %s532
        %v534 = vld [vmem:[%s530] sm:$0xff]
        %v535 = vld [vmem:[%s530 + $0x8] sm:$0xff]
        %v536 = vld [vmem:[%s530 + $0x10] sm:$0xff]
        %v537 = vld [vmem:[%s530 + $0x18] sm:$0xff]
        %v538 = vld [vmem:[%s2] sm:$0xff]
        %v539 = vld [vmem:[%s2 + $0x8] sm:$0xff]
        %v540 = vld [vmem:[%s2 + $0x10] sm:$0xff]
        %v541 = vld [vmem:[%s2 + $0x18] sm:$0xff]
        %v542 = vld [vmem:[%s2 + $0x20] sm:$0xff]
        %v543 = vld [vmem:[%s2 + $0x28] sm:$0xff]
        %v544 = vld [vmem:[%s2 + $0x30] sm:$0xff]
        %v545 = vld [vmem:[%s2 + $0x38] sm:$0xff]
        %v546 = vld [vmem:[%s2 + $0x40] sm:$0xff]
        %v547 = vld [vmem:[%s2 + $0x48] sm:$0xff]
        %v548 = vld [vmem:[%s2 + $0x50] sm:$0xff]
        %v549 = vld [vmem:[%s2 + $0x58] sm:$0xff]
        %v550 = vld [vmem:[%s2 + $0x60] sm:$0xff]
        %v551 = vld [vmem:[%s2 + $0x68] sm:$0xff]
        %v552 = vld [vmem:[%s2 + $0x70] sm:$0xff]
        %v553 = vld [vmem:[%s2 + $0x78] sm:$0xff]
        %v554 = vld [vmem:[%s2 + $0x80] sm:$0xff]
        %v555 = vld [vmem:[%s2 + $0x88] sm:$0xff]
        %v556 = vld [vmem:[%s2 + $0x90] sm:$0xff]
        %v557 = vld [vmem:[%s2 + $0x98] sm:$0xff]
        %v558 = vld [vmem:[%s2 + $0xa0] sm:$0xff]
        %v559 = vld [vmem:[%s2 + $0xa8] sm:$0xff]
        %v560 = vld [vmem:[%s2 + $0xb0] sm:$0xff]
        %v561 = vld [vmem:[%s2 + $0xb8] sm:$0xff]
        %vm562 = vcmask 523264
        %v564 = vsel %vm562, %v535, 0
        %v567 = vsel %vm562, %v537, 0
        %569 = vmatprep.subr.mxu0 0.0
        %570 = vmatpush1.msra.mxu0 %v553
        %571 = vmatprep.subr.mxu0 0.0
        %572 = vmatpush1.msra.mxu0 %v552
        %573 = vmatprep.subr.mxu0 0.0
        %574 = vmatpush1.msra.mxu0 %v551
        %575 = vmatprep.subr.mxu0 0.0
        %576 = vmatpush1.msra.mxu0 %v550
        %577 = vmatprep.subr.mxu0 0.0
        %578 = vmatpush1.msra.mxu0 %v549
        %579 = vmatprep.subr.mxu0 0.0
        %580 = vmatpush1.msra.mxu0 %v548
        %581 = vmatprep.subr.mxu0 0.0
        %582 = vmatpush1.msra.mxu0 %v547
        %583 = vmatprep.subr.mxu0 0.0
        %584 = vmatpush1.msra.mxu0 %v546
        %585 = vmatprep.subr.mxu0 0.0
        %586 = vmatpush1.msra.mxu0 %v545
        %587 = vmatprep.subr.mxu0 0.0
        %588 = vmatpush1.msra.mxu0 %v544
        %589 = vmatprep.subr.mxu0 0.0
        %590 = vmatpush1.msra.mxu0 %v543
        %591 = vmatprep.subr.mxu0 0.0
        %592 = vmatpush1.msra.mxu0 %v542
        %593 = vmatprep.subr.mxu0 0.0
        %594 = vmatpush1.msra.mxu0 %v541
        %595 = vmatprep.subr.mxu0 0.0
        %596 = vmatpush1.msra.mxu0 %v540
        %597 = vmatprep.subr.mxu0 0.0
        %598 = vmatpush1.msra.mxu0 %v539
        %599 = vmatprep.subr.mxu0 0.0
        %600 = vmatpush1.msra.mxu0 %v538
        %601 = vmatprep.subr.mxu0 0.0
        %602 = vmatpush2.msra.mxu0 0.0
        %603 = vmatprep.subr.mxu0 0.0
        %604 = vmatpush2.msra.mxu0 0.0
        %605 = vmatprep.subr.mxu0 0.0
        %606 = vmatpush2.msra.mxu0 0.0
        %607 = vmatprep.subr.mxu0 0.0
        %608 = vmatpush2.msra.mxu0 0.0
        %609 = vmatprep.subr.mxu0 0.0
        %610 = vmatpush2.msra.mxu0 0.0
        %611 = vmatprep.subr.mxu0 0.0
        %612 = vmatpush2.msra.mxu0 0.0
        %613 = vmatprep.subr.mxu0 0.0
        %614 = vmatpush2.msra.mxu0 0.0
        %615 = vmatprep.subr.mxu0 0.0
        %616 = vmatpush2.msra.mxu0 0.0
        %617 = vmatprep.subr.mxu0 0.0
        %618 = vmatpush2.msra.mxu0 %v561
        %619 = vmatprep.subr.mxu0 0.0
        %620 = vmatpush2.msra.mxu0 %v560
        %621 = vmatprep.subr.mxu0 0.0
        %622 = vmatpush2.msra.mxu0 %v559
        %623 = vmatprep.subr.mxu0 0.0
        %624 = vmatpush2.msra.mxu0 %v558
        %625 = vmatprep.subr.mxu0 0.0
        %626 = vmatpush2.msra.mxu0 %v557
        %627 = vmatprep.subr.mxu0 0.0
        %628 = vmatpush2.msra.mxu0 %v556
        %629 = vmatprep.subr.mxu0 0.0
        %630 = vmatpush2.msra.mxu0 %v555
        %631 = vmatprep.subr.mxu0 0.0
        %632 = vmatpush2.msra.mxu0 %v554
        %633 = vmatprep.mubr.f32.mxu0 %v564
        %634 = vmatmul.mubr.f32.gmra.mxu0 %v534
        %v635 = vpop.f32.mrf.mxu0
        %v636 = vadd.f32 0.0, %v635
        %v637 = vpop.f32.mrf.mxu0
        %638 = vmatprep.mubr.f32.mxu0 %v567
        %639 = vmatmul.mubr.f32.gmra.mxu0 %v536
        %v640 = vpop.f32.mrf.mxu0
        %v641 = vadd.f32 0.0, %v640
        %v642 = vpop.f32.mrf.mxu0
        %643 = vdwg.mxu0
        %v644 = vld [vmem:[%s3] sm:$0xff]
        %v645 = vld [vmem:[%s3 + $0x8] sm:$0xff]
        %v646 = vld [vmem:[%s3 + $0x10] sm:$0xff]
        %v647 = vld [vmem:[%s3 + $0x18] sm:$0xff]
        %v648 = vld [vmem:[%s3 + $0x20] sm:$0xff]
        %v649 = vld [vmem:[%s3 + $0x28] sm:$0xff]
        %v650 = vld [vmem:[%s3 + $0x30] sm:$0xff]
        %v651 = vld [vmem:[%s3 + $0x38] sm:$0xff]
        %v652 = vld [vmem:[%s3 + $0x40] sm:$0xff]
        %v653 = vld [vmem:[%s3 + $0x48] sm:$0xff]
        %v654 = vld [vmem:[%s3 + $0x50] sm:$0xff]
        %v655 = vld [vmem:[%s3 + $0x58] sm:$0xff]
        %v656 = vld [vmem:[%s3 + $0x60] sm:$0xff]
        %v657 = vld [vmem:[%s3 + $0x68] sm:$0xff]
        %v658 = vld [vmem:[%s3 + $0x70] sm:$0xff]
        %v659 = vld [vmem:[%s3 + $0x78] sm:$0xff]
        %v660 = vld [vmem:[%s3 + $0x80] sm:$0xff]
        %v661 = vld [vmem:[%s3 + $0x88] sm:$0xff]
        %v662 = vld [vmem:[%s3 + $0x90] sm:$0xff]
        %v663 = vld [vmem:[%s3 + $0x98] sm:$0xff]
        %v664 = vld [vmem:[%s3 + $0xa0] sm:$0xff]
        %v665 = vld [vmem:[%s3 + $0xa8] sm:$0xff]
        %v666 = vld [vmem:[%s3 + $0xb0] sm:$0xff]
        %v667 = vld [vmem:[%s3 + $0xb8] sm:$0xff]
        %v668 = vld [vmem:[%s4] sm:$0x1]
        %v670 = vlaneseq
        %v671 = vshrl.u32 %v670, 7
        %v672 = vsub.s32 0, %v671
        %v673 = vrot.slane %v668, %v672
        %675 = vmatprep.subr.mxu0 0.0
        %676 = vmatpush1.msra.mxu0 %v659
        %677 = vmatprep.subr.mxu0 0.0
        %678 = vmatpush1.msra.mxu0 %v658
        %679 = vmatprep.subr.mxu0 0.0
        %680 = vmatpush1.msra.mxu0 %v657
        %681 = vmatprep.subr.mxu0 0.0
        %682 = vmatpush1.msra.mxu0 %v656
        %683 = vmatprep.subr.mxu0 0.0
        %684 = vmatpush1.msra.mxu0 %v655
        %685 = vmatprep.subr.mxu0 0.0
        %686 = vmatpush1.msra.mxu0 %v654
        %687 = vmatprep.subr.mxu0 0.0
        %688 = vmatpush1.msra.mxu0 %v653
        %689 = vmatprep.subr.mxu0 0.0
        %690 = vmatpush1.msra.mxu0 %v652
        %691 = vmatprep.subr.mxu0 0.0
        %692 = vmatpush1.msra.mxu0 %v651
        %693 = vmatprep.subr.mxu0 0.0
        %694 = vmatpush1.msra.mxu0 %v650
        %695 = vmatprep.subr.mxu0 0.0
        %696 = vmatpush1.msra.mxu0 %v649
        %697 = vmatprep.subr.mxu0 0.0
        %698 = vmatpush1.msra.mxu0 %v648
        %699 = vmatprep.subr.mxu0 0.0
        %700 = vmatpush1.msra.mxu0 %v647
        %701 = vmatprep.subr.mxu0 0.0
        %702 = vmatpush1.msra.mxu0 %v646
        %703 = vmatprep.subr.mxu0 0.0
        %704 = vmatpush1.msra.mxu0 %v645
        %705 = vmatprep.subr.mxu0 0.0
        %706 = vmatpush1.msra.mxu0 %v644
        %707 = vmatprep.subr.mxu0 0.0
        %708 = vmatpush2.msra.mxu0 0.0
        %709 = vmatprep.subr.mxu0 0.0
        %710 = vmatpush2.msra.mxu0 0.0
        %711 = vmatprep.subr.mxu0 0.0
        %712 = vmatpush2.msra.mxu0 0.0
        %713 = vmatprep.subr.mxu0 0.0
        %714 = vmatpush2.msra.mxu0 0.0
        %715 = vmatprep.subr.mxu0 0.0
        %716 = vmatpush2.msra.mxu0 0.0
        %717 = vmatprep.subr.mxu0 0.0
        %718 = vmatpush2.msra.mxu0 0.0
        %719 = vmatprep.subr.mxu0 0.0
        %720 = vmatpush2.msra.mxu0 0.0
        %721 = vmatprep.subr.mxu0 0.0
        %722 = vmatpush2.msra.mxu0 0.0
        %723 = vmatprep.subr.mxu0 0.0
        %724 = vmatpush2.msra.mxu0 %v667
        %725 = vmatprep.subr.mxu0 0.0
        %726 = vmatpush2.msra.mxu0 %v666
        %727 = vmatprep.subr.mxu0 0.0
        %728 = vmatpush2.msra.mxu0 %v665
        %729 = vmatprep.subr.mxu0 0.0
        %730 = vmatpush2.msra.mxu0 %v664
        %731 = vmatprep.subr.mxu0 0.0
        %732 = vmatpush2.msra.mxu0 %v663
        %733 = vmatprep.subr.mxu0 0.0
        %734 = vmatpush2.msra.mxu0 %v662
        %735 = vmatprep.subr.mxu0 0.0
        %736 = vmatpush2.msra.mxu0 %v661
        %737 = vmatprep.subr.mxu0 0.0
        %738 = vmatpush2.msra.mxu0 %v660
        %739 = vmatprep.mubr.f32.mxu0 %v564
        %740 = vmatmul.mubr.f32.gmra.mxu0 %v534
        %v741 = vpop.f32.mrf.mxu0
        %v742 = vadd.f32 %v673, %v741
        %v743 = vpop.f32.mrf.mxu0
        %744 = vmatprep.mubr.f32.mxu0 %v567
        %745 = vmatmul.mubr.f32.gmra.mxu0 %v536
        %v746 = vpop.f32.mrf.mxu0
        %v747 = vadd.f32 %v673, %v746
        %v748 = vpop.f32.mrf.mxu0
        %749 = vdwg.mxu0
        %v750 = vld [vmem:[%s5] sm:$0xff]
        %v751 = vld [vmem:[%s5 + $0x8] sm:$0xff]
        %v752 = vld [vmem:[%s5 + $0x10] sm:$0xff]
        %v753 = vld [vmem:[%s5 + $0x18] sm:$0xff]
        %v754 = vld [vmem:[%s5 + $0x20] sm:$0xff]
        %v755 = vld [vmem:[%s5 + $0x28] sm:$0xff]
        %v756 = vld [vmem:[%s5 + $0x30] sm:$0xff]
        %v757 = vld [vmem:[%s5 + $0x38] sm:$0xff]
        %v758 = vld [vmem:[%s5 + $0x40] sm:$0xff]
        %v759 = vld [vmem:[%s5 + $0x48] sm:$0xff]
        %v760 = vld [vmem:[%s5 + $0x50] sm:$0xff]
        %v761 = vld [vmem:[%s5 + $0x58] sm:$0xff]
        %v762 = vld [vmem:[%s5 + $0x60] sm:$0xff]
        %v763 = vld [vmem:[%s5 + $0x68] sm:$0xff]
        %v764 = vld [vmem:[%s5 + $0x70] sm:$0xff]
        %v765 = vld [vmem:[%s5 + $0x78] sm:$0xff]
        %v766 = vld [vmem:[%s5 + $0x80] sm:$0xff]
        %v767 = vld [vmem:[%s5 + $0x88] sm:$0xff]
        %v768 = vld [vmem:[%s5 + $0x90] sm:$0xff]
        %v769 = vld [vmem:[%s5 + $0x98] sm:$0xff]
        %v770 = vld [vmem:[%s5 + $0xa0] sm:$0xff]
        %v771 = vld [vmem:[%s5 + $0xa8] sm:$0xff]
        %v772 = vld [vmem:[%s5 + $0xb0] sm:$0xff]
        %v773 = vld [vmem:[%s5 + $0xb8] sm:$0xff]
        %v774 = vld [vmem:[%s6] sm:$0x1]
        %v776 = vlaneseq
        %v777 = vshrl.u32 %v776, 7
        %v778 = vsub.s32 0, %v777
        %v779 = vrot.slane %v774, %v778
        %781 = vmatprep.subr.mxu0 0.0
        %782 = vmatpush1.msra.mxu0 %v765
        %783 = vmatprep.subr.mxu0 0.0
        %784 = vmatpush1.msra.mxu0 %v764
        %785 = vmatprep.subr.mxu0 0.0
        %786 = vmatpush1.msra.mxu0 %v763
        %787 = vmatprep.subr.mxu0 0.0
        %788 = vmatpush1.msra.mxu0 %v762
        %789 = vmatprep.subr.mxu0 0.0
        %790 = vmatpush1.msra.mxu0 %v761
        %791 = vmatprep.subr.mxu0 0.0
        %792 = vmatpush1.msra.mxu0 %v760
        %793 = vmatprep.subr.mxu0 0.0
        %794 = vmatpush1.msra.mxu0 %v759
        %795 = vmatprep.subr.mxu0 0.0
        %796 = vmatpush1.msra.mxu0 %v758
        %797 = vmatprep.subr.mxu0 0.0
        %798 = vmatpush1.msra.mxu0 %v757
        %799 = vmatprep.subr.mxu0 0.0
        %800 = vmatpush1.msra.mxu0 %v756
        %801 = vmatprep.subr.mxu0 0.0
        %802 = vmatpush1.msra.mxu0 %v755
        %803 = vmatprep.subr.mxu0 0.0
        %804 = vmatpush1.msra.mxu0 %v754
        %805 = vmatprep.subr.mxu0 0.0
        %806 = vmatpush1.msra.mxu0 %v753
        %807 = vmatprep.subr.mxu0 0.0
        %808 = vmatpush1.msra.mxu0 %v752
        %809 = vmatprep.subr.mxu0 0.0
        %810 = vmatpush1.msra.mxu0 %v751
        %811 = vmatprep.subr.mxu0 0.0
        %812 = vmatpush1.msra.mxu0 %v750
        %813 = vmatprep.subr.mxu0 0.0
        %814 = vmatpush2.msra.mxu0 0.0
        %815 = vmatprep.subr.mxu0 0.0
        %816 = vmatpush2.msra.mxu0 0.0
        %817 = vmatprep.subr.mxu0 0.0
        %818 = vmatpush2.msra.mxu0 0.0
        %819 = vmatprep.subr.mxu0 0.0
        %820 = vmatpush2.msra.mxu0 0.0
        %821 = vmatprep.subr.mxu0 0.0
        %822 = vmatpush2.msra.mxu0 0.0
        %823 = vmatprep.subr.mxu0 0.0
        %824 = vmatpush2.msra.mxu0 0.0
        %825 = vmatprep.subr.mxu0 0.0
        %826 = vmatpush2.msra.mxu0 0.0
        %827 = vmatprep.subr.mxu0 0.0
        %828 = vmatpush2.msra.mxu0 0.0
        %829 = vmatprep.subr.mxu0 0.0
        %830 = vmatpush2.msra.mxu0 %v773
        %831 = vmatprep.subr.mxu0 0.0
        %832 = vmatpush2.msra.mxu0 %v772
        %833 = vmatprep.subr.mxu0 0.0
        %834 = vmatpush2.msra.mxu0 %v771
        %835 = vmatprep.subr.mxu0 0.0
        %836 = vmatpush2.msra.mxu0 %v770
        %837 = vmatprep.subr.mxu0 0.0
        %838 = vmatpush2.msra.mxu0 %v769
        %839 = vmatprep.subr.mxu0 0.0
        %840 = vmatpush2.msra.mxu0 %v768
        %841 = vmatprep.subr.mxu0 0.0
        %842 = vmatpush2.msra.mxu0 %v767
        %843 = vmatprep.subr.mxu0 0.0
        %844 = vmatpush2.msra.mxu0 %v766
        %845 = vmatprep.mubr.f32.mxu0 %v564
        %846 = vmatmul.mubr.f32.gmra.mxu0 %v534
        %v847 = vpop.f32.mrf.mxu0
        %v848 = vadd.f32 %v779, %v847
        %v849 = vpop.f32.mrf.mxu0
        %850 = vmatprep.mubr.f32.mxu0 %v567
        %851 = vmatmul.mubr.f32.gmra.mxu0 %v536
        %v852 = vpop.f32.mrf.mxu0
        %v853 = vadd.f32 %v779, %v852
        %v854 = vpop.f32.mrf.mxu0
        %855 = vdwg.mxu0
        %v856 = vld [vmem:[%s9] sm:$0xff]
        %v857 = vld [vmem:[%s9 + $0x8] sm:$0xff]
        %v858 = vld [vmem:[%s9 + $0x10] sm:$0xff]
        %v859 = vld [vmem:[%s9 + $0x18] sm:$0xff]
        %v860 = vld [vmem:[%s9 + $0x20] sm:$0xff]
        %v861 = vld [vmem:[%s9 + $0x28] sm:$0xff]
        %v862 = vld [vmem:[%s9 + $0x30] sm:$0xff]
        %v863 = vld [vmem:[%s9 + $0x38] sm:$0xff]
        %v864 = vld [vmem:[%s10] sm:$0xff]
        %v865 = vld [vmem:[%s10 + $0x8] sm:$0xff]
        %v866 = vld [vmem:[%s10 + $0x10] sm:$0xff]
        %v867 = vld [vmem:[%s10 + $0x18] sm:$0xff]
        %v868 = vld [vmem:[%s10 + $0x20] sm:$0xff]
        %v869 = vld [vmem:[%s10 + $0x28] sm:$0xff]
        %v870 = vld [vmem:[%s10 + $0x30] sm:$0xff]
        %v871 = vld [vmem:[%s10 + $0x38] sm:$0xff]
        %v872 = vld [vmem:[%s10 + $0x40] sm:$0xff]
        %v873 = vld [vmem:[%s10 + $0x48] sm:$0xff]
        %v874 = vld [vmem:[%s10 + $0x50] sm:$0xff]
        %v875 = vld [vmem:[%s10 + $0x58] sm:$0xff]
        %v876 = vld [vmem:[%s10 + $0x60] sm:$0xff]
        %v877 = vld [vmem:[%s10 + $0x68] sm:$0xff]
        %v878 = vld [vmem:[%s10 + $0x70] sm:$0xff]
        %v879 = vld [vmem:[%s10 + $0x78] sm:$0xff]
        %v880 = vld [vmem:[%s10 + $0x80] sm:$0xff]
        %v881 = vld [vmem:[%s10 + $0x88] sm:$0xff]
        %v882 = vld [vmem:[%s10 + $0x90] sm:$0xff]
        %v883 = vld [vmem:[%s10 + $0x98] sm:$0xff]
        %v884 = vld [vmem:[%s10 + $0xa0] sm:$0xff]
        %v885 = vld [vmem:[%s10 + $0xa8] sm:$0xff]
        %v886 = vld [vmem:[%s10 + $0xb0] sm:$0xff]
        %v887 = vld [vmem:[%s10 + $0xb8] sm:$0xff]
        %v889 = vsel %vm562, %v857, 0
        %v892 = vsel %vm562, %v859, 0
        %v895 = vsel %vm562, %v861, 0
        %v898 = vsel %vm562, %v863, 0
        %900 = vmatprep.subr.mxu0 0.0
        %901 = vmatpush1.msra.mxu0 %v879
        %902 = vmatprep.subr.mxu0 0.0
        %903 = vmatpush1.msra.mxu0 %v878
        %904 = vmatprep.subr.mxu0 0.0
        %905 = vmatpush1.msra.mxu0 %v877
        %906 = vmatprep.subr.mxu0 0.0
        %907 = vmatpush1.msra.mxu0 %v876
        %908 = vmatprep.subr.mxu0 0.0
        %909 = vmatpush1.msra.mxu0 %v875
        %910 = vmatprep.subr.mxu0 0.0
        %911 = vmatpush1.msra.mxu0 %v874
        %912 = vmatprep.subr.mxu0 0.0
        %913 = vmatpush1.msra.mxu0 %v873
        %914 = vmatprep.subr.mxu0 0.0
        %915 = vmatpush1.msra.mxu0 %v872
        %916 = vmatprep.subr.mxu0 0.0
        %917 = vmatpush1.msra.mxu0 %v871
        %918 = vmatprep.subr.mxu0 0.0
        %919 = vmatpush1.msra.mxu0 %v870
        %920 = vmatprep.subr.mxu0 0.0
        %921 = vmatpush1.msra.mxu0 %v869
        %922 = vmatprep.subr.mxu0 0.0
        %923 = vmatpush1.msra.mxu0 %v868
        %924 = vmatprep.subr.mxu0 0.0
        %925 = vmatpush1.msra.mxu0 %v867
        %926 = vmatprep.subr.mxu0 0.0
        %927 = vmatpush1.msra.mxu0 %v866
        %928 = vmatprep.subr.mxu0 0.0
        %929 = vmatpush1.msra.mxu0 %v865
        %930 = vmatprep.subr.mxu0 0.0
        %931 = vmatpush1.msra.mxu0 %v864
        %932 = vmatprep.subr.mxu0 0.0
        %933 = vmatpush2.msra.mxu0 0.0
        %934 = vmatprep.subr.mxu0 0.0
        %935 = vmatpush2.msra.mxu0 0.0
        %936 = vmatprep.subr.mxu0 0.0
        %937 = vmatpush2.msra.mxu0 0.0
        %938 = vmatprep.subr.mxu0 0.0
        %939 = vmatpush2.msra.mxu0 0.0
        %940 = vmatprep.subr.mxu0 0.0
        %941 = vmatpush2.msra.mxu0 0.0
        %942 = vmatprep.subr.mxu0 0.0
        %943 = vmatpush2.msra.mxu0 0.0
        %944 = vmatprep.subr.mxu0 0.0
        %945 = vmatpush2.msra.mxu0 0.0
        %946 = vmatprep.subr.mxu0 0.0
        %947 = vmatpush2.msra.mxu0 0.0
        %948 = vmatprep.subr.mxu0 0.0
        %949 = vmatpush2.msra.mxu0 %v887
        %950 = vmatprep.subr.mxu0 0.0
        %951 = vmatpush2.msra.mxu0 %v886
        %952 = vmatprep.subr.mxu0 0.0
        %953 = vmatpush2.msra.mxu0 %v885
        %954 = vmatprep.subr.mxu0 0.0
        %955 = vmatpush2.msra.mxu0 %v884
        %956 = vmatprep.subr.mxu0 0.0
        %957 = vmatpush2.msra.mxu0 %v883
        %958 = vmatprep.subr.mxu0 0.0
        %959 = vmatpush2.msra.mxu0 %v882
        %960 = vmatprep.subr.mxu0 0.0
        %961 = vmatpush2.msra.mxu0 %v881
        %962 = vmatprep.subr.mxu0 0.0
        %963 = vmatpush2.msra.mxu0 %v880
        %964 = vmatprep.mubr.f32.mxu0 %v889
        %965 = vmatmul.mubr.f32.gmra.mxu0 %v856
        %v966 = vpop.f32.mrf.mxu0
        %v967 = vadd.f32 0.0, %v966
        %v968 = vpop.f32.mrf.mxu0
        %969 = vmatprep.mubr.f32.mxu0 %v892
        %970 = vmatmul.mubr.f32.gmra.mxu0 %v858
        %v971 = vpop.f32.mrf.mxu0
        %v972 = vadd.f32 0.0, %v971
        %v973 = vpop.f32.mrf.mxu0
        %974 = vmatprep.mubr.f32.mxu0 %v895
        %975 = vmatmul.mubr.f32.gmra.mxu0 %v860
        %v976 = vpop.f32.mrf.mxu0
        %v977 = vadd.f32 0.0, %v976
        %v978 = vpop.f32.mrf.mxu0
        %979 = vmatprep.mubr.f32.mxu0 %v898
        %980 = vmatmul.mubr.f32.gmra.mxu0 %v862
        %v981 = vpop.f32.mrf.mxu0
        %v982 = vadd.f32 0.0, %v981
        %v983 = vpop.f32.mrf.mxu0
        %984 = vdwg.mxu0
        %v985 = vld [vmem:[%s7] sm:$0x1]
        %v987 = vlaneseq
        %v988 = vshrl.u32 %v987, 7
        %v989 = vsub.s32 0, %v988
        %v990 = vrot.slane %v985, %v989
        %v992 = vadd.f32 %v636, %v990
        %v993 = vadd.f32 %v641, %v990
        %v994 = vld [vmem:[%s8] sm:$0x1]
        %v996 = vlaneseq
        %v997 = vshrl.u32 %v996, 7
        %v998 = vsub.s32 0, %v997
        %v999 = vrot.slane %v994, %v998
        %v1001 = vadd.f32 %v636, %v999
        %v1002 = vadd.f32 %v641, %v999
        %v1003 = vld [vmem:[%s11] sm:$0xff]
        %v1004 = vld [vmem:[%s11 + $0x8] sm:$0xff]
        %v1005 = vld [vmem:[%s11 + $0x10] sm:$0xff]
        %v1006 = vld [vmem:[%s11 + $0x18] sm:$0xff]
        %v1007 = vld [vmem:[%s11 + $0x20] sm:$0xff]
        %v1008 = vld [vmem:[%s11 + $0x28] sm:$0xff]
        %v1009 = vld [vmem:[%s11 + $0x30] sm:$0xff]
        %v1010 = vld [vmem:[%s11 + $0x38] sm:$0xff]
        %v1011 = vld [vmem:[%s11 + $0x40] sm:$0xff]
        %v1012 = vld [vmem:[%s11 + $0x48] sm:$0xff]
        %v1013 = vld [vmem:[%s11 + $0x50] sm:$0xff]
        %v1014 = vld [vmem:[%s11 + $0x58] sm:$0xff]
        %v1015 = vld [vmem:[%s11 + $0x60] sm:$0xff]
        %v1016 = vld [vmem:[%s11 + $0x68] sm:$0xff]
        %v1017 = vld [vmem:[%s11 + $0x70] sm:$0xff]
        %v1018 = vld [vmem:[%s11 + $0x78] sm:$0xff]
        %v1019 = vld [vmem:[%s11 + $0x80] sm:$0xff]
        %v1020 = vld [vmem:[%s11 + $0x88] sm:$0xff]
        %v1021 = vld [vmem:[%s11 + $0x90] sm:$0xff]
        %v1022 = vld [vmem:[%s11 + $0x98] sm:$0xff]
        %v1023 = vld [vmem:[%s11 + $0xa0] sm:$0xff]
        %v1024 = vld [vmem:[%s11 + $0xa8] sm:$0xff]
        %v1025 = vld [vmem:[%s11 + $0xb0] sm:$0xff]
        %v1026 = vld [vmem:[%s11 + $0xb8] sm:$0xff]
        %v1027 = vld [vmem:[%s11 + $0xc0] sm:$0xff]
        %v1028 = vld [vmem:[%s11 + $0xc8] sm:$0xff]
        %v1029 = vld [vmem:[%s11 + $0xd0] sm:$0xff]
        %v1030 = vld [vmem:[%s11 + $0xd8] sm:$0xff]
        %v1031 = vld [vmem:[%s11 + $0xe0] sm:$0xff]
        %v1032 = vld [vmem:[%s11 + $0xe8] sm:$0xff]
        %v1033 = vld [vmem:[%s11 + $0xf0] sm:$0xff]
        %v1034 = vld [vmem:[%s11 + $0xf8] sm:$0xff]
        %v1035 = vld [vmem:[%s11 + $0x100] sm:$0xff]
        %v1036 = vld [vmem:[%s11 + $0x108] sm:$0xff]
        %v1037 = vld [vmem:[%s11 + $0x110] sm:$0xff]
        %v1038 = vld [vmem:[%s11 + $0x118] sm:$0xff]
        %v1039 = vld [vmem:[%s11 + $0x120] sm:$0xff]
        %v1040 = vld [vmem:[%s11 + $0x128] sm:$0xff]
        %v1041 = vld [vmem:[%s11 + $0x130] sm:$0xff]
        %v1042 = vld [vmem:[%s11 + $0x138] sm:$0xff]
        %v1043 = vld [vmem:[%s11 + $0x140] sm:$0xff]
        %v1044 = vld [vmem:[%s11 + $0x148] sm:$0xff]
        %v1045 = vld [vmem:[%s11 + $0x150] sm:$0xff]
        %v1046 = vld [vmem:[%s11 + $0x158] sm:$0xff]
        %v1047 = vld [vmem:[%s11 + $0x160] sm:$0xff]
        %v1048 = vld [vmem:[%s11 + $0x168] sm:$0xff]
        %v1049 = vld [vmem:[%s11 + $0x170] sm:$0xff]
        %v1050 = vld [vmem:[%s11 + $0x178] sm:$0xff]
        %v1051 = vld [vmem:[%s11 + $0x180] sm:$0xff]
        %v1052 = vld [vmem:[%s11 + $0x188] sm:$0xff]
        %v1053 = vld [vmem:[%s11 + $0x190] sm:$0xff]
        %v1054 = vld [vmem:[%s11 + $0x198] sm:$0xff]
        %v1055 = vld [vmem:[%s11 + $0x1a0] sm:$0xff]
        %v1056 = vld [vmem:[%s11 + $0x1a8] sm:$0xff]
        %v1057 = vld [vmem:[%s11 + $0x1b0] sm:$0xff]
        %v1058 = vld [vmem:[%s11 + $0x1b8] sm:$0xff]
        %v1059 = vld [vmem:[%s11 + $0x1c0] sm:$0xff]
        %v1060 = vld [vmem:[%s11 + $0x1c8] sm:$0xff]
        %v1061 = vld [vmem:[%s11 + $0x1d0] sm:$0xff]
        %v1062 = vld [vmem:[%s11 + $0x1d8] sm:$0xff]
        %v1063 = vld [vmem:[%s11 + $0x1e0] sm:$0xff]
        %v1064 = vld [vmem:[%s11 + $0x1e8] sm:$0xff]
        %v1065 = vld [vmem:[%s11 + $0x1f0] sm:$0xff]
        %v1066 = vld [vmem:[%s11 + $0x1f8] sm:$0xff]
        %1071 = vrot.lane.b32.xlu0 %v967, 122
        %v1072 = vpop.permute.xlu0 %1071
        %1073 = vrot.lane.b32.xlu0 %v972, 122
        %v1074 = vpop.permute.xlu0 %1073
        %1075 = vrot.lane.b32.xlu0 %v977, 122
        %v1076 = vpop.permute.xlu0 %1075
        %1077 = vrot.lane.b32.xlu0 %v982, 122
        %v1078 = vpop.permute.xlu0 %1077
        %1079 = vrot.lane.b32.xlu0 %v967, 116
        %v1080 = vpop.permute.xlu0 %1079
        %1081 = vrot.lane.b32.xlu0 %v972, 116
        %v1082 = vpop.permute.xlu0 %1081
        %1083 = vrot.lane.b32.xlu0 %v977, 116
        %v1084 = vpop.permute.xlu0 %1083
        %1085 = vrot.lane.b32.xlu0 %v982, 116
        %v1086 = vpop.permute.xlu0 %1085
        %1087 = vrot.lane.b32.xlu0 %v967, 110
        %v1088 = vpop.permute.xlu0 %1087
        %1089 = vrot.lane.b32.xlu0 %v972, 110
        %v1090 = vpop.permute.xlu0 %1089
        %1091 = vrot.lane.b32.xlu0 %v977, 110
        %v1092 = vpop.permute.xlu0 %1091
        %1093 = vrot.lane.b32.xlu0 %v982, 110
        %v1094 = vpop.permute.xlu0 %1093
        %1095 = vrot.lane.b32.xlu0 %v967, 104
        %v1096 = vpop.permute.xlu0 %1095
        %1097 = vrot.lane.b32.xlu0 %v972, 104
        %v1098 = vpop.permute.xlu0 %1097
        %1099 = vrot.lane.b32.xlu0 %v977, 104
        %v1100 = vpop.permute.xlu0 %1099
        %1101 = vrot.lane.b32.xlu0 %v982, 104
        %v1102 = vpop.permute.xlu0 %1101
        %1103 = vrot.lane.b32.xlu0 %v967, 98
        %v1104 = vpop.permute.xlu0 %1103
        %1105 = vrot.lane.b32.xlu0 %v972, 98
        %v1106 = vpop.permute.xlu0 %1105
        %1107 = vrot.lane.b32.xlu0 %v977, 98
        %v1108 = vpop.permute.xlu0 %1107
        %1109 = vrot.lane.b32.xlu0 %v982, 98
        %v1110 = vpop.permute.xlu0 %1109
        %1111 = vrot.lane.b32.xlu0 %v967, 92
        %v1112 = vpop.permute.xlu0 %1111
        %1113 = vrot.lane.b32.xlu0 %v972, 92
        %v1114 = vpop.permute.xlu0 %1113
        %1115 = vrot.lane.b32.xlu0 %v977, 92
        %v1116 = vpop.permute.xlu0 %1115
        %1117 = vrot.lane.b32.xlu0 %v982, 92
        %v1118 = vpop.permute.xlu0 %1117
        %1119 = vrot.lane.b32.xlu0 %v967, 86
        %v1120 = vpop.permute.xlu0 %1119
        %1121 = vrot.lane.b32.xlu0 %v972, 86
        %v1122 = vpop.permute.xlu0 %1121
        %1123 = vrot.lane.b32.xlu0 %v977, 86
        %v1124 = vpop.permute.xlu0 %1123
        %1125 = vrot.lane.b32.xlu0 %v982, 86
        %v1126 = vpop.permute.xlu0 %1125
        %1127 = vrot.lane.b32.xlu0 %v967, 80
        %v1128 = vpop.permute.xlu0 %1127
        %1129 = vrot.lane.b32.xlu0 %v972, 80
        %v1130 = vpop.permute.xlu0 %1129
        %1131 = vrot.lane.b32.xlu0 %v977, 80
        %v1132 = vpop.permute.xlu0 %1131
        %1133 = vrot.lane.b32.xlu0 %v982, 80
        %v1134 = vpop.permute.xlu0 %1133
        %1135 = vrot.lane.b32.xlu0 %v967, 74
        %v1136 = vpop.permute.xlu0 %1135
        %1137 = vrot.lane.b32.xlu0 %v972, 74
        %v1138 = vpop.permute.xlu0 %1137
        %1139 = vrot.lane.b32.xlu0 %v977, 74
        %v1140 = vpop.permute.xlu0 %1139
        %1141 = vrot.lane.b32.xlu0 %v982, 74
        %v1142 = vpop.permute.xlu0 %1141
        %1143 = vrot.lane.b32.xlu0 %v967, 68
        %v1144 = vpop.permute.xlu0 %1143
        %1145 = vrot.lane.b32.xlu0 %v972, 68
        %v1146 = vpop.permute.xlu0 %1145
        %1147 = vrot.lane.b32.xlu0 %v977, 68
        %v1148 = vpop.permute.xlu0 %1147
        %1149 = vrot.lane.b32.xlu0 %v982, 68
        %v1150 = vpop.permute.xlu0 %1149
        %1151 = vrot.lane.b32.xlu0 %v967, 62
        %v1152 = vpop.permute.xlu0 %1151
        %1153 = vrot.lane.b32.xlu0 %v972, 62
        %v1154 = vpop.permute.xlu0 %1153
        %1155 = vrot.lane.b32.xlu0 %v977, 62
        %v1156 = vpop.permute.xlu0 %1155
        %1157 = vrot.lane.b32.xlu0 %v982, 62
        %v1158 = vpop.permute.xlu0 %1157
        %1159 = vrot.lane.b32.xlu0 %v967, 56
        %v1160 = vpop.permute.xlu0 %1159
        %1161 = vrot.lane.b32.xlu0 %v972, 56
        %v1162 = vpop.permute.xlu0 %1161
        %1163 = vrot.lane.b32.xlu0 %v977, 56
        %v1164 = vpop.permute.xlu0 %1163
        %1165 = vrot.lane.b32.xlu0 %v982, 56
        %v1166 = vpop.permute.xlu0 %1165
        %1167 = vrot.lane.b32.xlu0 %v967, 50
        %v1168 = vpop.permute.xlu0 %1167
        %1169 = vrot.lane.b32.xlu0 %v972, 50
        %v1170 = vpop.permute.xlu0 %1169
        %1171 = vrot.lane.b32.xlu0 %v977, 50
        %v1172 = vpop.permute.xlu0 %1171
        %1173 = vrot.lane.b32.xlu0 %v982, 50
        %v1174 = vpop.permute.xlu0 %1173
        %1175 = vrot.lane.b32.xlu0 %v967, 44
        %v1176 = vpop.permute.xlu0 %1175
        %1177 = vrot.lane.b32.xlu0 %v972, 44
        %v1178 = vpop.permute.xlu0 %1177
        %1179 = vrot.lane.b32.xlu0 %v977, 44
        %v1180 = vpop.permute.xlu0 %1179
        %1181 = vrot.lane.b32.xlu0 %v982, 44
        %v1182 = vpop.permute.xlu0 %1181
        %1183 = vrot.lane.b32.xlu0 %v967, 38
        %v1184 = vpop.permute.xlu0 %1183
        %1185 = vrot.lane.b32.xlu0 %v972, 38
        %v1186 = vpop.permute.xlu0 %1185
        %1187 = vrot.lane.b32.xlu0 %v977, 38
        %v1188 = vpop.permute.xlu0 %1187
        %1189 = vrot.lane.b32.xlu0 %v982, 38
        %v1190 = vpop.permute.xlu0 %1189
        %1193 = vrot.lane.b32.xlu0 %v992, 122
        %v1194 = vpop.permute.xlu0 %1193
        %1195 = vrot.lane.b32.xlu0 %v993, 122
        %v1196 = vpop.permute.xlu0 %1195
        %1197 = vrot.lane.b32.xlu0 %v992, 116
        %v1198 = vpop.permute.xlu0 %1197
        %1199 = vrot.lane.b32.xlu0 %v993, 116
        %v1200 = vpop.permute.xlu0 %1199
        %1201 = vrot.lane.b32.xlu0 %v992, 110
        %v1202 = vpop.permute.xlu0 %1201
        %1203 = vrot.lane.b32.xlu0 %v993, 110
        %v1204 = vpop.permute.xlu0 %1203
        %1205 = vrot.lane.b32.xlu0 %v992, 104
        %v1206 = vpop.permute.xlu0 %1205
        %1207 = vrot.lane.b32.xlu0 %v993, 104
        %v1208 = vpop.permute.xlu0 %1207
        %1209 = vrot.lane.b32.xlu0 %v992, 98
        %v1210 = vpop.permute.xlu0 %1209
        %1211 = vrot.lane.b32.xlu0 %v993, 98
        %v1212 = vpop.permute.xlu0 %1211
        %1213 = vrot.lane.b32.xlu0 %v992, 92
        %v1214 = vpop.permute.xlu0 %1213
        %1215 = vrot.lane.b32.xlu0 %v993, 92
        %v1216 = vpop.permute.xlu0 %1215
        %1217 = vrot.lane.b32.xlu0 %v992, 86
        %v1218 = vpop.permute.xlu0 %1217
        %1219 = vrot.lane.b32.xlu0 %v993, 86
        %v1220 = vpop.permute.xlu0 %1219
        %1221 = vrot.lane.b32.xlu0 %v992, 80
        %v1222 = vpop.permute.xlu0 %1221
        %1223 = vrot.lane.b32.xlu0 %v993, 80
        %v1224 = vpop.permute.xlu0 %1223
        %1225 = vrot.lane.b32.xlu0 %v992, 74
        %v1226 = vpop.permute.xlu0 %1225
        %1227 = vrot.lane.b32.xlu0 %v993, 74
        %v1228 = vpop.permute.xlu0 %1227
        %1229 = vrot.lane.b32.xlu0 %v992, 68
        %v1230 = vpop.permute.xlu0 %1229
        %1231 = vrot.lane.b32.xlu0 %v993, 68
        %v1232 = vpop.permute.xlu0 %1231
        %1233 = vrot.lane.b32.xlu0 %v992, 62
        %v1234 = vpop.permute.xlu0 %1233
        %1235 = vrot.lane.b32.xlu0 %v993, 62
        %v1236 = vpop.permute.xlu0 %1235
        %1237 = vrot.lane.b32.xlu0 %v992, 56
        %v1238 = vpop.permute.xlu0 %1237
        %1239 = vrot.lane.b32.xlu0 %v993, 56
        %v1240 = vpop.permute.xlu0 %1239
        %1241 = vrot.lane.b32.xlu0 %v992, 50
        %v1242 = vpop.permute.xlu0 %1241
        %1243 = vrot.lane.b32.xlu0 %v993, 50
        %v1244 = vpop.permute.xlu0 %1243
        %1245 = vrot.lane.b32.xlu0 %v992, 44
        %v1246 = vpop.permute.xlu0 %1245
        %1247 = vrot.lane.b32.xlu0 %v993, 44
        %v1248 = vpop.permute.xlu0 %1247
        %1249 = vrot.lane.b32.xlu0 %v992, 38
        %v1250 = vpop.permute.xlu0 %1249
        %1251 = vrot.lane.b32.xlu0 %v993, 38
        %v1252 = vpop.permute.xlu0 %1251
        %1255 = vrot.lane.b32.xlu0 %v1001, 122
        %v1256 = vpop.permute.xlu0 %1255
        %1257 = vrot.lane.b32.xlu0 %v1002, 122
        %v1258 = vpop.permute.xlu0 %1257
        %1259 = vrot.lane.b32.xlu0 %v1001, 116
        %v1260 = vpop.permute.xlu0 %1259
        %1261 = vrot.lane.b32.xlu0 %v1002, 116
        %v1262 = vpop.permute.xlu0 %1261
        %1263 = vrot.lane.b32.xlu0 %v1001, 110
        %v1264 = vpop.permute.xlu0 %1263
        %1265 = vrot.lane.b32.xlu0 %v1002, 110
        %v1266 = vpop.permute.xlu0 %1265
        %1267 = vrot.lane.b32.xlu0 %v1001, 104
        %v1268 = vpop.permute.xlu0 %1267
        %1269 = vrot.lane.b32.xlu0 %v1002, 104
        %v1270 = vpop.permute.xlu0 %1269
        %1271 = vrot.lane.b32.xlu0 %v1001, 98
        %v1272 = vpop.permute.xlu0 %1271
        %1273 = vrot.lane.b32.xlu0 %v1002, 98
        %v1274 = vpop.permute.xlu0 %1273
        %1275 = vrot.lane.b32.xlu0 %v1001, 92
        %v1276 = vpop.permute.xlu0 %1275
        %1277 = vrot.lane.b32.xlu0 %v1002, 92
        %v1278 = vpop.permute.xlu0 %1277
        %1279 = vrot.lane.b32.xlu0 %v1001, 86
        %v1280 = vpop.permute.xlu0 %1279
        %1281 = vrot.lane.b32.xlu0 %v1002, 86
        %v1282 = vpop.permute.xlu0 %1281
        %1283 = vrot.lane.b32.xlu0 %v1001, 80
        %v1284 = vpop.permute.xlu0 %1283
        %1285 = vrot.lane.b32.xlu0 %v1002, 80
        %v1286 = vpop.permute.xlu0 %1285
        %1287 = vrot.lane.b32.xlu0 %v1001, 74
        %v1288 = vpop.permute.xlu0 %1287
        %1289 = vrot.lane.b32.xlu0 %v1002, 74
        %v1290 = vpop.permute.xlu0 %1289
        %1291 = vrot.lane.b32.xlu0 %v1001, 68
        %v1292 = vpop.permute.xlu0 %1291
        %1293 = vrot.lane.b32.xlu0 %v1002, 68
        %v1294 = vpop.permute.xlu0 %1293
        %1295 = vrot.lane.b32.xlu0 %v1001, 62
        %v1296 = vpop.permute.xlu0 %1295
        %1297 = vrot.lane.b32.xlu0 %v1002, 62
        %v1298 = vpop.permute.xlu0 %1297
        %1299 = vrot.lane.b32.xlu0 %v1001, 56
        %v1300 = vpop.permute.xlu0 %1299
        %1301 = vrot.lane.b32.xlu0 %v1002, 56
        %v1302 = vpop.permute.xlu0 %1301
        %1303 = vrot.lane.b32.xlu0 %v1001, 50
        %v1304 = vpop.permute.xlu0 %1303
        %1305 = vrot.lane.b32.xlu0 %v1002, 50
        %v1306 = vpop.permute.xlu0 %1305
        %1307 = vrot.lane.b32.xlu0 %v1001, 44
        %v1308 = vpop.permute.xlu0 %1307
        %1309 = vrot.lane.b32.xlu0 %v1002, 44
        %v1310 = vpop.permute.xlu0 %1309
        %1311 = vrot.lane.b32.xlu0 %v1001, 38
        %v1312 = vpop.permute.xlu0 %1311
        %1313 = vrot.lane.b32.xlu0 %v1002, 38
        %v1314 = vpop.permute.xlu0 %1313
        %1317 = vrot.lane.b32.xlu0 %v742, 122
        %v1318 = vpop.permute.xlu0 %1317
        %1319 = vrot.lane.b32.xlu0 %v747, 122
        %v1320 = vpop.permute.xlu0 %1319
        %1321 = vrot.lane.b32.xlu0 %v742, 116
        %v1322 = vpop.permute.xlu0 %1321
        %1323 = vrot.lane.b32.xlu0 %v747, 116
        %v1324 = vpop.permute.xlu0 %1323
        %1325 = vrot.lane.b32.xlu0 %v742, 110
        %v1326 = vpop.permute.xlu0 %1325
        %1327 = vrot.lane.b32.xlu0 %v747, 110
        %v1328 = vpop.permute.xlu0 %1327
        %1329 = vrot.lane.b32.xlu0 %v742, 104
        %v1330 = vpop.permute.xlu0 %1329
        %1331 = vrot.lane.b32.xlu0 %v747, 104
        %v1332 = vpop.permute.xlu0 %1331
        %1333 = vrot.lane.b32.xlu0 %v742, 98
        %v1334 = vpop.permute.xlu0 %1333
        %1335 = vrot.lane.b32.xlu0 %v747, 98
        %v1336 = vpop.permute.xlu0 %1335
        %1337 = vrot.lane.b32.xlu0 %v742, 92
        %v1338 = vpop.permute.xlu0 %1337
        %1339 = vrot.lane.b32.xlu0 %v747, 92
        %v1340 = vpop.permute.xlu0 %1339
        %1341 = vrot.lane.b32.xlu0 %v742, 86
        %v1342 = vpop.permute.xlu0 %1341
        %1343 = vrot.lane.b32.xlu0 %v747, 86
        %v1344 = vpop.permute.xlu0 %1343
        %1345 = vrot.lane.b32.xlu0 %v742, 80
        %v1346 = vpop.permute.xlu0 %1345
        %1347 = vrot.lane.b32.xlu0 %v747, 80
        %v1348 = vpop.permute.xlu0 %1347
        %1349 = vrot.lane.b32.xlu0 %v742, 74
        %v1350 = vpop.permute.xlu0 %1349
        %1351 = vrot.lane.b32.xlu0 %v747, 74
        %v1352 = vpop.permute.xlu0 %1351
        %1353 = vrot.lane.b32.xlu0 %v742, 68
        %v1354 = vpop.permute.xlu0 %1353
        %1355 = vrot.lane.b32.xlu0 %v747, 68
        %v1356 = vpop.permute.xlu0 %1355
        %1357 = vrot.lane.b32.xlu0 %v742, 62
        %v1358 = vpop.permute.xlu0 %1357
        %1359 = vrot.lane.b32.xlu0 %v747, 62
        %v1360 = vpop.permute.xlu0 %1359
        %1361 = vrot.lane.b32.xlu0 %v742, 56
        %v1362 = vpop.permute.xlu0 %1361
        %1363 = vrot.lane.b32.xlu0 %v747, 56
        %v1364 = vpop.permute.xlu0 %1363
        %1365 = vrot.lane.b32.xlu0 %v742, 50
        %v1366 = vpop.permute.xlu0 %1365
        %1367 = vrot.lane.b32.xlu0 %v747, 50
        %v1368 = vpop.permute.xlu0 %1367
        %1369 = vrot.lane.b32.xlu0 %v742, 44
        %v1370 = vpop.permute.xlu0 %1369
        %1371 = vrot.lane.b32.xlu0 %v747, 44
        %v1372 = vpop.permute.xlu0 %1371
        %1373 = vrot.lane.b32.xlu0 %v742, 38
        %v1374 = vpop.permute.xlu0 %1373
        %1375 = vrot.lane.b32.xlu0 %v747, 38
        %v1376 = vpop.permute.xlu0 %1375
        %1379 = vrot.lane.b32.xlu0 %v848, 122
        %v1380 = vpop.permute.xlu0 %1379
        %1381 = vrot.lane.b32.xlu0 %v853, 122
        %v1382 = vpop.permute.xlu0 %1381
        %1385 = vrot.lane.b32.xlu0 %v848, 116
        %v1386 = vpop.permute.xlu0 %1385
        %1387 = vrot.lane.b32.xlu0 %v853, 116
        %v1388 = vpop.permute.xlu0 %1387
        %1391 = vrot.lane.b32.xlu0 %v848, 110
        %v1392 = vpop.permute.xlu0 %1391
        %1393 = vrot.lane.b32.xlu0 %v853, 110
        %v1394 = vpop.permute.xlu0 %1393
        %1397 = vrot.lane.b32.xlu0 %v848, 104
        %v1398 = vpop.permute.xlu0 %1397
        %1399 = vrot.lane.b32.xlu0 %v853, 104
        %v1400 = vpop.permute.xlu0 %1399
        %1403 = vrot.lane.b32.xlu0 %v848, 98
        %v1404 = vpop.permute.xlu0 %1403
        %1405 = vrot.lane.b32.xlu0 %v853, 98
        %v1406 = vpop.permute.xlu0 %1405
        %1409 = vrot.lane.b32.xlu0 %v848, 92
        %v1410 = vpop.permute.xlu0 %1409
        %1411 = vrot.lane.b32.xlu0 %v853, 92
        %v1412 = vpop.permute.xlu0 %1411
        %1415 = vrot.lane.b32.xlu0 %v848, 86
        %v1416 = vpop.permute.xlu0 %1415
        %1417 = vrot.lane.b32.xlu0 %v853, 86
        %v1418 = vpop.permute.xlu0 %1417
        %1421 = vrot.lane.b32.xlu0 %v848, 80
        %v1422 = vpop.permute.xlu0 %1421
        %1423 = vrot.lane.b32.xlu0 %v853, 80
        %v1424 = vpop.permute.xlu0 %1423
        %1427 = vrot.lane.b32.xlu0 %v848, 74
        %v1428 = vpop.permute.xlu0 %1427
        %1429 = vrot.lane.b32.xlu0 %v853, 74
        %v1430 = vpop.permute.xlu0 %1429
        %1433 = vrot.lane.b32.xlu0 %v848, 68
        %v1434 = vpop.permute.xlu0 %1433
        %1435 = vrot.lane.b32.xlu0 %v853, 68
        %v1436 = vpop.permute.xlu0 %1435
        %1439 = vrot.lane.b32.xlu0 %v848, 62
        %v1440 = vpop.permute.xlu0 %1439
        %1441 = vrot.lane.b32.xlu0 %v853, 62
        %v1442 = vpop.permute.xlu0 %1441
        %1445 = vrot.lane.b32.xlu0 %v848, 56
        %v1446 = vpop.permute.xlu0 %1445
        %1447 = vrot.lane.b32.xlu0 %v853, 56
        %v1448 = vpop.permute.xlu0 %1447
        %1451 = vrot.lane.b32.xlu0 %v848, 50
        %v1452 = vpop.permute.xlu0 %1451
        %1453 = vrot.lane.b32.xlu0 %v853, 50
        %v1454 = vpop.permute.xlu0 %1453
        %1457 = vrot.lane.b32.xlu0 %v848, 44
        %v1458 = vpop.permute.xlu0 %1457
        %1459 = vrot.lane.b32.xlu0 %v853, 44
        %v1460 = vpop.permute.xlu0 %1459
        %1463 = vrot.lane.b32.xlu0 %v848, 38
        %v1464 = vpop.permute.xlu0 %1463
        %1465 = vrot.lane.b32.xlu0 %v853, 38
        %v1466 = vpop.permute.xlu0 %1465
        %vm1469 = vcmask 48128
        %v1470 = vsel %vm1469, %v1001, 0
        %v1472 = vsel %vm1469, %v1002, 0
        %v1474 = vsel %vm1469, %v967, 0
        %v1476 = vsel %vm1469, %v972, 0
        %v1478 = vsel %vm1469, %v977, 0
        %v1480 = vsel %vm1469, %v982, 0
        %1482 = vmatprep.subr.mxu0 0.0
        %1483 = vmatpush1.xpose.msra.mxu0 0.0
        %1484 = vmatprep.subr.mxu0 0.0
        %1485 = vmatpush1.xpose.msra.mxu0 0.0
        %1486 = vmatprep.subr.mxu0 0.0
        %1487 = vmatpush1.xpose.msra.mxu0 0.0
        %1488 = vmatprep.subr.mxu0 0.0
        %1489 = vmatpush1.xpose.msra.mxu0 0.0
        %1490 = vmatprep.subr.mxu0 0.0
        %1491 = vmatpush1.xpose.msra.mxu0 0.0
        %1492 = vmatprep.subr.mxu0 0.0
        %1493 = vmatpush1.xpose.msra.mxu0 0.0
        %1494 = vmatprep.subr.mxu0 0.0
        %1495 = vmatpush1.xpose.msra.mxu0 0.0
        %1496 = vmatprep.subr.mxu0 0.0
        %1497 = vmatpush1.xpose.msra.mxu0 0.0
        %1498 = vmatprep.subr.mxu0 0.0
        %1499 = vmatpush1.xpose.msra.mxu0 0.0
        %1500 = vmatprep.subr.mxu0 0.0
        %1501 = vmatpush1.xpose.msra.mxu0 0.0
        %1502 = vmatprep.subr.mxu0 0.0
        %1503 = vmatpush1.xpose.msra.mxu0 0.0
        %1504 = vmatprep.subr.mxu0 0.0
        %1505 = vmatpush1.xpose.msra.mxu0 0.0
        %1506 = vmatprep.subr.mxu0 0.0
        %1507 = vmatpush1.xpose.msra.mxu0 %v1480
        %1508 = vmatprep.subr.mxu0 0.0
        %1509 = vmatpush1.xpose.msra.mxu0 %v1478
        %1510 = vmatprep.subr.mxu0 0.0
        %1511 = vmatpush1.xpose.msra.mxu0 %v1476
        %1512 = vmatprep.subr.mxu0 0.0
        %1513 = vmatpush1.xpose.msra.mxu0 %v1474
        %1514 = vmatprep.subr.mxu0 0.0
        %1515 = vmatpush2.xpose.msra.mxu0 0.0
        %1516 = vmatprep.subr.mxu0 0.0
        %1517 = vmatpush2.xpose.msra.mxu0 0.0
        %1518 = vmatprep.subr.mxu0 0.0
        %1519 = vmatpush2.xpose.msra.mxu0 0.0
        %1520 = vmatprep.subr.mxu0 0.0
        %1521 = vmatpush2.xpose.msra.mxu0 0.0
        %1522 = vmatprep.subr.mxu0 0.0
        %1523 = vmatpush2.xpose.msra.mxu0 0.0
        %1524 = vmatprep.subr.mxu0 0.0
        %1525 = vmatpush2.xpose.msra.mxu0 0.0
        %1526 = vmatprep.subr.mxu0 0.0
        %1527 = vmatpush2.xpose.msra.mxu0 0.0
        %1528 = vmatprep.subr.mxu0 0.0
        %1529 = vmatpush2.xpose.msra.mxu0 0.0
        %1530 = vmatprep.subr.mxu0 0.0
        %1531 = vmatpush2.xpose.msra.mxu0 0.0
        %1532 = vmatprep.subr.mxu0 0.0
        %1533 = vmatpush2.xpose.msra.mxu0 0.0
        %1534 = vmatprep.subr.mxu0 0.0
        %1535 = vmatpush2.xpose.msra.mxu0 0.0
        %1536 = vmatprep.subr.mxu0 0.0
        %1537 = vmatpush2.xpose.msra.mxu0 0.0
        %1538 = vmatprep.subr.mxu0 0.0
        %1539 = vmatpush2.xpose.msra.mxu0 0.0
        %1540 = vmatprep.subr.mxu0 0.0
        %1541 = vmatpush2.xpose.msra.mxu0 0.0
        %1542 = vmatprep.subr.mxu0 0.0
        %1543 = vmatpush2.xpose.msra.mxu0 0.0
        %1544 = vmatprep.subr.mxu0 0.0
        %1545 = vmatpush2.xpose.msra.mxu0 0.0
        %1546 = vmatprep.mubr.f32.mxu0 0.0
        %1547 = vmatmul.mubr.f32.gmra.mxu0 %v1470
        %v1548 = vpop.f32.mrf.mxu0
        %v1549 = vadd.f32 0.0, %v1548
        %v1550 = vpop.f32.mrf.mxu0
        %1551 = vmatprep.mubr.f32.mxu0 0.0
        %1552 = vmatmul.mubr.f32.gmra.mxu0 %v1472
        %v1553 = vpop.f32.mrf.mxu0
        %v1554 = vadd.f32 0.0, %v1553
        %v1555 = vpop.f32.mrf.mxu0
        %1556 = vdwg.mxu0
        %v1557 = vsel %vm1469, %v1256, 0
        %v1559 = vsel %vm1469, %v1258, 0
        %v1561 = vsel %vm1469, %v1072, 0
        %v1563 = vsel %vm1469, %v1074, 0
        %v1565 = vsel %vm1469, %v1076, 0
        %v1567 = vsel %vm1469, %v1078, 0
        %1569 = vmatprep.subr.mxu0 0.0
        %1570 = vmatpush1.xpose.msra.mxu0 0.0
        %1571 = vmatprep.subr.mxu0 0.0
        %1572 = vmatpush1.xpose.msra.mxu0 0.0
        %1573 = vmatprep.subr.mxu0 0.0
        %1574 = vmatpush1.xpose.msra.mxu0 0.0
        %1575 = vmatprep.subr.mxu0 0.0
        %1576 = vmatpush1.xpose.msra.mxu0 0.0
        %1577 = vmatprep.subr.mxu0 0.0
        %1578 = vmatpush1.xpose.msra.mxu0 0.0
        %1579 = vmatprep.subr.mxu0 0.0
        %1580 = vmatpush1.xpose.msra.mxu0 0.0
        %1581 = vmatprep.subr.mxu0 0.0
        %1582 = vmatpush1.xpose.msra.mxu0 0.0
        %1583 = vmatprep.subr.mxu0 0.0
        %1584 = vmatpush1.xpose.msra.mxu0 0.0
        %1585 = vmatprep.subr.mxu0 0.0
        %1586 = vmatpush1.xpose.msra.mxu0 0.0
        %1587 = vmatprep.subr.mxu0 0.0
        %1588 = vmatpush1.xpose.msra.mxu0 0.0
        %1589 = vmatprep.subr.mxu0 0.0
        %1590 = vmatpush1.xpose.msra.mxu0 0.0
        %1591 = vmatprep.subr.mxu0 0.0
        %1592 = vmatpush1.xpose.msra.mxu0 0.0
        %1593 = vmatprep.subr.mxu0 0.0
        %1594 = vmatpush1.xpose.msra.mxu0 %v1567
        %1595 = vmatprep.subr.mxu0 0.0
        %1596 = vmatpush1.xpose.msra.mxu0 %v1565
        %1597 = vmatprep.subr.mxu0 0.0
        %1598 = vmatpush1.xpose.msra.mxu0 %v1563
        %1599 = vmatprep.subr.mxu0 0.0
        %1600 = vmatpush1.xpose.msra.mxu0 %v1561
        %1601 = vmatprep.subr.mxu0 0.0
        %1602 = vmatpush2.xpose.msra.mxu0 0.0
        %1603 = vmatprep.subr.mxu0 0.0
        %1604 = vmatpush2.xpose.msra.mxu0 0.0
        %1605 = vmatprep.subr.mxu0 0.0
        %1606 = vmatpush2.xpose.msra.mxu0 0.0
        %1607 = vmatprep.subr.mxu0 0.0
        %1608 = vmatpush2.xpose.msra.mxu0 0.0
        %1609 = vmatprep.subr.mxu0 0.0
        %1610 = vmatpush2.xpose.msra.mxu0 0.0
        %1611 = vmatprep.subr.mxu0 0.0
        %1612 = vmatpush2.xpose.msra.mxu0 0.0
        %1613 = vmatprep.subr.mxu0 0.0
        %1614 = vmatpush2.xpose.msra.mxu0 0.0
        %1615 = vmatprep.subr.mxu0 0.0
        %1616 = vmatpush2.xpose.msra.mxu0 0.0
        %1617 = vmatprep.subr.mxu0 0.0
        %1618 = vmatpush2.xpose.msra.mxu0 0.0
        %1619 = vmatprep.subr.mxu0 0.0
        %1620 = vmatpush2.xpose.msra.mxu0 0.0
        %1621 = vmatprep.subr.mxu0 0.0
        %1622 = vmatpush2.xpose.msra.mxu0 0.0
        %1623 = vmatprep.subr.mxu0 0.0
        %1624 = vmatpush2.xpose.msra.mxu0 0.0
        %1625 = vmatprep.subr.mxu0 0.0
        %1626 = vmatpush2.xpose.msra.mxu0 0.0
        %1627 = vmatprep.subr.mxu0 0.0
        %1628 = vmatpush2.xpose.msra.mxu0 0.0
        %1629 = vmatprep.subr.mxu0 0.0
        %1630 = vmatpush2.xpose.msra.mxu0 0.0
        %1631 = vmatprep.subr.mxu0 0.0
        %1632 = vmatpush2.xpose.msra.mxu0 0.0
        %1633 = vmatprep.mubr.f32.mxu0 0.0
        %1634 = vmatmul.mubr.f32.gmra.mxu0 %v1557
        %v1635 = vpop.f32.mrf.mxu0
        %v1636 = vadd.f32 0.0, %v1635
        %v1637 = vpop.f32.mrf.mxu0
        %1638 = vmatprep.mubr.f32.mxu0 0.0
        %1639 = vmatmul.mubr.f32.gmra.mxu0 %v1559
        %v1640 = vpop.f32.mrf.mxu0
        %v1641 = vadd.f32 0.0, %v1640
        %v1642 = vpop.f32.mrf.mxu0
        %1643 = vdwg.mxu0
        %v1644 = vsel %vm1469, %v1260, 0
        %v1646 = vsel %vm1469, %v1262, 0
        %v1648 = vsel %vm1469, %v1080, 0
        %v1650 = vsel %vm1469, %v1082, 0
        %v1652 = vsel %vm1469, %v1084, 0
        %v1654 = vsel %vm1469, %v1086, 0
        %1656 = vmatprep.subr.mxu0 0.0
        %1657 = vmatpush1.xpose.msra.mxu0 0.0
        %1658 = vmatprep.subr.mxu0 0.0
        %1659 = vmatpush1.xpose.msra.mxu0 0.0
        %1660 = vmatprep.subr.mxu0 0.0
        %1661 = vmatpush1.xpose.msra.mxu0 0.0
        %1662 = vmatprep.subr.mxu0 0.0
        %1663 = vmatpush1.xpose.msra.mxu0 0.0
        %1664 = vmatprep.subr.mxu0 0.0
        %1665 = vmatpush1.xpose.msra.mxu0 0.0
        %1666 = vmatprep.subr.mxu0 0.0
        %1667 = vmatpush1.xpose.msra.mxu0 0.0
        %1668 = vmatprep.subr.mxu0 0.0
        %1669 = vmatpush1.xpose.msra.mxu0 0.0
        %1670 = vmatprep.subr.mxu0 0.0
        %1671 = vmatpush1.xpose.msra.mxu0 0.0
        %1672 = vmatprep.subr.mxu0 0.0
        %1673 = vmatpush1.xpose.msra.mxu0 0.0
        %1674 = vmatprep.subr.mxu0 0.0
        %1675 = vmatpush1.xpose.msra.mxu0 0.0
        %1676 = vmatprep.subr.mxu0 0.0
        %1677 = vmatpush1.xpose.msra.mxu0 0.0
        %1678 = vmatprep.subr.mxu0 0.0
        %1679 = vmatpush1.xpose.msra.mxu0 0.0
        %1680 = vmatprep.subr.mxu0 0.0
        %1681 = vmatpush1.xpose.msra.mxu0 %v1654
        %1682 = vmatprep.subr.mxu0 0.0
        %1683 = vmatpush1.xpose.msra.mxu0 %v1652
        %1684 = vmatprep.subr.mxu0 0.0
        %1685 = vmatpush1.xpose.msra.mxu0 %v1650
        %1686 = vmatprep.subr.mxu0 0.0
        %1687 = vmatpush1.xpose.msra.mxu0 %v1648
        %1688 = vmatprep.subr.mxu0 0.0
        %1689 = vmatpush2.xpose.msra.mxu0 0.0
        %1690 = vmatprep.subr.mxu0 0.0
        %1691 = vmatpush2.xpose.msra.mxu0 0.0
        %1692 = vmatprep.subr.mxu0 0.0
        %1693 = vmatpush2.xpose.msra.mxu0 0.0
        %1694 = vmatprep.subr.mxu0 0.0
        %1695 = vmatpush2.xpose.msra.mxu0 0.0
        %1696 = vmatprep.subr.mxu0 0.0
        %1697 = vmatpush2.xpose.msra.mxu0 0.0
        %1698 = vmatprep.subr.mxu0 0.0
        %1699 = vmatpush2.xpose.msra.mxu0 0.0
        %1700 = vmatprep.subr.mxu0 0.0
        %1701 = vmatpush2.xpose.msra.mxu0 0.0
        %1702 = vmatprep.subr.mxu0 0.0
        %1703 = vmatpush2.xpose.msra.mxu0 0.0
        %1704 = vmatprep.subr.mxu0 0.0
        %1705 = vmatpush2.xpose.msra.mxu0 0.0
        %1706 = vmatprep.subr.mxu0 0.0
        %1707 = vmatpush2.xpose.msra.mxu0 0.0
        %1708 = vmatprep.subr.mxu0 0.0
        %1709 = vmatpush2.xpose.msra.mxu0 0.0
        %1710 = vmatprep.subr.mxu0 0.0
        %1711 = vmatpush2.xpose.msra.mxu0 0.0
        %1712 = vmatprep.subr.mxu0 0.0
        %1713 = vmatpush2.xpose.msra.mxu0 0.0
        %1714 = vmatprep.subr.mxu0 0.0
        %1715 = vmatpush2.xpose.msra.mxu0 0.0
        %1716 = vmatprep.subr.mxu0 0.0
        %1717 = vmatpush2.xpose.msra.mxu0 0.0
        %1718 = vmatprep.subr.mxu0 0.0
        %1719 = vmatpush2.xpose.msra.mxu0 0.0
        %1720 = vmatprep.mubr.f32.mxu0 0.0
        %1721 = vmatmul.mubr.f32.gmra.mxu0 %v1644
        %v1722 = vpop.f32.mrf.mxu0
        %v1723 = vadd.f32 0.0, %v1722
        %v1724 = vpop.f32.mrf.mxu0
        %1725 = vmatprep.mubr.f32.mxu0 0.0
        %1726 = vmatmul.mubr.f32.gmra.mxu0 %v1646
        %v1727 = vpop.f32.mrf.mxu0
        %v1728 = vadd.f32 0.0, %v1727
        %v1729 = vpop.f32.mrf.mxu0
        %1730 = vdwg.mxu0
        %v1731 = vsel %vm1469, %v1264, 0
        %v1733 = vsel %vm1469, %v1266, 0
        %v1735 = vsel %vm1469, %v1088, 0
        %v1737 = vsel %vm1469, %v1090, 0
        %v1739 = vsel %vm1469, %v1092, 0
        %v1741 = vsel %vm1469, %v1094, 0
        %1743 = vmatprep.subr.mxu0 0.0
        %1744 = vmatpush1.xpose.msra.mxu0 0.0
        %1745 = vmatprep.subr.mxu0 0.0
        %1746 = vmatpush1.xpose.msra.mxu0 0.0
        %1747 = vmatprep.subr.mxu0 0.0
        %1748 = vmatpush1.xpose.msra.mxu0 0.0
        %1749 = vmatprep.subr.mxu0 0.0
        %1750 = vmatpush1.xpose.msra.mxu0 0.0
        %1751 = vmatprep.subr.mxu0 0.0
        %1752 = vmatpush1.xpose.msra.mxu0 0.0
        %1753 = vmatprep.subr.mxu0 0.0
        %1754 = vmatpush1.xpose.msra.mxu0 0.0
        %1755 = vmatprep.subr.mxu0 0.0
        %1756 = vmatpush1.xpose.msra.mxu0 0.0
        %1757 = vmatprep.subr.mxu0 0.0
        %1758 = vmatpush1.xpose.msra.mxu0 0.0
        %1759 = vmatprep.subr.mxu0 0.0
        %1760 = vmatpush1.xpose.msra.mxu0 0.0
        %1761 = vmatprep.subr.mxu0 0.0
        %1762 = vmatpush1.xpose.msra.mxu0 0.0
        %1763 = vmatprep.subr.mxu0 0.0
        %1764 = vmatpush1.xpose.msra.mxu0 0.0
        %1765 = vmatprep.subr.mxu0 0.0
        %1766 = vmatpush1.xpose.msra.mxu0 0.0
        %1767 = vmatprep.subr.mxu0 0.0
        %1768 = vmatpush1.xpose.msra.mxu0 %v1741
        %1769 = vmatprep.subr.mxu0 0.0
        %1770 = vmatpush1.xpose.msra.mxu0 %v1739
        %1771 = vmatprep.subr.mxu0 0.0
        %1772 = vmatpush1.xpose.msra.mxu0 %v1737
        %1773 = vmatprep.subr.mxu0 0.0
        %1774 = vmatpush1.xpose.msra.mxu0 %v1735
        %1775 = vmatprep.subr.mxu0 0.0
        %1776 = vmatpush2.xpose.msra.mxu0 0.0
        %1777 = vmatprep.subr.mxu0 0.0
        %1778 = vmatpush2.xpose.msra.mxu0 0.0
        %1779 = vmatprep.subr.mxu0 0.0
        %1780 = vmatpush2.xpose.msra.mxu0 0.0
        %1781 = vmatprep.subr.mxu0 0.0
        %1782 = vmatpush2.xpose.msra.mxu0 0.0
        %1783 = vmatprep.subr.mxu0 0.0
        %1784 = vmatpush2.xpose.msra.mxu0 0.0
        %1785 = vmatprep.subr.mxu0 0.0
        %1786 = vmatpush2.xpose.msra.mxu0 0.0
        %1787 = vmatprep.subr.mxu0 0.0
        %1788 = vmatpush2.xpose.msra.mxu0 0.0
        %1789 = vmatprep.subr.mxu0 0.0
        %1790 = vmatpush2.xpose.msra.mxu0 0.0
        %1791 = vmatprep.subr.mxu0 0.0
        %1792 = vmatpush2.xpose.msra.mxu0 0.0
        %1793 = vmatprep.subr.mxu0 0.0
        %1794 = vmatpush2.xpose.msra.mxu0 0.0
        %1795 = vmatprep.subr.mxu0 0.0
        %1796 = vmatpush2.xpose.msra.mxu0 0.0
        %1797 = vmatprep.subr.mxu0 0.0
        %1798 = vmatpush2.xpose.msra.mxu0 0.0
        %1799 = vmatprep.subr.mxu0 0.0
        %1800 = vmatpush2.xpose.msra.mxu0 0.0
        %1801 = vmatprep.subr.mxu0 0.0
        %1802 = vmatpush2.xpose.msra.mxu0 0.0
        %1803 = vmatprep.subr.mxu0 0.0
        %1804 = vmatpush2.xpose.msra.mxu0 0.0
        %1805 = vmatprep.subr.mxu0 0.0
        %1806 = vmatpush2.xpose.msra.mxu0 0.0
        %1807 = vmatprep.mubr.f32.mxu0 0.0
        %1808 = vmatmul.mubr.f32.gmra.mxu0 %v1731
        %v1809 = vpop.f32.mrf.mxu0
        %v1810 = vadd.f32 0.0, %v1809
        %v1811 = vpop.f32.mrf.mxu0
        %1812 = vmatprep.mubr.f32.mxu0 0.0
        %1813 = vmatmul.mubr.f32.gmra.mxu0 %v1733
        %v1814 = vpop.f32.mrf.mxu0
        %v1815 = vadd.f32 0.0, %v1814
        %v1816 = vpop.f32.mrf.mxu0
        %1817 = vdwg.mxu0
        %v1818 = vsel %vm1469, %v1268, 0
        %v1820 = vsel %vm1469, %v1270, 0
        %v1822 = vsel %vm1469, %v1096, 0
        %v1824 = vsel %vm1469, %v1098, 0
        %v1826 = vsel %vm1469, %v1100, 0
        %v1828 = vsel %vm1469, %v1102, 0
        %1830 = vmatprep.subr.mxu0 0.0
        %1831 = vmatpush1.xpose.msra.mxu0 0.0
        %1832 = vmatprep.subr.mxu0 0.0
        %1833 = vmatpush1.xpose.msra.mxu0 0.0
        %1834 = vmatprep.subr.mxu0 0.0
        %1835 = vmatpush1.xpose.msra.mxu0 0.0
        %1836 = vmatprep.subr.mxu0 0.0
        %1837 = vmatpush1.xpose.msra.mxu0 0.0
        %1838 = vmatprep.subr.mxu0 0.0
        %1839 = vmatpush1.xpose.msra.mxu0 0.0
        %1840 = vmatprep.subr.mxu0 0.0
        %1841 = vmatpush1.xpose.msra.mxu0 0.0
        %1842 = vmatprep.subr.mxu0 0.0
        %1843 = vmatpush1.xpose.msra.mxu0 0.0
        %1844 = vmatprep.subr.mxu0 0.0
        %1845 = vmatpush1.xpose.msra.mxu0 0.0
        %1846 = vmatprep.subr.mxu0 0.0
        %1847 = vmatpush1.xpose.msra.mxu0 0.0
        %1848 = vmatprep.subr.mxu0 0.0
        %1849 = vmatpush1.xpose.msra.mxu0 0.0
        %1850 = vmatprep.subr.mxu0 0.0
        %1851 = vmatpush1.xpose.msra.mxu0 0.0
        %1852 = vmatprep.subr.mxu0 0.0
        %1853 = vmatpush1.xpose.msra.mxu0 0.0
        %1854 = vmatprep.subr.mxu0 0.0
        %1855 = vmatpush1.xpose.msra.mxu0 %v1828
        %1856 = vmatprep.subr.mxu0 0.0
        %1857 = vmatpush1.xpose.msra.mxu0 %v1826
        %1858 = vmatprep.subr.mxu0 0.0
        %1859 = vmatpush1.xpose.msra.mxu0 %v1824
        %1860 = vmatprep.subr.mxu0 0.0
        %1861 = vmatpush1.xpose.msra.mxu0 %v1822
        %1862 = vmatprep.subr.mxu0 0.0
        %1863 = vmatpush2.xpose.msra.mxu0 0.0
        %1864 = vmatprep.subr.mxu0 0.0
        %1865 = vmatpush2.xpose.msra.mxu0 0.0
        %1866 = vmatprep.subr.mxu0 0.0
        %1867 = vmatpush2.xpose.msra.mxu0 0.0
        %1868 = vmatprep.subr.mxu0 0.0
        %1869 = vmatpush2.xpose.msra.mxu0 0.0
        %1870 = vmatprep.subr.mxu0 0.0
        %1871 = vmatpush2.xpose.msra.mxu0 0.0
        %1872 = vmatprep.subr.mxu0 0.0
        %1873 = vmatpush2.xpose.msra.mxu0 0.0
        %1874 = vmatprep.subr.mxu0 0.0
        %1875 = vmatpush2.xpose.msra.mxu0 0.0
        %1876 = vmatprep.subr.mxu0 0.0
        %1877 = vmatpush2.xpose.msra.mxu0 0.0
        %1878 = vmatprep.subr.mxu0 0.0
        %1879 = vmatpush2.xpose.msra.mxu0 0.0
        %1880 = vmatprep.subr.mxu0 0.0
        %1881 = vmatpush2.xpose.msra.mxu0 0.0
        %1882 = vmatprep.subr.mxu0 0.0
        %1883 = vmatpush2.xpose.msra.mxu0 0.0
        %1884 = vmatprep.subr.mxu0 0.0
        %1885 = vmatpush2.xpose.msra.mxu0 0.0
        %1886 = vmatprep.subr.mxu0 0.0
        %1887 = vmatpush2.xpose.msra.mxu0 0.0
        %1888 = vmatprep.subr.mxu0 0.0
        %1889 = vmatpush2.xpose.msra.mxu0 0.0
        %1890 = vmatprep.subr.mxu0 0.0
        %1891 = vmatpush2.xpose.msra.mxu0 0.0
        %1892 = vmatprep.subr.mxu0 0.0
        %1893 = vmatpush2.xpose.msra.mxu0 0.0
        %1894 = vmatprep.mubr.f32.mxu0 0.0
        %1895 = vmatmul.mubr.f32.gmra.mxu0 %v1818
        %v1896 = vpop.f32.mrf.mxu0
        %v1897 = vadd.f32 0.0, %v1896
        %v1898 = vpop.f32.mrf.mxu0
        %1899 = vmatprep.mubr.f32.mxu0 0.0
        %1900 = vmatmul.mubr.f32.gmra.mxu0 %v1820
        %v1901 = vpop.f32.mrf.mxu0
        %v1902 = vadd.f32 0.0, %v1901
        %v1903 = vpop.f32.mrf.mxu0
        %1904 = vdwg.mxu0
        %v1905 = vsel %vm1469, %v1272, 0
        %v1907 = vsel %vm1469, %v1274, 0
        %v1909 = vsel %vm1469, %v1104, 0
        %v1911 = vsel %vm1469, %v1106, 0
        %v1913 = vsel %vm1469, %v1108, 0
        %v1915 = vsel %vm1469, %v1110, 0
        %1917 = vmatprep.subr.mxu0 0.0
        %1918 = vmatpush1.xpose.msra.mxu0 0.0
        %1919 = vmatprep.subr.mxu0 0.0
        %1920 = vmatpush1.xpose.msra.mxu0 0.0
        %1921 = vmatprep.subr.mxu0 0.0
        %1922 = vmatpush1.xpose.msra.mxu0 0.0
        %1923 = vmatprep.subr.mxu0 0.0
        %1924 = vmatpush1.xpose.msra.mxu0 0.0
        %1925 = vmatprep.subr.mxu0 0.0
        %1926 = vmatpush1.xpose.msra.mxu0 0.0
        %1927 = vmatprep.subr.mxu0 0.0
        %1928 = vmatpush1.xpose.msra.mxu0 0.0
        %1929 = vmatprep.subr.mxu0 0.0
        %1930 = vmatpush1.xpose.msra.mxu0 0.0
        %1931 = vmatprep.subr.mxu0 0.0
        %1932 = vmatpush1.xpose.msra.mxu0 0.0
        %1933 = vmatprep.subr.mxu0 0.0
        %1934 = vmatpush1.xpose.msra.mxu0 0.0
        %1935 = vmatprep.subr.mxu0 0.0
        %1936 = vmatpush1.xpose.msra.mxu0 0.0
        %1937 = vmatprep.subr.mxu0 0.0
        %1938 = vmatpush1.xpose.msra.mxu0 0.0
        %1939 = vmatprep.subr.mxu0 0.0
        %1940 = vmatpush1.xpose.msra.mxu0 0.0
        %1941 = vmatprep.subr.mxu0 0.0
        %1942 = vmatpush1.xpose.msra.mxu0 %v1915
        %1943 = vmatprep.subr.mxu0 0.0
        %1944 = vmatpush1.xpose.msra.mxu0 %v1913
        %1945 = vmatprep.subr.mxu0 0.0
        %1946 = vmatpush1.xpose.msra.mxu0 %v1911
        %1947 = vmatprep.subr.mxu0 0.0
        %1948 = vmatpush1.xpose.msra.mxu0 %v1909
        %1949 = vmatprep.subr.mxu0 0.0
        %1950 = vmatpush2.xpose.msra.mxu0 0.0
        %1951 = vmatprep.subr.mxu0 0.0
        %1952 = vmatpush2.xpose.msra.mxu0 0.0
        %1953 = vmatprep.subr.mxu0 0.0
        %1954 = vmatpush2.xpose.msra.mxu0 0.0
        %1955 = vmatprep.subr.mxu0 0.0
        %1956 = vmatpush2.xpose.msra.mxu0 0.0
        %1957 = vmatprep.subr.mxu0 0.0
        %1958 = vmatpush2.xpose.msra.mxu0 0.0
        %1959 = vmatprep.subr.mxu0 0.0
        %1960 = vmatpush2.xpose.msra.mxu0 0.0
        %1961 = vmatprep.subr.mxu0 0.0
        %1962 = vmatpush2.xpose.msra.mxu0 0.0
        %1963 = vmatprep.subr.mxu0 0.0
        %1964 = vmatpush2.xpose.msra.mxu0 0.0
        %1965 = vmatprep.subr.mxu0 0.0
        %1966 = vmatpush2.xpose.msra.mxu0 0.0
        %1967 = vmatprep.subr.mxu0 0.0
        %1968 = vmatpush2.xpose.msra.mxu0 0.0
        %1969 = vmatprep.subr.mxu0 0.0
        %1970 = vmatpush2.xpose.msra.mxu0 0.0
        %1971 = vmatprep.subr.mxu0 0.0
        %1972 = vmatpush2.xpose.msra.mxu0 0.0
        %1973 = vmatprep.subr.mxu0 0.0
        %1974 = vmatpush2.xpose.msra.mxu0 0.0
        %1975 = vmatprep.subr.mxu0 0.0
        %1976 = vmatpush2.xpose.msra.mxu0 0.0
        %1977 = vmatprep.subr.mxu0 0.0
        %1978 = vmatpush2.xpose.msra.mxu0 0.0
        %1979 = vmatprep.subr.mxu0 0.0
        %1980 = vmatpush2.xpose.msra.mxu0 0.0
        %1981 = vmatprep.mubr.f32.mxu0 0.0
        %1982 = vmatmul.mubr.f32.gmra.mxu0 %v1905
        %v1983 = vpop.f32.mrf.mxu0
        %v1984 = vadd.f32 0.0, %v1983
        %v1985 = vpop.f32.mrf.mxu0
        %1986 = vmatprep.mubr.f32.mxu0 0.0
        %1987 = vmatmul.mubr.f32.gmra.mxu0 %v1907
        %v1988 = vpop.f32.mrf.mxu0
        %v1989 = vadd.f32 0.0, %v1988
        %v1990 = vpop.f32.mrf.mxu0
        %1991 = vdwg.mxu0
        %v1992 = vsel %vm1469, %v1276, 0
        %v1994 = vsel %vm1469, %v1278, 0
        %v1996 = vsel %vm1469, %v1112, 0
        %v1998 = vsel %vm1469, %v1114, 0
        %v2000 = vsel %vm1469, %v1116, 0
        %v2002 = vsel %vm1469, %v1118, 0
        %2004 = vmatprep.subr.mxu0 0.0
        %2005 = vmatpush1.xpose.msra.mxu0 0.0
        %2006 = vmatprep.subr.mxu0 0.0
        %2007 = vmatpush1.xpose.msra.mxu0 0.0
        %2008 = vmatprep.subr.mxu0 0.0
        %2009 = vmatpush1.xpose.msra.mxu0 0.0
        %2010 = vmatprep.subr.mxu0 0.0
        %2011 = vmatpush1.xpose.msra.mxu0 0.0
        %2012 = vmatprep.subr.mxu0 0.0
        %2013 = vmatpush1.xpose.msra.mxu0 0.0
        %2014 = vmatprep.subr.mxu0 0.0
        %2015 = vmatpush1.xpose.msra.mxu0 0.0
        %2016 = vmatprep.subr.mxu0 0.0
        %2017 = vmatpush1.xpose.msra.mxu0 0.0
        %2018 = vmatprep.subr.mxu0 0.0
        %2019 = vmatpush1.xpose.msra.mxu0 0.0
        %2020 = vmatprep.subr.mxu0 0.0
        %2021 = vmatpush1.xpose.msra.mxu0 0.0
        %2022 = vmatprep.subr.mxu0 0.0
        %2023 = vmatpush1.xpose.msra.mxu0 0.0
        %2024 = vmatprep.subr.mxu0 0.0
        %2025 = vmatpush1.xpose.msra.mxu0 0.0
        %2026 = vmatprep.subr.mxu0 0.0
        %2027 = vmatpush1.xpose.msra.mxu0 0.0
        %2028 = vmatprep.subr.mxu0 0.0
        %2029 = vmatpush1.xpose.msra.mxu0 %v2002
        %2030 = vmatprep.subr.mxu0 0.0
        %2031 = vmatpush1.xpose.msra.mxu0 %v2000
        %2032 = vmatprep.subr.mxu0 0.0
        %2033 = vmatpush1.xpose.msra.mxu0 %v1998
        %2034 = vmatprep.subr.mxu0 0.0
        %2035 = vmatpush1.xpose.msra.mxu0 %v1996
        %2036 = vmatprep.subr.mxu0 0.0
        %2037 = vmatpush2.xpose.msra.mxu0 0.0
        %2038 = vmatprep.subr.mxu0 0.0
        %2039 = vmatpush2.xpose.msra.mxu0 0.0
        %2040 = vmatprep.subr.mxu0 0.0
        %2041 = vmatpush2.xpose.msra.mxu0 0.0
        %2042 = vmatprep.subr.mxu0 0.0
        %2043 = vmatpush2.xpose.msra.mxu0 0.0
        %2044 = vmatprep.subr.mxu0 0.0
        %2045 = vmatpush2.xpose.msra.mxu0 0.0
        %2046 = vmatprep.subr.mxu0 0.0
        %2047 = vmatpush2.xpose.msra.mxu0 0.0
        %2048 = vmatprep.subr.mxu0 0.0
        %2049 = vmatpush2.xpose.msra.mxu0 0.0
        %2050 = vmatprep.subr.mxu0 0.0
        %2051 = vmatpush2.xpose.msra.mxu0 0.0
        %2052 = vmatprep.subr.mxu0 0.0
        %2053 = vmatpush2.xpose.msra.mxu0 0.0
        %2054 = vmatprep.subr.mxu0 0.0
        %2055 = vmatpush2.xpose.msra.mxu0 0.0
        %2056 = vmatprep.subr.mxu0 0.0
        %2057 = vmatpush2.xpose.msra.mxu0 0.0
        %2058 = vmatprep.subr.mxu0 0.0
        %2059 = vmatpush2.xpose.msra.mxu0 0.0
        %2060 = vmatprep.subr.mxu0 0.0
        %2061 = vmatpush2.xpose.msra.mxu0 0.0
        %2062 = vmatprep.subr.mxu0 0.0
        %2063 = vmatpush2.xpose.msra.mxu0 0.0
        %2064 = vmatprep.subr.mxu0 0.0
        %2065 = vmatpush2.xpose.msra.mxu0 0.0
        %2066 = vmatprep.subr.mxu0 0.0
        %2067 = vmatpush2.xpose.msra.mxu0 0.0
        %2068 = vmatprep.mubr.f32.mxu0 0.0
        %2069 = vmatmul.mubr.f32.gmra.mxu0 %v1992
        %v2070 = vpop.f32.mrf.mxu0
        %v2071 = vadd.f32 0.0, %v2070
        %v2072 = vpop.f32.mrf.mxu0
        %2073 = vmatprep.mubr.f32.mxu0 0.0
        %2074 = vmatmul.mubr.f32.gmra.mxu0 %v1994
        %v2075 = vpop.f32.mrf.mxu0
        %v2076 = vadd.f32 0.0, %v2075
        %v2077 = vpop.f32.mrf.mxu0
        %2078 = vdwg.mxu0
        %v2079 = vsel %vm1469, %v1280, 0
        %v2081 = vsel %vm1469, %v1282, 0
        %v2083 = vsel %vm1469, %v1120, 0
        %v2085 = vsel %vm1469, %v1122, 0
        %v2087 = vsel %vm1469, %v1124, 0
        %v2089 = vsel %vm1469, %v1126, 0
        %2091 = vmatprep.subr.mxu0 0.0
        %2092 = vmatpush1.xpose.msra.mxu0 0.0
        %2093 = vmatprep.subr.mxu0 0.0
        %2094 = vmatpush1.xpose.msra.mxu0 0.0
        %2095 = vmatprep.subr.mxu0 0.0
        %2096 = vmatpush1.xpose.msra.mxu0 0.0
        %2097 = vmatprep.subr.mxu0 0.0
        %2098 = vmatpush1.xpose.msra.mxu0 0.0
        %2099 = vmatprep.subr.mxu0 0.0
        %2100 = vmatpush1.xpose.msra.mxu0 0.0
        %2101 = vmatprep.subr.mxu0 0.0
        %2102 = vmatpush1.xpose.msra.mxu0 0.0
        %2103 = vmatprep.subr.mxu0 0.0
        %2104 = vmatpush1.xpose.msra.mxu0 0.0
        %2105 = vmatprep.subr.mxu0 0.0
        %2106 = vmatpush1.xpose.msra.mxu0 0.0
        %2107 = vmatprep.subr.mxu0 0.0
        %2108 = vmatpush1.xpose.msra.mxu0 0.0
        %2109 = vmatprep.subr.mxu0 0.0
        %2110 = vmatpush1.xpose.msra.mxu0 0.0
        %2111 = vmatprep.subr.mxu0 0.0
        %2112 = vmatpush1.xpose.msra.mxu0 0.0
        %2113 = vmatprep.subr.mxu0 0.0
        %2114 = vmatpush1.xpose.msra.mxu0 0.0
        %2115 = vmatprep.subr.mxu0 0.0
        %2116 = vmatpush1.xpose.msra.mxu0 %v2089
        %2117 = vmatprep.subr.mxu0 0.0
        %2118 = vmatpush1.xpose.msra.mxu0 %v2087
        %2119 = vmatprep.subr.mxu0 0.0
        %2120 = vmatpush1.xpose.msra.mxu0 %v2085
        %2121 = vmatprep.subr.mxu0 0.0
        %2122 = vmatpush1.xpose.msra.mxu0 %v2083
        %2123 = vmatprep.subr.mxu0 0.0
        %2124 = vmatpush2.xpose.msra.mxu0 0.0
        %2125 = vmatprep.subr.mxu0 0.0
        %2126 = vmatpush2.xpose.msra.mxu0 0.0
        %2127 = vmatprep.subr.mxu0 0.0
        %2128 = vmatpush2.xpose.msra.mxu0 0.0
        %2129 = vmatprep.subr.mxu0 0.0
        %2130 = vmatpush2.xpose.msra.mxu0 0.0
        %2131 = vmatprep.subr.mxu0 0.0
        %2132 = vmatpush2.xpose.msra.mxu0 0.0
        %2133 = vmatprep.subr.mxu0 0.0
        %2134 = vmatpush2.xpose.msra.mxu0 0.0
        %2135 = vmatprep.subr.mxu0 0.0
        %2136 = vmatpush2.xpose.msra.mxu0 0.0
        %2137 = vmatprep.subr.mxu0 0.0
        %2138 = vmatpush2.xpose.msra.mxu0 0.0
        %2139 = vmatprep.subr.mxu0 0.0
        %2140 = vmatpush2.xpose.msra.mxu0 0.0
        %2141 = vmatprep.subr.mxu0 0.0
        %2142 = vmatpush2.xpose.msra.mxu0 0.0
        %2143 = vmatprep.subr.mxu0 0.0
        %2144 = vmatpush2.xpose.msra.mxu0 0.0
        %2145 = vmatprep.subr.mxu0 0.0
        %2146 = vmatpush2.xpose.msra.mxu0 0.0
        %2147 = vmatprep.subr.mxu0 0.0
        %2148 = vmatpush2.xpose.msra.mxu0 0.0
        %2149 = vmatprep.subr.mxu0 0.0
        %2150 = vmatpush2.xpose.msra.mxu0 0.0
        %2151 = vmatprep.subr.mxu0 0.0
        %2152 = vmatpush2.xpose.msra.mxu0 0.0
        %2153 = vmatprep.subr.mxu0 0.0
        %2154 = vmatpush2.xpose.msra.mxu0 0.0
        %2155 = vmatprep.mubr.f32.mxu0 0.0
        %2156 = vmatmul.mubr.f32.gmra.mxu0 %v2079
        %v2157 = vpop.f32.mrf.mxu0
        %v2158 = vadd.f32 0.0, %v2157
        %v2159 = vpop.f32.mrf.mxu0
        %2160 = vmatprep.mubr.f32.mxu0 0.0
        %2161 = vmatmul.mubr.f32.gmra.mxu0 %v2081
        %v2162 = vpop.f32.mrf.mxu0
        %v2163 = vadd.f32 0.0, %v2162
        %v2164 = vpop.f32.mrf.mxu0
        %2165 = vdwg.mxu0
        %v2166 = vsel %vm1469, %v1284, 0
        %v2168 = vsel %vm1469, %v1286, 0
        %v2170 = vsel %vm1469, %v1128, 0
        %v2172 = vsel %vm1469, %v1130, 0
        %v2174 = vsel %vm1469, %v1132, 0
        %v2176 = vsel %vm1469, %v1134, 0
        %2178 = vmatprep.subr.mxu0 0.0
        %2179 = vmatpush1.xpose.msra.mxu0 0.0
        %2180 = vmatprep.subr.mxu0 0.0
        %2181 = vmatpush1.xpose.msra.mxu0 0.0
        %2182 = vmatprep.subr.mxu0 0.0
        %2183 = vmatpush1.xpose.msra.mxu0 0.0
        %2184 = vmatprep.subr.mxu0 0.0
        %2185 = vmatpush1.xpose.msra.mxu0 0.0
        %2186 = vmatprep.subr.mxu0 0.0
        %2187 = vmatpush1.xpose.msra.mxu0 0.0
        %2188 = vmatprep.subr.mxu0 0.0
        %2189 = vmatpush1.xpose.msra.mxu0 0.0
        %2190 = vmatprep.subr.mxu0 0.0
        %2191 = vmatpush1.xpose.msra.mxu0 0.0
        %2192 = vmatprep.subr.mxu0 0.0
        %2193 = vmatpush1.xpose.msra.mxu0 0.0
        %2194 = vmatprep.subr.mxu0 0.0
        %2195 = vmatpush1.xpose.msra.mxu0 0.0
        %2196 = vmatprep.subr.mxu0 0.0
        %2197 = vmatpush1.xpose.msra.mxu0 0.0
        %2198 = vmatprep.subr.mxu0 0.0
        %2199 = vmatpush1.xpose.msra.mxu0 0.0
        %2200 = vmatprep.subr.mxu0 0.0
        %2201 = vmatpush1.xpose.msra.mxu0 0.0
        %2202 = vmatprep.subr.mxu0 0.0
        %2203 = vmatpush1.xpose.msra.mxu0 %v2176
        %2204 = vmatprep.subr.mxu0 0.0
        %2205 = vmatpush1.xpose.msra.mxu0 %v2174
        %2206 = vmatprep.subr.mxu0 0.0
        %2207 = vmatpush1.xpose.msra.mxu0 %v2172
        %2208 = vmatprep.subr.mxu0 0.0
        %2209 = vmatpush1.xpose.msra.mxu0 %v2170
        %2210 = vmatprep.subr.mxu0 0.0
        %2211 = vmatpush2.xpose.msra.mxu0 0.0
        %2212 = vmatprep.subr.mxu0 0.0
        %2213 = vmatpush2.xpose.msra.mxu0 0.0
        %2214 = vmatprep.subr.mxu0 0.0
        %2215 = vmatpush2.xpose.msra.mxu0 0.0
        %2216 = vmatprep.subr.mxu0 0.0
        %2217 = vmatpush2.xpose.msra.mxu0 0.0
        %2218 = vmatprep.subr.mxu0 0.0
        %2219 = vmatpush2.xpose.msra.mxu0 0.0
        %2220 = vmatprep.subr.mxu0 0.0
        %2221 = vmatpush2.xpose.msra.mxu0 0.0
        %2222 = vmatprep.subr.mxu0 0.0
        %2223 = vmatpush2.xpose.msra.mxu0 0.0
        %2224 = vmatprep.subr.mxu0 0.0
        %2225 = vmatpush2.xpose.msra.mxu0 0.0
        %2226 = vmatprep.subr.mxu0 0.0
        %2227 = vmatpush2.xpose.msra.mxu0 0.0
        %2228 = vmatprep.subr.mxu0 0.0
        %2229 = vmatpush2.xpose.msra.mxu0 0.0
        %2230 = vmatprep.subr.mxu0 0.0
        %2231 = vmatpush2.xpose.msra.mxu0 0.0
        %2232 = vmatprep.subr.mxu0 0.0
        %2233 = vmatpush2.xpose.msra.mxu0 0.0
        %2234 = vmatprep.subr.mxu0 0.0
        %2235 = vmatpush2.xpose.msra.mxu0 0.0
        %2236 = vmatprep.subr.mxu0 0.0
        %2237 = vmatpush2.xpose.msra.mxu0 0.0
        %2238 = vmatprep.subr.mxu0 0.0
        %2239 = vmatpush2.xpose.msra.mxu0 0.0
        %2240 = vmatprep.subr.mxu0 0.0
        %2241 = vmatpush2.xpose.msra.mxu0 0.0
        %2242 = vmatprep.mubr.f32.mxu0 0.0
        %2243 = vmatmul.mubr.f32.gmra.mxu0 %v2166
        %v2244 = vpop.f32.mrf.mxu0
        %v2245 = vadd.f32 0.0, %v2244
        %v2246 = vpop.f32.mrf.mxu0
        %2247 = vmatprep.mubr.f32.mxu0 0.0
        %2248 = vmatmul.mubr.f32.gmra.mxu0 %v2168
        %v2249 = vpop.f32.mrf.mxu0
        %v2250 = vadd.f32 0.0, %v2249
        %v2251 = vpop.f32.mrf.mxu0
        %2252 = vdwg.mxu0
        %v2253 = vsel %vm1469, %v1288, 0
        %v2255 = vsel %vm1469, %v1290, 0
        %v2257 = vsel %vm1469, %v1136, 0
        %v2259 = vsel %vm1469, %v1138, 0
        %v2261 = vsel %vm1469, %v1140, 0
        %v2263 = vsel %vm1469, %v1142, 0
        %2265 = vmatprep.subr.mxu0 0.0
        %2266 = vmatpush1.xpose.msra.mxu0 0.0
        %2267 = vmatprep.subr.mxu0 0.0
        %2268 = vmatpush1.xpose.msra.mxu0 0.0
        %2269 = vmatprep.subr.mxu0 0.0
        %2270 = vmatpush1.xpose.msra.mxu0 0.0
        %2271 = vmatprep.subr.mxu0 0.0
        %2272 = vmatpush1.xpose.msra.mxu0 0.0
        %2273 = vmatprep.subr.mxu0 0.0
        %2274 = vmatpush1.xpose.msra.mxu0 0.0
        %2275 = vmatprep.subr.mxu0 0.0
        %2276 = vmatpush1.xpose.msra.mxu0 0.0
        %2277 = vmatprep.subr.mxu0 0.0
        %2278 = vmatpush1.xpose.msra.mxu0 0.0
        %2279 = vmatprep.subr.mxu0 0.0
        %2280 = vmatpush1.xpose.msra.mxu0 0.0
        %2281 = vmatprep.subr.mxu0 0.0
        %2282 = vmatpush1.xpose.msra.mxu0 0.0
        %2283 = vmatprep.subr.mxu0 0.0
        %2284 = vmatpush1.xpose.msra.mxu0 0.0
        %2285 = vmatprep.subr.mxu0 0.0
        %2286 = vmatpush1.xpose.msra.mxu0 0.0
        %2287 = vmatprep.subr.mxu0 0.0
        %2288 = vmatpush1.xpose.msra.mxu0 0.0
        %2289 = vmatprep.subr.mxu0 0.0
        %2290 = vmatpush1.xpose.msra.mxu0 %v2263
        %2291 = vmatprep.subr.mxu0 0.0
        %2292 = vmatpush1.xpose.msra.mxu0 %v2261
        %2293 = vmatprep.subr.mxu0 0.0
        %2294 = vmatpush1.xpose.msra.mxu0 %v2259
        %2295 = vmatprep.subr.mxu0 0.0
        %2296 = vmatpush1.xpose.msra.mxu0 %v2257
        %2297 = vmatprep.subr.mxu0 0.0
        %2298 = vmatpush2.xpose.msra.mxu0 0.0
        %2299 = vmatprep.subr.mxu0 0.0
        %2300 = vmatpush2.xpose.msra.mxu0 0.0
        %2301 = vmatprep.subr.mxu0 0.0
        %2302 = vmatpush2.xpose.msra.mxu0 0.0
        %2303 = vmatprep.subr.mxu0 0.0
        %2304 = vmatpush2.xpose.msra.mxu0 0.0
        %2305 = vmatprep.subr.mxu0 0.0
        %2306 = vmatpush2.xpose.msra.mxu0 0.0
        %2307 = vmatprep.subr.mxu0 0.0
        %2308 = vmatpush2.xpose.msra.mxu0 0.0
        %2309 = vmatprep.subr.mxu0 0.0
        %2310 = vmatpush2.xpose.msra.mxu0 0.0
        %2311 = vmatprep.subr.mxu0 0.0
        %2312 = vmatpush2.xpose.msra.mxu0 0.0
        %2313 = vmatprep.subr.mxu0 0.0
        %2314 = vmatpush2.xpose.msra.mxu0 0.0
        %2315 = vmatprep.subr.mxu0 0.0
        %2316 = vmatpush2.xpose.msra.mxu0 0.0
        %2317 = vmatprep.subr.mxu0 0.0
        %2318 = vmatpush2.xpose.msra.mxu0 0.0
        %2319 = vmatprep.subr.mxu0 0.0
        %2320 = vmatpush2.xpose.msra.mxu0 0.0
        %2321 = vmatprep.subr.mxu0 0.0
        %2322 = vmatpush2.xpose.msra.mxu0 0.0
        %2323 = vmatprep.subr.mxu0 0.0
        %2324 = vmatpush2.xpose.msra.mxu0 0.0
        %2325 = vmatprep.subr.mxu0 0.0
        %2326 = vmatpush2.xpose.msra.mxu0 0.0
        %2327 = vmatprep.subr.mxu0 0.0
        %2328 = vmatpush2.xpose.msra.mxu0 0.0
        %2329 = vmatprep.mubr.f32.mxu0 0.0
        %2330 = vmatmul.mubr.f32.gmra.mxu0 %v2253
        %v2331 = vpop.f32.mrf.mxu0
        %v2332 = vadd.f32 0.0, %v2331
        %v2333 = vpop.f32.mrf.mxu0
        %2334 = vmatprep.mubr.f32.mxu0 0.0
        %2335 = vmatmul.mubr.f32.gmra.mxu0 %v2255
        %v2336 = vpop.f32.mrf.mxu0
        %v2337 = vadd.f32 0.0, %v2336
        %v2338 = vpop.f32.mrf.mxu0
        %2339 = vdwg.mxu0
        %v2340 = vsel %vm1469, %v1292, 0
        %v2342 = vsel %vm1469, %v1294, 0
        %v2344 = vsel %vm1469, %v1144, 0
        %v2346 = vsel %vm1469, %v1146, 0
        %v2348 = vsel %vm1469, %v1148, 0
        %v2350 = vsel %vm1469, %v1150, 0
        %2352 = vmatprep.subr.mxu0 0.0
        %2353 = vmatpush1.xpose.msra.mxu0 0.0
        %2354 = vmatprep.subr.mxu0 0.0
        %2355 = vmatpush1.xpose.msra.mxu0 0.0
        %2356 = vmatprep.subr.mxu0 0.0
        %2357 = vmatpush1.xpose.msra.mxu0 0.0
        %2358 = vmatprep.subr.mxu0 0.0
        %2359 = vmatpush1.xpose.msra.mxu0 0.0
        %2360 = vmatprep.subr.mxu0 0.0
        %2361 = vmatpush1.xpose.msra.mxu0 0.0
        %2362 = vmatprep.subr.mxu0 0.0
        %2363 = vmatpush1.xpose.msra.mxu0 0.0
        %2364 = vmatprep.subr.mxu0 0.0
        %2365 = vmatpush1.xpose.msra.mxu0 0.0
        %2366 = vmatprep.subr.mxu0 0.0
        %2367 = vmatpush1.xpose.msra.mxu0 0.0
        %2368 = vmatprep.subr.mxu0 0.0
        %2369 = vmatpush1.xpose.msra.mxu0 0.0
        %2370 = vmatprep.subr.mxu0 0.0
        %2371 = vmatpush1.xpose.msra.mxu0 0.0
        %2372 = vmatprep.subr.mxu0 0.0
        %2373 = vmatpush1.xpose.msra.mxu0 0.0
        %2374 = vmatprep.subr.mxu0 0.0
        %2375 = vmatpush1.xpose.msra.mxu0 0.0
        %2376 = vmatprep.subr.mxu0 0.0
        %2377 = vmatpush1.xpose.msra.mxu0 %v2350
        %2378 = vmatprep.subr.mxu0 0.0
        %2379 = vmatpush1.xpose.msra.mxu0 %v2348
        %2380 = vmatprep.subr.mxu0 0.0
        %2381 = vmatpush1.xpose.msra.mxu0 %v2346
        %2382 = vmatprep.subr.mxu0 0.0
        %2383 = vmatpush1.xpose.msra.mxu0 %v2344
        %2384 = vmatprep.subr.mxu0 0.0
        %2385 = vmatpush2.xpose.msra.mxu0 0.0
        %2386 = vmatprep.subr.mxu0 0.0
        %2387 = vmatpush2.xpose.msra.mxu0 0.0
        %2388 = vmatprep.subr.mxu0 0.0
        %2389 = vmatpush2.xpose.msra.mxu0 0.0
        %2390 = vmatprep.subr.mxu0 0.0
        %2391 = vmatpush2.xpose.msra.mxu0 0.0
        %2392 = vmatprep.subr.mxu0 0.0
        %2393 = vmatpush2.xpose.msra.mxu0 0.0
        %2394 = vmatprep.subr.mxu0 0.0
        %2395 = vmatpush2.xpose.msra.mxu0 0.0
        %2396 = vmatprep.subr.mxu0 0.0
        %2397 = vmatpush2.xpose.msra.mxu0 0.0
        %2398 = vmatprep.subr.mxu0 0.0
        %2399 = vmatpush2.xpose.msra.mxu0 0.0
        %2400 = vmatprep.subr.mxu0 0.0
        %2401 = vmatpush2.xpose.msra.mxu0 0.0
        %2402 = vmatprep.subr.mxu0 0.0
        %2403 = vmatpush2.xpose.msra.mxu0 0.0
        %2404 = vmatprep.subr.mxu0 0.0
        %2405 = vmatpush2.xpose.msra.mxu0 0.0
        %2406 = vmatprep.subr.mxu0 0.0
        %2407 = vmatpush2.xpose.msra.mxu0 0.0
        %2408 = vmatprep.subr.mxu0 0.0
        %2409 = vmatpush2.xpose.msra.mxu0 0.0
        %2410 = vmatprep.subr.mxu0 0.0
        %2411 = vmatpush2.xpose.msra.mxu0 0.0
        %2412 = vmatprep.subr.mxu0 0.0
        %2413 = vmatpush2.xpose.msra.mxu0 0.0
        %2414 = vmatprep.subr.mxu0 0.0
        %2415 = vmatpush2.xpose.msra.mxu0 0.0
        %2416 = vmatprep.mubr.f32.mxu0 0.0
        %2417 = vmatmul.mubr.f32.gmra.mxu0 %v2340
        %v2418 = vpop.f32.mrf.mxu0
        %v2419 = vadd.f32 0.0, %v2418
        %v2420 = vpop.f32.mrf.mxu0
        %2421 = vmatprep.mubr.f32.mxu0 0.0
        %2422 = vmatmul.mubr.f32.gmra.mxu0 %v2342
        %v2423 = vpop.f32.mrf.mxu0
        %v2424 = vadd.f32 0.0, %v2423
        %v2425 = vpop.f32.mrf.mxu0
        %2426 = vdwg.mxu0
        %v2427 = vsel %vm1469, %v1296, 0
        %v2429 = vsel %vm1469, %v1298, 0
        %v2431 = vsel %vm1469, %v1152, 0
        %v2433 = vsel %vm1469, %v1154, 0
        %v2435 = vsel %vm1469, %v1156, 0
        %v2437 = vsel %vm1469, %v1158, 0
        %2439 = vmatprep.subr.mxu0 0.0
        %2440 = vmatpush1.xpose.msra.mxu0 0.0
        %2441 = vmatprep.subr.mxu0 0.0
        %2442 = vmatpush1.xpose.msra.mxu0 0.0
        %2443 = vmatprep.subr.mxu0 0.0
        %2444 = vmatpush1.xpose.msra.mxu0 0.0
        %2445 = vmatprep.subr.mxu0 0.0
        %2446 = vmatpush1.xpose.msra.mxu0 0.0
        %2447 = vmatprep.subr.mxu0 0.0
        %2448 = vmatpush1.xpose.msra.mxu0 0.0
        %2449 = vmatprep.subr.mxu0 0.0
        %2450 = vmatpush1.xpose.msra.mxu0 0.0
        %2451 = vmatprep.subr.mxu0 0.0
        %2452 = vmatpush1.xpose.msra.mxu0 0.0
        %2453 = vmatprep.subr.mxu0 0.0
        %2454 = vmatpush1.xpose.msra.mxu0 0.0
        %2455 = vmatprep.subr.mxu0 0.0
        %2456 = vmatpush1.xpose.msra.mxu0 0.0
        %2457 = vmatprep.subr.mxu0 0.0
        %2458 = vmatpush1.xpose.msra.mxu0 0.0
        %2459 = vmatprep.subr.mxu0 0.0
        %2460 = vmatpush1.xpose.msra.mxu0 0.0
        %2461 = vmatprep.subr.mxu0 0.0
        %2462 = vmatpush1.xpose.msra.mxu0 0.0
        %2463 = vmatprep.subr.mxu0 0.0
        %2464 = vmatpush1.xpose.msra.mxu0 %v2437
        %2465 = vmatprep.subr.mxu0 0.0
        %2466 = vmatpush1.xpose.msra.mxu0 %v2435
        %2467 = vmatprep.subr.mxu0 0.0
        %2468 = vmatpush1.xpose.msra.mxu0 %v2433
        %2469 = vmatprep.subr.mxu0 0.0
        %2470 = vmatpush1.xpose.msra.mxu0 %v2431
        %2471 = vmatprep.subr.mxu0 0.0
        %2472 = vmatpush2.xpose.msra.mxu0 0.0
        %2473 = vmatprep.subr.mxu0 0.0
        %2474 = vmatpush2.xpose.msra.mxu0 0.0
        %2475 = vmatprep.subr.mxu0 0.0
        %2476 = vmatpush2.xpose.msra.mxu0 0.0
        %2477 = vmatprep.subr.mxu0 0.0
        %2478 = vmatpush2.xpose.msra.mxu0 0.0
        %2479 = vmatprep.subr.mxu0 0.0
        %2480 = vmatpush2.xpose.msra.mxu0 0.0
        %2481 = vmatprep.subr.mxu0 0.0
        %2482 = vmatpush2.xpose.msra.mxu0 0.0
        %2483 = vmatprep.subr.mxu0 0.0
        %2484 = vmatpush2.xpose.msra.mxu0 0.0
        %2485 = vmatprep.subr.mxu0 0.0
        %2486 = vmatpush2.xpose.msra.mxu0 0.0
        %2487 = vmatprep.subr.mxu0 0.0
        %2488 = vmatpush2.xpose.msra.mxu0 0.0
        %2489 = vmatprep.subr.mxu0 0.0
        %2490 = vmatpush2.xpose.msra.mxu0 0.0
        %2491 = vmatprep.subr.mxu0 0.0
        %2492 = vmatpush2.xpose.msra.mxu0 0.0
        %2493 = vmatprep.subr.mxu0 0.0
        %2494 = vmatpush2.xpose.msra.mxu0 0.0
        %2495 = vmatprep.subr.mxu0 0.0
        %2496 = vmatpush2.xpose.msra.mxu0 0.0
        %2497 = vmatprep.subr.mxu0 0.0
        %2498 = vmatpush2.xpose.msra.mxu0 0.0
        %2499 = vmatprep.subr.mxu0 0.0
        %2500 = vmatpush2.xpose.msra.mxu0 0.0
        %2501 = vmatprep.subr.mxu0 0.0
        %2502 = vmatpush2.xpose.msra.mxu0 0.0
        %2503 = vmatprep.mubr.f32.mxu0 0.0
        %2504 = vmatmul.mubr.f32.gmra.mxu0 %v2427
        %v2505 = vpop.f32.mrf.mxu0
        %v2506 = vadd.f32 0.0, %v2505
        %v2507 = vpop.f32.mrf.mxu0
        %2508 = vmatprep.mubr.f32.mxu0 0.0
        %2509 = vmatmul.mubr.f32.gmra.mxu0 %v2429
        %v2510 = vpop.f32.mrf.mxu0
        %v2511 = vadd.f32 0.0, %v2510
        %v2512 = vpop.f32.mrf.mxu0
        %2513 = vdwg.mxu0
        %v2514 = vsel %vm1469, %v1300, 0
        %v2516 = vsel %vm1469, %v1302, 0
        %v2518 = vsel %vm1469, %v1160, 0
        %v2520 = vsel %vm1469, %v1162, 0
        %v2522 = vsel %vm1469, %v1164, 0
        %v2524 = vsel %vm1469, %v1166, 0
        %2526 = vmatprep.subr.mxu0 0.0
        %2527 = vmatpush1.xpose.msra.mxu0 0.0
        %2528 = vmatprep.subr.mxu0 0.0
        %2529 = vmatpush1.xpose.msra.mxu0 0.0
        %2530 = vmatprep.subr.mxu0 0.0
        %2531 = vmatpush1.xpose.msra.mxu0 0.0
        %2532 = vmatprep.subr.mxu0 0.0
        %2533 = vmatpush1.xpose.msra.mxu0 0.0
        %2534 = vmatprep.subr.mxu0 0.0
        %2535 = vmatpush1.xpose.msra.mxu0 0.0
        %2536 = vmatprep.subr.mxu0 0.0
        %2537 = vmatpush1.xpose.msra.mxu0 0.0
        %2538 = vmatprep.subr.mxu0 0.0
        %2539 = vmatpush1.xpose.msra.mxu0 0.0
        %2540 = vmatprep.subr.mxu0 0.0
        %2541 = vmatpush1.xpose.msra.mxu0 0.0
        %2542 = vmatprep.subr.mxu0 0.0
        %2543 = vmatpush1.xpose.msra.mxu0 0.0
        %2544 = vmatprep.subr.mxu0 0.0
        %2545 = vmatpush1.xpose.msra.mxu0 0.0
        %2546 = vmatprep.subr.mxu0 0.0
        %2547 = vmatpush1.xpose.msra.mxu0 0.0
        %2548 = vmatprep.subr.mxu0 0.0
        %2549 = vmatpush1.xpose.msra.mxu0 0.0
        %2550 = vmatprep.subr.mxu0 0.0
        %2551 = vmatpush1.xpose.msra.mxu0 %v2524
        %2552 = vmatprep.subr.mxu0 0.0
        %2553 = vmatpush1.xpose.msra.mxu0 %v2522
        %2554 = vmatprep.subr.mxu0 0.0
        %2555 = vmatpush1.xpose.msra.mxu0 %v2520
        %2556 = vmatprep.subr.mxu0 0.0
        %2557 = vmatpush1.xpose.msra.mxu0 %v2518
        %2558 = vmatprep.subr.mxu0 0.0
        %2559 = vmatpush2.xpose.msra.mxu0 0.0
        %2560 = vmatprep.subr.mxu0 0.0
        %2561 = vmatpush2.xpose.msra.mxu0 0.0
        %2562 = vmatprep.subr.mxu0 0.0
        %2563 = vmatpush2.xpose.msra.mxu0 0.0
        %2564 = vmatprep.subr.mxu0 0.0
        %2565 = vmatpush2.xpose.msra.mxu0 0.0
        %2566 = vmatprep.subr.mxu0 0.0
        %2567 = vmatpush2.xpose.msra.mxu0 0.0
        %2568 = vmatprep.subr.mxu0 0.0
        %2569 = vmatpush2.xpose.msra.mxu0 0.0
        %2570 = vmatprep.subr.mxu0 0.0
        %2571 = vmatpush2.xpose.msra.mxu0 0.0
        %2572 = vmatprep.subr.mxu0 0.0
        %2573 = vmatpush2.xpose.msra.mxu0 0.0
        %2574 = vmatprep.subr.mxu0 0.0
        %2575 = vmatpush2.xpose.msra.mxu0 0.0
        %2576 = vmatprep.subr.mxu0 0.0
        %2577 = vmatpush2.xpose.msra.mxu0 0.0
        %2578 = vmatprep.subr.mxu0 0.0
        %2579 = vmatpush2.xpose.msra.mxu0 0.0
        %2580 = vmatprep.subr.mxu0 0.0
        %2581 = vmatpush2.xpose.msra.mxu0 0.0
        %2582 = vmatprep.subr.mxu0 0.0
        %2583 = vmatpush2.xpose.msra.mxu0 0.0
        %2584 = vmatprep.subr.mxu0 0.0
        %2585 = vmatpush2.xpose.msra.mxu0 0.0
        %2586 = vmatprep.subr.mxu0 0.0
        %2587 = vmatpush2.xpose.msra.mxu0 0.0
        %2588 = vmatprep.subr.mxu0 0.0
        %2589 = vmatpush2.xpose.msra.mxu0 0.0
        %2590 = vmatprep.mubr.f32.mxu0 0.0
        %2591 = vmatmul.mubr.f32.gmra.mxu0 %v2514
        %v2592 = vpop.f32.mrf.mxu0
        %v2593 = vadd.f32 0.0, %v2592
        %v2594 = vpop.f32.mrf.mxu0
        %2595 = vmatprep.mubr.f32.mxu0 0.0
        %2596 = vmatmul.mubr.f32.gmra.mxu0 %v2516
        %v2597 = vpop.f32.mrf.mxu0
        %v2598 = vadd.f32 0.0, %v2597
        %v2599 = vpop.f32.mrf.mxu0
        %2600 = vdwg.mxu0
        %v2601 = vsel %vm1469, %v1304, 0
        %v2603 = vsel %vm1469, %v1306, 0
        %v2605 = vsel %vm1469, %v1168, 0
        %v2607 = vsel %vm1469, %v1170, 0
        %v2609 = vsel %vm1469, %v1172, 0
        %v2611 = vsel %vm1469, %v1174, 0
        %2613 = vmatprep.subr.mxu0 0.0
        %2614 = vmatpush1.xpose.msra.mxu0 0.0
        %2615 = vmatprep.subr.mxu0 0.0
        %2616 = vmatpush1.xpose.msra.mxu0 0.0
        %2617 = vmatprep.subr.mxu0 0.0
        %2618 = vmatpush1.xpose.msra.mxu0 0.0
        %2619 = vmatprep.subr.mxu0 0.0
        %2620 = vmatpush1.xpose.msra.mxu0 0.0
        %2621 = vmatprep.subr.mxu0 0.0
        %2622 = vmatpush1.xpose.msra.mxu0 0.0
        %2623 = vmatprep.subr.mxu0 0.0
        %2624 = vmatpush1.xpose.msra.mxu0 0.0
        %2625 = vmatprep.subr.mxu0 0.0
        %2626 = vmatpush1.xpose.msra.mxu0 0.0
        %2627 = vmatprep.subr.mxu0 0.0
        %2628 = vmatpush1.xpose.msra.mxu0 0.0
        %2629 = vmatprep.subr.mxu0 0.0
        %2630 = vmatpush1.xpose.msra.mxu0 0.0
        %2631 = vmatprep.subr.mxu0 0.0
        %2632 = vmatpush1.xpose.msra.mxu0 0.0
        %2633 = vmatprep.subr.mxu0 0.0
        %2634 = vmatpush1.xpose.msra.mxu0 0.0
        %2635 = vmatprep.subr.mxu0 0.0
        %2636 = vmatpush1.xpose.msra.mxu0 0.0
        %2637 = vmatprep.subr.mxu0 0.0
        %2638 = vmatpush1.xpose.msra.mxu0 %v2611
        %2639 = vmatprep.subr.mxu0 0.0
        %2640 = vmatpush1.xpose.msra.mxu0 %v2609
        %2641 = vmatprep.subr.mxu0 0.0
        %2642 = vmatpush1.xpose.msra.mxu0 %v2607
        %2643 = vmatprep.subr.mxu0 0.0
        %2644 = vmatpush1.xpose.msra.mxu0 %v2605
        %2645 = vmatprep.subr.mxu0 0.0
        %2646 = vmatpush2.xpose.msra.mxu0 0.0
        %2647 = vmatprep.subr.mxu0 0.0
        %2648 = vmatpush2.xpose.msra.mxu0 0.0
        %2649 = vmatprep.subr.mxu0 0.0
        %2650 = vmatpush2.xpose.msra.mxu0 0.0
        %2651 = vmatprep.subr.mxu0 0.0
        %2652 = vmatpush2.xpose.msra.mxu0 0.0
        %2653 = vmatprep.subr.mxu0 0.0
        %2654 = vmatpush2.xpose.msra.mxu0 0.0
        %2655 = vmatprep.subr.mxu0 0.0
        %2656 = vmatpush2.xpose.msra.mxu0 0.0
        %2657 = vmatprep.subr.mxu0 0.0
        %2658 = vmatpush2.xpose.msra.mxu0 0.0
        %2659 = vmatprep.subr.mxu0 0.0
        %2660 = vmatpush2.xpose.msra.mxu0 0.0
        %2661 = vmatprep.subr.mxu0 0.0
        %2662 = vmatpush2.xpose.msra.mxu0 0.0
        %2663 = vmatprep.subr.mxu0 0.0
        %2664 = vmatpush2.xpose.msra.mxu0 0.0
        %2665 = vmatprep.subr.mxu0 0.0
        %2666 = vmatpush2.xpose.msra.mxu0 0.0
        %2667 = vmatprep.subr.mxu0 0.0
        %2668 = vmatpush2.xpose.msra.mxu0 0.0
        %2669 = vmatprep.subr.mxu0 0.0
        %2670 = vmatpush2.xpose.msra.mxu0 0.0
        %2671 = vmatprep.subr.mxu0 0.0
        %2672 = vmatpush2.xpose.msra.mxu0 0.0
        %2673 = vmatprep.subr.mxu0 0.0
        %2674 = vmatpush2.xpose.msra.mxu0 0.0
        %2675 = vmatprep.subr.mxu0 0.0
        %2676 = vmatpush2.xpose.msra.mxu0 0.0
        %2677 = vmatprep.mubr.f32.mxu0 0.0
        %2678 = vmatmul.mubr.f32.gmra.mxu0 %v2601
        %v2679 = vpop.f32.mrf.mxu0
        %v2680 = vadd.f32 0.0, %v2679
        %v2681 = vpop.f32.mrf.mxu0
        %2682 = vmatprep.mubr.f32.mxu0 0.0
        %2683 = vmatmul.mubr.f32.gmra.mxu0 %v2603
        %v2684 = vpop.f32.mrf.mxu0
        %v2685 = vadd.f32 0.0, %v2684
        %v2686 = vpop.f32.mrf.mxu0
        %2687 = vdwg.mxu0
        %v2688 = vsel %vm1469, %v1308, 0
        %v2690 = vsel %vm1469, %v1310, 0
        %v2692 = vsel %vm1469, %v1176, 0
        %v2694 = vsel %vm1469, %v1178, 0
        %v2696 = vsel %vm1469, %v1180, 0
        %v2698 = vsel %vm1469, %v1182, 0
        %2700 = vmatprep.subr.mxu0 0.0
        %2701 = vmatpush1.xpose.msra.mxu0 0.0
        %2702 = vmatprep.subr.mxu0 0.0
        %2703 = vmatpush1.xpose.msra.mxu0 0.0
        %2704 = vmatprep.subr.mxu0 0.0
        %2705 = vmatpush1.xpose.msra.mxu0 0.0
        %2706 = vmatprep.subr.mxu0 0.0
        %2707 = vmatpush1.xpose.msra.mxu0 0.0
        %2708 = vmatprep.subr.mxu0 0.0
        %2709 = vmatpush1.xpose.msra.mxu0 0.0
        %2710 = vmatprep.subr.mxu0 0.0
        %2711 = vmatpush1.xpose.msra.mxu0 0.0
        %2712 = vmatprep.subr.mxu0 0.0
        %2713 = vmatpush1.xpose.msra.mxu0 0.0
        %2714 = vmatprep.subr.mxu0 0.0
        %2715 = vmatpush1.xpose.msra.mxu0 0.0
        %2716 = vmatprep.subr.mxu0 0.0
        %2717 = vmatpush1.xpose.msra.mxu0 0.0
        %2718 = vmatprep.subr.mxu0 0.0
        %2719 = vmatpush1.xpose.msra.mxu0 0.0
        %2720 = vmatprep.subr.mxu0 0.0
        %2721 = vmatpush1.xpose.msra.mxu0 0.0
        %2722 = vmatprep.subr.mxu0 0.0
        %2723 = vmatpush1.xpose.msra.mxu0 0.0
        %2724 = vmatprep.subr.mxu0 0.0
        %2725 = vmatpush1.xpose.msra.mxu0 %v2698
        %2726 = vmatprep.subr.mxu0 0.0
        %2727 = vmatpush1.xpose.msra.mxu0 %v2696
        %2728 = vmatprep.subr.mxu0 0.0
        %2729 = vmatpush1.xpose.msra.mxu0 %v2694
        %2730 = vmatprep.subr.mxu0 0.0
        %2731 = vmatpush1.xpose.msra.mxu0 %v2692
        %2732 = vmatprep.subr.mxu0 0.0
        %2733 = vmatpush2.xpose.msra.mxu0 0.0
        %2734 = vmatprep.subr.mxu0 0.0
        %2735 = vmatpush2.xpose.msra.mxu0 0.0
        %2736 = vmatprep.subr.mxu0 0.0
        %2737 = vmatpush2.xpose.msra.mxu0 0.0
        %2738 = vmatprep.subr.mxu0 0.0
        %2739 = vmatpush2.xpose.msra.mxu0 0.0
        %2740 = vmatprep.subr.mxu0 0.0
        %2741 = vmatpush2.xpose.msra.mxu0 0.0
        %2742 = vmatprep.subr.mxu0 0.0
        %2743 = vmatpush2.xpose.msra.mxu0 0.0
        %2744 = vmatprep.subr.mxu0 0.0
        %2745 = vmatpush2.xpose.msra.mxu0 0.0
        %2746 = vmatprep.subr.mxu0 0.0
        %2747 = vmatpush2.xpose.msra.mxu0 0.0
        %2748 = vmatprep.subr.mxu0 0.0
        %2749 = vmatpush2.xpose.msra.mxu0 0.0
        %2750 = vmatprep.subr.mxu0 0.0
        %2751 = vmatpush2.xpose.msra.mxu0 0.0
        %2752 = vmatprep.subr.mxu0 0.0
        %2753 = vmatpush2.xpose.msra.mxu0 0.0
        %2754 = vmatprep.subr.mxu0 0.0
        %2755 = vmatpush2.xpose.msra.mxu0 0.0
        %2756 = vmatprep.subr.mxu0 0.0
        %2757 = vmatpush2.xpose.msra.mxu0 0.0
        %2758 = vmatprep.subr.mxu0 0.0
        %2759 = vmatpush2.xpose.msra.mxu0 0.0
        %2760 = vmatprep.subr.mxu0 0.0
        %2761 = vmatpush2.xpose.msra.mxu0 0.0
        %2762 = vmatprep.subr.mxu0 0.0
        %2763 = vmatpush2.xpose.msra.mxu0 0.0
        %2764 = vmatprep.mubr.f32.mxu0 0.0
        %2765 = vmatmul.mubr.f32.gmra.mxu0 %v2688
        %v2766 = vpop.f32.mrf.mxu0
        %v2767 = vadd.f32 0.0, %v2766
        %v2768 = vpop.f32.mrf.mxu0
        %2769 = vmatprep.mubr.f32.mxu0 0.0
        %2770 = vmatmul.mubr.f32.gmra.mxu0 %v2690
        %v2771 = vpop.f32.mrf.mxu0
        %v2772 = vadd.f32 0.0, %v2771
        %v2773 = vpop.f32.mrf.mxu0
        %2774 = vdwg.mxu0
        %v2775 = vsel %vm1469, %v1312, 0
        %v2777 = vsel %vm1469, %v1314, 0
        %v2779 = vsel %vm1469, %v1184, 0
        %v2781 = vsel %vm1469, %v1186, 0
        %v2783 = vsel %vm1469, %v1188, 0
        %v2785 = vsel %vm1469, %v1190, 0
        %2787 = vmatprep.subr.mxu0 0.0
        %2788 = vmatpush1.xpose.msra.mxu0 0.0
        %2789 = vmatprep.subr.mxu0 0.0
        %2790 = vmatpush1.xpose.msra.mxu0 0.0
        %2791 = vmatprep.subr.mxu0 0.0
        %2792 = vmatpush1.xpose.msra.mxu0 0.0
        %2793 = vmatprep.subr.mxu0 0.0
        %2794 = vmatpush1.xpose.msra.mxu0 0.0
        %2795 = vmatprep.subr.mxu0 0.0
        %2796 = vmatpush1.xpose.msra.mxu0 0.0
        %2797 = vmatprep.subr.mxu0 0.0
        %2798 = vmatpush1.xpose.msra.mxu0 0.0
        %2799 = vmatprep.subr.mxu0 0.0
        %2800 = vmatpush1.xpose.msra.mxu0 0.0
        %2801 = vmatprep.subr.mxu0 0.0
        %2802 = vmatpush1.xpose.msra.mxu0 0.0
        %2803 = vmatprep.subr.mxu0 0.0
        %2804 = vmatpush1.xpose.msra.mxu0 0.0
        %2805 = vmatprep.subr.mxu0 0.0
        %2806 = vmatpush1.xpose.msra.mxu0 0.0
        %2807 = vmatprep.subr.mxu0 0.0
        %2808 = vmatpush1.xpose.msra.mxu0 0.0
        %2809 = vmatprep.subr.mxu0 0.0
        %2810 = vmatpush1.xpose.msra.mxu0 0.0
        %2811 = vmatprep.subr.mxu0 0.0
        %2812 = vmatpush1.xpose.msra.mxu0 %v2785
        %2813 = vmatprep.subr.mxu0 0.0
        %2814 = vmatpush1.xpose.msra.mxu0 %v2783
        %2815 = vmatprep.subr.mxu0 0.0
        %2816 = vmatpush1.xpose.msra.mxu0 %v2781
        %2817 = vmatprep.subr.mxu0 0.0
        %2818 = vmatpush1.xpose.msra.mxu0 %v2779
        %2819 = vmatprep.subr.mxu0 0.0
        %2820 = vmatpush2.xpose.msra.mxu0 0.0
        %2821 = vmatprep.subr.mxu0 0.0
        %2822 = vmatpush2.xpose.msra.mxu0 0.0
        %2823 = vmatprep.subr.mxu0 0.0
        %2824 = vmatpush2.xpose.msra.mxu0 0.0
        %2825 = vmatprep.subr.mxu0 0.0
        %2826 = vmatpush2.xpose.msra.mxu0 0.0
        %2827 = vmatprep.subr.mxu0 0.0
        %2828 = vmatpush2.xpose.msra.mxu0 0.0
        %2829 = vmatprep.subr.mxu0 0.0
        %2830 = vmatpush2.xpose.msra.mxu0 0.0
        %2831 = vmatprep.subr.mxu0 0.0
        %2832 = vmatpush2.xpose.msra.mxu0 0.0
        %2833 = vmatprep.subr.mxu0 0.0
        %2834 = vmatpush2.xpose.msra.mxu0 0.0
        %2835 = vmatprep.subr.mxu0 0.0
        %2836 = vmatpush2.xpose.msra.mxu0 0.0
        %2837 = vmatprep.subr.mxu0 0.0
        %2838 = vmatpush2.xpose.msra.mxu0 0.0
        %2839 = vmatprep.subr.mxu0 0.0
        %2840 = vmatpush2.xpose.msra.mxu0 0.0
        %2841 = vmatprep.subr.mxu0 0.0
        %2842 = vmatpush2.xpose.msra.mxu0 0.0
        %2843 = vmatprep.subr.mxu0 0.0
        %2844 = vmatpush2.xpose.msra.mxu0 0.0
        %2845 = vmatprep.subr.mxu0 0.0
        %2846 = vmatpush2.xpose.msra.mxu0 0.0
        %2847 = vmatprep.subr.mxu0 0.0
        %2848 = vmatpush2.xpose.msra.mxu0 0.0
        %2849 = vmatprep.subr.mxu0 0.0
        %2850 = vmatpush2.xpose.msra.mxu0 0.0
        %2851 = vmatprep.mubr.f32.mxu0 0.0
        %2852 = vmatmul.mubr.f32.gmra.mxu0 %v2775
        %v2853 = vpop.f32.mrf.mxu0
        %v2854 = vadd.f32 0.0, %v2853
        %v2855 = vpop.f32.mrf.mxu0
        %2856 = vmatprep.mubr.f32.mxu0 0.0
        %2857 = vmatmul.mubr.f32.gmra.mxu0 %v2777
        %v2858 = vpop.f32.mrf.mxu0
        %v2859 = vadd.f32 0.0, %v2858
        %v2860 = vpop.f32.mrf.mxu0
        %2861 = vdwg.mxu0
        %v2862 = vcombine.low %v1549, %v1723
        %v2863 = vcombine.high %v1549, %v1723
        %v2865 = vunpack.c.l.s4 1983009808
        %v2866 = vunpack.c.0.s8 %v2865
        %v2867 = vlaneseq
        %v2868 = vshrl.u32 %v2867, 7
        %v2869 = vsub.s32 %v2866, %v2868
        %v2870 = vrot.slane %v2862, %v2869
        %v2872 = vunpack.c.l.s4 1983009808
        %v2873 = vunpack.c.0.s8 %v2872
        %v2874 = vlaneseq
        %v2875 = vshrl.u32 %v2874, 7
        %v2876 = vsub.s32 %v2873, %v2875
        %v2877 = vrot.slane %v2863, %v2876
        %v2878 = vcombine.low %v1636, %v1810
        %v2879 = vcombine.high %v1636, %v1810
        %v2881 = vunpack.c.l.s4 1983009808
        %v2882 = vunpack.c.0.s8 %v2881
        %v2883 = vlaneseq
        %v2884 = vshrl.u32 %v2883, 7
        %v2885 = vsub.s32 %v2882, %v2884
        %v2886 = vrot.slane %v2878, %v2885
        %v2888 = vunpack.c.l.s4 1983009808
        %v2889 = vunpack.c.0.s8 %v2888
        %v2890 = vlaneseq
        %v2891 = vshrl.u32 %v2890, 7
        %v2892 = vsub.s32 %v2889, %v2891
        %v2893 = vrot.slane %v2879, %v2892
        %v2894 = vcombine.low %v1897, %v2071
        %v2895 = vcombine.high %v1897, %v2071
        %v2897 = vunpack.c.l.s4 1983009808
        %v2898 = vunpack.c.0.s8 %v2897
        %v2899 = vlaneseq
        %v2900 = vshrl.u32 %v2899, 7
        %v2901 = vsub.s32 %v2898, %v2900
        %v2902 = vrot.slane %v2894, %v2901
        %v2904 = vunpack.c.l.s4 1983009808
        %v2905 = vunpack.c.0.s8 %v2904
        %v2906 = vlaneseq
        %v2907 = vshrl.u32 %v2906, 7
        %v2908 = vsub.s32 %v2905, %v2907
        %v2909 = vrot.slane %v2895, %v2908
        %v2910 = vcombine.low %v1984, %v2158
        %v2911 = vcombine.high %v1984, %v2158
        %v2913 = vunpack.c.l.s4 1983009808
        %v2914 = vunpack.c.0.s8 %v2913
        %v2915 = vlaneseq
        %v2916 = vshrl.u32 %v2915, 7
        %v2917 = vsub.s32 %v2914, %v2916
        %v2918 = vrot.slane %v2910, %v2917
        %v2920 = vunpack.c.l.s4 1983009808
        %v2921 = vunpack.c.0.s8 %v2920
        %v2922 = vlaneseq
        %v2923 = vshrl.u32 %v2922, 7
        %v2924 = vsub.s32 %v2921, %v2923
        %v2925 = vrot.slane %v2911, %v2924
        %v2926 = vcombine.low %v2870, %v2886
        %v2927 = vcombine.high %v2870, %v2886
        %v2929 = vunpack.c.l.s4 1934713408
        %v2930 = vunpack.c.0.s8 %v2929
        %v2931 = vlaneseq
        %v2932 = vshrl.u32 %v2931, 7
        %v2933 = vsub.s32 %v2930, %v2932
        %v2934 = vrot.slane %v2926, %v2933
        %v2936 = vunpack.c.l.s4 1934713408
        %v2937 = vunpack.c.0.s8 %v2936
        %v2938 = vlaneseq
        %v2939 = vshrl.u32 %v2938, 7
        %v2940 = vsub.s32 %v2937, %v2939
        %v2941 = vrot.slane %v2927, %v2940
        %v2942 = vcombine.low %v2877, %v2893
        %v2943 = vcombine.high %v2877, %v2893
        %v2945 = vunpack.c.l.s4 1934713408
        %v2946 = vunpack.c.0.s8 %v2945
        %v2947 = vlaneseq
        %v2948 = vshrl.u32 %v2947, 7
        %v2949 = vsub.s32 %v2946, %v2948
        %v2950 = vrot.slane %v2942, %v2949
        %v2952 = vunpack.c.l.s4 1934713408
        %v2953 = vunpack.c.0.s8 %v2952
        %v2954 = vlaneseq
        %v2955 = vshrl.u32 %v2954, 7
        %v2956 = vsub.s32 %v2953, %v2955
        %v2957 = vrot.slane %v2943, %v2956
        %v2958 = vcombine.low %v2902, %v2918
        %v2959 = vcombine.high %v2902, %v2918
        %v2961 = vunpack.c.l.s4 1934713408
        %v2962 = vunpack.c.0.s8 %v2961
        %v2963 = vlaneseq
        %v2964 = vshrl.u32 %v2963, 7
        %v2965 = vsub.s32 %v2962, %v2964
        %v2966 = vrot.slane %v2958, %v2965
        %v2968 = vunpack.c.l.s4 1934713408
        %v2969 = vunpack.c.0.s8 %v2968
        %v2970 = vlaneseq
        %v2971 = vshrl.u32 %v2970, 7
        %v2972 = vsub.s32 %v2969, %v2971
        %v2973 = vrot.slane %v2959, %v2972
        %v2974 = vcombine.low %v2909, %v2925
        %v2975 = vcombine.high %v2909, %v2925
        %v2977 = vunpack.c.l.s4 1934713408
        %v2978 = vunpack.c.0.s8 %v2977
        %v2979 = vlaneseq
        %v2980 = vshrl.u32 %v2979, 7
        %v2981 = vsub.s32 %v2978, %v2980
        %v2982 = vrot.slane %v2974, %v2981
        %v2984 = vunpack.c.l.s4 1934713408
        %v2985 = vunpack.c.0.s8 %v2984
        %v2986 = vlaneseq
        %v2987 = vshrl.u32 %v2986, 7
        %v2988 = vsub.s32 %v2985, %v2987
        %v2989 = vrot.slane %v2975, %v2988
        %v2990 = vcombine.low %v2934, %v2966
        %v2991 = vcombine.high %v2934, %v2966
        %v2992 = vcombine.low %v2941, %v2973
        %v2993 = vcombine.high %v2941, %v2973
        %v2994 = vcombine.low %v2950, %v2982
        %v2995 = vcombine.high %v2950, %v2982
        %v2996 = vcombine.low %v2957, %v2989
        %v2997 = vcombine.high %v2957, %v2989
        %v2998 = vcombine.low %v2245, %v2419
        %v2999 = vcombine.high %v2245, %v2419
        %v3001 = vunpack.c.l.s4 1983009808
        %v3002 = vunpack.c.0.s8 %v3001
        %v3003 = vlaneseq
        %v3004 = vshrl.u32 %v3003, 7
        %v3005 = vsub.s32 %v3002, %v3004
        %v3006 = vrot.slane %v2998, %v3005
        %v3008 = vunpack.c.l.s4 1983009808
        %v3009 = vunpack.c.0.s8 %v3008
        %v3010 = vlaneseq
        %v3011 = vshrl.u32 %v3010, 7
        %v3012 = vsub.s32 %v3009, %v3011
        %v3013 = vrot.slane %v2999, %v3012
        %v3014 = vcombine.low %v2332, %v2506
        %v3015 = vcombine.high %v2332, %v2506
        %v3017 = vunpack.c.l.s4 1983009808
        %v3018 = vunpack.c.0.s8 %v3017
        %v3019 = vlaneseq
        %v3020 = vshrl.u32 %v3019, 7
        %v3021 = vsub.s32 %v3018, %v3020
        %v3022 = vrot.slane %v3014, %v3021
        %v3024 = vunpack.c.l.s4 1983009808
        %v3025 = vunpack.c.0.s8 %v3024
        %v3026 = vlaneseq
        %v3027 = vshrl.u32 %v3026, 7
        %v3028 = vsub.s32 %v3025, %v3027
        %v3029 = vrot.slane %v3015, %v3028
        %v3030 = vcombine.low %v2593, %v2767
        %v3031 = vcombine.high %v2593, %v2767
        %v3033 = vunpack.c.l.s4 1983009808
        %v3034 = vunpack.c.0.s8 %v3033
        %v3035 = vlaneseq
        %v3036 = vshrl.u32 %v3035, 7
        %v3037 = vsub.s32 %v3034, %v3036
        %v3038 = vrot.slane %v3030, %v3037
        %v3040 = vunpack.c.l.s4 1983009808
        %v3041 = vunpack.c.0.s8 %v3040
        %v3042 = vlaneseq
        %v3043 = vshrl.u32 %v3042, 7
        %v3044 = vsub.s32 %v3041, %v3043
        %v3045 = vrot.slane %v3031, %v3044
        %v3046 = vcombine.low %v2680, %v2854
        %v3047 = vcombine.high %v2680, %v2854
        %v3049 = vunpack.c.l.s4 1983009808
        %v3050 = vunpack.c.0.s8 %v3049
        %v3051 = vlaneseq
        %v3052 = vshrl.u32 %v3051, 7
        %v3053 = vsub.s32 %v3050, %v3052
        %v3054 = vrot.slane %v3046, %v3053
        %v3056 = vunpack.c.l.s4 1983009808
        %v3057 = vunpack.c.0.s8 %v3056
        %v3058 = vlaneseq
        %v3059 = vshrl.u32 %v3058, 7
        %v3060 = vsub.s32 %v3057, %v3059
        %v3061 = vrot.slane %v3047, %v3060
        %v3062 = vcombine.low %v3006, %v3022
        %v3063 = vcombine.high %v3006, %v3022
        %v3065 = vunpack.c.l.s4 1934713408
        %v3066 = vunpack.c.0.s8 %v3065
        %v3067 = vlaneseq
        %v3068 = vshrl.u32 %v3067, 7
        %v3069 = vsub.s32 %v3066, %v3068
        %v3070 = vrot.slane %v3062, %v3069
        %v3072 = vunpack.c.l.s4 1934713408
        %v3073 = vunpack.c.0.s8 %v3072
        %v3074 = vlaneseq
        %v3075 = vshrl.u32 %v3074, 7
        %v3076 = vsub.s32 %v3073, %v3075
        %v3077 = vrot.slane %v3063, %v3076
        %v3078 = vcombine.low %v3013, %v3029
        %v3079 = vcombine.high %v3013, %v3029
        %v3081 = vunpack.c.l.s4 1934713408
        %v3082 = vunpack.c.0.s8 %v3081
        %v3083 = vlaneseq
        %v3084 = vshrl.u32 %v3083, 7
        %v3085 = vsub.s32 %v3082, %v3084
        %v3086 = vrot.slane %v3078, %v3085
        %v3088 = vunpack.c.l.s4 1934713408
        %v3089 = vunpack.c.0.s8 %v3088
        %v3090 = vlaneseq
        %v3091 = vshrl.u32 %v3090, 7
        %v3092 = vsub.s32 %v3089, %v3091
        %v3093 = vrot.slane %v3079, %v3092
        %v3094 = vcombine.low %v3038, %v3054
        %v3095 = vcombine.high %v3038, %v3054
        %v3097 = vunpack.c.l.s4 1934713408
        %v3098 = vunpack.c.0.s8 %v3097
        %v3099 = vlaneseq
        %v3100 = vshrl.u32 %v3099, 7
        %v3101 = vsub.s32 %v3098, %v3100
        %v3102 = vrot.slane %v3094, %v3101
        %v3104 = vunpack.c.l.s4 1934713408
        %v3105 = vunpack.c.0.s8 %v3104
        %v3106 = vlaneseq
        %v3107 = vshrl.u32 %v3106, 7
        %v3108 = vsub.s32 %v3105, %v3107
        %v3109 = vrot.slane %v3095, %v3108
        %v3110 = vcombine.low %v3045, %v3061
        %v3111 = vcombine.high %v3045, %v3061
        %v3113 = vunpack.c.l.s4 1934713408
        %v3114 = vunpack.c.0.s8 %v3113
        %v3115 = vlaneseq
        %v3116 = vshrl.u32 %v3115, 7
        %v3117 = vsub.s32 %v3114, %v3116
        %v3118 = vrot.slane %v3110, %v3117
        %v3120 = vunpack.c.l.s4 1934713408
        %v3121 = vunpack.c.0.s8 %v3120
        %v3122 = vlaneseq
        %v3123 = vshrl.u32 %v3122, 7
        %v3124 = vsub.s32 %v3121, %v3123
        %v3125 = vrot.slane %v3111, %v3124
        %v3126 = vcombine.low %v3070, %v3102
        %v3127 = vcombine.high %v3070, %v3102
        %v3128 = vcombine.low %v3077, %v3109
        %v3129 = vcombine.high %v3077, %v3109
        %v3130 = vcombine.low %v3086, %v3118
        %v3131 = vcombine.high %v3086, %v3118
        %v3132 = vcombine.low %v3093, %v3125
        %v3133 = vcombine.high %v3093, %v3125
        %v3134 = vcombine.low %v1554, %v1728
        %v3135 = vcombine.high %v1554, %v1728
        %v3137 = vunpack.c.l.s4 1983009808
        %v3138 = vunpack.c.0.s8 %v3137
        %v3139 = vlaneseq
        %v3140 = vshrl.u32 %v3139, 7
        %v3141 = vsub.s32 %v3138, %v3140
        %v3142 = vrot.slane %v3134, %v3141
        %v3144 = vunpack.c.l.s4 1983009808
        %v3145 = vunpack.c.0.s8 %v3144
        %v3146 = vlaneseq
        %v3147 = vshrl.u32 %v3146, 7
        %v3148 = vsub.s32 %v3145, %v3147
        %v3149 = vrot.slane %v3135, %v3148
        %v3150 = vcombine.low %v1641, %v1815
        %v3151 = vcombine.high %v1641, %v1815
        %v3153 = vunpack.c.l.s4 1983009808
        %v3154 = vunpack.c.0.s8 %v3153
        %v3155 = vlaneseq
        %v3156 = vshrl.u32 %v3155, 7
        %v3157 = vsub.s32 %v3154, %v3156
        %v3158 = vrot.slane %v3150, %v3157
        %v3160 = vunpack.c.l.s4 1983009808
        %v3161 = vunpack.c.0.s8 %v3160
        %v3162 = vlaneseq
        %v3163 = vshrl.u32 %v3162, 7
        %v3164 = vsub.s32 %v3161, %v3163
        %v3165 = vrot.slane %v3151, %v3164
        %v3166 = vcombine.low %v1902, %v2076
        %v3167 = vcombine.high %v1902, %v2076
        %v3169 = vunpack.c.l.s4 1983009808
        %v3170 = vunpack.c.0.s8 %v3169
        %v3171 = vlaneseq
        %v3172 = vshrl.u32 %v3171, 7
        %v3173 = vsub.s32 %v3170, %v3172
        %v3174 = vrot.slane %v3166, %v3173
        %v3176 = vunpack.c.l.s4 1983009808
        %v3177 = vunpack.c.0.s8 %v3176
        %v3178 = vlaneseq
        %v3179 = vshrl.u32 %v3178, 7
        %v3180 = vsub.s32 %v3177, %v3179
        %v3181 = vrot.slane %v3167, %v3180
        %v3182 = vcombine.low %v1989, %v2163
        %v3183 = vcombine.high %v1989, %v2163
        %v3185 = vunpack.c.l.s4 1983009808
        %v3186 = vunpack.c.0.s8 %v3185
        %v3187 = vlaneseq
        %v3188 = vshrl.u32 %v3187, 7
        %v3189 = vsub.s32 %v3186, %v3188
        %v3190 = vrot.slane %v3182, %v3189
        %v3192 = vunpack.c.l.s4 1983009808
        %v3193 = vunpack.c.0.s8 %v3192
        %v3194 = vlaneseq
        %v3195 = vshrl.u32 %v3194, 7
        %v3196 = vsub.s32 %v3193, %v3195
        %v3197 = vrot.slane %v3183, %v3196
        %v3198 = vcombine.low %v3142, %v3158
        %v3199 = vcombine.high %v3142, %v3158
        %v3201 = vunpack.c.l.s4 1934713408
        %v3202 = vunpack.c.0.s8 %v3201
        %v3203 = vlaneseq
        %v3204 = vshrl.u32 %v3203, 7
        %v3205 = vsub.s32 %v3202, %v3204
        %v3206 = vrot.slane %v3198, %v3205
        %v3208 = vunpack.c.l.s4 1934713408
        %v3209 = vunpack.c.0.s8 %v3208
        %v3210 = vlaneseq
        %v3211 = vshrl.u32 %v3210, 7
        %v3212 = vsub.s32 %v3209, %v3211
        %v3213 = vrot.slane %v3199, %v3212
        %v3214 = vcombine.low %v3149, %v3165
        %v3215 = vcombine.high %v3149, %v3165
        %v3217 = vunpack.c.l.s4 1934713408
        %v3218 = vunpack.c.0.s8 %v3217
        %v3219 = vlaneseq
        %v3220 = vshrl.u32 %v3219, 7
        %v3221 = vsub.s32 %v3218, %v3220
        %v3222 = vrot.slane %v3214, %v3221
        %v3224 = vunpack.c.l.s4 1934713408
        %v3225 = vunpack.c.0.s8 %v3224
        %v3226 = vlaneseq
        %v3227 = vshrl.u32 %v3226, 7
        %v3228 = vsub.s32 %v3225, %v3227
        %v3229 = vrot.slane %v3215, %v3228
        %v3230 = vcombine.low %v3174, %v3190
        %v3231 = vcombine.high %v3174, %v3190
        %v3233 = vunpack.c.l.s4 1934713408
        %v3234 = vunpack.c.0.s8 %v3233
        %v3235 = vlaneseq
        %v3236 = vshrl.u32 %v3235, 7
        %v3237 = vsub.s32 %v3234, %v3236
        %v3238 = vrot.slane %v3230, %v3237
        %v3240 = vunpack.c.l.s4 1934713408
        %v3241 = vunpack.c.0.s8 %v3240
        %v3242 = vlaneseq
        %v3243 = vshrl.u32 %v3242, 7
        %v3244 = vsub.s32 %v3241, %v3243
        %v3245 = vrot.slane %v3231, %v3244
        %v3246 = vcombine.low %v3181, %v3197
        %v3247 = vcombine.high %v3181, %v3197
        %v3249 = vunpack.c.l.s4 1934713408
        %v3250 = vunpack.c.0.s8 %v3249
        %v3251 = vlaneseq
        %v3252 = vshrl.u32 %v3251, 7
        %v3253 = vsub.s32 %v3250, %v3252
        %v3254 = vrot.slane %v3246, %v3253
        %v3256 = vunpack.c.l.s4 1934713408
        %v3257 = vunpack.c.0.s8 %v3256
        %v3258 = vlaneseq
        %v3259 = vshrl.u32 %v3258, 7
        %v3260 = vsub.s32 %v3257, %v3259
        %v3261 = vrot.slane %v3247, %v3260
        %v3262 = vcombine.low %v3206, %v3238
        %v3263 = vcombine.high %v3206, %v3238
        %v3264 = vcombine.low %v3213, %v3245
        %v3265 = vcombine.high %v3213, %v3245
        %v3266 = vcombine.low %v3222, %v3254
        %v3267 = vcombine.high %v3222, %v3254
        %v3268 = vcombine.low %v3229, %v3261
        %v3269 = vcombine.high %v3229, %v3261
        %v3270 = vcombine.low %v2250, %v2424
        %v3271 = vcombine.high %v2250, %v2424
        %v3273 = vunpack.c.l.s4 1983009808
        %v3274 = vunpack.c.0.s8 %v3273
        %v3275 = vlaneseq
        %v3276 = vshrl.u32 %v3275, 7
        %v3277 = vsub.s32 %v3274, %v3276
        %v3278 = vrot.slane %v3270, %v3277
        %v3280 = vunpack.c.l.s4 1983009808
        %v3281 = vunpack.c.0.s8 %v3280
        %v3282 = vlaneseq
        %v3283 = vshrl.u32 %v3282, 7
        %v3284 = vsub.s32 %v3281, %v3283
        %v3285 = vrot.slane %v3271, %v3284
        %v3286 = vcombine.low %v2337, %v2511
        %v3287 = vcombine.high %v2337, %v2511
        %v3289 = vunpack.c.l.s4 1983009808
        %v3290 = vunpack.c.0.s8 %v3289
        %v3291 = vlaneseq
        %v3292 = vshrl.u32 %v3291, 7
        %v3293 = vsub.s32 %v3290, %v3292
        %v3294 = vrot.slane %v3286, %v3293
        %v3296 = vunpack.c.l.s4 1983009808
        %v3297 = vunpack.c.0.s8 %v3296
        %v3298 = vlaneseq
        %v3299 = vshrl.u32 %v3298, 7
        %v3300 = vsub.s32 %v3297, %v3299
        %v3301 = vrot.slane %v3287, %v3300
        %v3302 = vcombine.low %v2598, %v2772
        %v3303 = vcombine.high %v2598, %v2772
        %v3305 = vunpack.c.l.s4 1983009808
        %v3306 = vunpack.c.0.s8 %v3305
        %v3307 = vlaneseq
        %v3308 = vshrl.u32 %v3307, 7
        %v3309 = vsub.s32 %v3306, %v3308
        %v3310 = vrot.slane %v3302, %v3309
        %v3312 = vunpack.c.l.s4 1983009808
        %v3313 = vunpack.c.0.s8 %v3312
        %v3314 = vlaneseq
        %v3315 = vshrl.u32 %v3314, 7
        %v3316 = vsub.s32 %v3313, %v3315
        %v3317 = vrot.slane %v3303, %v3316
        %v3318 = vcombine.low %v2685, %v2859
        %v3319 = vcombine.high %v2685, %v2859
        %v3321 = vunpack.c.l.s4 1983009808
        %v3322 = vunpack.c.0.s8 %v3321
        %v3323 = vlaneseq
        %v3324 = vshrl.u32 %v3323, 7
        %v3325 = vsub.s32 %v3322, %v3324
        %v3326 = vrot.slane %v3318, %v3325
        %v3328 = vunpack.c.l.s4 1983009808
        %v3329 = vunpack.c.0.s8 %v3328
        %v3330 = vlaneseq
        %v3331 = vshrl.u32 %v3330, 7
        %v3332 = vsub.s32 %v3329, %v3331
        %v3333 = vrot.slane %v3319, %v3332
        %v3334 = vcombine.low %v3278, %v3294
        %v3335 = vcombine.high %v3278, %v3294
        %v3337 = vunpack.c.l.s4 1934713408
        %v3338 = vunpack.c.0.s8 %v3337
        %v3339 = vlaneseq
        %v3340 = vshrl.u32 %v3339, 7
        %v3341 = vsub.s32 %v3338, %v3340
        %v3342 = vrot.slane %v3334, %v3341
        %v3344 = vunpack.c.l.s4 1934713408
        %v3345 = vunpack.c.0.s8 %v3344
        %v3346 = vlaneseq
        %v3347 = vshrl.u32 %v3346, 7
        %v3348 = vsub.s32 %v3345, %v3347
        %v3349 = vrot.slane %v3335, %v3348
        %v3350 = vcombine.low %v3285, %v3301
        %v3351 = vcombine.high %v3285, %v3301
        %v3353 = vunpack.c.l.s4 1934713408
        %v3354 = vunpack.c.0.s8 %v3353
        %v3355 = vlaneseq
        %v3356 = vshrl.u32 %v3355, 7
        %v3357 = vsub.s32 %v3354, %v3356
        %v3358 = vrot.slane %v3350, %v3357
        %v3360 = vunpack.c.l.s4 1934713408
        %v3361 = vunpack.c.0.s8 %v3360
        %v3362 = vlaneseq
        %v3363 = vshrl.u32 %v3362, 7
        %v3364 = vsub.s32 %v3361, %v3363
        %v3365 = vrot.slane %v3351, %v3364
        %v3366 = vcombine.low %v3310, %v3326
        %v3367 = vcombine.high %v3310, %v3326
        %v3369 = vunpack.c.l.s4 1934713408
        %v3370 = vunpack.c.0.s8 %v3369
        %v3371 = vlaneseq
        %v3372 = vshrl.u32 %v3371, 7
        %v3373 = vsub.s32 %v3370, %v3372
        %v3374 = vrot.slane %v3366, %v3373
        %v3376 = vunpack.c.l.s4 1934713408
        %v3377 = vunpack.c.0.s8 %v3376
        %v3378 = vlaneseq
        %v3379 = vshrl.u32 %v3378, 7
        %v3380 = vsub.s32 %v3377, %v3379
        %v3381 = vrot.slane %v3367, %v3380
        %v3382 = vcombine.low %v3317, %v3333
        %v3383 = vcombine.high %v3317, %v3333
        %v3385 = vunpack.c.l.s4 1934713408
        %v3386 = vunpack.c.0.s8 %v3385
        %v3387 = vlaneseq
        %v3388 = vshrl.u32 %v3387, 7
        %v3389 = vsub.s32 %v3386, %v3388
        %v3390 = vrot.slane %v3382, %v3389
        %v3392 = vunpack.c.l.s4 1934713408
        %v3393 = vunpack.c.0.s8 %v3392
        %v3394 = vlaneseq
        %v3395 = vshrl.u32 %v3394, 7
        %v3396 = vsub.s32 %v3393, %v3395
        %v3397 = vrot.slane %v3383, %v3396
        %v3398 = vcombine.low %v3342, %v3374
        %v3399 = vcombine.high %v3342, %v3374
        %v3400 = vcombine.low %v3349, %v3381
        %v3401 = vcombine.high %v3349, %v3381
        %v3402 = vcombine.low %v3358, %v3390
        %v3403 = vcombine.high %v3358, %v3390
        %v3404 = vcombine.low %v3365, %v3397
        %v3405 = vcombine.high %v3365, %v3397
        %vm3406 = vcmask 261120
        %v3408 = vsel %vm3406, %v2990, 0
        %v3411 = vsel %vm3406, %v3126, 0
        %3413 = vmatprep.subr.mxu0 0.0
        %3414 = vmatpush1.msra.mxu0 0.0
        %3415 = vmatprep.subr.mxu0 0.0
        %3416 = vmatpush1.msra.mxu0 0.0
        %3417 = vmatprep.subr.mxu0 0.0
        %3418 = vmatpush1.msra.mxu0 0.0
        %3419 = vmatprep.subr.mxu0 0.0
        %3420 = vmatpush1.msra.mxu0 0.0
        %3421 = vmatprep.subr.mxu0 0.0
        %3422 = vmatpush1.msra.mxu0 0.0
        %3423 = vmatprep.subr.mxu0 0.0
        %3424 = vmatpush1.msra.mxu0 0.0
        %3425 = vmatprep.subr.mxu0 0.0
        %3426 = vmatpush1.msra.mxu0 0.0
        %3427 = vmatprep.subr.mxu0 0.0
        %3428 = vmatpush1.msra.mxu0 0.0
        %3429 = vmatprep.subr.mxu0 0.0
        %3430 = vmatpush1.msra.mxu0 0.0
        %3431 = vmatprep.subr.mxu0 0.0
        %3432 = vmatpush1.msra.mxu0 0.0
        %3433 = vmatprep.subr.mxu0 0.0
        %3434 = vmatpush1.msra.mxu0 0.0
        %3435 = vmatprep.subr.mxu0 0.0
        %3436 = vmatpush1.msra.mxu0 0.0
        %3437 = vmatprep.subr.mxu0 0.0
        %3438 = vmatpush1.msra.mxu0 %v1006
        %3439 = vmatprep.subr.mxu0 0.0
        %3440 = vmatpush1.msra.mxu0 %v1005
        %3441 = vmatprep.subr.mxu0 0.0
        %3442 = vmatpush1.msra.mxu0 %v1004
        %3443 = vmatprep.subr.mxu0 0.0
        %3444 = vmatpush1.msra.mxu0 %v1003
        %3445 = vmatprep.subr.mxu0 0.0
        %3446 = vmatpush2.msra.mxu0 0.0
        %3447 = vmatprep.subr.mxu0 0.0
        %3448 = vmatpush2.msra.mxu0 0.0
        %3449 = vmatprep.subr.mxu0 0.0
        %3450 = vmatpush2.msra.mxu0 0.0
        %3451 = vmatprep.subr.mxu0 0.0
        %3452 = vmatpush2.msra.mxu0 0.0
        %3453 = vmatprep.subr.mxu0 0.0
        %3454 = vmatpush2.msra.mxu0 0.0
        %3455 = vmatprep.subr.mxu0 0.0
        %3456 = vmatpush2.msra.mxu0 0.0
        %3457 = vmatprep.subr.mxu0 0.0
        %3458 = vmatpush2.msra.mxu0 0.0
        %3459 = vmatprep.subr.mxu0 0.0
        %3460 = vmatpush2.msra.mxu0 0.0
        %3461 = vmatprep.subr.mxu0 0.0
        %3462 = vmatpush2.msra.mxu0 0.0
        %3463 = vmatprep.subr.mxu0 0.0
        %3464 = vmatpush2.msra.mxu0 0.0
        %3465 = vmatprep.subr.mxu0 0.0
        %3466 = vmatpush2.msra.mxu0 0.0
        %3467 = vmatprep.subr.mxu0 0.0
        %3468 = vmatpush2.msra.mxu0 0.0
        %3469 = vmatprep.subr.mxu0 0.0
        %3470 = vmatpush2.msra.mxu0 0.0
        %3471 = vmatprep.subr.mxu0 0.0
        %3472 = vmatpush2.msra.mxu0 0.0
        %3473 = vmatprep.subr.mxu0 0.0
        %3474 = vmatpush2.msra.mxu0 0.0
        %3475 = vmatprep.subr.mxu0 0.0
        %3476 = vmatpush2.msra.mxu0 0.0
        %3477 = vmatprep.mubr.f32.mxu0 0.0
        %3478 = vmatmul.mubr.f32.gmra.mxu0 %v3408
        %v3479 = vpop.f32.mrf.mxu0
        %v3480 = vadd.f32 0.0, %v3479
        %v3481 = vpop.f32.mrf.mxu0
        %3482 = vmatprep.mubr.f32.mxu0 0.0
        %3483 = vmatmul.mubr.f32.gmra.mxu0 %v3411
        %v3484 = vpop.f32.mrf.mxu0
        %v3485 = vadd.f32 0.0, %v3484
        %v3486 = vpop.f32.mrf.mxu0
        %3487 = vdwg.mxu0
        %v3489 = vsel %vm3406, %v2991, 0
        %v3492 = vsel %vm3406, %v3127, 0
        %3494 = vmatprep.subr.mxu0 0.0
        %3495 = vmatpush1.msra.mxu0 0.0
        %3496 = vmatprep.subr.mxu0 0.0
        %3497 = vmatpush1.msra.mxu0 0.0
        %3498 = vmatprep.subr.mxu0 0.0
        %3499 = vmatpush1.msra.mxu0 0.0
        %3500 = vmatprep.subr.mxu0 0.0
        %3501 = vmatpush1.msra.mxu0 0.0
        %3502 = vmatprep.subr.mxu0 0.0
        %3503 = vmatpush1.msra.mxu0 0.0
        %3504 = vmatprep.subr.mxu0 0.0
        %3505 = vmatpush1.msra.mxu0 0.0
        %3506 = vmatprep.subr.mxu0 0.0
        %3507 = vmatpush1.msra.mxu0 0.0
        %3508 = vmatprep.subr.mxu0 0.0
        %3509 = vmatpush1.msra.mxu0 0.0
        %3510 = vmatprep.subr.mxu0 0.0
        %3511 = vmatpush1.msra.mxu0 0.0
        %3512 = vmatprep.subr.mxu0 0.0
        %3513 = vmatpush1.msra.mxu0 0.0
        %3514 = vmatprep.subr.mxu0 0.0
        %3515 = vmatpush1.msra.mxu0 0.0
        %3516 = vmatprep.subr.mxu0 0.0
        %3517 = vmatpush1.msra.mxu0 0.0
        %3518 = vmatprep.subr.mxu0 0.0
        %3519 = vmatpush1.msra.mxu0 %v1010
        %3520 = vmatprep.subr.mxu0 0.0
        %3521 = vmatpush1.msra.mxu0 %v1009
        %3522 = vmatprep.subr.mxu0 0.0
        %3523 = vmatpush1.msra.mxu0 %v1008
        %3524 = vmatprep.subr.mxu0 0.0
        %3525 = vmatpush1.msra.mxu0 %v1007
        %3526 = vmatprep.subr.mxu0 0.0
        %3527 = vmatpush2.msra.mxu0 0.0
        %3528 = vmatprep.subr.mxu0 0.0
        %3529 = vmatpush2.msra.mxu0 0.0
        %3530 = vmatprep.subr.mxu0 0.0
        %3531 = vmatpush2.msra.mxu0 0.0
        %3532 = vmatprep.subr.mxu0 0.0
        %3533 = vmatpush2.msra.mxu0 0.0
        %3534 = vmatprep.subr.mxu0 0.0
        %3535 = vmatpush2.msra.mxu0 0.0
        %3536 = vmatprep.subr.mxu0 0.0
        %3537 = vmatpush2.msra.mxu0 0.0
        %3538 = vmatprep.subr.mxu0 0.0
        %3539 = vmatpush2.msra.mxu0 0.0
        %3540 = vmatprep.subr.mxu0 0.0
        %3541 = vmatpush2.msra.mxu0 0.0
        %3542 = vmatprep.subr.mxu0 0.0
        %3543 = vmatpush2.msra.mxu0 0.0
        %3544 = vmatprep.subr.mxu0 0.0
        %3545 = vmatpush2.msra.mxu0 0.0
        %3546 = vmatprep.subr.mxu0 0.0
        %3547 = vmatpush2.msra.mxu0 0.0
        %3548 = vmatprep.subr.mxu0 0.0
        %3549 = vmatpush2.msra.mxu0 0.0
        %3550 = vmatprep.subr.mxu0 0.0
        %3551 = vmatpush2.msra.mxu0 0.0
        %3552 = vmatprep.subr.mxu0 0.0
        %3553 = vmatpush2.msra.mxu0 0.0
        %3554 = vmatprep.subr.mxu0 0.0
        %3555 = vmatpush2.msra.mxu0 0.0
        %3556 = vmatprep.subr.mxu0 0.0
        %3557 = vmatpush2.msra.mxu0 0.0
        %3558 = vmatprep.mubr.f32.mxu0 0.0
        %3559 = vmatmul.mubr.f32.gmra.mxu0 %v3489
        %v3560 = vpop.f32.mrf.mxu0
        %v3561 = vadd.f32 0.0, %v3560
        %v3562 = vpop.f32.mrf.mxu0
        %3563 = vmatprep.mubr.f32.mxu0 0.0
        %3564 = vmatmul.mubr.f32.gmra.mxu0 %v3492
        %v3565 = vpop.f32.mrf.mxu0
        %v3566 = vadd.f32 0.0, %v3565
        %v3567 = vpop.f32.mrf.mxu0
        %3568 = vdwg.mxu0
        %v3570 = vsel %vm3406, %v2992, 0
        %v3573 = vsel %vm3406, %v3128, 0
        %3575 = vmatprep.subr.mxu0 0.0
        %3576 = vmatpush1.msra.mxu0 0.0
        %3577 = vmatprep.subr.mxu0 0.0
        %3578 = vmatpush1.msra.mxu0 0.0
        %3579 = vmatprep.subr.mxu0 0.0
        %3580 = vmatpush1.msra.mxu0 0.0
        %3581 = vmatprep.subr.mxu0 0.0
        %3582 = vmatpush1.msra.mxu0 0.0
        %3583 = vmatprep.subr.mxu0 0.0
        %3584 = vmatpush1.msra.mxu0 0.0
        %3585 = vmatprep.subr.mxu0 0.0
        %3586 = vmatpush1.msra.mxu0 0.0
        %3587 = vmatprep.subr.mxu0 0.0
        %3588 = vmatpush1.msra.mxu0 0.0
        %3589 = vmatprep.subr.mxu0 0.0
        %3590 = vmatpush1.msra.mxu0 0.0
        %3591 = vmatprep.subr.mxu0 0.0
        %3592 = vmatpush1.msra.mxu0 0.0
        %3593 = vmatprep.subr.mxu0 0.0
        %3594 = vmatpush1.msra.mxu0 0.0
        %3595 = vmatprep.subr.mxu0 0.0
        %3596 = vmatpush1.msra.mxu0 0.0
        %3597 = vmatprep.subr.mxu0 0.0
        %3598 = vmatpush1.msra.mxu0 0.0
        %3599 = vmatprep.subr.mxu0 0.0
        %3600 = vmatpush1.msra.mxu0 %v1014
        %3601 = vmatprep.subr.mxu0 0.0
        %3602 = vmatpush1.msra.mxu0 %v1013
        %3603 = vmatprep.subr.mxu0 0.0
        %3604 = vmatpush1.msra.mxu0 %v1012
        %3605 = vmatprep.subr.mxu0 0.0
        %3606 = vmatpush1.msra.mxu0 %v1011
        %3607 = vmatprep.subr.mxu0 0.0
        %3608 = vmatpush2.msra.mxu0 0.0
        %3609 = vmatprep.subr.mxu0 0.0
        %3610 = vmatpush2.msra.mxu0 0.0
        %3611 = vmatprep.subr.mxu0 0.0
        %3612 = vmatpush2.msra.mxu0 0.0
        %3613 = vmatprep.subr.mxu0 0.0
        %3614 = vmatpush2.msra.mxu0 0.0
        %3615 = vmatprep.subr.mxu0 0.0
        %3616 = vmatpush2.msra.mxu0 0.0
        %3617 = vmatprep.subr.mxu0 0.0
        %3618 = vmatpush2.msra.mxu0 0.0
        %3619 = vmatprep.subr.mxu0 0.0
        %3620 = vmatpush2.msra.mxu0 0.0
        %3621 = vmatprep.subr.mxu0 0.0
        %3622 = vmatpush2.msra.mxu0 0.0
        %3623 = vmatprep.subr.mxu0 0.0
        %3624 = vmatpush2.msra.mxu0 0.0
        %3625 = vmatprep.subr.mxu0 0.0
        %3626 = vmatpush2.msra.mxu0 0.0
        %3627 = vmatprep.subr.mxu0 0.0
        %3628 = vmatpush2.msra.mxu0 0.0
        %3629 = vmatprep.subr.mxu0 0.0
        %3630 = vmatpush2.msra.mxu0 0.0
        %3631 = vmatprep.subr.mxu0 0.0
        %3632 = vmatpush2.msra.mxu0 0.0
        %3633 = vmatprep.subr.mxu0 0.0
        %3634 = vmatpush2.msra.mxu0 0.0
        %3635 = vmatprep.subr.mxu0 0.0
        %3636 = vmatpush2.msra.mxu0 0.0
        %3637 = vmatprep.subr.mxu0 0.0
        %3638 = vmatpush2.msra.mxu0 0.0
        %3639 = vmatprep.mubr.f32.mxu0 0.0
        %3640 = vmatmul.mubr.f32.gmra.mxu0 %v3570
        %v3641 = vpop.f32.mrf.mxu0
        %v3642 = vadd.f32 0.0, %v3641
        %v3643 = vpop.f32.mrf.mxu0
        %3644 = vmatprep.mubr.f32.mxu0 0.0
        %3645 = vmatmul.mubr.f32.gmra.mxu0 %v3573
        %v3646 = vpop.f32.mrf.mxu0
        %v3647 = vadd.f32 0.0, %v3646
        %v3648 = vpop.f32.mrf.mxu0
        %3649 = vdwg.mxu0
        %v3651 = vsel %vm3406, %v2993, 0
        %v3654 = vsel %vm3406, %v3129, 0
        %3656 = vmatprep.subr.mxu0 0.0
        %3657 = vmatpush1.msra.mxu0 0.0
        %3658 = vmatprep.subr.mxu0 0.0
        %3659 = vmatpush1.msra.mxu0 0.0
        %3660 = vmatprep.subr.mxu0 0.0
        %3661 = vmatpush1.msra.mxu0 0.0
        %3662 = vmatprep.subr.mxu0 0.0
        %3663 = vmatpush1.msra.mxu0 0.0
        %3664 = vmatprep.subr.mxu0 0.0
        %3665 = vmatpush1.msra.mxu0 0.0
        %3666 = vmatprep.subr.mxu0 0.0
        %3667 = vmatpush1.msra.mxu0 0.0
        %3668 = vmatprep.subr.mxu0 0.0
        %3669 = vmatpush1.msra.mxu0 0.0
        %3670 = vmatprep.subr.mxu0 0.0
        %3671 = vmatpush1.msra.mxu0 0.0
        %3672 = vmatprep.subr.mxu0 0.0
        %3673 = vmatpush1.msra.mxu0 0.0
        %3674 = vmatprep.subr.mxu0 0.0
        %3675 = vmatpush1.msra.mxu0 0.0
        %3676 = vmatprep.subr.mxu0 0.0
        %3677 = vmatpush1.msra.mxu0 0.0
        %3678 = vmatprep.subr.mxu0 0.0
        %3679 = vmatpush1.msra.mxu0 0.0
        %3680 = vmatprep.subr.mxu0 0.0
        %3681 = vmatpush1.msra.mxu0 %v1018
        %3682 = vmatprep.subr.mxu0 0.0
        %3683 = vmatpush1.msra.mxu0 %v1017
        %3684 = vmatprep.subr.mxu0 0.0
        %3685 = vmatpush1.msra.mxu0 %v1016
        %3686 = vmatprep.subr.mxu0 0.0
        %3687 = vmatpush1.msra.mxu0 %v1015
        %3688 = vmatprep.subr.mxu0 0.0
        %3689 = vmatpush2.msra.mxu0 0.0
        %3690 = vmatprep.subr.mxu0 0.0
        %3691 = vmatpush2.msra.mxu0 0.0
        %3692 = vmatprep.subr.mxu0 0.0
        %3693 = vmatpush2.msra.mxu0 0.0
        %3694 = vmatprep.subr.mxu0 0.0
        %3695 = vmatpush2.msra.mxu0 0.0
        %3696 = vmatprep.subr.mxu0 0.0
        %3697 = vmatpush2.msra.mxu0 0.0
        %3698 = vmatprep.subr.mxu0 0.0
        %3699 = vmatpush2.msra.mxu0 0.0
        %3700 = vmatprep.subr.mxu0 0.0
        %3701 = vmatpush2.msra.mxu0 0.0
        %3702 = vmatprep.subr.mxu0 0.0
        %3703 = vmatpush2.msra.mxu0 0.0
        %3704 = vmatprep.subr.mxu0 0.0
        %3705 = vmatpush2.msra.mxu0 0.0
        %3706 = vmatprep.subr.mxu0 0.0
        %3707 = vmatpush2.msra.mxu0 0.0
        %3708 = vmatprep.subr.mxu0 0.0
        %3709 = vmatpush2.msra.mxu0 0.0
        %3710 = vmatprep.subr.mxu0 0.0
        %3711 = vmatpush2.msra.mxu0 0.0
        %3712 = vmatprep.subr.mxu0 0.0
        %3713 = vmatpush2.msra.mxu0 0.0
        %3714 = vmatprep.subr.mxu0 0.0
        %3715 = vmatpush2.msra.mxu0 0.0
        %3716 = vmatprep.subr.mxu0 0.0
        %3717 = vmatpush2.msra.mxu0 0.0
        %3718 = vmatprep.subr.mxu0 0.0
        %3719 = vmatpush2.msra.mxu0 0.0
        %3720 = vmatprep.mubr.f32.mxu0 0.0
        %3721 = vmatmul.mubr.f32.gmra.mxu0 %v3651
        %v3722 = vpop.f32.mrf.mxu0
        %v3723 = vadd.f32 0.0, %v3722
        %v3724 = vpop.f32.mrf.mxu0
        %3725 = vmatprep.mubr.f32.mxu0 0.0
        %3726 = vmatmul.mubr.f32.gmra.mxu0 %v3654
        %v3727 = vpop.f32.mrf.mxu0
        %v3728 = vadd.f32 0.0, %v3727
        %v3729 = vpop.f32.mrf.mxu0
        %3730 = vdwg.mxu0
        %v3732 = vsel %vm3406, %v2994, 0
        %v3735 = vsel %vm3406, %v3130, 0
        %3737 = vmatprep.subr.mxu0 0.0
        %3738 = vmatpush1.msra.mxu0 0.0
        %3739 = vmatprep.subr.mxu0 0.0
        %3740 = vmatpush1.msra.mxu0 0.0
        %3741 = vmatprep.subr.mxu0 0.0
        %3742 = vmatpush1.msra.mxu0 0.0
        %3743 = vmatprep.subr.mxu0 0.0
        %3744 = vmatpush1.msra.mxu0 0.0
        %3745 = vmatprep.subr.mxu0 0.0
        %3746 = vmatpush1.msra.mxu0 0.0
        %3747 = vmatprep.subr.mxu0 0.0
        %3748 = vmatpush1.msra.mxu0 0.0
        %3749 = vmatprep.subr.mxu0 0.0
        %3750 = vmatpush1.msra.mxu0 0.0
        %3751 = vmatprep.subr.mxu0 0.0
        %3752 = vmatpush1.msra.mxu0 0.0
        %3753 = vmatprep.subr.mxu0 0.0
        %3754 = vmatpush1.msra.mxu0 0.0
        %3755 = vmatprep.subr.mxu0 0.0
        %3756 = vmatpush1.msra.mxu0 0.0
        %3757 = vmatprep.subr.mxu0 0.0
        %3758 = vmatpush1.msra.mxu0 0.0
        %3759 = vmatprep.subr.mxu0 0.0
        %3760 = vmatpush1.msra.mxu0 0.0
        %3761 = vmatprep.subr.mxu0 0.0
        %3762 = vmatpush1.msra.mxu0 %v1022
        %3763 = vmatprep.subr.mxu0 0.0
        %3764 = vmatpush1.msra.mxu0 %v1021
        %3765 = vmatprep.subr.mxu0 0.0
        %3766 = vmatpush1.msra.mxu0 %v1020
        %3767 = vmatprep.subr.mxu0 0.0
        %3768 = vmatpush1.msra.mxu0 %v1019
        %3769 = vmatprep.subr.mxu0 0.0
        %3770 = vmatpush2.msra.mxu0 0.0
        %3771 = vmatprep.subr.mxu0 0.0
        %3772 = vmatpush2.msra.mxu0 0.0
        %3773 = vmatprep.subr.mxu0 0.0
        %3774 = vmatpush2.msra.mxu0 0.0
        %3775 = vmatprep.subr.mxu0 0.0
        %3776 = vmatpush2.msra.mxu0 0.0
        %3777 = vmatprep.subr.mxu0 0.0
        %3778 = vmatpush2.msra.mxu0 0.0
        %3779 = vmatprep.subr.mxu0 0.0
        %3780 = vmatpush2.msra.mxu0 0.0
        %3781 = vmatprep.subr.mxu0 0.0
        %3782 = vmatpush2.msra.mxu0 0.0
        %3783 = vmatprep.subr.mxu0 0.0
        %3784 = vmatpush2.msra.mxu0 0.0
        %3785 = vmatprep.subr.mxu0 0.0
        %3786 = vmatpush2.msra.mxu0 0.0
        %3787 = vmatprep.subr.mxu0 0.0
        %3788 = vmatpush2.msra.mxu0 0.0
        %3789 = vmatprep.subr.mxu0 0.0
        %3790 = vmatpush2.msra.mxu0 0.0
        %3791 = vmatprep.subr.mxu0 0.0
        %3792 = vmatpush2.msra.mxu0 0.0
        %3793 = vmatprep.subr.mxu0 0.0
        %3794 = vmatpush2.msra.mxu0 0.0
        %3795 = vmatprep.subr.mxu0 0.0
        %3796 = vmatpush2.msra.mxu0 0.0
        %3797 = vmatprep.subr.mxu0 0.0
        %3798 = vmatpush2.msra.mxu0 0.0
        %3799 = vmatprep.subr.mxu0 0.0
        %3800 = vmatpush2.msra.mxu0 0.0
        %3801 = vmatprep.mubr.f32.mxu0 0.0
        %3802 = vmatmul.mubr.f32.gmra.mxu0 %v3732
        %v3803 = vpop.f32.mrf.mxu0
        %v3804 = vadd.f32 0.0, %v3803
        %v3805 = vpop.f32.mrf.mxu0
        %3806 = vmatprep.mubr.f32.mxu0 0.0
        %3807 = vmatmul.mubr.f32.gmra.mxu0 %v3735
        %v3808 = vpop.f32.mrf.mxu0
        %v3809 = vadd.f32 0.0, %v3808
        %v3810 = vpop.f32.mrf.mxu0
        %3811 = vdwg.mxu0
        %v3813 = vsel %vm3406, %v2995, 0
        %v3816 = vsel %vm3406, %v3131, 0
        %3818 = vmatprep.subr.mxu0 0.0
        %3819 = vmatpush1.msra.mxu0 0.0
        %3820 = vmatprep.subr.mxu0 0.0
        %3821 = vmatpush1.msra.mxu0 0.0
        %3822 = vmatprep.subr.mxu0 0.0
        %3823 = vmatpush1.msra.mxu0 0.0
        %3824 = vmatprep.subr.mxu0 0.0
        %3825 = vmatpush1.msra.mxu0 0.0
        %3826 = vmatprep.subr.mxu0 0.0
        %3827 = vmatpush1.msra.mxu0 0.0
        %3828 = vmatprep.subr.mxu0 0.0
        %3829 = vmatpush1.msra.mxu0 0.0
        %3830 = vmatprep.subr.mxu0 0.0
        %3831 = vmatpush1.msra.mxu0 0.0
        %3832 = vmatprep.subr.mxu0 0.0
        %3833 = vmatpush1.msra.mxu0 0.0
        %3834 = vmatprep.subr.mxu0 0.0
        %3835 = vmatpush1.msra.mxu0 0.0
        %3836 = vmatprep.subr.mxu0 0.0
        %3837 = vmatpush1.msra.mxu0 0.0
        %3838 = vmatprep.subr.mxu0 0.0
        %3839 = vmatpush1.msra.mxu0 0.0
        %3840 = vmatprep.subr.mxu0 0.0
        %3841 = vmatpush1.msra.mxu0 0.0
        %3842 = vmatprep.subr.mxu0 0.0
        %3843 = vmatpush1.msra.mxu0 %v1026
        %3844 = vmatprep.subr.mxu0 0.0
        %3845 = vmatpush1.msra.mxu0 %v1025
        %3846 = vmatprep.subr.mxu0 0.0
        %3847 = vmatpush1.msra.mxu0 %v1024
        %3848 = vmatprep.subr.mxu0 0.0
        %3849 = vmatpush1.msra.mxu0 %v1023
        %3850 = vmatprep.subr.mxu0 0.0
        %3851 = vmatpush2.msra.mxu0 0.0
        %3852 = vmatprep.subr.mxu0 0.0
        %3853 = vmatpush2.msra.mxu0 0.0
        %3854 = vmatprep.subr.mxu0 0.0
        %3855 = vmatpush2.msra.mxu0 0.0
        %3856 = vmatprep.subr.mxu0 0.0
        %3857 = vmatpush2.msra.mxu0 0.0
        %3858 = vmatprep.subr.mxu0 0.0
        %3859 = vmatpush2.msra.mxu0 0.0
        %3860 = vmatprep.subr.mxu0 0.0
        %3861 = vmatpush2.msra.mxu0 0.0
        %3862 = vmatprep.subr.mxu0 0.0
        %3863 = vmatpush2.msra.mxu0 0.0
        %3864 = vmatprep.subr.mxu0 0.0
        %3865 = vmatpush2.msra.mxu0 0.0
        %3866 = vmatprep.subr.mxu0 0.0
        %3867 = vmatpush2.msra.mxu0 0.0
        %3868 = vmatprep.subr.mxu0 0.0
        %3869 = vmatpush2.msra.mxu0 0.0
        %3870 = vmatprep.subr.mxu0 0.0
        %3871 = vmatpush2.msra.mxu0 0.0
        %3872 = vmatprep.subr.mxu0 0.0
        %3873 = vmatpush2.msra.mxu0 0.0
        %3874 = vmatprep.subr.mxu0 0.0
        %3875 = vmatpush2.msra.mxu0 0.0
        %3876 = vmatprep.subr.mxu0 0.0
        %3877 = vmatpush2.msra.mxu0 0.0
        %3878 = vmatprep.subr.mxu0 0.0
        %3879 = vmatpush2.msra.mxu0 0.0
        %3880 = vmatprep.subr.mxu0 0.0
        %3881 = vmatpush2.msra.mxu0 0.0
        %3882 = vmatprep.mubr.f32.mxu0 0.0
        %3883 = vmatmul.mubr.f32.gmra.mxu0 %v3813
        %v3884 = vpop.f32.mrf.mxu0
        %v3885 = vadd.f32 0.0, %v3884
        %v3886 = vpop.f32.mrf.mxu0
        %3887 = vmatprep.mubr.f32.mxu0 0.0
        %3888 = vmatmul.mubr.f32.gmra.mxu0 %v3816
        %v3889 = vpop.f32.mrf.mxu0
        %v3890 = vadd.f32 0.0, %v3889
        %v3891 = vpop.f32.mrf.mxu0
        %3892 = vdwg.mxu0
        %v3894 = vsel %vm3406, %v2996, 0
        %v3897 = vsel %vm3406, %v3132, 0
        %3899 = vmatprep.subr.mxu0 0.0
        %3900 = vmatpush1.msra.mxu0 0.0
        %3901 = vmatprep.subr.mxu0 0.0
        %3902 = vmatpush1.msra.mxu0 0.0
        %3903 = vmatprep.subr.mxu0 0.0
        %3904 = vmatpush1.msra.mxu0 0.0
        %3905 = vmatprep.subr.mxu0 0.0
        %3906 = vmatpush1.msra.mxu0 0.0
        %3907 = vmatprep.subr.mxu0 0.0
        %3908 = vmatpush1.msra.mxu0 0.0
        %3909 = vmatprep.subr.mxu0 0.0
        %3910 = vmatpush1.msra.mxu0 0.0
        %3911 = vmatprep.subr.mxu0 0.0
        %3912 = vmatpush1.msra.mxu0 0.0
        %3913 = vmatprep.subr.mxu0 0.0
        %3914 = vmatpush1.msra.mxu0 0.0
        %3915 = vmatprep.subr.mxu0 0.0
        %3916 = vmatpush1.msra.mxu0 0.0
        %3917 = vmatprep.subr.mxu0 0.0
        %3918 = vmatpush1.msra.mxu0 0.0
        %3919 = vmatprep.subr.mxu0 0.0
        %3920 = vmatpush1.msra.mxu0 0.0
        %3921 = vmatprep.subr.mxu0 0.0
        %3922 = vmatpush1.msra.mxu0 0.0
        %3923 = vmatprep.subr.mxu0 0.0
        %3924 = vmatpush1.msra.mxu0 %v1030
        %3925 = vmatprep.subr.mxu0 0.0
        %3926 = vmatpush1.msra.mxu0 %v1029
        %3927 = vmatprep.subr.mxu0 0.0
        %3928 = vmatpush1.msra.mxu0 %v1028
        %3929 = vmatprep.subr.mxu0 0.0
        %3930 = vmatpush1.msra.mxu0 %v1027
        %3931 = vmatprep.subr.mxu0 0.0
        %3932 = vmatpush2.msra.mxu0 0.0
        %3933 = vmatprep.subr.mxu0 0.0
        %3934 = vmatpush2.msra.mxu0 0.0
        %3935 = vmatprep.subr.mxu0 0.0
        %3936 = vmatpush2.msra.mxu0 0.0
        %3937 = vmatprep.subr.mxu0 0.0
        %3938 = vmatpush2.msra.mxu0 0.0
        %3939 = vmatprep.subr.mxu0 0.0
        %3940 = vmatpush2.msra.mxu0 0.0
        %3941 = vmatprep.subr.mxu0 0.0
        %3942 = vmatpush2.msra.mxu0 0.0
        %3943 = vmatprep.subr.mxu0 0.0
        %3944 = vmatpush2.msra.mxu0 0.0
        %3945 = vmatprep.subr.mxu0 0.0
        %3946 = vmatpush2.msra.mxu0 0.0
        %3947 = vmatprep.subr.mxu0 0.0
        %3948 = vmatpush2.msra.mxu0 0.0
        %3949 = vmatprep.subr.mxu0 0.0
        %3950 = vmatpush2.msra.mxu0 0.0
        %3951 = vmatprep.subr.mxu0 0.0
        %3952 = vmatpush2.msra.mxu0 0.0
        %3953 = vmatprep.subr.mxu0 0.0
        %3954 = vmatpush2.msra.mxu0 0.0
        %3955 = vmatprep.subr.mxu0 0.0
        %3956 = vmatpush2.msra.mxu0 0.0
        %3957 = vmatprep.subr.mxu0 0.0
        %3958 = vmatpush2.msra.mxu0 0.0
        %3959 = vmatprep.subr.mxu0 0.0
        %3960 = vmatpush2.msra.mxu0 0.0
        %3961 = vmatprep.subr.mxu0 0.0
        %3962 = vmatpush2.msra.mxu0 0.0
        %3963 = vmatprep.mubr.f32.mxu0 0.0
        %3964 = vmatmul.mubr.f32.gmra.mxu0 %v3894
        %v3965 = vpop.f32.mrf.mxu0
        %v3966 = vadd.f32 0.0, %v3965
        %v3967 = vpop.f32.mrf.mxu0
        %3968 = vmatprep.mubr.f32.mxu0 0.0
        %3969 = vmatmul.mubr.f32.gmra.mxu0 %v3897
        %v3970 = vpop.f32.mrf.mxu0
        %v3971 = vadd.f32 0.0, %v3970
        %v3972 = vpop.f32.mrf.mxu0
        %3973 = vdwg.mxu0
        %v3975 = vsel %vm3406, %v2997, 0
        %v3978 = vsel %vm3406, %v3133, 0
        %3980 = vmatprep.subr.mxu0 0.0
        %3981 = vmatpush1.msra.mxu0 0.0
        %3982 = vmatprep.subr.mxu0 0.0
        %3983 = vmatpush1.msra.mxu0 0.0
        %3984 = vmatprep.subr.mxu0 0.0
        %3985 = vmatpush1.msra.mxu0 0.0
        %3986 = vmatprep.subr.mxu0 0.0
        %3987 = vmatpush1.msra.mxu0 0.0
        %3988 = vmatprep.subr.mxu0 0.0
        %3989 = vmatpush1.msra.mxu0 0.0
        %3990 = vmatprep.subr.mxu0 0.0
        %3991 = vmatpush1.msra.mxu0 0.0
        %3992 = vmatprep.subr.mxu0 0.0
        %3993 = vmatpush1.msra.mxu0 0.0
        %3994 = vmatprep.subr.mxu0 0.0
        %3995 = vmatpush1.msra.mxu0 0.0
        %3996 = vmatprep.subr.mxu0 0.0
        %3997 = vmatpush1.msra.mxu0 0.0
        %3998 = vmatprep.subr.mxu0 0.0
        %3999 = vmatpush1.msra.mxu0 0.0
        %4000 = vmatprep.subr.mxu0 0.0
        %4001 = vmatpush1.msra.mxu0 0.0
        %4002 = vmatprep.subr.mxu0 0.0
        %4003 = vmatpush1.msra.mxu0 0.0
        %4004 = vmatprep.subr.mxu0 0.0
        %4005 = vmatpush1.msra.mxu0 %v1034
        %4006 = vmatprep.subr.mxu0 0.0
        %4007 = vmatpush1.msra.mxu0 %v1033
        %4008 = vmatprep.subr.mxu0 0.0
        %4009 = vmatpush1.msra.mxu0 %v1032
        %4010 = vmatprep.subr.mxu0 0.0
        %4011 = vmatpush1.msra.mxu0 %v1031
        %4012 = vmatprep.subr.mxu0 0.0
        %4013 = vmatpush2.msra.mxu0 0.0
        %4014 = vmatprep.subr.mxu0 0.0
        %4015 = vmatpush2.msra.mxu0 0.0
        %4016 = vmatprep.subr.mxu0 0.0
        %4017 = vmatpush2.msra.mxu0 0.0
        %4018 = vmatprep.subr.mxu0 0.0
        %4019 = vmatpush2.msra.mxu0 0.0
        %4020 = vmatprep.subr.mxu0 0.0
        %4021 = vmatpush2.msra.mxu0 0.0
        %4022 = vmatprep.subr.mxu0 0.0
        %4023 = vmatpush2.msra.mxu0 0.0
        %4024 = vmatprep.subr.mxu0 0.0
        %4025 = vmatpush2.msra.mxu0 0.0
        %4026 = vmatprep.subr.mxu0 0.0
        %4027 = vmatpush2.msra.mxu0 0.0
        %4028 = vmatprep.subr.mxu0 0.0
        %4029 = vmatpush2.msra.mxu0 0.0
        %4030 = vmatprep.subr.mxu0 0.0
        %4031 = vmatpush2.msra.mxu0 0.0
        %4032 = vmatprep.subr.mxu0 0.0
        %4033 = vmatpush2.msra.mxu0 0.0
        %4034 = vmatprep.subr.mxu0 0.0
        %4035 = vmatpush2.msra.mxu0 0.0
        %4036 = vmatprep.subr.mxu0 0.0
        %4037 = vmatpush2.msra.mxu0 0.0
        %4038 = vmatprep.subr.mxu0 0.0
        %4039 = vmatpush2.msra.mxu0 0.0
        %4040 = vmatprep.subr.mxu0 0.0
        %4041 = vmatpush2.msra.mxu0 0.0
        %4042 = vmatprep.subr.mxu0 0.0
        %4043 = vmatpush2.msra.mxu0 0.0
        %4044 = vmatprep.mubr.f32.mxu0 0.0
        %4045 = vmatmul.mubr.f32.gmra.mxu0 %v3975
        %v4046 = vpop.f32.mrf.mxu0
        %v4047 = vadd.f32 0.0, %v4046
        %v4048 = vpop.f32.mrf.mxu0
        %4049 = vmatprep.mubr.f32.mxu0 0.0
        %4050 = vmatmul.mubr.f32.gmra.mxu0 %v3978
        %v4051 = vpop.f32.mrf.mxu0
        %v4052 = vadd.f32 0.0, %v4051
        %v4053 = vpop.f32.mrf.mxu0
        %4054 = vdwg.mxu0
        %v4056 = vsel %vm3406, %v3262, 0
        %v4059 = vsel %vm3406, %v3398, 0
        %4061 = vmatprep.subr.mxu0 0.0
        %4062 = vmatpush1.msra.mxu0 0.0
        %4063 = vmatprep.subr.mxu0 0.0
        %4064 = vmatpush1.msra.mxu0 0.0
        %4065 = vmatprep.subr.mxu0 0.0
        %4066 = vmatpush1.msra.mxu0 0.0
        %4067 = vmatprep.subr.mxu0 0.0
        %4068 = vmatpush1.msra.mxu0 0.0
        %4069 = vmatprep.subr.mxu0 0.0
        %4070 = vmatpush1.msra.mxu0 0.0
        %4071 = vmatprep.subr.mxu0 0.0
        %4072 = vmatpush1.msra.mxu0 0.0
        %4073 = vmatprep.subr.mxu0 0.0
        %4074 = vmatpush1.msra.mxu0 0.0
        %4075 = vmatprep.subr.mxu0 0.0
        %4076 = vmatpush1.msra.mxu0 0.0
        %4077 = vmatprep.subr.mxu0 0.0
        %4078 = vmatpush1.msra.mxu0 0.0
        %4079 = vmatprep.subr.mxu0 0.0
        %4080 = vmatpush1.msra.mxu0 0.0
        %4081 = vmatprep.subr.mxu0 0.0
        %4082 = vmatpush1.msra.mxu0 0.0
        %4083 = vmatprep.subr.mxu0 0.0
        %4084 = vmatpush1.msra.mxu0 0.0
        %4085 = vmatprep.subr.mxu0 0.0
        %4086 = vmatpush1.msra.mxu0 %v1038
        %4087 = vmatprep.subr.mxu0 0.0
        %4088 = vmatpush1.msra.mxu0 %v1037
        %4089 = vmatprep.subr.mxu0 0.0
        %4090 = vmatpush1.msra.mxu0 %v1036
        %4091 = vmatprep.subr.mxu0 0.0
        %4092 = vmatpush1.msra.mxu0 %v1035
        %4093 = vmatprep.subr.mxu0 0.0
        %4094 = vmatpush2.msra.mxu0 0.0
        %4095 = vmatprep.subr.mxu0 0.0
        %4096 = vmatpush2.msra.mxu0 0.0
        %4097 = vmatprep.subr.mxu0 0.0
        %4098 = vmatpush2.msra.mxu0 0.0
        %4099 = vmatprep.subr.mxu0 0.0
        %4100 = vmatpush2.msra.mxu0 0.0
        %4101 = vmatprep.subr.mxu0 0.0
        %4102 = vmatpush2.msra.mxu0 0.0
        %4103 = vmatprep.subr.mxu0 0.0
        %4104 = vmatpush2.msra.mxu0 0.0
        %4105 = vmatprep.subr.mxu0 0.0
        %4106 = vmatpush2.msra.mxu0 0.0
        %4107 = vmatprep.subr.mxu0 0.0
        %4108 = vmatpush2.msra.mxu0 0.0
        %4109 = vmatprep.subr.mxu0 0.0
        %4110 = vmatpush2.msra.mxu0 0.0
        %4111 = vmatprep.subr.mxu0 0.0
        %4112 = vmatpush2.msra.mxu0 0.0
        %4113 = vmatprep.subr.mxu0 0.0
        %4114 = vmatpush2.msra.mxu0 0.0
        %4115 = vmatprep.subr.mxu0 0.0
        %4116 = vmatpush2.msra.mxu0 0.0
        %4117 = vmatprep.subr.mxu0 0.0
        %4118 = vmatpush2.msra.mxu0 0.0
        %4119 = vmatprep.subr.mxu0 0.0
        %4120 = vmatpush2.msra.mxu0 0.0
        %4121 = vmatprep.subr.mxu0 0.0
        %4122 = vmatpush2.msra.mxu0 0.0
        %4123 = vmatprep.subr.mxu0 0.0
        %4124 = vmatpush2.msra.mxu0 0.0
        %4125 = vmatprep.mubr.f32.mxu0 0.0
        %4126 = vmatmul.mubr.f32.gmra.mxu0 %v4056
        %v4127 = vpop.f32.mrf.mxu0
        %v4128 = vadd.f32 0.0, %v4127
        %v4129 = vpop.f32.mrf.mxu0
        %4130 = vmatprep.mubr.f32.mxu0 0.0
        %4131 = vmatmul.mubr.f32.gmra.mxu0 %v4059
        %v4132 = vpop.f32.mrf.mxu0
        %v4133 = vadd.f32 0.0, %v4132
        %v4134 = vpop.f32.mrf.mxu0
        %4135 = vdwg.mxu0
        %v4137 = vsel %vm3406, %v3263, 0
        %v4140 = vsel %vm3406, %v3399, 0
        %4142 = vmatprep.subr.mxu0 0.0
        %4143 = vmatpush1.msra.mxu0 0.0
        %4144 = vmatprep.subr.mxu0 0.0
        %4145 = vmatpush1.msra.mxu0 0.0
        %4146 = vmatprep.subr.mxu0 0.0
        %4147 = vmatpush1.msra.mxu0 0.0
        %4148 = vmatprep.subr.mxu0 0.0
        %4149 = vmatpush1.msra.mxu0 0.0
        %4150 = vmatprep.subr.mxu0 0.0
        %4151 = vmatpush1.msra.mxu0 0.0
        %4152 = vmatprep.subr.mxu0 0.0
        %4153 = vmatpush1.msra.mxu0 0.0
        %4154 = vmatprep.subr.mxu0 0.0
        %4155 = vmatpush1.msra.mxu0 0.0
        %4156 = vmatprep.subr.mxu0 0.0
        %4157 = vmatpush1.msra.mxu0 0.0
        %4158 = vmatprep.subr.mxu0 0.0
        %4159 = vmatpush1.msra.mxu0 0.0
        %4160 = vmatprep.subr.mxu0 0.0
        %4161 = vmatpush1.msra.mxu0 0.0
        %4162 = vmatprep.subr.mxu0 0.0
        %4163 = vmatpush1.msra.mxu0 0.0
        %4164 = vmatprep.subr.mxu0 0.0
        %4165 = vmatpush1.msra.mxu0 0.0
        %4166 = vmatprep.subr.mxu0 0.0
        %4167 = vmatpush1.msra.mxu0 %v1042
        %4168 = vmatprep.subr.mxu0 0.0
        %4169 = vmatpush1.msra.mxu0 %v1041
        %4170 = vmatprep.subr.mxu0 0.0
        %4171 = vmatpush1.msra.mxu0 %v1040
        %4172 = vmatprep.subr.mxu0 0.0
        %4173 = vmatpush1.msra.mxu0 %v1039
        %4174 = vmatprep.subr.mxu0 0.0
        %4175 = vmatpush2.msra.mxu0 0.0
        %4176 = vmatprep.subr.mxu0 0.0
        %4177 = vmatpush2.msra.mxu0 0.0
        %4178 = vmatprep.subr.mxu0 0.0
        %4179 = vmatpush2.msra.mxu0 0.0
        %4180 = vmatprep.subr.mxu0 0.0
        %4181 = vmatpush2.msra.mxu0 0.0
        %4182 = vmatprep.subr.mxu0 0.0
        %4183 = vmatpush2.msra.mxu0 0.0
        %4184 = vmatprep.subr.mxu0 0.0
        %4185 = vmatpush2.msra.mxu0 0.0
        %4186 = vmatprep.subr.mxu0 0.0
        %4187 = vmatpush2.msra.mxu0 0.0
        %4188 = vmatprep.subr.mxu0 0.0
        %4189 = vmatpush2.msra.mxu0 0.0
        %4190 = vmatprep.subr.mxu0 0.0
        %4191 = vmatpush2.msra.mxu0 0.0
        %4192 = vmatprep.subr.mxu0 0.0
        %4193 = vmatpush2.msra.mxu0 0.0
        %4194 = vmatprep.subr.mxu0 0.0
        %4195 = vmatpush2.msra.mxu0 0.0
        %4196 = vmatprep.subr.mxu0 0.0
        %4197 = vmatpush2.msra.mxu0 0.0
        %4198 = vmatprep.subr.mxu0 0.0
        %4199 = vmatpush2.msra.mxu0 0.0
        %4200 = vmatprep.subr.mxu0 0.0
        %4201 = vmatpush2.msra.mxu0 0.0
        %4202 = vmatprep.subr.mxu0 0.0
        %4203 = vmatpush2.msra.mxu0 0.0
        %4204 = vmatprep.subr.mxu0 0.0
        %4205 = vmatpush2.msra.mxu0 0.0
        %4206 = vmatprep.mubr.f32.mxu0 0.0
        %4207 = vmatmul.mubr.f32.gmra.mxu0 %v4137
        %v4208 = vpop.f32.mrf.mxu0
        %v4209 = vadd.f32 0.0, %v4208
        %v4210 = vpop.f32.mrf.mxu0
        %4211 = vmatprep.mubr.f32.mxu0 0.0
        %4212 = vmatmul.mubr.f32.gmra.mxu0 %v4140
        %v4213 = vpop.f32.mrf.mxu0
        %v4214 = vadd.f32 0.0, %v4213
        %v4215 = vpop.f32.mrf.mxu0
        %4216 = vdwg.mxu0
        %v4218 = vsel %vm3406, %v3264, 0
        %v4221 = vsel %vm3406, %v3400, 0
        %4223 = vmatprep.subr.mxu0 0.0
        %4224 = vmatpush1.msra.mxu0 0.0
        %4225 = vmatprep.subr.mxu0 0.0
        %4226 = vmatpush1.msra.mxu0 0.0
        %4227 = vmatprep.subr.mxu0 0.0
        %4228 = vmatpush1.msra.mxu0 0.0
        %4229 = vmatprep.subr.mxu0 0.0
        %4230 = vmatpush1.msra.mxu0 0.0
        %4231 = vmatprep.subr.mxu0 0.0
        %4232 = vmatpush1.msra.mxu0 0.0
        %4233 = vmatprep.subr.mxu0 0.0
        %4234 = vmatpush1.msra.mxu0 0.0
        %4235 = vmatprep.subr.mxu0 0.0
        %4236 = vmatpush1.msra.mxu0 0.0
        %4237 = vmatprep.subr.mxu0 0.0
        %4238 = vmatpush1.msra.mxu0 0.0
        %4239 = vmatprep.subr.mxu0 0.0
        %4240 = vmatpush1.msra.mxu0 0.0
        %4241 = vmatprep.subr.mxu0 0.0
        %4242 = vmatpush1.msra.mxu0 0.0
        %4243 = vmatprep.subr.mxu0 0.0
        %4244 = vmatpush1.msra.mxu0 0.0
        %4245 = vmatprep.subr.mxu0 0.0
        %4246 = vmatpush1.msra.mxu0 0.0
        %4247 = vmatprep.subr.mxu0 0.0
        %4248 = vmatpush1.msra.mxu0 %v1046
        %4249 = vmatprep.subr.mxu0 0.0
        %4250 = vmatpush1.msra.mxu0 %v1045
        %4251 = vmatprep.subr.mxu0 0.0
        %4252 = vmatpush1.msra.mxu0 %v1044
        %4253 = vmatprep.subr.mxu0 0.0
        %4254 = vmatpush1.msra.mxu0 %v1043
        %4255 = vmatprep.subr.mxu0 0.0
        %4256 = vmatpush2.msra.mxu0 0.0
        %4257 = vmatprep.subr.mxu0 0.0
        %4258 = vmatpush2.msra.mxu0 0.0
        %4259 = vmatprep.subr.mxu0 0.0
        %4260 = vmatpush2.msra.mxu0 0.0
        %4261 = vmatprep.subr.mxu0 0.0
        %4262 = vmatpush2.msra.mxu0 0.0
        %4263 = vmatprep.subr.mxu0 0.0
        %4264 = vmatpush2.msra.mxu0 0.0
        %4265 = vmatprep.subr.mxu0 0.0
        %4266 = vmatpush2.msra.mxu0 0.0
        %4267 = vmatprep.subr.mxu0 0.0
        %4268 = vmatpush2.msra.mxu0 0.0
        %4269 = vmatprep.subr.mxu0 0.0
        %4270 = vmatpush2.msra.mxu0 0.0
        %4271 = vmatprep.subr.mxu0 0.0
        %4272 = vmatpush2.msra.mxu0 0.0
        %4273 = vmatprep.subr.mxu0 0.0
        %4274 = vmatpush2.msra.mxu0 0.0
        %4275 = vmatprep.subr.mxu0 0.0
        %4276 = vmatpush2.msra.mxu0 0.0
        %4277 = vmatprep.subr.mxu0 0.0
        %4278 = vmatpush2.msra.mxu0 0.0
        %4279 = vmatprep.subr.mxu0 0.0
        %4280 = vmatpush2.msra.mxu0 0.0
        %4281 = vmatprep.subr.mxu0 0.0
        %4282 = vmatpush2.msra.mxu0 0.0
        %4283 = vmatprep.subr.mxu0 0.0
        %4284 = vmatpush2.msra.mxu0 0.0
        %4285 = vmatprep.subr.mxu0 0.0
        %4286 = vmatpush2.msra.mxu0 0.0
        %4287 = vmatprep.mubr.f32.mxu0 0.0
        %4288 = vmatmul.mubr.f32.gmra.mxu0 %v4218
        %v4289 = vpop.f32.mrf.mxu0
        %v4290 = vadd.f32 0.0, %v4289
        %v4291 = vpop.f32.mrf.mxu0
        %4292 = vmatprep.mubr.f32.mxu0 0.0
        %4293 = vmatmul.mubr.f32.gmra.mxu0 %v4221
        %v4294 = vpop.f32.mrf.mxu0
        %v4295 = vadd.f32 0.0, %v4294
        %v4296 = vpop.f32.mrf.mxu0
        %4297 = vdwg.mxu0
        %v4299 = vsel %vm3406, %v3265, 0
        %v4302 = vsel %vm3406, %v3401, 0
        %4304 = vmatprep.subr.mxu0 0.0
        %4305 = vmatpush1.msra.mxu0 0.0
        %4306 = vmatprep.subr.mxu0 0.0
        %4307 = vmatpush1.msra.mxu0 0.0
        %4308 = vmatprep.subr.mxu0 0.0
        %4309 = vmatpush1.msra.mxu0 0.0
        %4310 = vmatprep.subr.mxu0 0.0
        %4311 = vmatpush1.msra.mxu0 0.0
        %4312 = vmatprep.subr.mxu0 0.0
        %4313 = vmatpush1.msra.mxu0 0.0
        %4314 = vmatprep.subr.mxu0 0.0
        %4315 = vmatpush1.msra.mxu0 0.0
        %4316 = vmatprep.subr.mxu0 0.0
        %4317 = vmatpush1.msra.mxu0 0.0
        %4318 = vmatprep.subr.mxu0 0.0
        %4319 = vmatpush1.msra.mxu0 0.0
        %4320 = vmatprep.subr.mxu0 0.0
        %4321 = vmatpush1.msra.mxu0 0.0
        %4322 = vmatprep.subr.mxu0 0.0
        %4323 = vmatpush1.msra.mxu0 0.0
        %4324 = vmatprep.subr.mxu0 0.0
        %4325 = vmatpush1.msra.mxu0 0.0
        %4326 = vmatprep.subr.mxu0 0.0
        %4327 = vmatpush1.msra.mxu0 0.0
        %4328 = vmatprep.subr.mxu0 0.0
        %4329 = vmatpush1.msra.mxu0 %v1050
        %4330 = vmatprep.subr.mxu0 0.0
        %4331 = vmatpush1.msra.mxu0 %v1049
        %4332 = vmatprep.subr.mxu0 0.0
        %4333 = vmatpush1.msra.mxu0 %v1048
        %4334 = vmatprep.subr.mxu0 0.0
        %4335 = vmatpush1.msra.mxu0 %v1047
        %4336 = vmatprep.subr.mxu0 0.0
        %4337 = vmatpush2.msra.mxu0 0.0
        %4338 = vmatprep.subr.mxu0 0.0
        %4339 = vmatpush2.msra.mxu0 0.0
        %4340 = vmatprep.subr.mxu0 0.0
        %4341 = vmatpush2.msra.mxu0 0.0
        %4342 = vmatprep.subr.mxu0 0.0
        %4343 = vmatpush2.msra.mxu0 0.0
        %4344 = vmatprep.subr.mxu0 0.0
        %4345 = vmatpush2.msra.mxu0 0.0
        %4346 = vmatprep.subr.mxu0 0.0
        %4347 = vmatpush2.msra.mxu0 0.0
        %4348 = vmatprep.subr.mxu0 0.0
        %4349 = vmatpush2.msra.mxu0 0.0
        %4350 = vmatprep.subr.mxu0 0.0
        %4351 = vmatpush2.msra.mxu0 0.0
        %4352 = vmatprep.subr.mxu0 0.0
        %4353 = vmatpush2.msra.mxu0 0.0
        %4354 = vmatprep.subr.mxu0 0.0
        %4355 = vmatpush2.msra.mxu0 0.0
        %4356 = vmatprep.subr.mxu0 0.0
        %4357 = vmatpush2.msra.mxu0 0.0
        %4358 = vmatprep.subr.mxu0 0.0
        %4359 = vmatpush2.msra.mxu0 0.0
        %4360 = vmatprep.subr.mxu0 0.0
        %4361 = vmatpush2.msra.mxu0 0.0
        %4362 = vmatprep.subr.mxu0 0.0
        %4363 = vmatpush2.msra.mxu0 0.0
        %4364 = vmatprep.subr.mxu0 0.0
        %4365 = vmatpush2.msra.mxu0 0.0
        %4366 = vmatprep.subr.mxu0 0.0
        %4367 = vmatpush2.msra.mxu0 0.0
        %4368 = vmatprep.mubr.f32.mxu0 0.0
        %4369 = vmatmul.mubr.f32.gmra.mxu0 %v4299
        %v4370 = vpop.f32.mrf.mxu0
        %v4371 = vadd.f32 0.0, %v4370
        %v4372 = vpop.f32.mrf.mxu0
        %4373 = vmatprep.mubr.f32.mxu0 0.0
        %4374 = vmatmul.mubr.f32.gmra.mxu0 %v4302
        %v4375 = vpop.f32.mrf.mxu0
        %v4376 = vadd.f32 0.0, %v4375
        %v4377 = vpop.f32.mrf.mxu0
        %4378 = vdwg.mxu0
        %v4380 = vsel %vm3406, %v3266, 0
        %v4383 = vsel %vm3406, %v3402, 0
        %4385 = vmatprep.subr.mxu0 0.0
        %4386 = vmatpush1.msra.mxu0 0.0
        %4387 = vmatprep.subr.mxu0 0.0
        %4388 = vmatpush1.msra.mxu0 0.0
        %4389 = vmatprep.subr.mxu0 0.0
        %4390 = vmatpush1.msra.mxu0 0.0
        %4391 = vmatprep.subr.mxu0 0.0
        %4392 = vmatpush1.msra.mxu0 0.0
        %4393 = vmatprep.subr.mxu0 0.0
        %4394 = vmatpush1.msra.mxu0 0.0
        %4395 = vmatprep.subr.mxu0 0.0
        %4396 = vmatpush1.msra.mxu0 0.0
        %4397 = vmatprep.subr.mxu0 0.0
        %4398 = vmatpush1.msra.mxu0 0.0
        %4399 = vmatprep.subr.mxu0 0.0
        %4400 = vmatpush1.msra.mxu0 0.0
        %4401 = vmatprep.subr.mxu0 0.0
        %4402 = vmatpush1.msra.mxu0 0.0
        %4403 = vmatprep.subr.mxu0 0.0
        %4404 = vmatpush1.msra.mxu0 0.0
        %4405 = vmatprep.subr.mxu0 0.0
        %4406 = vmatpush1.msra.mxu0 0.0
        %4407 = vmatprep.subr.mxu0 0.0
        %4408 = vmatpush1.msra.mxu0 0.0
        %4409 = vmatprep.subr.mxu0 0.0
        %4410 = vmatpush1.msra.mxu0 %v1054
        %4411 = vmatprep.subr.mxu0 0.0
        %4412 = vmatpush1.msra.mxu0 %v1053
        %4413 = vmatprep.subr.mxu0 0.0
        %4414 = vmatpush1.msra.mxu0 %v1052
        %4415 = vmatprep.subr.mxu0 0.0
        %4416 = vmatpush1.msra.mxu0 %v1051
        %4417 = vmatprep.subr.mxu0 0.0
        %4418 = vmatpush2.msra.mxu0 0.0
        %4419 = vmatprep.subr.mxu0 0.0
        %4420 = vmatpush2.msra.mxu0 0.0
        %4421 = vmatprep.subr.mxu0 0.0
        %4422 = vmatpush2.msra.mxu0 0.0
        %4423 = vmatprep.subr.mxu0 0.0
        %4424 = vmatpush2.msra.mxu0 0.0
        %4425 = vmatprep.subr.mxu0 0.0
        %4426 = vmatpush2.msra.mxu0 0.0
        %4427 = vmatprep.subr.mxu0 0.0
        %4428 = vmatpush2.msra.mxu0 0.0
        %4429 = vmatprep.subr.mxu0 0.0
        %4430 = vmatpush2.msra.mxu0 0.0
        %4431 = vmatprep.subr.mxu0 0.0
        %4432 = vmatpush2.msra.mxu0 0.0
        %4433 = vmatprep.subr.mxu0 0.0
        %4434 = vmatpush2.msra.mxu0 0.0
        %4435 = vmatprep.subr.mxu0 0.0
        %4436 = vmatpush2.msra.mxu0 0.0
        %4437 = vmatprep.subr.mxu0 0.0
        %4438 = vmatpush2.msra.mxu0 0.0
        %4439 = vmatprep.subr.mxu0 0.0
        %4440 = vmatpush2.msra.mxu0 0.0
        %4441 = vmatprep.subr.mxu0 0.0
        %4442 = vmatpush2.msra.mxu0 0.0
        %4443 = vmatprep.subr.mxu0 0.0
        %4444 = vmatpush2.msra.mxu0 0.0
        %4445 = vmatprep.subr.mxu0 0.0
        %4446 = vmatpush2.msra.mxu0 0.0
        %4447 = vmatprep.subr.mxu0 0.0
        %4448 = vmatpush2.msra.mxu0 0.0
        %4449 = vmatprep.mubr.f32.mxu0 0.0
        %4450 = vmatmul.mubr.f32.gmra.mxu0 %v4380
        %v4451 = vpop.f32.mrf.mxu0
        %v4452 = vadd.f32 0.0, %v4451
        %v4453 = vpop.f32.mrf.mxu0
        %4454 = vmatprep.mubr.f32.mxu0 0.0
        %4455 = vmatmul.mubr.f32.gmra.mxu0 %v4383
        %v4456 = vpop.f32.mrf.mxu0
        %v4457 = vadd.f32 0.0, %v4456
        %v4458 = vpop.f32.mrf.mxu0
        %4459 = vdwg.mxu0
        %v4461 = vsel %vm3406, %v3267, 0
        %v4464 = vsel %vm3406, %v3403, 0
        %4466 = vmatprep.subr.mxu0 0.0
        %4467 = vmatpush1.msra.mxu0 0.0
        %4468 = vmatprep.subr.mxu0 0.0
        %4469 = vmatpush1.msra.mxu0 0.0
        %4470 = vmatprep.subr.mxu0 0.0
        %4471 = vmatpush1.msra.mxu0 0.0
        %4472 = vmatprep.subr.mxu0 0.0
        %4473 = vmatpush1.msra.mxu0 0.0
        %4474 = vmatprep.subr.mxu0 0.0
        %4475 = vmatpush1.msra.mxu0 0.0
        %4476 = vmatprep.subr.mxu0 0.0
        %4477 = vmatpush1.msra.mxu0 0.0
        %4478 = vmatprep.subr.mxu0 0.0
        %4479 = vmatpush1.msra.mxu0 0.0
        %4480 = vmatprep.subr.mxu0 0.0
        %4481 = vmatpush1.msra.mxu0 0.0
        %4482 = vmatprep.subr.mxu0 0.0
        %4483 = vmatpush1.msra.mxu0 0.0
        %4484 = vmatprep.subr.mxu0 0.0
        %4485 = vmatpush1.msra.mxu0 0.0
        %4486 = vmatprep.subr.mxu0 0.0
        %4487 = vmatpush1.msra.mxu0 0.0
        %4488 = vmatprep.subr.mxu0 0.0
        %4489 = vmatpush1.msra.mxu0 0.0
        %4490 = vmatprep.subr.mxu0 0.0
        %4491 = vmatpush1.msra.mxu0 %v1058
        %4492 = vmatprep.subr.mxu0 0.0
        %4493 = vmatpush1.msra.mxu0 %v1057
        %4494 = vmatprep.subr.mxu0 0.0
        %4495 = vmatpush1.msra.mxu0 %v1056
        %4496 = vmatprep.subr.mxu0 0.0
        %4497 = vmatpush1.msra.mxu0 %v1055
        %4498 = vmatprep.subr.mxu0 0.0
        %4499 = vmatpush2.msra.mxu0 0.0
        %4500 = vmatprep.subr.mxu0 0.0
        %4501 = vmatpush2.msra.mxu0 0.0
        %4502 = vmatprep.subr.mxu0 0.0
        %4503 = vmatpush2.msra.mxu0 0.0
        %4504 = vmatprep.subr.mxu0 0.0
        %4505 = vmatpush2.msra.mxu0 0.0
        %4506 = vmatprep.subr.mxu0 0.0
        %4507 = vmatpush2.msra.mxu0 0.0
        %4508 = vmatprep.subr.mxu0 0.0
        %4509 = vmatpush2.msra.mxu0 0.0
        %4510 = vmatprep.subr.mxu0 0.0
        %4511 = vmatpush2.msra.mxu0 0.0
        %4512 = vmatprep.subr.mxu0 0.0
        %4513 = vmatpush2.msra.mxu0 0.0
        %4514 = vmatprep.subr.mxu0 0.0
        %4515 = vmatpush2.msra.mxu0 0.0
        %4516 = vmatprep.subr.mxu0 0.0
        %4517 = vmatpush2.msra.mxu0 0.0
        %4518 = vmatprep.subr.mxu0 0.0
        %4519 = vmatpush2.msra.mxu0 0.0
        %4520 = vmatprep.subr.mxu0 0.0
        %4521 = vmatpush2.msra.mxu0 0.0
        %4522 = vmatprep.subr.mxu0 0.0
        %4523 = vmatpush2.msra.mxu0 0.0
        %4524 = vmatprep.subr.mxu0 0.0
        %4525 = vmatpush2.msra.mxu0 0.0
        %4526 = vmatprep.subr.mxu0 0.0
        %4527 = vmatpush2.msra.mxu0 0.0
        %4528 = vmatprep.subr.mxu0 0.0
        %4529 = vmatpush2.msra.mxu0 0.0
        %4530 = vmatprep.mubr.f32.mxu0 0.0
        %4531 = vmatmul.mubr.f32.gmra.mxu0 %v4461
        %v4532 = vpop.f32.mrf.mxu0
        %v4533 = vadd.f32 0.0, %v4532
        %v4534 = vpop.f32.mrf.mxu0
        %4535 = vmatprep.mubr.f32.mxu0 0.0
        %4536 = vmatmul.mubr.f32.gmra.mxu0 %v4464
        %v4537 = vpop.f32.mrf.mxu0
        %v4538 = vadd.f32 0.0, %v4537
        %v4539 = vpop.f32.mrf.mxu0
        %4540 = vdwg.mxu0
        %v4542 = vsel %vm3406, %v3268, 0
        %v4545 = vsel %vm3406, %v3404, 0
        %4547 = vmatprep.subr.mxu0 0.0
        %4548 = vmatpush1.msra.mxu0 0.0
        %4549 = vmatprep.subr.mxu0 0.0
        %4550 = vmatpush1.msra.mxu0 0.0
        %4551 = vmatprep.subr.mxu0 0.0
        %4552 = vmatpush1.msra.mxu0 0.0
        %4553 = vmatprep.subr.mxu0 0.0
        %4554 = vmatpush1.msra.mxu0 0.0
        %4555 = vmatprep.subr.mxu0 0.0
        %4556 = vmatpush1.msra.mxu0 0.0
        %4557 = vmatprep.subr.mxu0 0.0
        %4558 = vmatpush1.msra.mxu0 0.0
        %4559 = vmatprep.subr.mxu0 0.0
        %4560 = vmatpush1.msra.mxu0 0.0
        %4561 = vmatprep.subr.mxu0 0.0
        %4562 = vmatpush1.msra.mxu0 0.0
        %4563 = vmatprep.subr.mxu0 0.0
        %4564 = vmatpush1.msra.mxu0 0.0
        %4565 = vmatprep.subr.mxu0 0.0
        %4566 = vmatpush1.msra.mxu0 0.0
        %4567 = vmatprep.subr.mxu0 0.0
        %4568 = vmatpush1.msra.mxu0 0.0
        %4569 = vmatprep.subr.mxu0 0.0
        %4570 = vmatpush1.msra.mxu0 0.0
        %4571 = vmatprep.subr.mxu0 0.0
        %4572 = vmatpush1.msra.mxu0 %v1062
        %4573 = vmatprep.subr.mxu0 0.0
        %4574 = vmatpush1.msra.mxu0 %v1061
        %4575 = vmatprep.subr.mxu0 0.0
        %4576 = vmatpush1.msra.mxu0 %v1060
        %4577 = vmatprep.subr.mxu0 0.0
        %4578 = vmatpush1.msra.mxu0 %v1059
        %4579 = vmatprep.subr.mxu0 0.0
        %4580 = vmatpush2.msra.mxu0 0.0
        %4581 = vmatprep.subr.mxu0 0.0
        %4582 = vmatpush2.msra.mxu0 0.0
        %4583 = vmatprep.subr.mxu0 0.0
        %4584 = vmatpush2.msra.mxu0 0.0
        %4585 = vmatprep.subr.mxu0 0.0
        %4586 = vmatpush2.msra.mxu0 0.0
        %4587 = vmatprep.subr.mxu0 0.0
        %4588 = vmatpush2.msra.mxu0 0.0
        %4589 = vmatprep.subr.mxu0 0.0
        %4590 = vmatpush2.msra.mxu0 0.0
        %4591 = vmatprep.subr.mxu0 0.0
        %4592 = vmatpush2.msra.mxu0 0.0
        %4593 = vmatprep.subr.mxu0 0.0
        %4594 = vmatpush2.msra.mxu0 0.0
        %4595 = vmatprep.subr.mxu0 0.0
        %4596 = vmatpush2.msra.mxu0 0.0
        %4597 = vmatprep.subr.mxu0 0.0
        %4598 = vmatpush2.msra.mxu0 0.0
        %4599 = vmatprep.subr.mxu0 0.0
        %4600 = vmatpush2.msra.mxu0 0.0
        %4601 = vmatprep.subr.mxu0 0.0
        %4602 = vmatpush2.msra.mxu0 0.0
        %4603 = vmatprep.subr.mxu0 0.0
        %4604 = vmatpush2.msra.mxu0 0.0
        %4605 = vmatprep.subr.mxu0 0.0
        %4606 = vmatpush2.msra.mxu0 0.0
        %4607 = vmatprep.subr.mxu0 0.0
        %4608 = vmatpush2.msra.mxu0 0.0
        %4609 = vmatprep.subr.mxu0 0.0
        %4610 = vmatpush2.msra.mxu0 0.0
        %4611 = vmatprep.mubr.f32.mxu0 0.0
        %4612 = vmatmul.mubr.f32.gmra.mxu0 %v4542
        %v4613 = vpop.f32.mrf.mxu0
        %v4614 = vadd.f32 0.0, %v4613
        %v4615 = vpop.f32.mrf.mxu0
        %4616 = vmatprep.mubr.f32.mxu0 0.0
        %4617 = vmatmul.mubr.f32.gmra.mxu0 %v4545
        %v4618 = vpop.f32.mrf.mxu0
        %v4619 = vadd.f32 0.0, %v4618
        %v4620 = vpop.f32.mrf.mxu0
        %4621 = vdwg.mxu0
        %v4623 = vsel %vm3406, %v3269, 0
        %v4626 = vsel %vm3406, %v3405, 0
        %4628 = vmatprep.subr.mxu0 0.0
        %4629 = vmatpush1.msra.mxu0 0.0
        %4630 = vmatprep.subr.mxu0 0.0
        %4631 = vmatpush1.msra.mxu0 0.0
        %4632 = vmatprep.subr.mxu0 0.0
        %4633 = vmatpush1.msra.mxu0 0.0
        %4634 = vmatprep.subr.mxu0 0.0
        %4635 = vmatpush1.msra.mxu0 0.0
        %4636 = vmatprep.subr.mxu0 0.0
        %4637 = vmatpush1.msra.mxu0 0.0
        %4638 = vmatprep.subr.mxu0 0.0
        %4639 = vmatpush1.msra.mxu0 0.0
        %4640 = vmatprep.subr.mxu0 0.0
        %4641 = vmatpush1.msra.mxu0 0.0
        %4642 = vmatprep.subr.mxu0 0.0
        %4643 = vmatpush1.msra.mxu0 0.0
        %4644 = vmatprep.subr.mxu0 0.0
        %4645 = vmatpush1.msra.mxu0 0.0
        %4646 = vmatprep.subr.mxu0 0.0
        %4647 = vmatpush1.msra.mxu0 0.0
        %4648 = vmatprep.subr.mxu0 0.0
        %4649 = vmatpush1.msra.mxu0 0.0
        %4650 = vmatprep.subr.mxu0 0.0
        %4651 = vmatpush1.msra.mxu0 0.0
        %4652 = vmatprep.subr.mxu0 0.0
        %4653 = vmatpush1.msra.mxu0 %v1066
        %4654 = vmatprep.subr.mxu0 0.0
        %4655 = vmatpush1.msra.mxu0 %v1065
        %4656 = vmatprep.subr.mxu0 0.0
        %4657 = vmatpush1.msra.mxu0 %v1064
        %4658 = vmatprep.subr.mxu0 0.0
        %4659 = vmatpush1.msra.mxu0 %v1063
        %4660 = vmatprep.subr.mxu0 0.0
        %4661 = vmatpush2.msra.mxu0 0.0
        %4662 = vmatprep.subr.mxu0 0.0
        %4663 = vmatpush2.msra.mxu0 0.0
        %4664 = vmatprep.subr.mxu0 0.0
        %4665 = vmatpush2.msra.mxu0 0.0
        %4666 = vmatprep.subr.mxu0 0.0
        %4667 = vmatpush2.msra.mxu0 0.0
        %4668 = vmatprep.subr.mxu0 0.0
        %4669 = vmatpush2.msra.mxu0 0.0
        %4670 = vmatprep.subr.mxu0 0.0
        %4671 = vmatpush2.msra.mxu0 0.0
        %4672 = vmatprep.subr.mxu0 0.0
        %4673 = vmatpush2.msra.mxu0 0.0
        %4674 = vmatprep.subr.mxu0 0.0
        %4675 = vmatpush2.msra.mxu0 0.0
        %4676 = vmatprep.subr.mxu0 0.0
        %4677 = vmatpush2.msra.mxu0 0.0
        %4678 = vmatprep.subr.mxu0 0.0
        %4679 = vmatpush2.msra.mxu0 0.0
        %4680 = vmatprep.subr.mxu0 0.0
        %4681 = vmatpush2.msra.mxu0 0.0
        %4682 = vmatprep.subr.mxu0 0.0
        %4683 = vmatpush2.msra.mxu0 0.0
        %4684 = vmatprep.subr.mxu0 0.0
        %4685 = vmatpush2.msra.mxu0 0.0
        %4686 = vmatprep.subr.mxu0 0.0
        %4687 = vmatpush2.msra.mxu0 0.0
        %4688 = vmatprep.subr.mxu0 0.0
        %4689 = vmatpush2.msra.mxu0 0.0
        %4690 = vmatprep.subr.mxu0 0.0
        %4691 = vmatpush2.msra.mxu0 0.0
        %4692 = vmatprep.mubr.f32.mxu0 0.0
        %4693 = vmatmul.mubr.f32.gmra.mxu0 %v4623
        %v4694 = vpop.f32.mrf.mxu0
        %v4695 = vadd.f32 0.0, %v4694
        %v4696 = vpop.f32.mrf.mxu0
        %4697 = vmatprep.mubr.f32.mxu0 0.0
        %4698 = vmatmul.mubr.f32.gmra.mxu0 %v4626
        %v4699 = vpop.f32.mrf.mxu0
        %v4700 = vadd.f32 0.0, %v4699
        %v4701 = vpop.f32.mrf.mxu0
        %4702 = vdwg.mxu0
        %v4703 = vcombine.low %v3480, %v3642
        %v4704 = vcombine.high %v3480, %v3642
        %v4706 = vunpack.c.l.s4 1983009808
        %v4707 = vunpack.c.0.s8 %v4706
        %v4708 = vlaneseq
        %v4709 = vshrl.u32 %v4708, 7
        %v4710 = vsub.s32 %v4707, %v4709
        %v4711 = vrot.slane %v4703, %v4710
        %v4713 = vunpack.c.l.s4 1983009808
        %v4714 = vunpack.c.0.s8 %v4713
        %v4715 = vlaneseq
        %v4716 = vshrl.u32 %v4715, 7
        %v4717 = vsub.s32 %v4714, %v4716
        %v4718 = vrot.slane %v4704, %v4717
        %v4719 = vcombine.low %v3561, %v3723
        %v4720 = vcombine.high %v3561, %v3723
        %v4722 = vunpack.c.l.s4 1983009808
        %v4723 = vunpack.c.0.s8 %v4722
        %v4724 = vlaneseq
        %v4725 = vshrl.u32 %v4724, 7
        %v4726 = vsub.s32 %v4723, %v4725
        %v4727 = vrot.slane %v4719, %v4726
        %v4729 = vunpack.c.l.s4 1983009808
        %v4730 = vunpack.c.0.s8 %v4729
        %v4731 = vlaneseq
        %v4732 = vshrl.u32 %v4731, 7
        %v4733 = vsub.s32 %v4730, %v4732
        %v4734 = vrot.slane %v4720, %v4733
        %v4735 = vcombine.low %v3804, %v3966
        %v4736 = vcombine.high %v3804, %v3966
        %v4738 = vunpack.c.l.s4 1983009808
        %v4739 = vunpack.c.0.s8 %v4738
        %v4740 = vlaneseq
        %v4741 = vshrl.u32 %v4740, 7
        %v4742 = vsub.s32 %v4739, %v4741
        %v4743 = vrot.slane %v4735, %v4742
        %v4745 = vunpack.c.l.s4 1983009808
        %v4746 = vunpack.c.0.s8 %v4745
        %v4747 = vlaneseq
        %v4748 = vshrl.u32 %v4747, 7
        %v4749 = vsub.s32 %v4746, %v4748
        %v4750 = vrot.slane %v4736, %v4749
        %v4751 = vcombine.low %v3885, %v4047
        %v4752 = vcombine.high %v3885, %v4047
        %v4754 = vunpack.c.l.s4 1983009808
        %v4755 = vunpack.c.0.s8 %v4754
        %v4756 = vlaneseq
        %v4757 = vshrl.u32 %v4756, 7
        %v4758 = vsub.s32 %v4755, %v4757
        %v4759 = vrot.slane %v4751, %v4758
        %v4761 = vunpack.c.l.s4 1983009808
        %v4762 = vunpack.c.0.s8 %v4761
        %v4763 = vlaneseq
        %v4764 = vshrl.u32 %v4763, 7
        %v4765 = vsub.s32 %v4762, %v4764
        %v4766 = vrot.slane %v4752, %v4765
        %v4767 = vcombine.low %v4711, %v4727
        %v4768 = vcombine.high %v4711, %v4727
        %v4770 = vunpack.c.l.s4 1934713408
        %v4771 = vunpack.c.0.s8 %v4770
        %v4772 = vlaneseq
        %v4773 = vshrl.u32 %v4772, 7
        %v4774 = vsub.s32 %v4771, %v4773
        %v4775 = vrot.slane %v4767, %v4774
        %v4777 = vunpack.c.l.s4 1934713408
        %v4778 = vunpack.c.0.s8 %v4777
        %v4779 = vlaneseq
        %v4780 = vshrl.u32 %v4779, 7
        %v4781 = vsub.s32 %v4778, %v4780
        %v4782 = vrot.slane %v4768, %v4781
        %v4783 = vcombine.low %v4718, %v4734
        %v4784 = vcombine.high %v4718, %v4734
        %v4786 = vunpack.c.l.s4 1934713408
        %v4787 = vunpack.c.0.s8 %v4786
        %v4788 = vlaneseq
        %v4789 = vshrl.u32 %v4788, 7
        %v4790 = vsub.s32 %v4787, %v4789
        %v4791 = vrot.slane %v4783, %v4790
        %v4793 = vunpack.c.l.s4 1934713408
        %v4794 = vunpack.c.0.s8 %v4793
        %v4795 = vlaneseq
        %v4796 = vshrl.u32 %v4795, 7
        %v4797 = vsub.s32 %v4794, %v4796
        %v4798 = vrot.slane %v4784, %v4797
        %v4799 = vcombine.low %v4743, %v4759
        %v4800 = vcombine.high %v4743, %v4759
        %v4802 = vunpack.c.l.s4 1934713408
        %v4803 = vunpack.c.0.s8 %v4802
        %v4804 = vlaneseq
        %v4805 = vshrl.u32 %v4804, 7
        %v4806 = vsub.s32 %v4803, %v4805
        %v4807 = vrot.slane %v4799, %v4806
        %v4809 = vunpack.c.l.s4 1934713408
        %v4810 = vunpack.c.0.s8 %v4809
        %v4811 = vlaneseq
        %v4812 = vshrl.u32 %v4811, 7
        %v4813 = vsub.s32 %v4810, %v4812
        %v4814 = vrot.slane %v4800, %v4813
        %v4815 = vcombine.low %v4750, %v4766
        %v4816 = vcombine.high %v4750, %v4766
        %v4818 = vunpack.c.l.s4 1934713408
        %v4819 = vunpack.c.0.s8 %v4818
        %v4820 = vlaneseq
        %v4821 = vshrl.u32 %v4820, 7
        %v4822 = vsub.s32 %v4819, %v4821
        %v4823 = vrot.slane %v4815, %v4822
        %v4825 = vunpack.c.l.s4 1934713408
        %v4826 = vunpack.c.0.s8 %v4825
        %v4827 = vlaneseq
        %v4828 = vshrl.u32 %v4827, 7
        %v4829 = vsub.s32 %v4826, %v4828
        %v4830 = vrot.slane %v4816, %v4829
        %v4831 = vcombine.low %v4775, %v4807
        %v4832 = vcombine.high %v4775, %v4807
        %v4833 = vcombine.low %v4782, %v4814
        %v4834 = vcombine.high %v4782, %v4814
        %v4835 = vcombine.low %v4791, %v4823
        %v4836 = vcombine.high %v4791, %v4823
        %v4837 = vcombine.low %v4798, %v4830
        %v4838 = vcombine.high %v4798, %v4830
        %v4839 = vcombine.low %v4128, %v4290
        %v4840 = vcombine.high %v4128, %v4290
        %v4842 = vunpack.c.l.s4 1983009808
        %v4843 = vunpack.c.0.s8 %v4842
        %v4844 = vlaneseq
        %v4845 = vshrl.u32 %v4844, 7
        %v4846 = vsub.s32 %v4843, %v4845
        %v4847 = vrot.slane %v4839, %v4846
        %v4849 = vunpack.c.l.s4 1983009808
        %v4850 = vunpack.c.0.s8 %v4849
        %v4851 = vlaneseq
        %v4852 = vshrl.u32 %v4851, 7
        %v4853 = vsub.s32 %v4850, %v4852
        %v4854 = vrot.slane %v4840, %v4853
        %v4855 = vcombine.low %v4209, %v4371
        %v4856 = vcombine.high %v4209, %v4371
        %v4858 = vunpack.c.l.s4 1983009808
        %v4859 = vunpack.c.0.s8 %v4858
        %v4860 = vlaneseq
        %v4861 = vshrl.u32 %v4860, 7
        %v4862 = vsub.s32 %v4859, %v4861
        %v4863 = vrot.slane %v4855, %v4862
        %v4865 = vunpack.c.l.s4 1983009808
        %v4866 = vunpack.c.0.s8 %v4865
        %v4867 = vlaneseq
        %v4868 = vshrl.u32 %v4867, 7
        %v4869 = vsub.s32 %v4866, %v4868
        %v4870 = vrot.slane %v4856, %v4869
        %v4871 = vcombine.low %v4452, %v4614
        %v4872 = vcombine.high %v4452, %v4614
        %v4874 = vunpack.c.l.s4 1983009808
        %v4875 = vunpack.c.0.s8 %v4874
        %v4876 = vlaneseq
        %v4877 = vshrl.u32 %v4876, 7
        %v4878 = vsub.s32 %v4875, %v4877
        %v4879 = vrot.slane %v4871, %v4878
        %v4881 = vunpack.c.l.s4 1983009808
        %v4882 = vunpack.c.0.s8 %v4881
        %v4883 = vlaneseq
        %v4884 = vshrl.u32 %v4883, 7
        %v4885 = vsub.s32 %v4882, %v4884
        %v4886 = vrot.slane %v4872, %v4885
        %v4887 = vcombine.low %v4533, %v4695
        %v4888 = vcombine.high %v4533, %v4695
        %v4890 = vunpack.c.l.s4 1983009808
        %v4891 = vunpack.c.0.s8 %v4890
        %v4892 = vlaneseq
        %v4893 = vshrl.u32 %v4892, 7
        %v4894 = vsub.s32 %v4891, %v4893
        %v4895 = vrot.slane %v4887, %v4894
        %v4897 = vunpack.c.l.s4 1983009808
        %v4898 = vunpack.c.0.s8 %v4897
        %v4899 = vlaneseq
        %v4900 = vshrl.u32 %v4899, 7
        %v4901 = vsub.s32 %v4898, %v4900
        %v4902 = vrot.slane %v4888, %v4901
        %v4903 = vcombine.low %v4847, %v4863
        %v4904 = vcombine.high %v4847, %v4863
        %v4906 = vunpack.c.l.s4 1934713408
        %v4907 = vunpack.c.0.s8 %v4906
        %v4908 = vlaneseq
        %v4909 = vshrl.u32 %v4908, 7
        %v4910 = vsub.s32 %v4907, %v4909
        %v4911 = vrot.slane %v4903, %v4910
        %v4913 = vunpack.c.l.s4 1934713408
        %v4914 = vunpack.c.0.s8 %v4913
        %v4915 = vlaneseq
        %v4916 = vshrl.u32 %v4915, 7
        %v4917 = vsub.s32 %v4914, %v4916
        %v4918 = vrot.slane %v4904, %v4917
        %v4919 = vcombine.low %v4854, %v4870
        %v4920 = vcombine.high %v4854, %v4870
        %v4922 = vunpack.c.l.s4 1934713408
        %v4923 = vunpack.c.0.s8 %v4922
        %v4924 = vlaneseq
        %v4925 = vshrl.u32 %v4924, 7
        %v4926 = vsub.s32 %v4923, %v4925
        %v4927 = vrot.slane %v4919, %v4926
        %v4929 = vunpack.c.l.s4 1934713408
        %v4930 = vunpack.c.0.s8 %v4929
        %v4931 = vlaneseq
        %v4932 = vshrl.u32 %v4931, 7
        %v4933 = vsub.s32 %v4930, %v4932
        %v4934 = vrot.slane %v4920, %v4933
        %v4935 = vcombine.low %v4879, %v4895
        %v4936 = vcombine.high %v4879, %v4895
        %v4938 = vunpack.c.l.s4 1934713408
        %v4939 = vunpack.c.0.s8 %v4938
        %v4940 = vlaneseq
        %v4941 = vshrl.u32 %v4940, 7
        %v4942 = vsub.s32 %v4939, %v4941
        %v4943 = vrot.slane %v4935, %v4942
        %v4945 = vunpack.c.l.s4 1934713408
        %v4946 = vunpack.c.0.s8 %v4945
        %v4947 = vlaneseq
        %v4948 = vshrl.u32 %v4947, 7
        %v4949 = vsub.s32 %v4946, %v4948
        %v4950 = vrot.slane %v4936, %v4949
        %v4951 = vcombine.low %v4886, %v4902
        %v4952 = vcombine.high %v4886, %v4902
        %v4954 = vunpack.c.l.s4 1934713408
        %v4955 = vunpack.c.0.s8 %v4954
        %v4956 = vlaneseq
        %v4957 = vshrl.u32 %v4956, 7
        %v4958 = vsub.s32 %v4955, %v4957
        %v4959 = vrot.slane %v4951, %v4958
        %v4961 = vunpack.c.l.s4 1934713408
        %v4962 = vunpack.c.0.s8 %v4961
        %v4963 = vlaneseq
        %v4964 = vshrl.u32 %v4963, 7
        %v4965 = vsub.s32 %v4962, %v4964
        %v4966 = vrot.slane %v4952, %v4965
        %v4967 = vcombine.low %v4911, %v4943
        %v4968 = vcombine.high %v4911, %v4943
        %v4969 = vcombine.low %v4918, %v4950
        %v4970 = vcombine.high %v4918, %v4950
        %v4971 = vcombine.low %v4927, %v4959
        %v4972 = vcombine.high %v4927, %v4959
        %v4973 = vcombine.low %v4934, %v4966
        %v4974 = vcombine.high %v4934, %v4966
        %v4975 = vcombine.low %v3485, %v3647
        %v4976 = vcombine.high %v3485, %v3647
        %v4978 = vunpack.c.l.s4 1983009808
        %v4979 = vunpack.c.0.s8 %v4978
        %v4980 = vlaneseq
        %v4981 = vshrl.u32 %v4980, 7
        %v4982 = vsub.s32 %v4979, %v4981
        %v4983 = vrot.slane %v4975, %v4982
        %v4985 = vunpack.c.l.s4 1983009808
        %v4986 = vunpack.c.0.s8 %v4985
        %v4987 = vlaneseq
        %v4988 = vshrl.u32 %v4987, 7
        %v4989 = vsub.s32 %v4986, %v4988
        %v4990 = vrot.slane %v4976, %v4989
        %v4991 = vcombine.low %v3566, %v3728
        %v4992 = vcombine.high %v3566, %v3728
        %v4994 = vunpack.c.l.s4 1983009808
        %v4995 = vunpack.c.0.s8 %v4994
        %v4996 = vlaneseq
        %v4997 = vshrl.u32 %v4996, 7
        %v4998 = vsub.s32 %v4995, %v4997
        %v4999 = vrot.slane %v4991, %v4998
        %v5001 = vunpack.c.l.s4 1983009808
        %v5002 = vunpack.c.0.s8 %v5001
        %v5003 = vlaneseq
        %v5004 = vshrl.u32 %v5003, 7
        %v5005 = vsub.s32 %v5002, %v5004
        %v5006 = vrot.slane %v4992, %v5005
        %v5007 = vcombine.low %v3809, %v3971
        %v5008 = vcombine.high %v3809, %v3971
        %v5010 = vunpack.c.l.s4 1983009808
        %v5011 = vunpack.c.0.s8 %v5010
        %v5012 = vlaneseq
        %v5013 = vshrl.u32 %v5012, 7
        %v5014 = vsub.s32 %v5011, %v5013
        %v5015 = vrot.slane %v5007, %v5014
        %v5017 = vunpack.c.l.s4 1983009808
        %v5018 = vunpack.c.0.s8 %v5017
        %v5019 = vlaneseq
        %v5020 = vshrl.u32 %v5019, 7
        %v5021 = vsub.s32 %v5018, %v5020
        %v5022 = vrot.slane %v5008, %v5021
        %v5023 = vcombine.low %v3890, %v4052
        %v5024 = vcombine.high %v3890, %v4052
        %v5026 = vunpack.c.l.s4 1983009808
        %v5027 = vunpack.c.0.s8 %v5026
        %v5028 = vlaneseq
        %v5029 = vshrl.u32 %v5028, 7
        %v5030 = vsub.s32 %v5027, %v5029
        %v5031 = vrot.slane %v5023, %v5030
        %v5033 = vunpack.c.l.s4 1983009808
        %v5034 = vunpack.c.0.s8 %v5033
        %v5035 = vlaneseq
        %v5036 = vshrl.u32 %v5035, 7
        %v5037 = vsub.s32 %v5034, %v5036
        %v5038 = vrot.slane %v5024, %v5037
        %v5039 = vcombine.low %v4983, %v4999
        %v5040 = vcombine.high %v4983, %v4999
        %v5042 = vunpack.c.l.s4 1934713408
        %v5043 = vunpack.c.0.s8 %v5042
        %v5044 = vlaneseq
        %v5045 = vshrl.u32 %v5044, 7
        %v5046 = vsub.s32 %v5043, %v5045
        %v5047 = vrot.slane %v5039, %v5046
        %v5049 = vunpack.c.l.s4 1934713408
        %v5050 = vunpack.c.0.s8 %v5049
        %v5051 = vlaneseq
        %v5052 = vshrl.u32 %v5051, 7
        %v5053 = vsub.s32 %v5050, %v5052
        %v5054 = vrot.slane %v5040, %v5053
        %v5055 = vcombine.low %v4990, %v5006
        %v5056 = vcombine.high %v4990, %v5006
        %v5058 = vunpack.c.l.s4 1934713408
        %v5059 = vunpack.c.0.s8 %v5058
        %v5060 = vlaneseq
        %v5061 = vshrl.u32 %v5060, 7
        %v5062 = vsub.s32 %v5059, %v5061
        %v5063 = vrot.slane %v5055, %v5062
        %v5065 = vunpack.c.l.s4 1934713408
        %v5066 = vunpack.c.0.s8 %v5065
        %v5067 = vlaneseq
        %v5068 = vshrl.u32 %v5067, 7
        %v5069 = vsub.s32 %v5066, %v5068
        %v5070 = vrot.slane %v5056, %v5069
        %v5071 = vcombine.low %v5015, %v5031
        %v5072 = vcombine.high %v5015, %v5031
        %v5074 = vunpack.c.l.s4 1934713408
        %v5075 = vunpack.c.0.s8 %v5074
        %v5076 = vlaneseq
        %v5077 = vshrl.u32 %v5076, 7
        %v5078 = vsub.s32 %v5075, %v5077
        %v5079 = vrot.slane %v5071, %v5078
        %v5081 = vunpack.c.l.s4 1934713408
        %v5082 = vunpack.c.0.s8 %v5081
        %v5083 = vlaneseq
        %v5084 = vshrl.u32 %v5083, 7
        %v5085 = vsub.s32 %v5082, %v5084
        %v5086 = vrot.slane %v5072, %v5085
        %v5087 = vcombine.low %v5022, %v5038
        %v5088 = vcombine.high %v5022, %v5038
        %v5090 = vunpack.c.l.s4 1934713408
        %v5091 = vunpack.c.0.s8 %v5090
        %v5092 = vlaneseq
        %v5093 = vshrl.u32 %v5092, 7
        %v5094 = vsub.s32 %v5091, %v5093
        %v5095 = vrot.slane %v5087, %v5094
        %v5097 = vunpack.c.l.s4 1934713408
        %v5098 = vunpack.c.0.s8 %v5097
        %v5099 = vlaneseq
        %v5100 = vshrl.u32 %v5099, 7
        %v5101 = vsub.s32 %v5098, %v5100
        %v5102 = vrot.slane %v5088, %v5101
        %v5103 = vcombine.low %v5047, %v5079
        %v5104 = vcombine.high %v5047, %v5079
        %v5105 = vcombine.low %v5054, %v5086
        %v5106 = vcombine.high %v5054, %v5086
        %v5107 = vcombine.low %v5063, %v5095
        %v5108 = vcombine.high %v5063, %v5095
        %v5109 = vcombine.low %v5070, %v5102
        %v5110 = vcombine.high %v5070, %v5102
        %v5111 = vcombine.low %v4133, %v4295
        %v5112 = vcombine.high %v4133, %v4295
        %v5114 = vunpack.c.l.s4 1983009808
        %v5115 = vunpack.c.0.s8 %v5114
        %v5116 = vlaneseq
        %v5117 = vshrl.u32 %v5116, 7
        %v5118 = vsub.s32 %v5115, %v5117
        %v5119 = vrot.slane %v5111, %v5118
        %v5121 = vunpack.c.l.s4 1983009808
        %v5122 = vunpack.c.0.s8 %v5121
        %v5123 = vlaneseq
        %v5124 = vshrl.u32 %v5123, 7
        %v5125 = vsub.s32 %v5122, %v5124
        %v5126 = vrot.slane %v5112, %v5125
        %v5127 = vcombine.low %v4214, %v4376
        %v5128 = vcombine.high %v4214, %v4376
        %v5130 = vunpack.c.l.s4 1983009808
        %v5131 = vunpack.c.0.s8 %v5130
        %v5132 = vlaneseq
        %v5133 = vshrl.u32 %v5132, 7
        %v5134 = vsub.s32 %v5131, %v5133
        %v5135 = vrot.slane %v5127, %v5134
        %v5137 = vunpack.c.l.s4 1983009808
        %v5138 = vunpack.c.0.s8 %v5137
        %v5139 = vlaneseq
        %v5140 = vshrl.u32 %v5139, 7
        %v5141 = vsub.s32 %v5138, %v5140
        %v5142 = vrot.slane %v5128, %v5141
        %v5143 = vcombine.low %v4457, %v4619
        %v5144 = vcombine.high %v4457, %v4619
        %v5146 = vunpack.c.l.s4 1983009808
        %v5147 = vunpack.c.0.s8 %v5146
        %v5148 = vlaneseq
        %v5149 = vshrl.u32 %v5148, 7
        %v5150 = vsub.s32 %v5147, %v5149
        %v5151 = vrot.slane %v5143, %v5150
        %v5153 = vunpack.c.l.s4 1983009808
        %v5154 = vunpack.c.0.s8 %v5153
        %v5155 = vlaneseq
        %v5156 = vshrl.u32 %v5155, 7
        %v5157 = vsub.s32 %v5154, %v5156
        %v5158 = vrot.slane %v5144, %v5157
        %v5159 = vcombine.low %v4538, %v4700
        %v5160 = vcombine.high %v4538, %v4700
        %v5162 = vunpack.c.l.s4 1983009808
        %v5163 = vunpack.c.0.s8 %v5162
        %v5164 = vlaneseq
        %v5165 = vshrl.u32 %v5164, 7
        %v5166 = vsub.s32 %v5163, %v5165
        %v5167 = vrot.slane %v5159, %v5166
        %v5169 = vunpack.c.l.s4 1983009808
        %v5170 = vunpack.c.0.s8 %v5169
        %v5171 = vlaneseq
        %v5172 = vshrl.u32 %v5171, 7
        %v5173 = vsub.s32 %v5170, %v5172
        %v5174 = vrot.slane %v5160, %v5173
        %v5175 = vcombine.low %v5119, %v5135
        %v5176 = vcombine.high %v5119, %v5135
        %v5178 = vunpack.c.l.s4 1934713408
        %v5179 = vunpack.c.0.s8 %v5178
        %v5180 = vlaneseq
        %v5181 = vshrl.u32 %v5180, 7
        %v5182 = vsub.s32 %v5179, %v5181
        %v5183 = vrot.slane %v5175, %v5182
        %v5185 = vunpack.c.l.s4 1934713408
        %v5186 = vunpack.c.0.s8 %v5185
        %v5187 = vlaneseq
        %v5188 = vshrl.u32 %v5187, 7
        %v5189 = vsub.s32 %v5186, %v5188
        %v5190 = vrot.slane %v5176, %v5189
        %v5191 = vcombine.low %v5126, %v5142
        %v5192 = vcombine.high %v5126, %v5142
        %v5194 = vunpack.c.l.s4 1934713408
        %v5195 = vunpack.c.0.s8 %v5194
        %v5196 = vlaneseq
        %v5197 = vshrl.u32 %v5196, 7
        %v5198 = vsub.s32 %v5195, %v5197
        %v5199 = vrot.slane %v5191, %v5198
        %v5201 = vunpack.c.l.s4 1934713408
        %v5202 = vunpack.c.0.s8 %v5201
        %v5203 = vlaneseq
        %v5204 = vshrl.u32 %v5203, 7
        %v5205 = vsub.s32 %v5202, %v5204
        %v5206 = vrot.slane %v5192, %v5205
        %v5207 = vcombine.low %v5151, %v5167
        %v5208 = vcombine.high %v5151, %v5167
        %v5210 = vunpack.c.l.s4 1934713408
        %v5211 = vunpack.c.0.s8 %v5210
        %v5212 = vlaneseq
        %v5213 = vshrl.u32 %v5212, 7
        %v5214 = vsub.s32 %v5211, %v5213
        %v5215 = vrot.slane %v5207, %v5214
        %v5217 = vunpack.c.l.s4 1934713408
        %v5218 = vunpack.c.0.s8 %v5217
        %v5219 = vlaneseq
        %v5220 = vshrl.u32 %v5219, 7
        %v5221 = vsub.s32 %v5218, %v5220
        %v5222 = vrot.slane %v5208, %v5221
        %v5223 = vcombine.low %v5158, %v5174
        %v5224 = vcombine.high %v5158, %v5174
        %v5226 = vunpack.c.l.s4 1934713408
        %v5227 = vunpack.c.0.s8 %v5226
        %v5228 = vlaneseq
        %v5229 = vshrl.u32 %v5228, 7
        %v5230 = vsub.s32 %v5227, %v5229
        %v5231 = vrot.slane %v5223, %v5230
        %v5233 = vunpack.c.l.s4 1934713408
        %v5234 = vunpack.c.0.s8 %v5233
        %v5235 = vlaneseq
        %v5236 = vshrl.u32 %v5235, 7
        %v5237 = vsub.s32 %v5234, %v5236
        %v5238 = vrot.slane %v5224, %v5237
        %v5239 = vcombine.low %v5183, %v5215
        %v5240 = vcombine.high %v5183, %v5215
        %v5241 = vcombine.low %v5190, %v5222
        %v5242 = vcombine.high %v5190, %v5222
        %v5243 = vcombine.low %v5199, %v5231
        %v5244 = vcombine.high %v5199, %v5231
        %v5245 = vcombine.low %v5206, %v5238
        %v5246 = vcombine.high %v5206, %v5238
        %v5247 = vsel %vm1469, %v992, 0
        %v5249 = vsel %vm1469, %v993, 0
        %v5251 = vsel %vm1469, %v742, 0
        %v5253 = vsel %vm1469, %v747, 0
        %5255 = vmatprep.subr.mxu0 0.0
        %5256 = vmatpush1.xpose.msra.mxu0 0.0
        %5257 = vmatprep.subr.mxu0 0.0
        %5258 = vmatpush1.xpose.msra.mxu0 0.0
        %5259 = vmatprep.subr.mxu0 0.0
        %5260 = vmatpush1.xpose.msra.mxu0 0.0
        %5261 = vmatprep.subr.mxu0 0.0
        %5262 = vmatpush1.xpose.msra.mxu0 0.0
        %5263 = vmatprep.subr.mxu0 0.0
        %5264 = vmatpush1.xpose.msra.mxu0 0.0
        %5265 = vmatprep.subr.mxu0 0.0
        %5266 = vmatpush1.xpose.msra.mxu0 0.0
        %5267 = vmatprep.subr.mxu0 0.0
        %5268 = vmatpush1.xpose.msra.mxu0 0.0
        %5269 = vmatprep.subr.mxu0 0.0
        %5270 = vmatpush1.xpose.msra.mxu0 0.0
        %5271 = vmatprep.subr.mxu0 0.0
        %5272 = vmatpush1.xpose.msra.mxu0 0.0
        %5273 = vmatprep.subr.mxu0 0.0
        %5274 = vmatpush1.xpose.msra.mxu0 0.0
        %5275 = vmatprep.subr.mxu0 0.0
        %5276 = vmatpush1.xpose.msra.mxu0 0.0
        %5277 = vmatprep.subr.mxu0 0.0
        %5278 = vmatpush1.xpose.msra.mxu0 0.0
        %5279 = vmatprep.subr.mxu0 0.0
        %5280 = vmatpush1.xpose.msra.mxu0 0.0
        %5281 = vmatprep.subr.mxu0 0.0
        %5282 = vmatpush1.xpose.msra.mxu0 0.0
        %5283 = vmatprep.subr.mxu0 0.0
        %5284 = vmatpush1.xpose.msra.mxu0 %v5253
        %5285 = vmatprep.subr.mxu0 0.0
        %5286 = vmatpush1.xpose.msra.mxu0 %v5251
        %5287 = vmatprep.subr.mxu0 0.0
        %5288 = vmatpush2.xpose.msra.mxu0 0.0
        %5289 = vmatprep.subr.mxu0 0.0
        %5290 = vmatpush2.xpose.msra.mxu0 0.0
        %5291 = vmatprep.subr.mxu0 0.0
        %5292 = vmatpush2.xpose.msra.mxu0 0.0
        %5293 = vmatprep.subr.mxu0 0.0
        %5294 = vmatpush2.xpose.msra.mxu0 0.0
        %5295 = vmatprep.subr.mxu0 0.0
        %5296 = vmatpush2.xpose.msra.mxu0 0.0
        %5297 = vmatprep.subr.mxu0 0.0
        %5298 = vmatpush2.xpose.msra.mxu0 0.0
        %5299 = vmatprep.subr.mxu0 0.0
        %5300 = vmatpush2.xpose.msra.mxu0 0.0
        %5301 = vmatprep.subr.mxu0 0.0
        %5302 = vmatpush2.xpose.msra.mxu0 0.0
        %5303 = vmatprep.subr.mxu0 0.0
        %5304 = vmatpush2.xpose.msra.mxu0 0.0
        %5305 = vmatprep.subr.mxu0 0.0
        %5306 = vmatpush2.xpose.msra.mxu0 0.0
        %5307 = vmatprep.subr.mxu0 0.0
        %5308 = vmatpush2.xpose.msra.mxu0 0.0
        %5309 = vmatprep.subr.mxu0 0.0
        %5310 = vmatpush2.xpose.msra.mxu0 0.0
        %5311 = vmatprep.subr.mxu0 0.0
        %5312 = vmatpush2.xpose.msra.mxu0 0.0
        %5313 = vmatprep.subr.mxu0 0.0
        %5314 = vmatpush2.xpose.msra.mxu0 0.0
        %5315 = vmatprep.subr.mxu0 0.0
        %5316 = vmatpush2.xpose.msra.mxu0 0.0
        %5317 = vmatprep.subr.mxu0 0.0
        %5318 = vmatpush2.xpose.msra.mxu0 0.0
        %5319 = vmatprep.mubr.f32.mxu0 0.0
        %5320 = vmatmul.mubr.f32.gmra.mxu0 %v5247
        %v5321 = vpop.f32.mrf.mxu0
        %v5322 = vadd.f32 %v4831, %v5321
        %v5323 = vpop.f32.mrf.mxu0
        %5324 = vmatprep.mubr.f32.mxu0 0.0
        %5325 = vmatmul.mubr.f32.gmra.mxu0 %v5249
        %v5326 = vpop.f32.mrf.mxu0
        %v5327 = vadd.f32 %v4967, %v5326
        %v5328 = vpop.f32.mrf.mxu0
        %5329 = vdwg.mxu0
        %v5330 = vsel %vm1469, %v1194, 0
        %v5332 = vsel %vm1469, %v1196, 0
        %v5334 = vsel %vm1469, %v1318, 0
        %v5336 = vsel %vm1469, %v1320, 0
        %5338 = vmatprep.subr.mxu0 0.0
        %5339 = vmatpush1.xpose.msra.mxu0 0.0
        %5340 = vmatprep.subr.mxu0 0.0
        %5341 = vmatpush1.xpose.msra.mxu0 0.0
        %5342 = vmatprep.subr.mxu0 0.0
        %5343 = vmatpush1.xpose.msra.mxu0 0.0
        %5344 = vmatprep.subr.mxu0 0.0
        %5345 = vmatpush1.xpose.msra.mxu0 0.0
        %5346 = vmatprep.subr.mxu0 0.0
        %5347 = vmatpush1.xpose.msra.mxu0 0.0
        %5348 = vmatprep.subr.mxu0 0.0
        %5349 = vmatpush1.xpose.msra.mxu0 0.0
        %5350 = vmatprep.subr.mxu0 0.0
        %5351 = vmatpush1.xpose.msra.mxu0 0.0
        %5352 = vmatprep.subr.mxu0 0.0
        %5353 = vmatpush1.xpose.msra.mxu0 0.0
        %5354 = vmatprep.subr.mxu0 0.0
        %5355 = vmatpush1.xpose.msra.mxu0 0.0
        %5356 = vmatprep.subr.mxu0 0.0
        %5357 = vmatpush1.xpose.msra.mxu0 0.0
        %5358 = vmatprep.subr.mxu0 0.0
        %5359 = vmatpush1.xpose.msra.mxu0 0.0
        %5360 = vmatprep.subr.mxu0 0.0
        %5361 = vmatpush1.xpose.msra.mxu0 0.0
        %5362 = vmatprep.subr.mxu0 0.0
        %5363 = vmatpush1.xpose.msra.mxu0 0.0
        %5364 = vmatprep.subr.mxu0 0.0
        %5365 = vmatpush1.xpose.msra.mxu0 0.0
        %5366 = vmatprep.subr.mxu0 0.0
        %5367 = vmatpush1.xpose.msra.mxu0 %v5336
        %5368 = vmatprep.subr.mxu0 0.0
        %5369 = vmatpush1.xpose.msra.mxu0 %v5334
        %5370 = vmatprep.subr.mxu0 0.0
        %5371 = vmatpush2.xpose.msra.mxu0 0.0
        %5372 = vmatprep.subr.mxu0 0.0
        %5373 = vmatpush2.xpose.msra.mxu0 0.0
        %5374 = vmatprep.subr.mxu0 0.0
        %5375 = vmatpush2.xpose.msra.mxu0 0.0
        %5376 = vmatprep.subr.mxu0 0.0
        %5377 = vmatpush2.xpose.msra.mxu0 0.0
        %5378 = vmatprep.subr.mxu0 0.0
        %5379 = vmatpush2.xpose.msra.mxu0 0.0
        %5380 = vmatprep.subr.mxu0 0.0
        %5381 = vmatpush2.xpose.msra.mxu0 0.0
        %5382 = vmatprep.subr.mxu0 0.0
        %5383 = vmatpush2.xpose.msra.mxu0 0.0
        %5384 = vmatprep.subr.mxu0 0.0
        %5385 = vmatpush2.xpose.msra.mxu0 0.0
        %5386 = vmatprep.subr.mxu0 0.0
        %5387 = vmatpush2.xpose.msra.mxu0 0.0
        %5388 = vmatprep.subr.mxu0 0.0
        %5389 = vmatpush2.xpose.msra.mxu0 0.0
        %5390 = vmatprep.subr.mxu0 0.0
        %5391 = vmatpush2.xpose.msra.mxu0 0.0
        %5392 = vmatprep.subr.mxu0 0.0
        %5393 = vmatpush2.xpose.msra.mxu0 0.0
        %5394 = vmatprep.subr.mxu0 0.0
        %5395 = vmatpush2.xpose.msra.mxu0 0.0
        %5396 = vmatprep.subr.mxu0 0.0
        %5397 = vmatpush2.xpose.msra.mxu0 0.0
        %5398 = vmatprep.subr.mxu0 0.0
        %5399 = vmatpush2.xpose.msra.mxu0 0.0
        %5400 = vmatprep.subr.mxu0 0.0
        %5401 = vmatpush2.xpose.msra.mxu0 0.0
        %5402 = vmatprep.mubr.f32.mxu0 0.0
        %5403 = vmatmul.mubr.f32.gmra.mxu0 %v5330
        %v5404 = vpop.f32.mrf.mxu0
        %v5405 = vadd.f32 %v4832, %v5404
        %v5406 = vpop.f32.mrf.mxu0
        %5407 = vmatprep.mubr.f32.mxu0 0.0
        %5408 = vmatmul.mubr.f32.gmra.mxu0 %v5332
        %v5409 = vpop.f32.mrf.mxu0
        %v5410 = vadd.f32 %v4968, %v5409
        %v5411 = vpop.f32.mrf.mxu0
        %5412 = vdwg.mxu0
        %v5413 = vsel %vm1469, %v1198, 0
        %v5415 = vsel %vm1469, %v1200, 0
        %v5417 = vsel %vm1469, %v1322, 0
        %v5419 = vsel %vm1469, %v1324, 0
        %5421 = vmatprep.subr.mxu0 0.0
        %5422 = vmatpush1.xpose.msra.mxu0 0.0
        %5423 = vmatprep.subr.mxu0 0.0
        %5424 = vmatpush1.xpose.msra.mxu0 0.0
        %5425 = vmatprep.subr.mxu0 0.0
        %5426 = vmatpush1.xpose.msra.mxu0 0.0
        %5427 = vmatprep.subr.mxu0 0.0
        %5428 = vmatpush1.xpose.msra.mxu0 0.0
        %5429 = vmatprep.subr.mxu0 0.0
        %5430 = vmatpush1.xpose.msra.mxu0 0.0
        %5431 = vmatprep.subr.mxu0 0.0
        %5432 = vmatpush1.xpose.msra.mxu0 0.0
        %5433 = vmatprep.subr.mxu0 0.0
        %5434 = vmatpush1.xpose.msra.mxu0 0.0
        %5435 = vmatprep.subr.mxu0 0.0
        %5436 = vmatpush1.xpose.msra.mxu0 0.0
        %5437 = vmatprep.subr.mxu0 0.0
        %5438 = vmatpush1.xpose.msra.mxu0 0.0
        %5439 = vmatprep.subr.mxu0 0.0
        %5440 = vmatpush1.xpose.msra.mxu0 0.0
        %5441 = vmatprep.subr.mxu0 0.0
        %5442 = vmatpush1.xpose.msra.mxu0 0.0
        %5443 = vmatprep.subr.mxu0 0.0
        %5444 = vmatpush1.xpose.msra.mxu0 0.0
        %5445 = vmatprep.subr.mxu0 0.0
        %5446 = vmatpush1.xpose.msra.mxu0 0.0
        %5447 = vmatprep.subr.mxu0 0.0
        %5448 = vmatpush1.xpose.msra.mxu0 0.0
        %5449 = vmatprep.subr.mxu0 0.0
        %5450 = vmatpush1.xpose.msra.mxu0 %v5419
        %5451 = vmatprep.subr.mxu0 0.0
        %5452 = vmatpush1.xpose.msra.mxu0 %v5417
        %5453 = vmatprep.subr.mxu0 0.0
        %5454 = vmatpush2.xpose.msra.mxu0 0.0
        %5455 = vmatprep.subr.mxu0 0.0
        %5456 = vmatpush2.xpose.msra.mxu0 0.0
        %5457 = vmatprep.subr.mxu0 0.0
        %5458 = vmatpush2.xpose.msra.mxu0 0.0
        %5459 = vmatprep.subr.mxu0 0.0
        %5460 = vmatpush2.xpose.msra.mxu0 0.0
        %5461 = vmatprep.subr.mxu0 0.0
        %5462 = vmatpush2.xpose.msra.mxu0 0.0
        %5463 = vmatprep.subr.mxu0 0.0
        %5464 = vmatpush2.xpose.msra.mxu0 0.0
        %5465 = vmatprep.subr.mxu0 0.0
        %5466 = vmatpush2.xpose.msra.mxu0 0.0
        %5467 = vmatprep.subr.mxu0 0.0
        %5468 = vmatpush2.xpose.msra.mxu0 0.0
        %5469 = vmatprep.subr.mxu0 0.0
        %5470 = vmatpush2.xpose.msra.mxu0 0.0
        %5471 = vmatprep.subr.mxu0 0.0
        %5472 = vmatpush2.xpose.msra.mxu0 0.0
        %5473 = vmatprep.subr.mxu0 0.0
        %5474 = vmatpush2.xpose.msra.mxu0 0.0
        %5475 = vmatprep.subr.mxu0 0.0
        %5476 = vmatpush2.xpose.msra.mxu0 0.0
        %5477 = vmatprep.subr.mxu0 0.0
        %5478 = vmatpush2.xpose.msra.mxu0 0.0
        %5479 = vmatprep.subr.mxu0 0.0
        %5480 = vmatpush2.xpose.msra.mxu0 0.0
        %5481 = vmatprep.subr.mxu0 0.0
        %5482 = vmatpush2.xpose.msra.mxu0 0.0
        %5483 = vmatprep.subr.mxu0 0.0
        %5484 = vmatpush2.xpose.msra.mxu0 0.0
        %5485 = vmatprep.mubr.f32.mxu0 0.0
        %5486 = vmatmul.mubr.f32.gmra.mxu0 %v5413
        %v5487 = vpop.f32.mrf.mxu0
        %v5488 = vadd.f32 %v4833, %v5487
        %v5489 = vpop.f32.mrf.mxu0
        %5490 = vmatprep.mubr.f32.mxu0 0.0
        %5491 = vmatmul.mubr.f32.gmra.mxu0 %v5415
        %v5492 = vpop.f32.mrf.mxu0
        %v5493 = vadd.f32 %v4969, %v5492
        %v5494 = vpop.f32.mrf.mxu0
        %5495 = vdwg.mxu0
        %v5496 = vsel %vm1469, %v1202, 0
        %v5498 = vsel %vm1469, %v1204, 0
        %v5500 = vsel %vm1469, %v1326, 0
        %v5502 = vsel %vm1469, %v1328, 0
        %5504 = vmatprep.subr.mxu0 0.0
        %5505 = vmatpush1.xpose.msra.mxu0 0.0
        %5506 = vmatprep.subr.mxu0 0.0
        %5507 = vmatpush1.xpose.msra.mxu0 0.0
        %5508 = vmatprep.subr.mxu0 0.0
        %5509 = vmatpush1.xpose.msra.mxu0 0.0
        %5510 = vmatprep.subr.mxu0 0.0
        %5511 = vmatpush1.xpose.msra.mxu0 0.0
        %5512 = vmatprep.subr.mxu0 0.0
        %5513 = vmatpush1.xpose.msra.mxu0 0.0
        %5514 = vmatprep.subr.mxu0 0.0
        %5515 = vmatpush1.xpose.msra.mxu0 0.0
        %5516 = vmatprep.subr.mxu0 0.0
        %5517 = vmatpush1.xpose.msra.mxu0 0.0
        %5518 = vmatprep.subr.mxu0 0.0
        %5519 = vmatpush1.xpose.msra.mxu0 0.0
        %5520 = vmatprep.subr.mxu0 0.0
        %5521 = vmatpush1.xpose.msra.mxu0 0.0
        %5522 = vmatprep.subr.mxu0 0.0
        %5523 = vmatpush1.xpose.msra.mxu0 0.0
        %5524 = vmatprep.subr.mxu0 0.0
        %5525 = vmatpush1.xpose.msra.mxu0 0.0
        %5526 = vmatprep.subr.mxu0 0.0
        %5527 = vmatpush1.xpose.msra.mxu0 0.0
        %5528 = vmatprep.subr.mxu0 0.0
        %5529 = vmatpush1.xpose.msra.mxu0 0.0
        %5530 = vmatprep.subr.mxu0 0.0
        %5531 = vmatpush1.xpose.msra.mxu0 0.0
        %5532 = vmatprep.subr.mxu0 0.0
        %5533 = vmatpush1.xpose.msra.mxu0 %v5502
        %5534 = vmatprep.subr.mxu0 0.0
        %5535 = vmatpush1.xpose.msra.mxu0 %v5500
        %5536 = vmatprep.subr.mxu0 0.0
        %5537 = vmatpush2.xpose.msra.mxu0 0.0
        %5538 = vmatprep.subr.mxu0 0.0
        %5539 = vmatpush2.xpose.msra.mxu0 0.0
        %5540 = vmatprep.subr.mxu0 0.0
        %5541 = vmatpush2.xpose.msra.mxu0 0.0
        %5542 = vmatprep.subr.mxu0 0.0
        %5543 = vmatpush2.xpose.msra.mxu0 0.0
        %5544 = vmatprep.subr.mxu0 0.0
        %5545 = vmatpush2.xpose.msra.mxu0 0.0
        %5546 = vmatprep.subr.mxu0 0.0
        %5547 = vmatpush2.xpose.msra.mxu0 0.0
        %5548 = vmatprep.subr.mxu0 0.0
        %5549 = vmatpush2.xpose.msra.mxu0 0.0
        %5550 = vmatprep.subr.mxu0 0.0
        %5551 = vmatpush2.xpose.msra.mxu0 0.0
        %5552 = vmatprep.subr.mxu0 0.0
        %5553 = vmatpush2.xpose.msra.mxu0 0.0
        %5554 = vmatprep.subr.mxu0 0.0
        %5555 = vmatpush2.xpose.msra.mxu0 0.0
        %5556 = vmatprep.subr.mxu0 0.0
        %5557 = vmatpush2.xpose.msra.mxu0 0.0
        %5558 = vmatprep.subr.mxu0 0.0
        %5559 = vmatpush2.xpose.msra.mxu0 0.0
        %5560 = vmatprep.subr.mxu0 0.0
        %5561 = vmatpush2.xpose.msra.mxu0 0.0
        %5562 = vmatprep.subr.mxu0 0.0
        %5563 = vmatpush2.xpose.msra.mxu0 0.0
        %5564 = vmatprep.subr.mxu0 0.0
        %5565 = vmatpush2.xpose.msra.mxu0 0.0
        %5566 = vmatprep.subr.mxu0 0.0
        %5567 = vmatpush2.xpose.msra.mxu0 0.0
        %5568 = vmatprep.mubr.f32.mxu0 0.0
        %5569 = vmatmul.mubr.f32.gmra.mxu0 %v5496
        %v5570 = vpop.f32.mrf.mxu0
        %v5571 = vadd.f32 %v4834, %v5570
        %v5572 = vpop.f32.mrf.mxu0
        %5573 = vmatprep.mubr.f32.mxu0 0.0
        %5574 = vmatmul.mubr.f32.gmra.mxu0 %v5498
        %v5575 = vpop.f32.mrf.mxu0
        %v5576 = vadd.f32 %v4970, %v5575
        %v5577 = vpop.f32.mrf.mxu0
        %5578 = vdwg.mxu0
        %v5579 = vsel %vm1469, %v1206, 0
        %v5581 = vsel %vm1469, %v1208, 0
        %v5583 = vsel %vm1469, %v1330, 0
        %v5585 = vsel %vm1469, %v1332, 0
        %5587 = vmatprep.subr.mxu0 0.0
        %5588 = vmatpush1.xpose.msra.mxu0 0.0
        %5589 = vmatprep.subr.mxu0 0.0
        %5590 = vmatpush1.xpose.msra.mxu0 0.0
        %5591 = vmatprep.subr.mxu0 0.0
        %5592 = vmatpush1.xpose.msra.mxu0 0.0
        %5593 = vmatprep.subr.mxu0 0.0
        %5594 = vmatpush1.xpose.msra.mxu0 0.0
        %5595 = vmatprep.subr.mxu0 0.0
        %5596 = vmatpush1.xpose.msra.mxu0 0.0
        %5597 = vmatprep.subr.mxu0 0.0
        %5598 = vmatpush1.xpose.msra.mxu0 0.0
        %5599 = vmatprep.subr.mxu0 0.0
        %5600 = vmatpush1.xpose.msra.mxu0 0.0
        %5601 = vmatprep.subr.mxu0 0.0
        %5602 = vmatpush1.xpose.msra.mxu0 0.0
        %5603 = vmatprep.subr.mxu0 0.0
        %5604 = vmatpush1.xpose.msra.mxu0 0.0
        %5605 = vmatprep.subr.mxu0 0.0
        %5606 = vmatpush1.xpose.msra.mxu0 0.0
        %5607 = vmatprep.subr.mxu0 0.0
        %5608 = vmatpush1.xpose.msra.mxu0 0.0
        %5609 = vmatprep.subr.mxu0 0.0
        %5610 = vmatpush1.xpose.msra.mxu0 0.0
        %5611 = vmatprep.subr.mxu0 0.0
        %5612 = vmatpush1.xpose.msra.mxu0 0.0
        %5613 = vmatprep.subr.mxu0 0.0
        %5614 = vmatpush1.xpose.msra.mxu0 0.0
        %5615 = vmatprep.subr.mxu0 0.0
        %5616 = vmatpush1.xpose.msra.mxu0 %v5585
        %5617 = vmatprep.subr.mxu0 0.0
        %5618 = vmatpush1.xpose.msra.mxu0 %v5583
        %5619 = vmatprep.subr.mxu0 0.0
        %5620 = vmatpush2.xpose.msra.mxu0 0.0
        %5621 = vmatprep.subr.mxu0 0.0
        %5622 = vmatpush2.xpose.msra.mxu0 0.0
        %5623 = vmatprep.subr.mxu0 0.0
        %5624 = vmatpush2.xpose.msra.mxu0 0.0
        %5625 = vmatprep.subr.mxu0 0.0
        %5626 = vmatpush2.xpose.msra.mxu0 0.0
        %5627 = vmatprep.subr.mxu0 0.0
        %5628 = vmatpush2.xpose.msra.mxu0 0.0
        %5629 = vmatprep.subr.mxu0 0.0
        %5630 = vmatpush2.xpose.msra.mxu0 0.0
        %5631 = vmatprep.subr.mxu0 0.0
        %5632 = vmatpush2.xpose.msra.mxu0 0.0
        %5633 = vmatprep.subr.mxu0 0.0
        %5634 = vmatpush2.xpose.msra.mxu0 0.0
        %5635 = vmatprep.subr.mxu0 0.0
        %5636 = vmatpush2.xpose.msra.mxu0 0.0
        %5637 = vmatprep.subr.mxu0 0.0
        %5638 = vmatpush2.xpose.msra.mxu0 0.0
        %5639 = vmatprep.subr.mxu0 0.0
        %5640 = vmatpush2.xpose.msra.mxu0 0.0
        %5641 = vmatprep.subr.mxu0 0.0
        %5642 = vmatpush2.xpose.msra.mxu0 0.0
        %5643 = vmatprep.subr.mxu0 0.0
        %5644 = vmatpush2.xpose.msra.mxu0 0.0
        %5645 = vmatprep.subr.mxu0 0.0
        %5646 = vmatpush2.xpose.msra.mxu0 0.0
        %5647 = vmatprep.subr.mxu0 0.0
        %5648 = vmatpush2.xpose.msra.mxu0 0.0
        %5649 = vmatprep.subr.mxu0 0.0
        %5650 = vmatpush2.xpose.msra.mxu0 0.0
        %5651 = vmatprep.mubr.f32.mxu0 0.0
        %5652 = vmatmul.mubr.f32.gmra.mxu0 %v5579
        %v5653 = vpop.f32.mrf.mxu0
        %v5654 = vadd.f32 %v4835, %v5653
        %v5655 = vpop.f32.mrf.mxu0
        %5656 = vmatprep.mubr.f32.mxu0 0.0
        %5657 = vmatmul.mubr.f32.gmra.mxu0 %v5581
        %v5658 = vpop.f32.mrf.mxu0
        %v5659 = vadd.f32 %v4971, %v5658
        %v5660 = vpop.f32.mrf.mxu0
        %5661 = vdwg.mxu0
        %v5662 = vsel %vm1469, %v1210, 0
        %v5664 = vsel %vm1469, %v1212, 0
        %v5666 = vsel %vm1469, %v1334, 0
        %v5668 = vsel %vm1469, %v1336, 0
        %5670 = vmatprep.subr.mxu0 0.0
        %5671 = vmatpush1.xpose.msra.mxu0 0.0
        %5672 = vmatprep.subr.mxu0 0.0
        %5673 = vmatpush1.xpose.msra.mxu0 0.0
        %5674 = vmatprep.subr.mxu0 0.0
        %5675 = vmatpush1.xpose.msra.mxu0 0.0
        %5676 = vmatprep.subr.mxu0 0.0
        %5677 = vmatpush1.xpose.msra.mxu0 0.0
        %5678 = vmatprep.subr.mxu0 0.0
        %5679 = vmatpush1.xpose.msra.mxu0 0.0
        %5680 = vmatprep.subr.mxu0 0.0
        %5681 = vmatpush1.xpose.msra.mxu0 0.0
        %5682 = vmatprep.subr.mxu0 0.0
        %5683 = vmatpush1.xpose.msra.mxu0 0.0
        %5684 = vmatprep.subr.mxu0 0.0
        %5685 = vmatpush1.xpose.msra.mxu0 0.0
        %5686 = vmatprep.subr.mxu0 0.0
        %5687 = vmatpush1.xpose.msra.mxu0 0.0
        %5688 = vmatprep.subr.mxu0 0.0
        %5689 = vmatpush1.xpose.msra.mxu0 0.0
        %5690 = vmatprep.subr.mxu0 0.0
        %5691 = vmatpush1.xpose.msra.mxu0 0.0
        %5692 = vmatprep.subr.mxu0 0.0
        %5693 = vmatpush1.xpose.msra.mxu0 0.0
        %5694 = vmatprep.subr.mxu0 0.0
        %5695 = vmatpush1.xpose.msra.mxu0 0.0
        %5696 = vmatprep.subr.mxu0 0.0
        %5697 = vmatpush1.xpose.msra.mxu0 0.0
        %5698 = vmatprep.subr.mxu0 0.0
        %5699 = vmatpush1.xpose.msra.mxu0 %v5668
        %5700 = vmatprep.subr.mxu0 0.0
        %5701 = vmatpush1.xpose.msra.mxu0 %v5666
        %5702 = vmatprep.subr.mxu0 0.0
        %5703 = vmatpush2.xpose.msra.mxu0 0.0
        %5704 = vmatprep.subr.mxu0 0.0
        %5705 = vmatpush2.xpose.msra.mxu0 0.0
        %5706 = vmatprep.subr.mxu0 0.0
        %5707 = vmatpush2.xpose.msra.mxu0 0.0
        %5708 = vmatprep.subr.mxu0 0.0
        %5709 = vmatpush2.xpose.msra.mxu0 0.0
        %5710 = vmatprep.subr.mxu0 0.0
        %5711 = vmatpush2.xpose.msra.mxu0 0.0
        %5712 = vmatprep.subr.mxu0 0.0
        %5713 = vmatpush2.xpose.msra.mxu0 0.0
        %5714 = vmatprep.subr.mxu0 0.0
        %5715 = vmatpush2.xpose.msra.mxu0 0.0
        %5716 = vmatprep.subr.mxu0 0.0
        %5717 = vmatpush2.xpose.msra.mxu0 0.0
        %5718 = vmatprep.subr.mxu0 0.0
        %5719 = vmatpush2.xpose.msra.mxu0 0.0
        %5720 = vmatprep.subr.mxu0 0.0
        %5721 = vmatpush2.xpose.msra.mxu0 0.0
        %5722 = vmatprep.subr.mxu0 0.0
        %5723 = vmatpush2.xpose.msra.mxu0 0.0
        %5724 = vmatprep.subr.mxu0 0.0
        %5725 = vmatpush2.xpose.msra.mxu0 0.0
        %5726 = vmatprep.subr.mxu0 0.0
        %5727 = vmatpush2.xpose.msra.mxu0 0.0
        %5728 = vmatprep.subr.mxu0 0.0
        %5729 = vmatpush2.xpose.msra.mxu0 0.0
        %5730 = vmatprep.subr.mxu0 0.0
        %5731 = vmatpush2.xpose.msra.mxu0 0.0
        %5732 = vmatprep.subr.mxu0 0.0
        %5733 = vmatpush2.xpose.msra.mxu0 0.0
        %5734 = vmatprep.mubr.f32.mxu0 0.0
        %5735 = vmatmul.mubr.f32.gmra.mxu0 %v5662
        %v5736 = vpop.f32.mrf.mxu0
        %v5737 = vadd.f32 %v4836, %v5736
        %v5738 = vpop.f32.mrf.mxu0
        %5739 = vmatprep.mubr.f32.mxu0 0.0
        %5740 = vmatmul.mubr.f32.gmra.mxu0 %v5664
        %v5741 = vpop.f32.mrf.mxu0
        %v5742 = vadd.f32 %v4972, %v5741
        %v5743 = vpop.f32.mrf.mxu0
        %5744 = vdwg.mxu0
        %v5745 = vsel %vm1469, %v1214, 0
        %v5747 = vsel %vm1469, %v1216, 0
        %v5749 = vsel %vm1469, %v1338, 0
        %v5751 = vsel %vm1469, %v1340, 0
        %5753 = vmatprep.subr.mxu0 0.0
        %5754 = vmatpush1.xpose.msra.mxu0 0.0
        %5755 = vmatprep.subr.mxu0 0.0
        %5756 = vmatpush1.xpose.msra.mxu0 0.0
        %5757 = vmatprep.subr.mxu0 0.0
        %5758 = vmatpush1.xpose.msra.mxu0 0.0
        %5759 = vmatprep.subr.mxu0 0.0
        %5760 = vmatpush1.xpose.msra.mxu0 0.0
        %5761 = vmatprep.subr.mxu0 0.0
        %5762 = vmatpush1.xpose.msra.mxu0 0.0
        %5763 = vmatprep.subr.mxu0 0.0
        %5764 = vmatpush1.xpose.msra.mxu0 0.0
        %5765 = vmatprep.subr.mxu0 0.0
        %5766 = vmatpush1.xpose.msra.mxu0 0.0
        %5767 = vmatprep.subr.mxu0 0.0
        %5768 = vmatpush1.xpose.msra.mxu0 0.0
        %5769 = vmatprep.subr.mxu0 0.0
        %5770 = vmatpush1.xpose.msra.mxu0 0.0
        %5771 = vmatprep.subr.mxu0 0.0
        %5772 = vmatpush1.xpose.msra.mxu0 0.0
        %5773 = vmatprep.subr.mxu0 0.0
        %5774 = vmatpush1.xpose.msra.mxu0 0.0
        %5775 = vmatprep.subr.mxu0 0.0
        %5776 = vmatpush1.xpose.msra.mxu0 0.0
        %5777 = vmatprep.subr.mxu0 0.0
        %5778 = vmatpush1.xpose.msra.mxu0 0.0
        %5779 = vmatprep.subr.mxu0 0.0
        %5780 = vmatpush1.xpose.msra.mxu0 0.0
        %5781 = vmatprep.subr.mxu0 0.0
        %5782 = vmatpush1.xpose.msra.mxu0 %v5751
        %5783 = vmatprep.subr.mxu0 0.0
        %5784 = vmatpush1.xpose.msra.mxu0 %v5749
        %5785 = vmatprep.subr.mxu0 0.0
        %5786 = vmatpush2.xpose.msra.mxu0 0.0
        %5787 = vmatprep.subr.mxu0 0.0
        %5788 = vmatpush2.xpose.msra.mxu0 0.0
        %5789 = vmatprep.subr.mxu0 0.0
        %5790 = vmatpush2.xpose.msra.mxu0 0.0
        %5791 = vmatprep.subr.mxu0 0.0
        %5792 = vmatpush2.xpose.msra.mxu0 0.0
        %5793 = vmatprep.subr.mxu0 0.0
        %5794 = vmatpush2.xpose.msra.mxu0 0.0
        %5795 = vmatprep.subr.mxu0 0.0
        %5796 = vmatpush2.xpose.msra.mxu0 0.0
        %5797 = vmatprep.subr.mxu0 0.0
        %5798 = vmatpush2.xpose.msra.mxu0 0.0
        %5799 = vmatprep.subr.mxu0 0.0
        %5800 = vmatpush2.xpose.msra.mxu0 0.0
        %5801 = vmatprep.subr.mxu0 0.0
        %5802 = vmatpush2.xpose.msra.mxu0 0.0
        %5803 = vmatprep.subr.mxu0 0.0
        %5804 = vmatpush2.xpose.msra.mxu0 0.0
        %5805 = vmatprep.subr.mxu0 0.0
        %5806 = vmatpush2.xpose.msra.mxu0 0.0
        %5807 = vmatprep.subr.mxu0 0.0
        %5808 = vmatpush2.xpose.msra.mxu0 0.0
        %5809 = vmatprep.subr.mxu0 0.0
        %5810 = vmatpush2.xpose.msra.mxu0 0.0
        %5811 = vmatprep.subr.mxu0 0.0
        %5812 = vmatpush2.xpose.msra.mxu0 0.0
        %5813 = vmatprep.subr.mxu0 0.0
        %5814 = vmatpush2.xpose.msra.mxu0 0.0
        %5815 = vmatprep.subr.mxu0 0.0
        %5816 = vmatpush2.xpose.msra.mxu0 0.0
        %5817 = vmatprep.mubr.f32.mxu0 0.0
        %5818 = vmatmul.mubr.f32.gmra.mxu0 %v5745
        %v5819 = vpop.f32.mrf.mxu0
        %v5820 = vadd.f32 %v4837, %v5819
        %v5821 = vpop.f32.mrf.mxu0
        %5822 = vmatprep.mubr.f32.mxu0 0.0
        %5823 = vmatmul.mubr.f32.gmra.mxu0 %v5747
        %v5824 = vpop.f32.mrf.mxu0
        %v5825 = vadd.f32 %v4973, %v5824
        %v5826 = vpop.f32.mrf.mxu0
        %5827 = vdwg.mxu0
        %v5828 = vsel %vm1469, %v1218, 0
        %v5830 = vsel %vm1469, %v1220, 0
        %v5832 = vsel %vm1469, %v1342, 0
        %v5834 = vsel %vm1469, %v1344, 0
        %5836 = vmatprep.subr.mxu0 0.0
        %5837 = vmatpush1.xpose.msra.mxu0 0.0
        %5838 = vmatprep.subr.mxu0 0.0
        %5839 = vmatpush1.xpose.msra.mxu0 0.0
        %5840 = vmatprep.subr.mxu0 0.0
        %5841 = vmatpush1.xpose.msra.mxu0 0.0
        %5842 = vmatprep.subr.mxu0 0.0
        %5843 = vmatpush1.xpose.msra.mxu0 0.0
        %5844 = vmatprep.subr.mxu0 0.0
        %5845 = vmatpush1.xpose.msra.mxu0 0.0
        %5846 = vmatprep.subr.mxu0 0.0
        %5847 = vmatpush1.xpose.msra.mxu0 0.0
        %5848 = vmatprep.subr.mxu0 0.0
        %5849 = vmatpush1.xpose.msra.mxu0 0.0
        %5850 = vmatprep.subr.mxu0 0.0
        %5851 = vmatpush1.xpose.msra.mxu0 0.0
        %5852 = vmatprep.subr.mxu0 0.0
        %5853 = vmatpush1.xpose.msra.mxu0 0.0
        %5854 = vmatprep.subr.mxu0 0.0
        %5855 = vmatpush1.xpose.msra.mxu0 0.0
        %5856 = vmatprep.subr.mxu0 0.0
        %5857 = vmatpush1.xpose.msra.mxu0 0.0
        %5858 = vmatprep.subr.mxu0 0.0
        %5859 = vmatpush1.xpose.msra.mxu0 0.0
        %5860 = vmatprep.subr.mxu0 0.0
        %5861 = vmatpush1.xpose.msra.mxu0 0.0
        %5862 = vmatprep.subr.mxu0 0.0
        %5863 = vmatpush1.xpose.msra.mxu0 0.0
        %5864 = vmatprep.subr.mxu0 0.0
        %5865 = vmatpush1.xpose.msra.mxu0 %v5834
        %5866 = vmatprep.subr.mxu0 0.0
        %5867 = vmatpush1.xpose.msra.mxu0 %v5832
        %5868 = vmatprep.subr.mxu0 0.0
        %5869 = vmatpush2.xpose.msra.mxu0 0.0
        %5870 = vmatprep.subr.mxu0 0.0
        %5871 = vmatpush2.xpose.msra.mxu0 0.0
        %5872 = vmatprep.subr.mxu0 0.0
        %5873 = vmatpush2.xpose.msra.mxu0 0.0
        %5874 = vmatprep.subr.mxu0 0.0
        %5875 = vmatpush2.xpose.msra.mxu0 0.0
        %5876 = vmatprep.subr.mxu0 0.0
        %5877 = vmatpush2.xpose.msra.mxu0 0.0
        %5878 = vmatprep.subr.mxu0 0.0
        %5879 = vmatpush2.xpose.msra.mxu0 0.0
        %5880 = vmatprep.subr.mxu0 0.0
        %5881 = vmatpush2.xpose.msra.mxu0 0.0
        %5882 = vmatprep.subr.mxu0 0.0
        %5883 = vmatpush2.xpose.msra.mxu0 0.0
        %5884 = vmatprep.subr.mxu0 0.0
        %5885 = vmatpush2.xpose.msra.mxu0 0.0
        %5886 = vmatprep.subr.mxu0 0.0
        %5887 = vmatpush2.xpose.msra.mxu0 0.0
        %5888 = vmatprep.subr.mxu0 0.0
        %5889 = vmatpush2.xpose.msra.mxu0 0.0
        %5890 = vmatprep.subr.mxu0 0.0
        %5891 = vmatpush2.xpose.msra.mxu0 0.0
        %5892 = vmatprep.subr.mxu0 0.0
        %5893 = vmatpush2.xpose.msra.mxu0 0.0
        %5894 = vmatprep.subr.mxu0 0.0
        %5895 = vmatpush2.xpose.msra.mxu0 0.0
        %5896 = vmatprep.subr.mxu0 0.0
        %5897 = vmatpush2.xpose.msra.mxu0 0.0
        %5898 = vmatprep.subr.mxu0 0.0
        %5899 = vmatpush2.xpose.msra.mxu0 0.0
        %5900 = vmatprep.mubr.f32.mxu0 0.0
        %5901 = vmatmul.mubr.f32.gmra.mxu0 %v5828
        %v5902 = vpop.f32.mrf.mxu0
        %v5903 = vadd.f32 %v4838, %v5902
        %v5904 = vpop.f32.mrf.mxu0
        %5905 = vmatprep.mubr.f32.mxu0 0.0
        %5906 = vmatmul.mubr.f32.gmra.mxu0 %v5830
        %v5907 = vpop.f32.mrf.mxu0
        %v5908 = vadd.f32 %v4974, %v5907
        %v5909 = vpop.f32.mrf.mxu0
        %5910 = vdwg.mxu0
        %v5911 = vsel %vm1469, %v1222, 0
        %v5913 = vsel %vm1469, %v1224, 0
        %v5915 = vsel %vm1469, %v1346, 0
        %v5917 = vsel %vm1469, %v1348, 0
        %5919 = vmatprep.subr.mxu0 0.0
        %5920 = vmatpush1.xpose.msra.mxu0 0.0
        %5921 = vmatprep.subr.mxu0 0.0
        %5922 = vmatpush1.xpose.msra.mxu0 0.0
        %5923 = vmatprep.subr.mxu0 0.0
        %5924 = vmatpush1.xpose.msra.mxu0 0.0
        %5925 = vmatprep.subr.mxu0 0.0
        %5926 = vmatpush1.xpose.msra.mxu0 0.0
        %5927 = vmatprep.subr.mxu0 0.0
        %5928 = vmatpush1.xpose.msra.mxu0 0.0
        %5929 = vmatprep.subr.mxu0 0.0
        %5930 = vmatpush1.xpose.msra.mxu0 0.0
        %5931 = vmatprep.subr.mxu0 0.0
        %5932 = vmatpush1.xpose.msra.mxu0 0.0
        %5933 = vmatprep.subr.mxu0 0.0
        %5934 = vmatpush1.xpose.msra.mxu0 0.0
        %5935 = vmatprep.subr.mxu0 0.0
        %5936 = vmatpush1.xpose.msra.mxu0 0.0
        %5937 = vmatprep.subr.mxu0 0.0
        %5938 = vmatpush1.xpose.msra.mxu0 0.0
        %5939 = vmatprep.subr.mxu0 0.0
        %5940 = vmatpush1.xpose.msra.mxu0 0.0
        %5941 = vmatprep.subr.mxu0 0.0
        %5942 = vmatpush1.xpose.msra.mxu0 0.0
        %5943 = vmatprep.subr.mxu0 0.0
        %5944 = vmatpush1.xpose.msra.mxu0 0.0
        %5945 = vmatprep.subr.mxu0 0.0
        %5946 = vmatpush1.xpose.msra.mxu0 0.0
        %5947 = vmatprep.subr.mxu0 0.0
        %5948 = vmatpush1.xpose.msra.mxu0 %v5917
        %5949 = vmatprep.subr.mxu0 0.0
        %5950 = vmatpush1.xpose.msra.mxu0 %v5915
        %5951 = vmatprep.subr.mxu0 0.0
        %5952 = vmatpush2.xpose.msra.mxu0 0.0
        %5953 = vmatprep.subr.mxu0 0.0
        %5954 = vmatpush2.xpose.msra.mxu0 0.0
        %5955 = vmatprep.subr.mxu0 0.0
        %5956 = vmatpush2.xpose.msra.mxu0 0.0
        %5957 = vmatprep.subr.mxu0 0.0
        %5958 = vmatpush2.xpose.msra.mxu0 0.0
        %5959 = vmatprep.subr.mxu0 0.0
        %5960 = vmatpush2.xpose.msra.mxu0 0.0
        %5961 = vmatprep.subr.mxu0 0.0
        %5962 = vmatpush2.xpose.msra.mxu0 0.0
        %5963 = vmatprep.subr.mxu0 0.0
        %5964 = vmatpush2.xpose.msra.mxu0 0.0
        %5965 = vmatprep.subr.mxu0 0.0
        %5966 = vmatpush2.xpose.msra.mxu0 0.0
        %5967 = vmatprep.subr.mxu0 0.0
        %5968 = vmatpush2.xpose.msra.mxu0 0.0
        %5969 = vmatprep.subr.mxu0 0.0
        %5970 = vmatpush2.xpose.msra.mxu0 0.0
        %5971 = vmatprep.subr.mxu0 0.0
        %5972 = vmatpush2.xpose.msra.mxu0 0.0
        %5973 = vmatprep.subr.mxu0 0.0
        %5974 = vmatpush2.xpose.msra.mxu0 0.0
        %5975 = vmatprep.subr.mxu0 0.0
        %5976 = vmatpush2.xpose.msra.mxu0 0.0
        %5977 = vmatprep.subr.mxu0 0.0
        %5978 = vmatpush2.xpose.msra.mxu0 0.0
        %5979 = vmatprep.subr.mxu0 0.0
        %5980 = vmatpush2.xpose.msra.mxu0 0.0
        %5981 = vmatprep.subr.mxu0 0.0
        %5982 = vmatpush2.xpose.msra.mxu0 0.0
        %5983 = vmatprep.mubr.f32.mxu0 0.0
        %5984 = vmatmul.mubr.f32.gmra.mxu0 %v5911
        %v5985 = vpop.f32.mrf.mxu0
        %v5986 = vadd.f32 %v5103, %v5985
        %v5987 = vpop.f32.mrf.mxu0
        %5988 = vmatprep.mubr.f32.mxu0 0.0
        %5989 = vmatmul.mubr.f32.gmra.mxu0 %v5913
        %v5990 = vpop.f32.mrf.mxu0
        %v5991 = vadd.f32 %v5239, %v5990
        %v5992 = vpop.f32.mrf.mxu0
        %5993 = vdwg.mxu0
        %v5994 = vsel %vm1469, %v1226, 0
        %v5996 = vsel %vm1469, %v1228, 0
        %v5998 = vsel %vm1469, %v1350, 0
        %v6000 = vsel %vm1469, %v1352, 0
        %6002 = vmatprep.subr.mxu0 0.0
        %6003 = vmatpush1.xpose.msra.mxu0 0.0
        %6004 = vmatprep.subr.mxu0 0.0
        %6005 = vmatpush1.xpose.msra.mxu0 0.0
        %6006 = vmatprep.subr.mxu0 0.0
        %6007 = vmatpush1.xpose.msra.mxu0 0.0
        %6008 = vmatprep.subr.mxu0 0.0
        %6009 = vmatpush1.xpose.msra.mxu0 0.0
        %6010 = vmatprep.subr.mxu0 0.0
        %6011 = vmatpush1.xpose.msra.mxu0 0.0
        %6012 = vmatprep.subr.mxu0 0.0
        %6013 = vmatpush1.xpose.msra.mxu0 0.0
        %6014 = vmatprep.subr.mxu0 0.0
        %6015 = vmatpush1.xpose.msra.mxu0 0.0
        %6016 = vmatprep.subr.mxu0 0.0
        %6017 = vmatpush1.xpose.msra.mxu0 0.0
        %6018 = vmatprep.subr.mxu0 0.0
        %6019 = vmatpush1.xpose.msra.mxu0 0.0
        %6020 = vmatprep.subr.mxu0 0.0
        %6021 = vmatpush1.xpose.msra.mxu0 0.0
        %6022 = vmatprep.subr.mxu0 0.0
        %6023 = vmatpush1.xpose.msra.mxu0 0.0
        %6024 = vmatprep.subr.mxu0 0.0
        %6025 = vmatpush1.xpose.msra.mxu0 0.0
        %6026 = vmatprep.subr.mxu0 0.0
        %6027 = vmatpush1.xpose.msra.mxu0 0.0
        %6028 = vmatprep.subr.mxu0 0.0
        %6029 = vmatpush1.xpose.msra.mxu0 0.0
        %6030 = vmatprep.subr.mxu0 0.0
        %6031 = vmatpush1.xpose.msra.mxu0 %v6000
        %6032 = vmatprep.subr.mxu0 0.0
        %6033 = vmatpush1.xpose.msra.mxu0 %v5998
        %6034 = vmatprep.subr.mxu0 0.0
        %6035 = vmatpush2.xpose.msra.mxu0 0.0
        %6036 = vmatprep.subr.mxu0 0.0
        %6037 = vmatpush2.xpose.msra.mxu0 0.0
        %6038 = vmatprep.subr.mxu0 0.0
        %6039 = vmatpush2.xpose.msra.mxu0 0.0
        %6040 = vmatprep.subr.mxu0 0.0
        %6041 = vmatpush2.xpose.msra.mxu0 0.0
        %6042 = vmatprep.subr.mxu0 0.0
        %6043 = vmatpush2.xpose.msra.mxu0 0.0
        %6044 = vmatprep.subr.mxu0 0.0
        %6045 = vmatpush2.xpose.msra.mxu0 0.0
        %6046 = vmatprep.subr.mxu0 0.0
        %6047 = vmatpush2.xpose.msra.mxu0 0.0
        %6048 = vmatprep.subr.mxu0 0.0
        %6049 = vmatpush2.xpose.msra.mxu0 0.0
        %6050 = vmatprep.subr.mxu0 0.0
        %6051 = vmatpush2.xpose.msra.mxu0 0.0
        %6052 = vmatprep.subr.mxu0 0.0
        %6053 = vmatpush2.xpose.msra.mxu0 0.0
        %6054 = vmatprep.subr.mxu0 0.0
        %6055 = vmatpush2.xpose.msra.mxu0 0.0
        %6056 = vmatprep.subr.mxu0 0.0
        %6057 = vmatpush2.xpose.msra.mxu0 0.0
        %6058 = vmatprep.subr.mxu0 0.0
        %6059 = vmatpush2.xpose.msra.mxu0 0.0
        %6060 = vmatprep.subr.mxu0 0.0
        %6061 = vmatpush2.xpose.msra.mxu0 0.0
        %6062 = vmatprep.subr.mxu0 0.0
        %6063 = vmatpush2.xpose.msra.mxu0 0.0
        %6064 = vmatprep.subr.mxu0 0.0
        %6065 = vmatpush2.xpose.msra.mxu0 0.0
        %6066 = vmatprep.mubr.f32.mxu0 0.0
        %6067 = vmatmul.mubr.f32.gmra.mxu0 %v5994
        %v6068 = vpop.f32.mrf.mxu0
        %v6069 = vadd.f32 %v5104, %v6068
        %v6070 = vpop.f32.mrf.mxu0
        %6071 = vmatprep.mubr.f32.mxu0 0.0
        %6072 = vmatmul.mubr.f32.gmra.mxu0 %v5996
        %v6073 = vpop.f32.mrf.mxu0
        %v6074 = vadd.f32 %v5240, %v6073
        %v6075 = vpop.f32.mrf.mxu0
        %6076 = vdwg.mxu0
        %v6077 = vsel %vm1469, %v1230, 0
        %v6079 = vsel %vm1469, %v1232, 0
        %v6081 = vsel %vm1469, %v1354, 0
        %v6083 = vsel %vm1469, %v1356, 0
        %6085 = vmatprep.subr.mxu0 0.0
        %6086 = vmatpush1.xpose.msra.mxu0 0.0
        %6087 = vmatprep.subr.mxu0 0.0
        %6088 = vmatpush1.xpose.msra.mxu0 0.0
        %6089 = vmatprep.subr.mxu0 0.0
        %6090 = vmatpush1.xpose.msra.mxu0 0.0
        %6091 = vmatprep.subr.mxu0 0.0
        %6092 = vmatpush1.xpose.msra.mxu0 0.0
        %6093 = vmatprep.subr.mxu0 0.0
        %6094 = vmatpush1.xpose.msra.mxu0 0.0
        %6095 = vmatprep.subr.mxu0 0.0
        %6096 = vmatpush1.xpose.msra.mxu0 0.0
        %6097 = vmatprep.subr.mxu0 0.0
        %6098 = vmatpush1.xpose.msra.mxu0 0.0
        %6099 = vmatprep.subr.mxu0 0.0
        %6100 = vmatpush1.xpose.msra.mxu0 0.0
        %6101 = vmatprep.subr.mxu0 0.0
        %6102 = vmatpush1.xpose.msra.mxu0 0.0
        %6103 = vmatprep.subr.mxu0 0.0
        %6104 = vmatpush1.xpose.msra.mxu0 0.0
        %6105 = vmatprep.subr.mxu0 0.0
        %6106 = vmatpush1.xpose.msra.mxu0 0.0
        %6107 = vmatprep.subr.mxu0 0.0
        %6108 = vmatpush1.xpose.msra.mxu0 0.0
        %6109 = vmatprep.subr.mxu0 0.0
        %6110 = vmatpush1.xpose.msra.mxu0 0.0
        %6111 = vmatprep.subr.mxu0 0.0
        %6112 = vmatpush1.xpose.msra.mxu0 0.0
        %6113 = vmatprep.subr.mxu0 0.0
        %6114 = vmatpush1.xpose.msra.mxu0 %v6083
        %6115 = vmatprep.subr.mxu0 0.0
        %6116 = vmatpush1.xpose.msra.mxu0 %v6081
        %6117 = vmatprep.subr.mxu0 0.0
        %6118 = vmatpush2.xpose.msra.mxu0 0.0
        %6119 = vmatprep.subr.mxu0 0.0
        %6120 = vmatpush2.xpose.msra.mxu0 0.0
        %6121 = vmatprep.subr.mxu0 0.0
        %6122 = vmatpush2.xpose.msra.mxu0 0.0
        %6123 = vmatprep.subr.mxu0 0.0
        %6124 = vmatpush2.xpose.msra.mxu0 0.0
        %6125 = vmatprep.subr.mxu0 0.0
        %6126 = vmatpush2.xpose.msra.mxu0 0.0
        %6127 = vmatprep.subr.mxu0 0.0
        %6128 = vmatpush2.xpose.msra.mxu0 0.0
        %6129 = vmatprep.subr.mxu0 0.0
        %6130 = vmatpush2.xpose.msra.mxu0 0.0
        %6131 = vmatprep.subr.mxu0 0.0
        %6132 = vmatpush2.xpose.msra.mxu0 0.0
        %6133 = vmatprep.subr.mxu0 0.0
        %6134 = vmatpush2.xpose.msra.mxu0 0.0
        %6135 = vmatprep.subr.mxu0 0.0
        %6136 = vmatpush2.xpose.msra.mxu0 0.0
        %6137 = vmatprep.subr.mxu0 0.0
        %6138 = vmatpush2.xpose.msra.mxu0 0.0
        %6139 = vmatprep.subr.mxu0 0.0
        %6140 = vmatpush2.xpose.msra.mxu0 0.0
        %6141 = vmatprep.subr.mxu0 0.0
        %6142 = vmatpush2.xpose.msra.mxu0 0.0
        %6143 = vmatprep.subr.mxu0 0.0
        %6144 = vmatpush2.xpose.msra.mxu0 0.0
        %6145 = vmatprep.subr.mxu0 0.0
        %6146 = vmatpush2.xpose.msra.mxu0 0.0
        %6147 = vmatprep.subr.mxu0 0.0
        %6148 = vmatpush2.xpose.msra.mxu0 0.0
        %6149 = vmatprep.mubr.f32.mxu0 0.0
        %6150 = vmatmul.mubr.f32.gmra.mxu0 %v6077
        %v6151 = vpop.f32.mrf.mxu0
        %v6152 = vadd.f32 %v5105, %v6151
        %v6153 = vpop.f32.mrf.mxu0
        %6154 = vmatprep.mubr.f32.mxu0 0.0
        %6155 = vmatmul.mubr.f32.gmra.mxu0 %v6079
        %v6156 = vpop.f32.mrf.mxu0
        %v6157 = vadd.f32 %v5241, %v6156
        %v6158 = vpop.f32.mrf.mxu0
        %6159 = vdwg.mxu0
        %v6160 = vsel %vm1469, %v1234, 0
        %v6162 = vsel %vm1469, %v1236, 0
        %v6164 = vsel %vm1469, %v1358, 0
        %v6166 = vsel %vm1469, %v1360, 0
        %6168 = vmatprep.subr.mxu0 0.0
        %6169 = vmatpush1.xpose.msra.mxu0 0.0
        %6170 = vmatprep.subr.mxu0 0.0
        %6171 = vmatpush1.xpose.msra.mxu0 0.0
        %6172 = vmatprep.subr.mxu0 0.0
        %6173 = vmatpush1.xpose.msra.mxu0 0.0
        %6174 = vmatprep.subr.mxu0 0.0
        %6175 = vmatpush1.xpose.msra.mxu0 0.0
        %6176 = vmatprep.subr.mxu0 0.0
        %6177 = vmatpush1.xpose.msra.mxu0 0.0
        %6178 = vmatprep.subr.mxu0 0.0
        %6179 = vmatpush1.xpose.msra.mxu0 0.0
        %6180 = vmatprep.subr.mxu0 0.0
        %6181 = vmatpush1.xpose.msra.mxu0 0.0
        %6182 = vmatprep.subr.mxu0 0.0
        %6183 = vmatpush1.xpose.msra.mxu0 0.0
        %6184 = vmatprep.subr.mxu0 0.0
        %6185 = vmatpush1.xpose.msra.mxu0 0.0
        %6186 = vmatprep.subr.mxu0 0.0
        %6187 = vmatpush1.xpose.msra.mxu0 0.0
        %6188 = vmatprep.subr.mxu0 0.0
        %6189 = vmatpush1.xpose.msra.mxu0 0.0
        %6190 = vmatprep.subr.mxu0 0.0
        %6191 = vmatpush1.xpose.msra.mxu0 0.0
        %6192 = vmatprep.subr.mxu0 0.0
        %6193 = vmatpush1.xpose.msra.mxu0 0.0
        %6194 = vmatprep.subr.mxu0 0.0
        %6195 = vmatpush1.xpose.msra.mxu0 0.0
        %6196 = vmatprep.subr.mxu0 0.0
        %6197 = vmatpush1.xpose.msra.mxu0 %v6166
        %6198 = vmatprep.subr.mxu0 0.0
        %6199 = vmatpush1.xpose.msra.mxu0 %v6164
        %6200 = vmatprep.subr.mxu0 0.0
        %6201 = vmatpush2.xpose.msra.mxu0 0.0
        %6202 = vmatprep.subr.mxu0 0.0
        %6203 = vmatpush2.xpose.msra.mxu0 0.0
        %6204 = vmatprep.subr.mxu0 0.0
        %6205 = vmatpush2.xpose.msra.mxu0 0.0
        %6206 = vmatprep.subr.mxu0 0.0
        %6207 = vmatpush2.xpose.msra.mxu0 0.0
        %6208 = vmatprep.subr.mxu0 0.0
        %6209 = vmatpush2.xpose.msra.mxu0 0.0
        %6210 = vmatprep.subr.mxu0 0.0
        %6211 = vmatpush2.xpose.msra.mxu0 0.0
        %6212 = vmatprep.subr.mxu0 0.0
        %6213 = vmatpush2.xpose.msra.mxu0 0.0
        %6214 = vmatprep.subr.mxu0 0.0
        %6215 = vmatpush2.xpose.msra.mxu0 0.0
        %6216 = vmatprep.subr.mxu0 0.0
        %6217 = vmatpush2.xpose.msra.mxu0 0.0
        %6218 = vmatprep.subr.mxu0 0.0
        %6219 = vmatpush2.xpose.msra.mxu0 0.0
        %6220 = vmatprep.subr.mxu0 0.0
        %6221 = vmatpush2.xpose.msra.mxu0 0.0
        %6222 = vmatprep.subr.mxu0 0.0
        %6223 = vmatpush2.xpose.msra.mxu0 0.0
        %6224 = vmatprep.subr.mxu0 0.0
        %6225 = vmatpush2.xpose.msra.mxu0 0.0
        %6226 = vmatprep.subr.mxu0 0.0
        %6227 = vmatpush2.xpose.msra.mxu0 0.0
        %6228 = vmatprep.subr.mxu0 0.0
        %6229 = vmatpush2.xpose.msra.mxu0 0.0
        %6230 = vmatprep.subr.mxu0 0.0
        %6231 = vmatpush2.xpose.msra.mxu0 0.0
        %6232 = vmatprep.mubr.f32.mxu0 0.0
        %6233 = vmatmul.mubr.f32.gmra.mxu0 %v6160
        %v6234 = vpop.f32.mrf.mxu0
        %v6235 = vadd.f32 %v5106, %v6234
        %v6236 = vpop.f32.mrf.mxu0
        %6237 = vmatprep.mubr.f32.mxu0 0.0
        %6238 = vmatmul.mubr.f32.gmra.mxu0 %v6162
        %v6239 = vpop.f32.mrf.mxu0
        %v6240 = vadd.f32 %v5242, %v6239
        %v6241 = vpop.f32.mrf.mxu0
        %6242 = vdwg.mxu0
        %v6243 = vsel %vm1469, %v1238, 0
        %v6245 = vsel %vm1469, %v1240, 0
        %v6247 = vsel %vm1469, %v1362, 0
        %v6249 = vsel %vm1469, %v1364, 0
        %6251 = vmatprep.subr.mxu0 0.0
        %6252 = vmatpush1.xpose.msra.mxu0 0.0
        %6253 = vmatprep.subr.mxu0 0.0
        %6254 = vmatpush1.xpose.msra.mxu0 0.0
        %6255 = vmatprep.subr.mxu0 0.0
        %6256 = vmatpush1.xpose.msra.mxu0 0.0
        %6257 = vmatprep.subr.mxu0 0.0
        %6258 = vmatpush1.xpose.msra.mxu0 0.0
        %6259 = vmatprep.subr.mxu0 0.0
        %6260 = vmatpush1.xpose.msra.mxu0 0.0
        %6261 = vmatprep.subr.mxu0 0.0
        %6262 = vmatpush1.xpose.msra.mxu0 0.0
        %6263 = vmatprep.subr.mxu0 0.0
        %6264 = vmatpush1.xpose.msra.mxu0 0.0
        %6265 = vmatprep.subr.mxu0 0.0
        %6266 = vmatpush1.xpose.msra.mxu0 0.0
        %6267 = vmatprep.subr.mxu0 0.0
        %6268 = vmatpush1.xpose.msra.mxu0 0.0
        %6269 = vmatprep.subr.mxu0 0.0
        %6270 = vmatpush1.xpose.msra.mxu0 0.0
        %6271 = vmatprep.subr.mxu0 0.0
        %6272 = vmatpush1.xpose.msra.mxu0 0.0
        %6273 = vmatprep.subr.mxu0 0.0
        %6274 = vmatpush1.xpose.msra.mxu0 0.0
        %6275 = vmatprep.subr.mxu0 0.0
        %6276 = vmatpush1.xpose.msra.mxu0 0.0
        %6277 = vmatprep.subr.mxu0 0.0
        %6278 = vmatpush1.xpose.msra.mxu0 0.0
        %6279 = vmatprep.subr.mxu0 0.0
        %6280 = vmatpush1.xpose.msra.mxu0 %v6249
        %6281 = vmatprep.subr.mxu0 0.0
        %6282 = vmatpush1.xpose.msra.mxu0 %v6247
        %6283 = vmatprep.subr.mxu0 0.0
        %6284 = vmatpush2.xpose.msra.mxu0 0.0
        %6285 = vmatprep.subr.mxu0 0.0
        %6286 = vmatpush2.xpose.msra.mxu0 0.0
        %6287 = vmatprep.subr.mxu0 0.0
        %6288 = vmatpush2.xpose.msra.mxu0 0.0
        %6289 = vmatprep.subr.mxu0 0.0
        %6290 = vmatpush2.xpose.msra.mxu0 0.0
        %6291 = vmatprep.subr.mxu0 0.0
        %6292 = vmatpush2.xpose.msra.mxu0 0.0
        %6293 = vmatprep.subr.mxu0 0.0
        %6294 = vmatpush2.xpose.msra.mxu0 0.0
        %6295 = vmatprep.subr.mxu0 0.0
        %6296 = vmatpush2.xpose.msra.mxu0 0.0
        %6297 = vmatprep.subr.mxu0 0.0
        %6298 = vmatpush2.xpose.msra.mxu0 0.0
        %6299 = vmatprep.subr.mxu0 0.0
        %6300 = vmatpush2.xpose.msra.mxu0 0.0
        %6301 = vmatprep.subr.mxu0 0.0
        %6302 = vmatpush2.xpose.msra.mxu0 0.0
        %6303 = vmatprep.subr.mxu0 0.0
        %6304 = vmatpush2.xpose.msra.mxu0 0.0
        %6305 = vmatprep.subr.mxu0 0.0
        %6306 = vmatpush2.xpose.msra.mxu0 0.0
        %6307 = vmatprep.subr.mxu0 0.0
        %6308 = vmatpush2.xpose.msra.mxu0 0.0
        %6309 = vmatprep.subr.mxu0 0.0
        %6310 = vmatpush2.xpose.msra.mxu0 0.0
        %6311 = vmatprep.subr.mxu0 0.0
        %6312 = vmatpush2.xpose.msra.mxu0 0.0
        %6313 = vmatprep.subr.mxu0 0.0
        %6314 = vmatpush2.xpose.msra.mxu0 0.0
        %6315 = vmatprep.mubr.f32.mxu0 0.0
        %6316 = vmatmul.mubr.f32.gmra.mxu0 %v6243
        %v6317 = vpop.f32.mrf.mxu0
        %v6318 = vadd.f32 %v5107, %v6317
        %v6319 = vpop.f32.mrf.mxu0
        %6320 = vmatprep.mubr.f32.mxu0 0.0
        %6321 = vmatmul.mubr.f32.gmra.mxu0 %v6245
        %v6322 = vpop.f32.mrf.mxu0
        %v6323 = vadd.f32 %v5243, %v6322
        %v6324 = vpop.f32.mrf.mxu0
        %6325 = vdwg.mxu0
        %v6326 = vsel %vm1469, %v1242, 0
        %v6328 = vsel %vm1469, %v1244, 0
        %v6330 = vsel %vm1469, %v1366, 0
        %v6332 = vsel %vm1469, %v1368, 0
        %6334 = vmatprep.subr.mxu0 0.0
        %6335 = vmatpush1.xpose.msra.mxu0 0.0
        %6336 = vmatprep.subr.mxu0 0.0
        %6337 = vmatpush1.xpose.msra.mxu0 0.0
        %6338 = vmatprep.subr.mxu0 0.0
        %6339 = vmatpush1.xpose.msra.mxu0 0.0
        %6340 = vmatprep.subr.mxu0 0.0
        %6341 = vmatpush1.xpose.msra.mxu0 0.0
        %6342 = vmatprep.subr.mxu0 0.0
        %6343 = vmatpush1.xpose.msra.mxu0 0.0
        %6344 = vmatprep.subr.mxu0 0.0
        %6345 = vmatpush1.xpose.msra.mxu0 0.0
        %6346 = vmatprep.subr.mxu0 0.0
        %6347 = vmatpush1.xpose.msra.mxu0 0.0
        %6348 = vmatprep.subr.mxu0 0.0
        %6349 = vmatpush1.xpose.msra.mxu0 0.0
        %6350 = vmatprep.subr.mxu0 0.0
        %6351 = vmatpush1.xpose.msra.mxu0 0.0
        %6352 = vmatprep.subr.mxu0 0.0
        %6353 = vmatpush1.xpose.msra.mxu0 0.0
        %6354 = vmatprep.subr.mxu0 0.0
        %6355 = vmatpush1.xpose.msra.mxu0 0.0
        %6356 = vmatprep.subr.mxu0 0.0
        %6357 = vmatpush1.xpose.msra.mxu0 0.0
        %6358 = vmatprep.subr.mxu0 0.0
        %6359 = vmatpush1.xpose.msra.mxu0 0.0
        %6360 = vmatprep.subr.mxu0 0.0
        %6361 = vmatpush1.xpose.msra.mxu0 0.0
        %6362 = vmatprep.subr.mxu0 0.0
        %6363 = vmatpush1.xpose.msra.mxu0 %v6332
        %6364 = vmatprep.subr.mxu0 0.0
        %6365 = vmatpush1.xpose.msra.mxu0 %v6330
        %6366 = vmatprep.subr.mxu0 0.0
        %6367 = vmatpush2.xpose.msra.mxu0 0.0
        %6368 = vmatprep.subr.mxu0 0.0
        %6369 = vmatpush2.xpose.msra.mxu0 0.0
        %6370 = vmatprep.subr.mxu0 0.0
        %6371 = vmatpush2.xpose.msra.mxu0 0.0
        %6372 = vmatprep.subr.mxu0 0.0
        %6373 = vmatpush2.xpose.msra.mxu0 0.0
        %6374 = vmatprep.subr.mxu0 0.0
        %6375 = vmatpush2.xpose.msra.mxu0 0.0
        %6376 = vmatprep.subr.mxu0 0.0
        %6377 = vmatpush2.xpose.msra.mxu0 0.0
        %6378 = vmatprep.subr.mxu0 0.0
        %6379 = vmatpush2.xpose.msra.mxu0 0.0
        %6380 = vmatprep.subr.mxu0 0.0
        %6381 = vmatpush2.xpose.msra.mxu0 0.0
        %6382 = vmatprep.subr.mxu0 0.0
        %6383 = vmatpush2.xpose.msra.mxu0 0.0
        %6384 = vmatprep.subr.mxu0 0.0
        %6385 = vmatpush2.xpose.msra.mxu0 0.0
        %6386 = vmatprep.subr.mxu0 0.0
        %6387 = vmatpush2.xpose.msra.mxu0 0.0
        %6388 = vmatprep.subr.mxu0 0.0
        %6389 = vmatpush2.xpose.msra.mxu0 0.0
        %6390 = vmatprep.subr.mxu0 0.0
        %6391 = vmatpush2.xpose.msra.mxu0 0.0
        %6392 = vmatprep.subr.mxu0 0.0
        %6393 = vmatpush2.xpose.msra.mxu0 0.0
        %6394 = vmatprep.subr.mxu0 0.0
        %6395 = vmatpush2.xpose.msra.mxu0 0.0
        %6396 = vmatprep.subr.mxu0 0.0
        %6397 = vmatpush2.xpose.msra.mxu0 0.0
        %6398 = vmatprep.mubr.f32.mxu0 0.0
        %6399 = vmatmul.mubr.f32.gmra.mxu0 %v6326
        %v6400 = vpop.f32.mrf.mxu0
        %v6401 = vadd.f32 %v5108, %v6400
        %v6402 = vpop.f32.mrf.mxu0
        %6403 = vmatprep.mubr.f32.mxu0 0.0
        %6404 = vmatmul.mubr.f32.gmra.mxu0 %v6328
        %v6405 = vpop.f32.mrf.mxu0
        %v6406 = vadd.f32 %v5244, %v6405
        %v6407 = vpop.f32.mrf.mxu0
        %6408 = vdwg.mxu0
        %v6409 = vsel %vm1469, %v1246, 0
        %v6411 = vsel %vm1469, %v1248, 0
        %v6413 = vsel %vm1469, %v1370, 0
        %v6415 = vsel %vm1469, %v1372, 0
        %6417 = vmatprep.subr.mxu0 0.0
        %6418 = vmatpush1.xpose.msra.mxu0 0.0
        %6419 = vmatprep.subr.mxu0 0.0
        %6420 = vmatpush1.xpose.msra.mxu0 0.0
        %6421 = vmatprep.subr.mxu0 0.0
        %6422 = vmatpush1.xpose.msra.mxu0 0.0
        %6423 = vmatprep.subr.mxu0 0.0
        %6424 = vmatpush1.xpose.msra.mxu0 0.0
        %6425 = vmatprep.subr.mxu0 0.0
        %6426 = vmatpush1.xpose.msra.mxu0 0.0
        %6427 = vmatprep.subr.mxu0 0.0
        %6428 = vmatpush1.xpose.msra.mxu0 0.0
        %6429 = vmatprep.subr.mxu0 0.0
        %6430 = vmatpush1.xpose.msra.mxu0 0.0
        %6431 = vmatprep.subr.mxu0 0.0
        %6432 = vmatpush1.xpose.msra.mxu0 0.0
        %6433 = vmatprep.subr.mxu0 0.0
        %6434 = vmatpush1.xpose.msra.mxu0 0.0
        %6435 = vmatprep.subr.mxu0 0.0
        %6436 = vmatpush1.xpose.msra.mxu0 0.0
        %6437 = vmatprep.subr.mxu0 0.0
        %6438 = vmatpush1.xpose.msra.mxu0 0.0
        %6439 = vmatprep.subr.mxu0 0.0
        %6440 = vmatpush1.xpose.msra.mxu0 0.0
        %6441 = vmatprep.subr.mxu0 0.0
        %6442 = vmatpush1.xpose.msra.mxu0 0.0
        %6443 = vmatprep.subr.mxu0 0.0
        %6444 = vmatpush1.xpose.msra.mxu0 0.0
        %6445 = vmatprep.subr.mxu0 0.0
        %6446 = vmatpush1.xpose.msra.mxu0 %v6415
        %6447 = vmatprep.subr.mxu0 0.0
        %6448 = vmatpush1.xpose.msra.mxu0 %v6413
        %6449 = vmatprep.subr.mxu0 0.0
        %6450 = vmatpush2.xpose.msra.mxu0 0.0
        %6451 = vmatprep.subr.mxu0 0.0
        %6452 = vmatpush2.xpose.msra.mxu0 0.0
        %6453 = vmatprep.subr.mxu0 0.0
        %6454 = vmatpush2.xpose.msra.mxu0 0.0
        %6455 = vmatprep.subr.mxu0 0.0
        %6456 = vmatpush2.xpose.msra.mxu0 0.0
        %6457 = vmatprep.subr.mxu0 0.0
        %6458 = vmatpush2.xpose.msra.mxu0 0.0
        %6459 = vmatprep.subr.mxu0 0.0
        %6460 = vmatpush2.xpose.msra.mxu0 0.0
        %6461 = vmatprep.subr.mxu0 0.0
        %6462 = vmatpush2.xpose.msra.mxu0 0.0
        %6463 = vmatprep.subr.mxu0 0.0
        %6464 = vmatpush2.xpose.msra.mxu0 0.0
        %6465 = vmatprep.subr.mxu0 0.0
        %6466 = vmatpush2.xpose.msra.mxu0 0.0
        %6467 = vmatprep.subr.mxu0 0.0
        %6468 = vmatpush2.xpose.msra.mxu0 0.0
        %6469 = vmatprep.subr.mxu0 0.0
        %6470 = vmatpush2.xpose.msra.mxu0 0.0
        %6471 = vmatprep.subr.mxu0 0.0
        %6472 = vmatpush2.xpose.msra.mxu0 0.0
        %6473 = vmatprep.subr.mxu0 0.0
        %6474 = vmatpush2.xpose.msra.mxu0 0.0
        %6475 = vmatprep.subr.mxu0 0.0
        %6476 = vmatpush2.xpose.msra.mxu0 0.0
        %6477 = vmatprep.subr.mxu0 0.0
        %6478 = vmatpush2.xpose.msra.mxu0 0.0
        %6479 = vmatprep.subr.mxu0 0.0
        %6480 = vmatpush2.xpose.msra.mxu0 0.0
        %6481 = vmatprep.mubr.f32.mxu0 0.0
        %6482 = vmatmul.mubr.f32.gmra.mxu0 %v6409
        %v6483 = vpop.f32.mrf.mxu0
        %v6484 = vadd.f32 %v5109, %v6483
        %v6485 = vpop.f32.mrf.mxu0
        %6486 = vmatprep.mubr.f32.mxu0 0.0
        %6487 = vmatmul.mubr.f32.gmra.mxu0 %v6411
        %v6488 = vpop.f32.mrf.mxu0
        %v6489 = vadd.f32 %v5245, %v6488
        %v6490 = vpop.f32.mrf.mxu0
        %6491 = vdwg.mxu0
        %v6492 = vsel %vm1469, %v1250, 0
        %v6494 = vsel %vm1469, %v1252, 0
        %v6496 = vsel %vm1469, %v1374, 0
        %v6498 = vsel %vm1469, %v1376, 0
        %6500 = vmatprep.subr.mxu0 0.0
        %6501 = vmatpush1.xpose.msra.mxu0 0.0
        %6502 = vmatprep.subr.mxu0 0.0
        %6503 = vmatpush1.xpose.msra.mxu0 0.0
        %6504 = vmatprep.subr.mxu0 0.0
        %6505 = vmatpush1.xpose.msra.mxu0 0.0
        %6506 = vmatprep.subr.mxu0 0.0
        %6507 = vmatpush1.xpose.msra.mxu0 0.0
        %6508 = vmatprep.subr.mxu0 0.0
        %6509 = vmatpush1.xpose.msra.mxu0 0.0
        %6510 = vmatprep.subr.mxu0 0.0
        %6511 = vmatpush1.xpose.msra.mxu0 0.0
        %6512 = vmatprep.subr.mxu0 0.0
        %6513 = vmatpush1.xpose.msra.mxu0 0.0
        %6514 = vmatprep.subr.mxu0 0.0
        %6515 = vmatpush1.xpose.msra.mxu0 0.0
        %6516 = vmatprep.subr.mxu0 0.0
        %6517 = vmatpush1.xpose.msra.mxu0 0.0
        %6518 = vmatprep.subr.mxu0 0.0
        %6519 = vmatpush1.xpose.msra.mxu0 0.0
        %6520 = vmatprep.subr.mxu0 0.0
        %6521 = vmatpush1.xpose.msra.mxu0 0.0
        %6522 = vmatprep.subr.mxu0 0.0
        %6523 = vmatpush1.xpose.msra.mxu0 0.0
        %6524 = vmatprep.subr.mxu0 0.0
        %6525 = vmatpush1.xpose.msra.mxu0 0.0
        %6526 = vmatprep.subr.mxu0 0.0
        %6527 = vmatpush1.xpose.msra.mxu0 0.0
        %6528 = vmatprep.subr.mxu0 0.0
        %6529 = vmatpush1.xpose.msra.mxu0 %v6498
        %6530 = vmatprep.subr.mxu0 0.0
        %6531 = vmatpush1.xpose.msra.mxu0 %v6496
        %6532 = vmatprep.subr.mxu0 0.0
        %6533 = vmatpush2.xpose.msra.mxu0 0.0
        %6534 = vmatprep.subr.mxu0 0.0
        %6535 = vmatpush2.xpose.msra.mxu0 0.0
        %6536 = vmatprep.subr.mxu0 0.0
        %6537 = vmatpush2.xpose.msra.mxu0 0.0
        %6538 = vmatprep.subr.mxu0 0.0
        %6539 = vmatpush2.xpose.msra.mxu0 0.0
        %6540 = vmatprep.subr.mxu0 0.0
        %6541 = vmatpush2.xpose.msra.mxu0 0.0
        %6542 = vmatprep.subr.mxu0 0.0
        %6543 = vmatpush2.xpose.msra.mxu0 0.0
        %6544 = vmatprep.subr.mxu0 0.0
        %6545 = vmatpush2.xpose.msra.mxu0 0.0
        %6546 = vmatprep.subr.mxu0 0.0
        %6547 = vmatpush2.xpose.msra.mxu0 0.0
        %6548 = vmatprep.subr.mxu0 0.0
        %6549 = vmatpush2.xpose.msra.mxu0 0.0
        %6550 = vmatprep.subr.mxu0 0.0
        %6551 = vmatpush2.xpose.msra.mxu0 0.0
        %6552 = vmatprep.subr.mxu0 0.0
        %6553 = vmatpush2.xpose.msra.mxu0 0.0
        %6554 = vmatprep.subr.mxu0 0.0
        %6555 = vmatpush2.xpose.msra.mxu0 0.0
        %6556 = vmatprep.subr.mxu0 0.0
        %6557 = vmatpush2.xpose.msra.mxu0 0.0
        %6558 = vmatprep.subr.mxu0 0.0
        %6559 = vmatpush2.xpose.msra.mxu0 0.0
        %6560 = vmatprep.subr.mxu0 0.0
        %6561 = vmatpush2.xpose.msra.mxu0 0.0
        %6562 = vmatprep.subr.mxu0 0.0
        %6563 = vmatpush2.xpose.msra.mxu0 0.0
        %6564 = vmatprep.mubr.f32.mxu0 0.0
        %6565 = vmatmul.mubr.f32.gmra.mxu0 %v6492
        %v6566 = vpop.f32.mrf.mxu0
        %v6567 = vadd.f32 %v5110, %v6566
        %v6568 = vpop.f32.mrf.mxu0
        %6569 = vmatprep.mubr.f32.mxu0 0.0
        %6570 = vmatmul.mubr.f32.gmra.mxu0 %v6494
        %v6571 = vpop.f32.mrf.mxu0
        %v6572 = vadd.f32 %v5246, %v6571
        %v6573 = vpop.f32.mrf.mxu0
        %6574 = vdwg.mxu0
        %v6575 = vld [vmem:[%s533] sm:$0x1]
        %v6577 = vlaneseq
        %v6578 = vshrl.u32 %v6577, 7
        %v6579 = vsub.s32 0, %v6578
        %v6580 = vrot.slane %v6575, %v6579
        %v6582 = vadd.f32 %v5322, %v6580
        %v6583 = vadd.f32 %v5327, %v6580
        %v6584 = vadd.f32 %v5405, %v6580
        %v6585 = vadd.f32 %v5410, %v6580
        %v6586 = vadd.f32 %v5488, %v6580
        %v6587 = vadd.f32 %v5493, %v6580
        %v6588 = vadd.f32 %v5571, %v6580
        %v6589 = vadd.f32 %v5576, %v6580
        %v6590 = vadd.f32 %v5654, %v6580
        %v6591 = vadd.f32 %v5659, %v6580
        %v6592 = vadd.f32 %v5737, %v6580
        %v6593 = vadd.f32 %v5742, %v6580
        %v6594 = vadd.f32 %v5820, %v6580
        %v6595 = vadd.f32 %v5825, %v6580
        %v6596 = vadd.f32 %v5903, %v6580
        %v6597 = vadd.f32 %v5908, %v6580
        %v6598 = vadd.f32 %v5986, %v6580
        %v6599 = vadd.f32 %v5991, %v6580
        %v6600 = vadd.f32 %v6069, %v6580
        %v6601 = vadd.f32 %v6074, %v6580
        %v6602 = vadd.f32 %v6152, %v6580
        %v6603 = vadd.f32 %v6157, %v6580
        %v6604 = vadd.f32 %v6235, %v6580
        %v6605 = vadd.f32 %v6240, %v6580
        %v6606 = vadd.f32 %v6318, %v6580
        %v6607 = vadd.f32 %v6323, %v6580
        %v6608 = vadd.f32 %v6401, %v6580
        %v6609 = vadd.f32 %v6406, %v6580
        %v6610 = vadd.f32 %v6484, %v6580
        %v6611 = vadd.f32 %v6489, %v6580
        %v6612 = vadd.f32 %v6567, %v6580
        %v6613 = vadd.f32 %v6572, %v6580
        %vm6614 = vcmask 130048
        %v6615 = vsel %vm6614, %v6582, -inf
        %6616 = vmax.xlane.f32.xlu0 %v6615
        %v6617 = vpop.xlane.xlu0 %6616
        %v6618 = vsel %vm6614, %v6583, -inf
        %6619 = vmax.xlane.f32.xlu0 %v6618
        %v6620 = vpop.xlane.xlu0 %6619
        %v6621 = vsel %vm6614, %v6584, -inf
        %6622 = vmax.xlane.f32.xlu0 %v6621
        %v6623 = vpop.xlane.xlu0 %6622
        %v6624 = vsel %vm6614, %v6585, -inf
        %6625 = vmax.xlane.f32.xlu0 %v6624
        %v6626 = vpop.xlane.xlu0 %6625
        %v6627 = vsel %vm6614, %v6586, -inf
        %6628 = vmax.xlane.f32.xlu0 %v6627
        %v6629 = vpop.xlane.xlu0 %6628
        %v6630 = vsel %vm6614, %v6587, -inf
        %6631 = vmax.xlane.f32.xlu0 %v6630
        %v6632 = vpop.xlane.xlu0 %6631
        %v6633 = vsel %vm6614, %v6588, -inf
        %6634 = vmax.xlane.f32.xlu0 %v6633
        %v6635 = vpop.xlane.xlu0 %6634
        %v6636 = vsel %vm6614, %v6589, -inf
        %6637 = vmax.xlane.f32.xlu0 %v6636
        %v6638 = vpop.xlane.xlu0 %6637
        %v6639 = vsel %vm6614, %v6590, -inf
        %6640 = vmax.xlane.f32.xlu0 %v6639
        %v6641 = vpop.xlane.xlu0 %6640
        %v6642 = vsel %vm6614, %v6591, -inf
        %6643 = vmax.xlane.f32.xlu0 %v6642
        %v6644 = vpop.xlane.xlu0 %6643
        %v6645 = vsel %vm6614, %v6592, -inf
        %6646 = vmax.xlane.f32.xlu0 %v6645
        %v6647 = vpop.xlane.xlu0 %6646
        %v6648 = vsel %vm6614, %v6593, -inf
        %6649 = vmax.xlane.f32.xlu0 %v6648
        %v6650 = vpop.xlane.xlu0 %6649
        %v6651 = vsel %vm6614, %v6594, -inf
        %6652 = vmax.xlane.f32.xlu0 %v6651
        %v6653 = vpop.xlane.xlu0 %6652
        %v6654 = vsel %vm6614, %v6595, -inf
        %6655 = vmax.xlane.f32.xlu0 %v6654
        %v6656 = vpop.xlane.xlu0 %6655
        %v6657 = vsel %vm6614, %v6596, -inf
        %6658 = vmax.xlane.f32.xlu0 %v6657
        %v6659 = vpop.xlane.xlu0 %6658
        %v6660 = vsel %vm6614, %v6597, -inf
        %6661 = vmax.xlane.f32.xlu0 %v6660
        %v6662 = vpop.xlane.xlu0 %6661
        %v6663 = vsel %vm6614, %v6598, -inf
        %6664 = vmax.xlane.f32.xlu0 %v6663
        %v6665 = vpop.xlane.xlu0 %6664
        %v6666 = vsel %vm6614, %v6599, -inf
        %6667 = vmax.xlane.f32.xlu0 %v6666
        %v6668 = vpop.xlane.xlu0 %6667
        %v6669 = vsel %vm6614, %v6600, -inf
        %6670 = vmax.xlane.f32.xlu0 %v6669
        %v6671 = vpop.xlane.xlu0 %6670
        %v6672 = vsel %vm6614, %v6601, -inf
        %6673 = vmax.xlane.f32.xlu0 %v6672
        %v6674 = vpop.xlane.xlu0 %6673
        %v6675 = vsel %vm6614, %v6602, -inf
        %6676 = vmax.xlane.f32.xlu0 %v6675
        %v6677 = vpop.xlane.xlu0 %6676
        %v6678 = vsel %vm6614, %v6603, -inf
        %6679 = vmax.xlane.f32.xlu0 %v6678
        %v6680 = vpop.xlane.xlu0 %6679
        %v6681 = vsel %vm6614, %v6604, -inf
        %6682 = vmax.xlane.f32.xlu0 %v6681
        %v6683 = vpop.xlane.xlu0 %6682
        %v6684 = vsel %vm6614, %v6605, -inf
        %6685 = vmax.xlane.f32.xlu0 %v6684
        %v6686 = vpop.xlane.xlu0 %6685
        %v6687 = vsel %vm6614, %v6606, -inf
        %6688 = vmax.xlane.f32.xlu0 %v6687
        %v6689 = vpop.xlane.xlu0 %6688
        %v6690 = vsel %vm6614, %v6607, -inf
        %6691 = vmax.xlane.f32.xlu0 %v6690
        %v6692 = vpop.xlane.xlu0 %6691
        %v6693 = vsel %vm6614, %v6608, -inf
        %6694 = vmax.xlane.f32.xlu0 %v6693
        %v6695 = vpop.xlane.xlu0 %6694
        %v6696 = vsel %vm6614, %v6609, -inf
        %6697 = vmax.xlane.f32.xlu0 %v6696
        %v6698 = vpop.xlane.xlu0 %6697
        %v6699 = vsel %vm6614, %v6610, -inf
        %6700 = vmax.xlane.f32.xlu0 %v6699
        %v6701 = vpop.xlane.xlu0 %6700
        %v6702 = vsel %vm6614, %v6611, -inf
        %6703 = vmax.xlane.f32.xlu0 %v6702
        %v6704 = vpop.xlane.xlu0 %6703
        %v6705 = vsel %vm6614, %v6612, -inf
        %6706 = vmax.xlane.f32.xlu0 %v6705
        %v6707 = vpop.xlane.xlu0 %6706
        %v6708 = vsel %vm6614, %v6613, -inf
        %6709 = vmax.xlane.f32.xlu0 %v6708
        %v6710 = vpop.xlane.xlu0 %6709
        %v6711 = vsub.f32 %v6582, %v6617
        %v6712 = vsub.f32 %v6583, %v6620
        %v6713 = vsub.f32 %v6584, %v6623
        %v6714 = vsub.f32 %v6585, %v6626
        %v6715 = vsub.f32 %v6586, %v6629
        %v6716 = vsub.f32 %v6587, %v6632
        %v6717 = vsub.f32 %v6588, %v6635
        %v6718 = vsub.f32 %v6589, %v6638
        %v6719 = vsub.f32 %v6590, %v6641
        %v6720 = vsub.f32 %v6591, %v6644
        %v6721 = vsub.f32 %v6592, %v6647
        %v6722 = vsub.f32 %v6593, %v6650
        %v6723 = vsub.f32 %v6594, %v6653
        %v6724 = vsub.f32 %v6595, %v6656
        %v6725 = vsub.f32 %v6596, %v6659
        %v6726 = vsub.f32 %v6597, %v6662
        %v6727 = vsub.f32 %v6598, %v6665
        %v6728 = vsub.f32 %v6599, %v6668
        %v6729 = vsub.f32 %v6600, %v6671
        %v6730 = vsub.f32 %v6601, %v6674
        %v6731 = vsub.f32 %v6602, %v6677
        %v6732 = vsub.f32 %v6603, %v6680
        %v6733 = vsub.f32 %v6604, %v6683
        %v6734 = vsub.f32 %v6605, %v6686
        %v6735 = vsub.f32 %v6606, %v6689
        %v6736 = vsub.f32 %v6607, %v6692
        %v6737 = vsub.f32 %v6608, %v6695
        %v6738 = vsub.f32 %v6609, %v6698
        %v6739 = vsub.f32 %v6610, %v6701
        %v6740 = vsub.f32 %v6611, %v6704
        %v6741 = vsub.f32 %v6612, %v6707
        %v6742 = vsub.f32 %v6613, %v6710
        %v6743 = vmul.f32 %v6711, 1.442695
        %v6744 = vpow.pop %v6743
        %v6745 = vmul.f32 %v6712, 1.442695
        %v6746 = vpow.pop %v6745
        %v6747 = vmul.f32 %v6713, 1.442695
        %v6748 = vpow.pop %v6747
        %v6749 = vmul.f32 %v6714, 1.442695
        %v6750 = vpow.pop %v6749
        %v6751 = vmul.f32 %v6715, 1.442695
        %v6752 = vpow.pop %v6751
        %v6753 = vmul.f32 %v6716, 1.442695
        %v6754 = vpow.pop %v6753
        %v6755 = vmul.f32 %v6717, 1.442695
        %v6756 = vpow.pop %v6755
        %v6757 = vmul.f32 %v6718, 1.442695
        %v6758 = vpow.pop %v6757
        %v6759 = vmul.f32 %v6719, 1.442695
        %v6760 = vpow.pop %v6759
        %v6761 = vmul.f32 %v6720, 1.442695
        %v6762 = vpow.pop %v6761
        %v6763 = vmul.f32 %v6721, 1.442695
        %v6764 = vpow.pop %v6763
        %v6765 = vmul.f32 %v6722, 1.442695
        %v6766 = vpow.pop %v6765
        %v6767 = vmul.f32 %v6723, 1.442695
        %v6768 = vpow.pop %v6767
        %v6769 = vmul.f32 %v6724, 1.442695
        %v6770 = vpow.pop %v6769
        %v6771 = vmul.f32 %v6725, 1.442695
        %v6772 = vpow.pop %v6771
        %v6773 = vmul.f32 %v6726, 1.442695
        %v6774 = vpow.pop %v6773
        %v6775 = vmul.f32 %v6727, 1.442695
        %v6776 = vpow.pop %v6775
        %v6777 = vmul.f32 %v6728, 1.442695
        %v6778 = vpow.pop %v6777
        %v6779 = vmul.f32 %v6729, 1.442695
        %v6780 = vpow.pop %v6779
        %v6781 = vmul.f32 %v6730, 1.442695
        %v6782 = vpow.pop %v6781
        %v6783 = vmul.f32 %v6731, 1.442695
        %v6784 = vpow.pop %v6783
        %v6785 = vmul.f32 %v6732, 1.442695
        %v6786 = vpow.pop %v6785
        %v6787 = vmul.f32 %v6733, 1.442695
        %v6788 = vpow.pop %v6787
        %v6789 = vmul.f32 %v6734, 1.442695
        %v6790 = vpow.pop %v6789
        %v6791 = vmul.f32 %v6735, 1.442695
        %v6792 = vpow.pop %v6791
        %v6793 = vmul.f32 %v6736, 1.442695
        %v6794 = vpow.pop %v6793
        %v6795 = vmul.f32 %v6737, 1.442695
        %v6796 = vpow.pop %v6795
        %v6797 = vmul.f32 %v6738, 1.442695
        %v6798 = vpow.pop %v6797
        %v6799 = vmul.f32 %v6739, 1.442695
        %v6800 = vpow.pop %v6799
        %v6801 = vmul.f32 %v6740, 1.442695
        %v6802 = vpow.pop %v6801
        %v6803 = vmul.f32 %v6741, 1.442695
        %v6804 = vpow.pop %v6803
        %v6805 = vmul.f32 %v6742, 1.442695
        %v6806 = vpow.pop %v6805
        %v6807 = vsel %vm6614, %v6744, 0.0
        %6808 = vadd.xlane.f32.xlu0 %v6807
        %v6809 = vpop.xlane.xlu0 %6808
        %v6810 = vsel %vm6614, %v6746, 0.0
        %6811 = vadd.xlane.f32.xlu0 %v6810
        %v6812 = vpop.xlane.xlu0 %6811
        %v6813 = vsel %vm6614, %v6748, 0.0
        %6814 = vadd.xlane.f32.xlu0 %v6813
        %v6815 = vpop.xlane.xlu0 %6814
        %v6816 = vsel %vm6614, %v6750, 0.0
        %6817 = vadd.xlane.f32.xlu0 %v6816
        %v6818 = vpop.xlane.xlu0 %6817
        %v6819 = vsel %vm6614, %v6752, 0.0
        %6820 = vadd.xlane.f32.xlu0 %v6819
        %v6821 = vpop.xlane.xlu0 %6820
        %v6822 = vsel %vm6614, %v6754, 0.0
        %6823 = vadd.xlane.f32.xlu0 %v6822
        %v6824 = vpop.xlane.xlu0 %6823
        %v6825 = vsel %vm6614, %v6756, 0.0
        %6826 = vadd.xlane.f32.xlu0 %v6825
        %v6827 = vpop.xlane.xlu0 %6826
        %v6828 = vsel %vm6614, %v6758, 0.0
        %6829 = vadd.xlane.f32.xlu0 %v6828
        %v6830 = vpop.xlane.xlu0 %6829
        %v6831 = vsel %vm6614, %v6760, 0.0
        %6832 = vadd.xlane.f32.xlu0 %v6831
        %v6833 = vpop.xlane.xlu0 %6832
        %v6834 = vsel %vm6614, %v6762, 0.0
        %6835 = vadd.xlane.f32.xlu0 %v6834
        %v6836 = vpop.xlane.xlu0 %6835
        %v6837 = vsel %vm6614, %v6764, 0.0
        %6838 = vadd.xlane.f32.xlu0 %v6837
        %v6839 = vpop.xlane.xlu0 %6838
        %v6840 = vsel %vm6614, %v6766, 0.0
        %6841 = vadd.xlane.f32.xlu0 %v6840
        %v6842 = vpop.xlane.xlu0 %6841
        %v6843 = vsel %vm6614, %v6768, 0.0
        %6844 = vadd.xlane.f32.xlu0 %v6843
        %v6845 = vpop.xlane.xlu0 %6844
        %v6846 = vsel %vm6614, %v6770, 0.0
        %6847 = vadd.xlane.f32.xlu0 %v6846
        %v6848 = vpop.xlane.xlu0 %6847
        %v6849 = vsel %vm6614, %v6772, 0.0
        %6850 = vadd.xlane.f32.xlu0 %v6849
        %v6851 = vpop.xlane.xlu0 %6850
        %v6852 = vsel %vm6614, %v6774, 0.0
        %6853 = vadd.xlane.f32.xlu0 %v6852
        %v6854 = vpop.xlane.xlu0 %6853
        %v6855 = vsel %vm6614, %v6776, 0.0
        %6856 = vadd.xlane.f32.xlu0 %v6855
        %v6857 = vpop.xlane.xlu0 %6856
        %v6858 = vsel %vm6614, %v6778, 0.0
        %6859 = vadd.xlane.f32.xlu0 %v6858
        %v6860 = vpop.xlane.xlu0 %6859
        %v6861 = vsel %vm6614, %v6780, 0.0
        %6862 = vadd.xlane.f32.xlu0 %v6861
        %v6863 = vpop.xlane.xlu0 %6862
        %v6864 = vsel %vm6614, %v6782, 0.0
        %6865 = vadd.xlane.f32.xlu0 %v6864
        %v6866 = vpop.xlane.xlu0 %6865
        %v6867 = vsel %vm6614, %v6784, 0.0
        %6868 = vadd.xlane.f32.xlu0 %v6867
        %v6869 = vpop.xlane.xlu0 %6868
        %v6870 = vsel %vm6614, %v6786, 0.0
        %6871 = vadd.xlane.f32.xlu0 %v6870
        %v6872 = vpop.xlane.xlu0 %6871
        %v6873 = vsel %vm6614, %v6788, 0.0
        %6874 = vadd.xlane.f32.xlu0 %v6873
        %v6875 = vpop.xlane.xlu0 %6874
        %v6876 = vsel %vm6614, %v6790, 0.0
        %6877 = vadd.xlane.f32.xlu0 %v6876
        %v6878 = vpop.xlane.xlu0 %6877
        %v6879 = vsel %vm6614, %v6792, 0.0
        %6880 = vadd.xlane.f32.xlu0 %v6879
        %v6881 = vpop.xlane.xlu0 %6880
        %v6882 = vsel %vm6614, %v6794, 0.0
        %6883 = vadd.xlane.f32.xlu0 %v6882
        %v6884 = vpop.xlane.xlu0 %6883
        %v6885 = vsel %vm6614, %v6796, 0.0
        %6886 = vadd.xlane.f32.xlu0 %v6885
        %v6887 = vpop.xlane.xlu0 %6886
        %v6888 = vsel %vm6614, %v6798, 0.0
        %6889 = vadd.xlane.f32.xlu0 %v6888
        %v6890 = vpop.xlane.xlu0 %6889
        %v6891 = vsel %vm6614, %v6800, 0.0
        %6892 = vadd.xlane.f32.xlu0 %v6891
        %v6893 = vpop.xlane.xlu0 %6892
        %v6894 = vsel %vm6614, %v6802, 0.0
        %6895 = vadd.xlane.f32.xlu0 %v6894
        %v6896 = vpop.xlane.xlu0 %6895
        %v6897 = vsel %vm6614, %v6804, 0.0
        %6898 = vadd.xlane.f32.xlu0 %v6897
        %v6899 = vpop.xlane.xlu0 %6898
        %v6900 = vsel %vm6614, %v6806, 0.0
        %6901 = vadd.xlane.f32.xlu0 %v6900
        %v6902 = vpop.xlane.xlu0 %6901
        %v6903 = vrcp.pop %v6809
        %v6904 = vrcp.pop %v6812
        %v6905 = vrcp.pop %v6815
        %v6906 = vrcp.pop %v6818
        %v6907 = vrcp.pop %v6821
        %v6908 = vrcp.pop %v6824
        %v6909 = vrcp.pop %v6827
        %v6910 = vrcp.pop %v6830
        %v6911 = vrcp.pop %v6833
        %v6912 = vrcp.pop %v6836
        %v6913 = vrcp.pop %v6839
        %v6914 = vrcp.pop %v6842
        %v6915 = vrcp.pop %v6845
        %v6916 = vrcp.pop %v6848
        %v6917 = vrcp.pop %v6851
        %v6918 = vrcp.pop %v6854
        %v6919 = vrcp.pop %v6857
        %v6920 = vrcp.pop %v6860
        %v6921 = vrcp.pop %v6863
        %v6922 = vrcp.pop %v6866
        %v6923 = vrcp.pop %v6869
        %v6924 = vrcp.pop %v6872
        %v6925 = vrcp.pop %v6875
        %v6926 = vrcp.pop %v6878
        %v6927 = vrcp.pop %v6881
        %v6928 = vrcp.pop %v6884
        %v6929 = vrcp.pop %v6887
        %v6930 = vrcp.pop %v6890
        %v6931 = vrcp.pop %v6893
        %v6932 = vrcp.pop %v6896
        %v6933 = vrcp.pop %v6899
        %v6934 = vrcp.pop %v6902
        %v6935 = vmul.f32 %v6744, %v6903
        %v6936 = vmul.f32 %v6746, %v6904
        %v6937 = vmul.f32 %v6748, %v6905
        %v6938 = vmul.f32 %v6750, %v6906
        %v6939 = vmul.f32 %v6752, %v6907
        %v6940 = vmul.f32 %v6754, %v6908
        %v6941 = vmul.f32 %v6756, %v6909
        %v6942 = vmul.f32 %v6758, %v6910
        %v6943 = vmul.f32 %v6760, %v6911
        %v6944 = vmul.f32 %v6762, %v6912
        %v6945 = vmul.f32 %v6764, %v6913
        %v6946 = vmul.f32 %v6766, %v6914
        %v6947 = vmul.f32 %v6768, %v6915
        %v6948 = vmul.f32 %v6770, %v6916
        %v6949 = vmul.f32 %v6772, %v6917
        %v6950 = vmul.f32 %v6774, %v6918
        %v6951 = vmul.f32 %v6776, %v6919
        %v6952 = vmul.f32 %v6778, %v6920
        %v6953 = vmul.f32 %v6780, %v6921
        %v6954 = vmul.f32 %v6782, %v6922
        %v6955 = vmul.f32 %v6784, %v6923
        %v6956 = vmul.f32 %v6786, %v6924
        %v6957 = vmul.f32 %v6788, %v6925
        %v6958 = vmul.f32 %v6790, %v6926
        %v6959 = vmul.f32 %v6792, %v6927
        %v6960 = vmul.f32 %v6794, %v6928
        %v6961 = vmul.f32 %v6796, %v6929
        %v6962 = vmul.f32 %v6798, %v6930
        %v6963 = vmul.f32 %v6800, %v6931
        %v6964 = vmul.f32 %v6802, %v6932
        %v6965 = vmul.f32 %v6804, %v6933
        %v6966 = vmul.f32 %v6806, %v6934
        %v6968 = vsel %vm6614, %v6935, 0
        %v6971 = vsel %vm6614, %v6936, 0
        %6973 = vmatprep.subr.mxu0 0.0
        %6974 = vmatpush1.msra.mxu0 0.0
        %6975 = vmatprep.subr.mxu0 0.0
        %6976 = vmatpush1.msra.mxu0 0.0
        %6977 = vmatprep.subr.mxu0 0.0
        %6978 = vmatpush1.msra.mxu0 0.0
        %6979 = vmatprep.subr.mxu0 0.0
        %6980 = vmatpush1.msra.mxu0 0.0
        %6981 = vmatprep.subr.mxu0 0.0
        %6982 = vmatpush1.msra.mxu0 0.0
        %6983 = vmatprep.subr.mxu0 0.0
        %6984 = vmatpush1.msra.mxu0 0.0
        %6985 = vmatprep.subr.mxu0 0.0
        %6986 = vmatpush1.msra.mxu0 0.0
        %6987 = vmatprep.subr.mxu0 0.0
        %6988 = vmatpush1.msra.mxu0 0.0
        %6989 = vmatprep.subr.mxu0 0.0
        %6990 = vmatpush1.msra.mxu0 0.0
        %6991 = vmatprep.subr.mxu0 0.0
        %6992 = vmatpush1.msra.mxu0 0.0
        %6993 = vmatprep.subr.mxu0 0.0
        %6994 = vmatpush1.msra.mxu0 0.0
        %6995 = vmatprep.subr.mxu0 0.0
        %6996 = vmatpush1.msra.mxu0 0.0
        %6997 = vmatprep.subr.mxu0 0.0
        %6998 = vmatpush1.msra.mxu0 0.0
        %6999 = vmatprep.subr.mxu0 0.0
        %7000 = vmatpush1.msra.mxu0 0.0
        %7001 = vmatprep.subr.mxu0 0.0
        %7002 = vmatpush1.msra.mxu0 %v853
        %7003 = vmatprep.subr.mxu0 0.0
        %7004 = vmatpush1.msra.mxu0 %v848
        %7005 = vmatprep.subr.mxu0 0.0
        %7006 = vmatpush2.msra.mxu0 0.0
        %7007 = vmatprep.subr.mxu0 0.0
        %7008 = vmatpush2.msra.mxu0 0.0
        %7009 = vmatprep.subr.mxu0 0.0
        %7010 = vmatpush2.msra.mxu0 0.0
        %7011 = vmatprep.subr.mxu0 0.0
        %7012 = vmatpush2.msra.mxu0 0.0
        %7013 = vmatprep.subr.mxu0 0.0
        %7014 = vmatpush2.msra.mxu0 0.0
        %7015 = vmatprep.subr.mxu0 0.0
        %7016 = vmatpush2.msra.mxu0 0.0
        %7017 = vmatprep.subr.mxu0 0.0
        %7018 = vmatpush2.msra.mxu0 0.0
        %7019 = vmatprep.subr.mxu0 0.0
        %7020 = vmatpush2.msra.mxu0 0.0
        %7021 = vmatprep.subr.mxu0 0.0
        %7022 = vmatpush2.msra.mxu0 0.0
        %7023 = vmatprep.subr.mxu0 0.0
        %7024 = vmatpush2.msra.mxu0 0.0
        %7025 = vmatprep.subr.mxu0 0.0
        %7026 = vmatpush2.msra.mxu0 0.0
        %7027 = vmatprep.subr.mxu0 0.0
        %7028 = vmatpush2.msra.mxu0 0.0
        %7029 = vmatprep.subr.mxu0 0.0
        %7030 = vmatpush2.msra.mxu0 0.0
        %7031 = vmatprep.subr.mxu0 0.0
        %7032 = vmatpush2.msra.mxu0 0.0
        %7033 = vmatprep.subr.mxu0 0.0
        %7034 = vmatpush2.msra.mxu0 0.0
        %7035 = vmatprep.subr.mxu0 0.0
        %7036 = vmatpush2.msra.mxu0 0.0
        %7037 = vmatprep.mubr.f32.mxu0 0.0
        %7038 = vmatmul.mubr.f32.gmra.mxu0 %v6968
        %v7039 = vpop.f32.mrf.mxu0
        %v7040 = vadd.f32 0.0, %v7039
        %v7041 = vpop.f32.mrf.mxu0
        %7042 = vmatprep.mubr.f32.mxu0 0.0
        %7043 = vmatmul.mubr.f32.gmra.mxu0 %v6971
        %v7044 = vpop.f32.mrf.mxu0
        %v7045 = vadd.f32 0.0, %v7044
        %v7046 = vpop.f32.mrf.mxu0
        %7047 = vdwg.mxu0
        %v7049 = vsel %vm6614, %v6937, 0
        %v7052 = vsel %vm6614, %v6938, 0
        %7054 = vmatprep.subr.mxu0 0.0
        %7055 = vmatpush1.msra.mxu0 0.0
        %7056 = vmatprep.subr.mxu0 0.0
        %7057 = vmatpush1.msra.mxu0 0.0
        %7058 = vmatprep.subr.mxu0 0.0
        %7059 = vmatpush1.msra.mxu0 0.0
        %7060 = vmatprep.subr.mxu0 0.0
        %7061 = vmatpush1.msra.mxu0 0.0
        %7062 = vmatprep.subr.mxu0 0.0
        %7063 = vmatpush1.msra.mxu0 0.0
        %7064 = vmatprep.subr.mxu0 0.0
        %7065 = vmatpush1.msra.mxu0 0.0
        %7066 = vmatprep.subr.mxu0 0.0
        %7067 = vmatpush1.msra.mxu0 0.0
        %7068 = vmatprep.subr.mxu0 0.0
        %7069 = vmatpush1.msra.mxu0 0.0
        %7070 = vmatprep.subr.mxu0 0.0
        %7071 = vmatpush1.msra.mxu0 0.0
        %7072 = vmatprep.subr.mxu0 0.0
        %7073 = vmatpush1.msra.mxu0 0.0
        %7074 = vmatprep.subr.mxu0 0.0
        %7075 = vmatpush1.msra.mxu0 0.0
        %7076 = vmatprep.subr.mxu0 0.0
        %7077 = vmatpush1.msra.mxu0 0.0
        %7078 = vmatprep.subr.mxu0 0.0
        %7079 = vmatpush1.msra.mxu0 0.0
        %7080 = vmatprep.subr.mxu0 0.0
        %7081 = vmatpush1.msra.mxu0 0.0
        %7082 = vmatprep.subr.mxu0 0.0
        %7083 = vmatpush1.msra.mxu0 %v1382
        %7084 = vmatprep.subr.mxu0 0.0
        %7085 = vmatpush1.msra.mxu0 %v1380
        %7086 = vmatprep.subr.mxu0 0.0
        %7087 = vmatpush2.msra.mxu0 0.0
        %7088 = vmatprep.subr.mxu0 0.0
        %7089 = vmatpush2.msra.mxu0 0.0
        %7090 = vmatprep.subr.mxu0 0.0
        %7091 = vmatpush2.msra.mxu0 0.0
        %7092 = vmatprep.subr.mxu0 0.0
        %7093 = vmatpush2.msra.mxu0 0.0
        %7094 = vmatprep.subr.mxu0 0.0
        %7095 = vmatpush2.msra.mxu0 0.0
        %7096 = vmatprep.subr.mxu0 0.0
        %7097 = vmatpush2.msra.mxu0 0.0
        %7098 = vmatprep.subr.mxu0 0.0
        %7099 = vmatpush2.msra.mxu0 0.0
        %7100 = vmatprep.subr.mxu0 0.0
        %7101 = vmatpush2.msra.mxu0 0.0
        %7102 = vmatprep.subr.mxu0 0.0
        %7103 = vmatpush2.msra.mxu0 0.0
        %7104 = vmatprep.subr.mxu0 0.0
        %7105 = vmatpush2.msra.mxu0 0.0
        %7106 = vmatprep.subr.mxu0 0.0
        %7107 = vmatpush2.msra.mxu0 0.0
        %7108 = vmatprep.subr.mxu0 0.0
        %7109 = vmatpush2.msra.mxu0 0.0
        %7110 = vmatprep.subr.mxu0 0.0
        %7111 = vmatpush2.msra.mxu0 0.0
        %7112 = vmatprep.subr.mxu0 0.0
        %7113 = vmatpush2.msra.mxu0 0.0
        %7114 = vmatprep.subr.mxu0 0.0
        %7115 = vmatpush2.msra.mxu0 0.0
        %7116 = vmatprep.subr.mxu0 0.0
        %7117 = vmatpush2.msra.mxu0 0.0
        %7118 = vmatprep.mubr.f32.mxu0 0.0
        %7119 = vmatmul.mubr.f32.gmra.mxu0 %v7049
        %v7120 = vpop.f32.mrf.mxu0
        %v7121 = vadd.f32 0.0, %v7120
        %v7122 = vpop.f32.mrf.mxu0
        %7123 = vmatprep.mubr.f32.mxu0 0.0
        %7124 = vmatmul.mubr.f32.gmra.mxu0 %v7052
        %v7125 = vpop.f32.mrf.mxu0
        %v7126 = vadd.f32 0.0, %v7125
        %v7127 = vpop.f32.mrf.mxu0
        %7128 = vdwg.mxu0
        %v7130 = vsel %vm6614, %v6939, 0
        %v7133 = vsel %vm6614, %v6940, 0
        %7135 = vmatprep.subr.mxu0 0.0
        %7136 = vmatpush1.msra.mxu0 0.0
        %7137 = vmatprep.subr.mxu0 0.0
        %7138 = vmatpush1.msra.mxu0 0.0
        %7139 = vmatprep.subr.mxu0 0.0
        %7140 = vmatpush1.msra.mxu0 0.0
        %7141 = vmatprep.subr.mxu0 0.0
        %7142 = vmatpush1.msra.mxu0 0.0
        %7143 = vmatprep.subr.mxu0 0.0
        %7144 = vmatpush1.msra.mxu0 0.0
        %7145 = vmatprep.subr.mxu0 0.0
        %7146 = vmatpush1.msra.mxu0 0.0
        %7147 = vmatprep.subr.mxu0 0.0
        %7148 = vmatpush1.msra.mxu0 0.0
        %7149 = vmatprep.subr.mxu0 0.0
        %7150 = vmatpush1.msra.mxu0 0.0
        %7151 = vmatprep.subr.mxu0 0.0
        %7152 = vmatpush1.msra.mxu0 0.0
        %7153 = vmatprep.subr.mxu0 0.0
        %7154 = vmatpush1.msra.mxu0 0.0
        %7155 = vmatprep.subr.mxu0 0.0
        %7156 = vmatpush1.msra.mxu0 0.0
        %7157 = vmatprep.subr.mxu0 0.0
        %7158 = vmatpush1.msra.mxu0 0.0
        %7159 = vmatprep.subr.mxu0 0.0
        %7160 = vmatpush1.msra.mxu0 0.0
        %7161 = vmatprep.subr.mxu0 0.0
        %7162 = vmatpush1.msra.mxu0 0.0
        %7163 = vmatprep.subr.mxu0 0.0
        %7164 = vmatpush1.msra.mxu0 %v1388
        %7165 = vmatprep.subr.mxu0 0.0
        %7166 = vmatpush1.msra.mxu0 %v1386
        %7167 = vmatprep.subr.mxu0 0.0
        %7168 = vmatpush2.msra.mxu0 0.0
        %7169 = vmatprep.subr.mxu0 0.0
        %7170 = vmatpush2.msra.mxu0 0.0
        %7171 = vmatprep.subr.mxu0 0.0
        %7172 = vmatpush2.msra.mxu0 0.0
        %7173 = vmatprep.subr.mxu0 0.0
        %7174 = vmatpush2.msra.mxu0 0.0
        %7175 = vmatprep.subr.mxu0 0.0
        %7176 = vmatpush2.msra.mxu0 0.0
        %7177 = vmatprep.subr.mxu0 0.0
        %7178 = vmatpush2.msra.mxu0 0.0
        %7179 = vmatprep.subr.mxu0 0.0
        %7180 = vmatpush2.msra.mxu0 0.0
        %7181 = vmatprep.subr.mxu0 0.0
        %7182 = vmatpush2.msra.mxu0 0.0
        %7183 = vmatprep.subr.mxu0 0.0
        %7184 = vmatpush2.msra.mxu0 0.0
        %7185 = vmatprep.subr.mxu0 0.0
        %7186 = vmatpush2.msra.mxu0 0.0
        %7187 = vmatprep.subr.mxu0 0.0
        %7188 = vmatpush2.msra.mxu0 0.0
        %7189 = vmatprep.subr.mxu0 0.0
        %7190 = vmatpush2.msra.mxu0 0.0
        %7191 = vmatprep.subr.mxu0 0.0
        %7192 = vmatpush2.msra.mxu0 0.0
        %7193 = vmatprep.subr.mxu0 0.0
        %7194 = vmatpush2.msra.mxu0 0.0
        %7195 = vmatprep.subr.mxu0 0.0
        %7196 = vmatpush2.msra.mxu0 0.0
        %7197 = vmatprep.subr.mxu0 0.0
        %7198 = vmatpush2.msra.mxu0 0.0
        %7199 = vmatprep.mubr.f32.mxu0 0.0
        %7200 = vmatmul.mubr.f32.gmra.mxu0 %v7130
        %v7201 = vpop.f32.mrf.mxu0
        %v7202 = vadd.f32 0.0, %v7201
        %v7203 = vpop.f32.mrf.mxu0
        %7204 = vmatprep.mubr.f32.mxu0 0.0
        %7205 = vmatmul.mubr.f32.gmra.mxu0 %v7133
        %v7206 = vpop.f32.mrf.mxu0
        %v7207 = vadd.f32 0.0, %v7206
        %v7208 = vpop.f32.mrf.mxu0
        %7209 = vdwg.mxu0
        %v7211 = vsel %vm6614, %v6941, 0
        %v7214 = vsel %vm6614, %v6942, 0
        %7216 = vmatprep.subr.mxu0 0.0
        %7217 = vmatpush1.msra.mxu0 0.0
        %7218 = vmatprep.subr.mxu0 0.0
        %7219 = vmatpush1.msra.mxu0 0.0
        %7220 = vmatprep.subr.mxu0 0.0
        %7221 = vmatpush1.msra.mxu0 0.0
        %7222 = vmatprep.subr.mxu0 0.0
        %7223 = vmatpush1.msra.mxu0 0.0
        %7224 = vmatprep.subr.mxu0 0.0
        %7225 = vmatpush1.msra.mxu0 0.0
        %7226 = vmatprep.subr.mxu0 0.0
        %7227 = vmatpush1.msra.mxu0 0.0
        %7228 = vmatprep.subr.mxu0 0.0
        %7229 = vmatpush1.msra.mxu0 0.0
        %7230 = vmatprep.subr.mxu0 0.0
        %7231 = vmatpush1.msra.mxu0 0.0
        %7232 = vmatprep.subr.mxu0 0.0
        %7233 = vmatpush1.msra.mxu0 0.0
        %7234 = vmatprep.subr.mxu0 0.0
        %7235 = vmatpush1.msra.mxu0 0.0
        %7236 = vmatprep.subr.mxu0 0.0
        %7237 = vmatpush1.msra.mxu0 0.0
        %7238 = vmatprep.subr.mxu0 0.0
        %7239 = vmatpush1.msra.mxu0 0.0
        %7240 = vmatprep.subr.mxu0 0.0
        %7241 = vmatpush1.msra.mxu0 0.0
        %7242 = vmatprep.subr.mxu0 0.0
        %7243 = vmatpush1.msra.mxu0 0.0
        %7244 = vmatprep.subr.mxu0 0.0
        %7245 = vmatpush1.msra.mxu0 %v1394
        %7246 = vmatprep.subr.mxu0 0.0
        %7247 = vmatpush1.msra.mxu0 %v1392
        %7248 = vmatprep.subr.mxu0 0.0
        %7249 = vmatpush2.msra.mxu0 0.0
        %7250 = vmatprep.subr.mxu0 0.0
        %7251 = vmatpush2.msra.mxu0 0.0
        %7252 = vmatprep.subr.mxu0 0.0
        %7253 = vmatpush2.msra.mxu0 0.0
        %7254 = vmatprep.subr.mxu0 0.0
        %7255 = vmatpush2.msra.mxu0 0.0
        %7256 = vmatprep.subr.mxu0 0.0
        %7257 = vmatpush2.msra.mxu0 0.0
        %7258 = vmatprep.subr.mxu0 0.0
        %7259 = vmatpush2.msra.mxu0 0.0
        %7260 = vmatprep.subr.mxu0 0.0
        %7261 = vmatpush2.msra.mxu0 0.0
        %7262 = vmatprep.subr.mxu0 0.0
        %7263 = vmatpush2.msra.mxu0 0.0
        %7264 = vmatprep.subr.mxu0 0.0
        %7265 = vmatpush2.msra.mxu0 0.0
        %7266 = vmatprep.subr.mxu0 0.0
        %7267 = vmatpush2.msra.mxu0 0.0
        %7268 = vmatprep.subr.mxu0 0.0
        %7269 = vmatpush2.msra.mxu0 0.0
        %7270 = vmatprep.subr.mxu0 0.0
        %7271 = vmatpush2.msra.mxu0 0.0
        %7272 = vmatprep.subr.mxu0 0.0
        %7273 = vmatpush2.msra.mxu0 0.0
        %7274 = vmatprep.subr.mxu0 0.0
        %7275 = vmatpush2.msra.mxu0 0.0
        %7276 = vmatprep.subr.mxu0 0.0
        %7277 = vmatpush2.msra.mxu0 0.0
        %7278 = vmatprep.subr.mxu0 0.0
        %7279 = vmatpush2.msra.mxu0 0.0
        %7280 = vmatprep.mubr.f32.mxu0 0.0
        %7281 = vmatmul.mubr.f32.gmra.mxu0 %v7211
        %v7282 = vpop.f32.mrf.mxu0
        %v7283 = vadd.f32 0.0, %v7282
        %v7284 = vpop.f32.mrf.mxu0
        %7285 = vmatprep.mubr.f32.mxu0 0.0
        %7286 = vmatmul.mubr.f32.gmra.mxu0 %v7214
        %v7287 = vpop.f32.mrf.mxu0
        %v7288 = vadd.f32 0.0, %v7287
        %v7289 = vpop.f32.mrf.mxu0
        %7290 = vdwg.mxu0
        %v7292 = vsel %vm6614, %v6943, 0
        %v7295 = vsel %vm6614, %v6944, 0
        %7297 = vmatprep.subr.mxu0 0.0
        %7298 = vmatpush1.msra.mxu0 0.0
        %7299 = vmatprep.subr.mxu0 0.0
        %7300 = vmatpush1.msra.mxu0 0.0
        %7301 = vmatprep.subr.mxu0 0.0
        %7302 = vmatpush1.msra.mxu0 0.0
        %7303 = vmatprep.subr.mxu0 0.0
        %7304 = vmatpush1.msra.mxu0 0.0
        %7305 = vmatprep.subr.mxu0 0.0
        %7306 = vmatpush1.msra.mxu0 0.0
        %7307 = vmatprep.subr.mxu0 0.0
        %7308 = vmatpush1.msra.mxu0 0.0
        %7309 = vmatprep.subr.mxu0 0.0
        %7310 = vmatpush1.msra.mxu0 0.0
        %7311 = vmatprep.subr.mxu0 0.0
        %7312 = vmatpush1.msra.mxu0 0.0
        %7313 = vmatprep.subr.mxu0 0.0
        %7314 = vmatpush1.msra.mxu0 0.0
        %7315 = vmatprep.subr.mxu0 0.0
        %7316 = vmatpush1.msra.mxu0 0.0
        %7317 = vmatprep.subr.mxu0 0.0
        %7318 = vmatpush1.msra.mxu0 0.0
        %7319 = vmatprep.subr.mxu0 0.0
        %7320 = vmatpush1.msra.mxu0 0.0
        %7321 = vmatprep.subr.mxu0 0.0
        %7322 = vmatpush1.msra.mxu0 0.0
        %7323 = vmatprep.subr.mxu0 0.0
        %7324 = vmatpush1.msra.mxu0 0.0
        %7325 = vmatprep.subr.mxu0 0.0
        %7326 = vmatpush1.msra.mxu0 %v1400
        %7327 = vmatprep.subr.mxu0 0.0
        %7328 = vmatpush1.msra.mxu0 %v1398
        %7329 = vmatprep.subr.mxu0 0.0
        %7330 = vmatpush2.msra.mxu0 0.0
        %7331 = vmatprep.subr.mxu0 0.0
        %7332 = vmatpush2.msra.mxu0 0.0
        %7333 = vmatprep.subr.mxu0 0.0
        %7334 = vmatpush2.msra.mxu0 0.0
        %7335 = vmatprep.subr.mxu0 0.0
        %7336 = vmatpush2.msra.mxu0 0.0
        %7337 = vmatprep.subr.mxu0 0.0
        %7338 = vmatpush2.msra.mxu0 0.0
        %7339 = vmatprep.subr.mxu0 0.0
        %7340 = vmatpush2.msra.mxu0 0.0
        %7341 = vmatprep.subr.mxu0 0.0
        %7342 = vmatpush2.msra.mxu0 0.0
        %7343 = vmatprep.subr.mxu0 0.0
        %7344 = vmatpush2.msra.mxu0 0.0
        %7345 = vmatprep.subr.mxu0 0.0
        %7346 = vmatpush2.msra.mxu0 0.0
        %7347 = vmatprep.subr.mxu0 0.0
        %7348 = vmatpush2.msra.mxu0 0.0
        %7349 = vmatprep.subr.mxu0 0.0
        %7350 = vmatpush2.msra.mxu0 0.0
        %7351 = vmatprep.subr.mxu0 0.0
        %7352 = vmatpush2.msra.mxu0 0.0
        %7353 = vmatprep.subr.mxu0 0.0
        %7354 = vmatpush2.msra.mxu0 0.0
        %7355 = vmatprep.subr.mxu0 0.0
        %7356 = vmatpush2.msra.mxu0 0.0
        %7357 = vmatprep.subr.mxu0 0.0
        %7358 = vmatpush2.msra.mxu0 0.0
        %7359 = vmatprep.subr.mxu0 0.0
        %7360 = vmatpush2.msra.mxu0 0.0
        %7361 = vmatprep.mubr.f32.mxu0 0.0
        %7362 = vmatmul.mubr.f32.gmra.mxu0 %v7292
        %v7363 = vpop.f32.mrf.mxu0
        %v7364 = vadd.f32 0.0, %v7363
        %v7365 = vpop.f32.mrf.mxu0
        %7366 = vmatprep.mubr.f32.mxu0 0.0
        %7367 = vmatmul.mubr.f32.gmra.mxu0 %v7295
        %v7368 = vpop.f32.mrf.mxu0
        %v7369 = vadd.f32 0.0, %v7368
        %v7370 = vpop.f32.mrf.mxu0
        %7371 = vdwg.mxu0
        %v7373 = vsel %vm6614, %v6945, 0
        %v7376 = vsel %vm6614, %v6946, 0
        %7378 = vmatprep.subr.mxu0 0.0
        %7379 = vmatpush1.msra.mxu0 0.0
        %7380 = vmatprep.subr.mxu0 0.0
        %7381 = vmatpush1.msra.mxu0 0.0
        %7382 = vmatprep.subr.mxu0 0.0
        %7383 = vmatpush1.msra.mxu0 0.0
        %7384 = vmatprep.subr.mxu0 0.0
        %7385 = vmatpush1.msra.mxu0 0.0
        %7386 = vmatprep.subr.mxu0 0.0
        %7387 = vmatpush1.msra.mxu0 0.0
        %7388 = vmatprep.subr.mxu0 0.0
        %7389 = vmatpush1.msra.mxu0 0.0
        %7390 = vmatprep.subr.mxu0 0.0
        %7391 = vmatpush1.msra.mxu0 0.0
        %7392 = vmatprep.subr.mxu0 0.0
        %7393 = vmatpush1.msra.mxu0 0.0
        %7394 = vmatprep.subr.mxu0 0.0
        %7395 = vmatpush1.msra.mxu0 0.0
        %7396 = vmatprep.subr.mxu0 0.0
        %7397 = vmatpush1.msra.mxu0 0.0
        %7398 = vmatprep.subr.mxu0 0.0
        %7399 = vmatpush1.msra.mxu0 0.0
        %7400 = vmatprep.subr.mxu0 0.0
        %7401 = vmatpush1.msra.mxu0 0.0
        %7402 = vmatprep.subr.mxu0 0.0
        %7403 = vmatpush1.msra.mxu0 0.0
        %7404 = vmatprep.subr.mxu0 0.0
        %7405 = vmatpush1.msra.mxu0 0.0
        %7406 = vmatprep.subr.mxu0 0.0
        %7407 = vmatpush1.msra.mxu0 %v1406
        %7408 = vmatprep.subr.mxu0 0.0
        %7409 = vmatpush1.msra.mxu0 %v1404
        %7410 = vmatprep.subr.mxu0 0.0
        %7411 = vmatpush2.msra.mxu0 0.0
        %7412 = vmatprep.subr.mxu0 0.0
        %7413 = vmatpush2.msra.mxu0 0.0
        %7414 = vmatprep.subr.mxu0 0.0
        %7415 = vmatpush2.msra.mxu0 0.0
        %7416 = vmatprep.subr.mxu0 0.0
        %7417 = vmatpush2.msra.mxu0 0.0
        %7418 = vmatprep.subr.mxu0 0.0
        %7419 = vmatpush2.msra.mxu0 0.0
        %7420 = vmatprep.subr.mxu0 0.0
        %7421 = vmatpush2.msra.mxu0 0.0
        %7422 = vmatprep.subr.mxu0 0.0
        %7423 = vmatpush2.msra.mxu0 0.0
        %7424 = vmatprep.subr.mxu0 0.0
        %7425 = vmatpush2.msra.mxu0 0.0
        %7426 = vmatprep.subr.mxu0 0.0
        %7427 = vmatpush2.msra.mxu0 0.0
        %7428 = vmatprep.subr.mxu0 0.0
        %7429 = vmatpush2.msra.mxu0 0.0
        %7430 = vmatprep.subr.mxu0 0.0
        %7431 = vmatpush2.msra.mxu0 0.0
        %7432 = vmatprep.subr.mxu0 0.0
        %7433 = vmatpush2.msra.mxu0 0.0
        %7434 = vmatprep.subr.mxu0 0.0
        %7435 = vmatpush2.msra.mxu0 0.0
        %7436 = vmatprep.subr.mxu0 0.0
        %7437 = vmatpush2.msra.mxu0 0.0
        %7438 = vmatprep.subr.mxu0 0.0
        %7439 = vmatpush2.msra.mxu0 0.0
        %7440 = vmatprep.subr.mxu0 0.0
        %7441 = vmatpush2.msra.mxu0 0.0
        %7442 = vmatprep.mubr.f32.mxu0 0.0
        %7443 = vmatmul.mubr.f32.gmra.mxu0 %v7373
        %v7444 = vpop.f32.mrf.mxu0
        %v7445 = vadd.f32 0.0, %v7444
        %v7446 = vpop.f32.mrf.mxu0
        %7447 = vmatprep.mubr.f32.mxu0 0.0
        %7448 = vmatmul.mubr.f32.gmra.mxu0 %v7376
        %v7449 = vpop.f32.mrf.mxu0
        %v7450 = vadd.f32 0.0, %v7449
        %v7451 = vpop.f32.mrf.mxu0
        %7452 = vdwg.mxu0
        %v7454 = vsel %vm6614, %v6947, 0
        %v7457 = vsel %vm6614, %v6948, 0
        %7459 = vmatprep.subr.mxu0 0.0
        %7460 = vmatpush1.msra.mxu0 0.0
        %7461 = vmatprep.subr.mxu0 0.0
        %7462 = vmatpush1.msra.mxu0 0.0
        %7463 = vmatprep.subr.mxu0 0.0
        %7464 = vmatpush1.msra.mxu0 0.0
        %7465 = vmatprep.subr.mxu0 0.0
        %7466 = vmatpush1.msra.mxu0 0.0
        %7467 = vmatprep.subr.mxu0 0.0
        %7468 = vmatpush1.msra.mxu0 0.0
        %7469 = vmatprep.subr.mxu0 0.0
        %7470 = vmatpush1.msra.mxu0 0.0
        %7471 = vmatprep.subr.mxu0 0.0
        %7472 = vmatpush1.msra.mxu0 0.0
        %7473 = vmatprep.subr.mxu0 0.0
        %7474 = vmatpush1.msra.mxu0 0.0
        %7475 = vmatprep.subr.mxu0 0.0
        %7476 = vmatpush1.msra.mxu0 0.0
        %7477 = vmatprep.subr.mxu0 0.0
        %7478 = vmatpush1.msra.mxu0 0.0
        %7479 = vmatprep.subr.mxu0 0.0
        %7480 = vmatpush1.msra.mxu0 0.0
        %7481 = vmatprep.subr.mxu0 0.0
        %7482 = vmatpush1.msra.mxu0 0.0
        %7483 = vmatprep.subr.mxu0 0.0
        %7484 = vmatpush1.msra.mxu0 0.0
        %7485 = vmatprep.subr.mxu0 0.0
        %7486 = vmatpush1.msra.mxu0 0.0
        %7487 = vmatprep.subr.mxu0 0.0
        %7488 = vmatpush1.msra.mxu0 %v1412
        %7489 = vmatprep.subr.mxu0 0.0
        %7490 = vmatpush1.msra.mxu0 %v1410
        %7491 = vmatprep.subr.mxu0 0.0
        %7492 = vmatpush2.msra.mxu0 0.0
        %7493 = vmatprep.subr.mxu0 0.0
        %7494 = vmatpush2.msra.mxu0 0.0
        %7495 = vmatprep.subr.mxu0 0.0
        %7496 = vmatpush2.msra.mxu0 0.0
        %7497 = vmatprep.subr.mxu0 0.0
        %7498 = vmatpush2.msra.mxu0 0.0
        %7499 = vmatprep.subr.mxu0 0.0
        %7500 = vmatpush2.msra.mxu0 0.0
        %7501 = vmatprep.subr.mxu0 0.0
        %7502 = vmatpush2.msra.mxu0 0.0
        %7503 = vmatprep.subr.mxu0 0.0
        %7504 = vmatpush2.msra.mxu0 0.0
        %7505 = vmatprep.subr.mxu0 0.0
        %7506 = vmatpush2.msra.mxu0 0.0
        %7507 = vmatprep.subr.mxu0 0.0
        %7508 = vmatpush2.msra.mxu0 0.0
        %7509 = vmatprep.subr.mxu0 0.0
        %7510 = vmatpush2.msra.mxu0 0.0
        %7511 = vmatprep.subr.mxu0 0.0
        %7512 = vmatpush2.msra.mxu0 0.0
        %7513 = vmatprep.subr.mxu0 0.0
        %7514 = vmatpush2.msra.mxu0 0.0
        %7515 = vmatprep.subr.mxu0 0.0
        %7516 = vmatpush2.msra.mxu0 0.0
        %7517 = vmatprep.subr.mxu0 0.0
        %7518 = vmatpush2.msra.mxu0 0.0
        %7519 = vmatprep.subr.mxu0 0.0
        %7520 = vmatpush2.msra.mxu0 0.0
        %7521 = vmatprep.subr.mxu0 0.0
        %7522 = vmatpush2.msra.mxu0 0.0
        %7523 = vmatprep.mubr.f32.mxu0 0.0
        %7524 = vmatmul.mubr.f32.gmra.mxu0 %v7454
        %v7525 = vpop.f32.mrf.mxu0
        %v7526 = vadd.f32 0.0, %v7525
        %v7527 = vpop.f32.mrf.mxu0
        %7528 = vmatprep.mubr.f32.mxu0 0.0
        %7529 = vmatmul.mubr.f32.gmra.mxu0 %v7457
        %v7530 = vpop.f32.mrf.mxu0
        %v7531 = vadd.f32 0.0, %v7530
        %v7532 = vpop.f32.mrf.mxu0
        %7533 = vdwg.mxu0
        %v7535 = vsel %vm6614, %v6949, 0
        %v7538 = vsel %vm6614, %v6950, 0
        %7540 = vmatprep.subr.mxu0 0.0
        %7541 = vmatpush1.msra.mxu0 0.0
        %7542 = vmatprep.subr.mxu0 0.0
        %7543 = vmatpush1.msra.mxu0 0.0
        %7544 = vmatprep.subr.mxu0 0.0
        %7545 = vmatpush1.msra.mxu0 0.0
        %7546 = vmatprep.subr.mxu0 0.0
        %7547 = vmatpush1.msra.mxu0 0.0
        %7548 = vmatprep.subr.mxu0 0.0
        %7549 = vmatpush1.msra.mxu0 0.0
        %7550 = vmatprep.subr.mxu0 0.0
        %7551 = vmatpush1.msra.mxu0 0.0
        %7552 = vmatprep.subr.mxu0 0.0
        %7553 = vmatpush1.msra.mxu0 0.0
        %7554 = vmatprep.subr.mxu0 0.0
        %7555 = vmatpush1.msra.mxu0 0.0
        %7556 = vmatprep.subr.mxu0 0.0
        %7557 = vmatpush1.msra.mxu0 0.0
        %7558 = vmatprep.subr.mxu0 0.0
        %7559 = vmatpush1.msra.mxu0 0.0
        %7560 = vmatprep.subr.mxu0 0.0
        %7561 = vmatpush1.msra.mxu0 0.0
        %7562 = vmatprep.subr.mxu0 0.0
        %7563 = vmatpush1.msra.mxu0 0.0
        %7564 = vmatprep.subr.mxu0 0.0
        %7565 = vmatpush1.msra.mxu0 0.0
        %7566 = vmatprep.subr.mxu0 0.0
        %7567 = vmatpush1.msra.mxu0 0.0
        %7568 = vmatprep.subr.mxu0 0.0
        %7569 = vmatpush1.msra.mxu0 %v1418
        %7570 = vmatprep.subr.mxu0 0.0
        %7571 = vmatpush1.msra.mxu0 %v1416
        %7572 = vmatprep.subr.mxu0 0.0
        %7573 = vmatpush2.msra.mxu0 0.0
        %7574 = vmatprep.subr.mxu0 0.0
        %7575 = vmatpush2.msra.mxu0 0.0
        %7576 = vmatprep.subr.mxu0 0.0
        %7577 = vmatpush2.msra.mxu0 0.0
        %7578 = vmatprep.subr.mxu0 0.0
        %7579 = vmatpush2.msra.mxu0 0.0
        %7580 = vmatprep.subr.mxu0 0.0
        %7581 = vmatpush2.msra.mxu0 0.0
        %7582 = vmatprep.subr.mxu0 0.0
        %7583 = vmatpush2.msra.mxu0 0.0
        %7584 = vmatprep.subr.mxu0 0.0
        %7585 = vmatpush2.msra.mxu0 0.0
        %7586 = vmatprep.subr.mxu0 0.0
        %7587 = vmatpush2.msra.mxu0 0.0
        %7588 = vmatprep.subr.mxu0 0.0
        %7589 = vmatpush2.msra.mxu0 0.0
        %7590 = vmatprep.subr.mxu0 0.0
        %7591 = vmatpush2.msra.mxu0 0.0
        %7592 = vmatprep.subr.mxu0 0.0
        %7593 = vmatpush2.msra.mxu0 0.0
        %7594 = vmatprep.subr.mxu0 0.0
        %7595 = vmatpush2.msra.mxu0 0.0
        %7596 = vmatprep.subr.mxu0 0.0
        %7597 = vmatpush2.msra.mxu0 0.0
        %7598 = vmatprep.subr.mxu0 0.0
        %7599 = vmatpush2.msra.mxu0 0.0
        %7600 = vmatprep.subr.mxu0 0.0
        %7601 = vmatpush2.msra.mxu0 0.0
        %7602 = vmatprep.subr.mxu0 0.0
        %7603 = vmatpush2.msra.mxu0 0.0
        %7604 = vmatprep.mubr.f32.mxu0 0.0
        %7605 = vmatmul.mubr.f32.gmra.mxu0 %v7535
        %v7606 = vpop.f32.mrf.mxu0
        %v7607 = vadd.f32 0.0, %v7606
        %v7608 = vpop.f32.mrf.mxu0
        %7609 = vmatprep.mubr.f32.mxu0 0.0
        %7610 = vmatmul.mubr.f32.gmra.mxu0 %v7538
        %v7611 = vpop.f32.mrf.mxu0
        %v7612 = vadd.f32 0.0, %v7611
        %v7613 = vpop.f32.mrf.mxu0
        %7614 = vdwg.mxu0
        %v7616 = vsel %vm6614, %v6951, 0
        %v7619 = vsel %vm6614, %v6952, 0
        %7621 = vmatprep.subr.mxu0 0.0
        %7622 = vmatpush1.msra.mxu0 0.0
        %7623 = vmatprep.subr.mxu0 0.0
        %7624 = vmatpush1.msra.mxu0 0.0
        %7625 = vmatprep.subr.mxu0 0.0
        %7626 = vmatpush1.msra.mxu0 0.0
        %7627 = vmatprep.subr.mxu0 0.0
        %7628 = vmatpush1.msra.mxu0 0.0
        %7629 = vmatprep.subr.mxu0 0.0
        %7630 = vmatpush1.msra.mxu0 0.0
        %7631 = vmatprep.subr.mxu0 0.0
        %7632 = vmatpush1.msra.mxu0 0.0
        %7633 = vmatprep.subr.mxu0 0.0
        %7634 = vmatpush1.msra.mxu0 0.0
        %7635 = vmatprep.subr.mxu0 0.0
        %7636 = vmatpush1.msra.mxu0 0.0
        %7637 = vmatprep.subr.mxu0 0.0
        %7638 = vmatpush1.msra.mxu0 0.0
        %7639 = vmatprep.subr.mxu0 0.0
        %7640 = vmatpush1.msra.mxu0 0.0
        %7641 = vmatprep.subr.mxu0 0.0
        %7642 = vmatpush1.msra.mxu0 0.0
        %7643 = vmatprep.subr.mxu0 0.0
        %7644 = vmatpush1.msra.mxu0 0.0
        %7645 = vmatprep.subr.mxu0 0.0
        %7646 = vmatpush1.msra.mxu0 0.0
        %7647 = vmatprep.subr.mxu0 0.0
        %7648 = vmatpush1.msra.mxu0 0.0
        %7649 = vmatprep.subr.mxu0 0.0
        %7650 = vmatpush1.msra.mxu0 %v1424
        %7651 = vmatprep.subr.mxu0 0.0
        %7652 = vmatpush1.msra.mxu0 %v1422
        %7653 = vmatprep.subr.mxu0 0.0
        %7654 = vmatpush2.msra.mxu0 0.0
        %7655 = vmatprep.subr.mxu0 0.0
        %7656 = vmatpush2.msra.mxu0 0.0
        %7657 = vmatprep.subr.mxu0 0.0
        %7658 = vmatpush2.msra.mxu0 0.0
        %7659 = vmatprep.subr.mxu0 0.0
        %7660 = vmatpush2.msra.mxu0 0.0
        %7661 = vmatprep.subr.mxu0 0.0
        %7662 = vmatpush2.msra.mxu0 0.0
        %7663 = vmatprep.subr.mxu0 0.0
        %7664 = vmatpush2.msra.mxu0 0.0
        %7665 = vmatprep.subr.mxu0 0.0
        %7666 = vmatpush2.msra.mxu0 0.0
        %7667 = vmatprep.subr.mxu0 0.0
        %7668 = vmatpush2.msra.mxu0 0.0
        %7669 = vmatprep.subr.mxu0 0.0
        %7670 = vmatpush2.msra.mxu0 0.0
        %7671 = vmatprep.subr.mxu0 0.0
        %7672 = vmatpush2.msra.mxu0 0.0
        %7673 = vmatprep.subr.mxu0 0.0
        %7674 = vmatpush2.msra.mxu0 0.0
        %7675 = vmatprep.subr.mxu0 0.0
        %7676 = vmatpush2.msra.mxu0 0.0
        %7677 = vmatprep.subr.mxu0 0.0
        %7678 = vmatpush2.msra.mxu0 0.0
        %7679 = vmatprep.subr.mxu0 0.0
        %7680 = vmatpush2.msra.mxu0 0.0
        %7681 = vmatprep.subr.mxu0 0.0
        %7682 = vmatpush2.msra.mxu0 0.0
        %7683 = vmatprep.subr.mxu0 0.0
        %7684 = vmatpush2.msra.mxu0 0.0
        %7685 = vmatprep.mubr.f32.mxu0 0.0
        %7686 = vmatmul.mubr.f32.gmra.mxu0 %v7616
        %v7687 = vpop.f32.mrf.mxu0
        %v7688 = vadd.f32 0.0, %v7687
        %v7689 = vpop.f32.mrf.mxu0
        %7690 = vmatprep.mubr.f32.mxu0 0.0
        %7691 = vmatmul.mubr.f32.gmra.mxu0 %v7619
        %v7692 = vpop.f32.mrf.mxu0
        %v7693 = vadd.f32 0.0, %v7692
        %v7694 = vpop.f32.mrf.mxu0
        %7695 = vdwg.mxu0
        %v7697 = vsel %vm6614, %v6953, 0
        %v7700 = vsel %vm6614, %v6954, 0
        %7702 = vmatprep.subr.mxu0 0.0
        %7703 = vmatpush1.msra.mxu0 0.0
        %7704 = vmatprep.subr.mxu0 0.0
        %7705 = vmatpush1.msra.mxu0 0.0
        %7706 = vmatprep.subr.mxu0 0.0
        %7707 = vmatpush1.msra.mxu0 0.0
        %7708 = vmatprep.subr.mxu0 0.0
        %7709 = vmatpush1.msra.mxu0 0.0
        %7710 = vmatprep.subr.mxu0 0.0
        %7711 = vmatpush1.msra.mxu0 0.0
        %7712 = vmatprep.subr.mxu0 0.0
        %7713 = vmatpush1.msra.mxu0 0.0
        %7714 = vmatprep.subr.mxu0 0.0
        %7715 = vmatpush1.msra.mxu0 0.0
        %7716 = vmatprep.subr.mxu0 0.0
        %7717 = vmatpush1.msra.mxu0 0.0
        %7718 = vmatprep.subr.mxu0 0.0
        %7719 = vmatpush1.msra.mxu0 0.0
        %7720 = vmatprep.subr.mxu0 0.0
        %7721 = vmatpush1.msra.mxu0 0.0
        %7722 = vmatprep.subr.mxu0 0.0
        %7723 = vmatpush1.msra.mxu0 0.0
        %7724 = vmatprep.subr.mxu0 0.0
        %7725 = vmatpush1.msra.mxu0 0.0
        %7726 = vmatprep.subr.mxu0 0.0
        %7727 = vmatpush1.msra.mxu0 0.0
        %7728 = vmatprep.subr.mxu0 0.0
        %7729 = vmatpush1.msra.mxu0 0.0
        %7730 = vmatprep.subr.mxu0 0.0
        %7731 = vmatpush1.msra.mxu0 %v1430
        %7732 = vmatprep.subr.mxu0 0.0
        %7733 = vmatpush1.msra.mxu0 %v1428
        %7734 = vmatprep.subr.mxu0 0.0
        %7735 = vmatpush2.msra.mxu0 0.0
        %7736 = vmatprep.subr.mxu0 0.0
        %7737 = vmatpush2.msra.mxu0 0.0
        %7738 = vmatprep.subr.mxu0 0.0
        %7739 = vmatpush2.msra.mxu0 0.0
        %7740 = vmatprep.subr.mxu0 0.0
        %7741 = vmatpush2.msra.mxu0 0.0
        %7742 = vmatprep.subr.mxu0 0.0
        %7743 = vmatpush2.msra.mxu0 0.0
        %7744 = vmatprep.subr.mxu0 0.0
        %7745 = vmatpush2.msra.mxu0 0.0
        %7746 = vmatprep.subr.mxu0 0.0
        %7747 = vmatpush2.msra.mxu0 0.0
        %7748 = vmatprep.subr.mxu0 0.0
        %7749 = vmatpush2.msra.mxu0 0.0
        %7750 = vmatprep.subr.mxu0 0.0
        %7751 = vmatpush2.msra.mxu0 0.0
        %7752 = vmatprep.subr.mxu0 0.0
        %7753 = vmatpush2.msra.mxu0 0.0
        %7754 = vmatprep.subr.mxu0 0.0
        %7755 = vmatpush2.msra.mxu0 0.0
        %7756 = vmatprep.subr.mxu0 0.0
        %7757 = vmatpush2.msra.mxu0 0.0
        %7758 = vmatprep.subr.mxu0 0.0
        %7759 = vmatpush2.msra.mxu0 0.0
        %7760 = vmatprep.subr.mxu0 0.0
        %7761 = vmatpush2.msra.mxu0 0.0
        %7762 = vmatprep.subr.mxu0 0.0
        %7763 = vmatpush2.msra.mxu0 0.0
        %7764 = vmatprep.subr.mxu0 0.0
        %7765 = vmatpush2.msra.mxu0 0.0
        %7766 = vmatprep.mubr.f32.mxu0 0.0
        %7767 = vmatmul.mubr.f32.gmra.mxu0 %v7697
        %v7768 = vpop.f32.mrf.mxu0
        %v7769 = vadd.f32 0.0, %v7768
        %v7770 = vpop.f32.mrf.mxu0
        %7771 = vmatprep.mubr.f32.mxu0 0.0
        %7772 = vmatmul.mubr.f32.gmra.mxu0 %v7700
        %v7773 = vpop.f32.mrf.mxu0
        %v7774 = vadd.f32 0.0, %v7773
        %v7775 = vpop.f32.mrf.mxu0
        %7776 = vdwg.mxu0
        %v7778 = vsel %vm6614, %v6955, 0
        %v7781 = vsel %vm6614, %v6956, 0
        %7783 = vmatprep.subr.mxu0 0.0
        %7784 = vmatpush1.msra.mxu0 0.0
        %7785 = vmatprep.subr.mxu0 0.0
        %7786 = vmatpush1.msra.mxu0 0.0
        %7787 = vmatprep.subr.mxu0 0.0
        %7788 = vmatpush1.msra.mxu0 0.0
        %7789 = vmatprep.subr.mxu0 0.0
        %7790 = vmatpush1.msra.mxu0 0.0
        %7791 = vmatprep.subr.mxu0 0.0
        %7792 = vmatpush1.msra.mxu0 0.0
        %7793 = vmatprep.subr.mxu0 0.0
        %7794 = vmatpush1.msra.mxu0 0.0
        %7795 = vmatprep.subr.mxu0 0.0
        %7796 = vmatpush1.msra.mxu0 0.0
        %7797 = vmatprep.subr.mxu0 0.0
        %7798 = vmatpush1.msra.mxu0 0.0
        %7799 = vmatprep.subr.mxu0 0.0
        %7800 = vmatpush1.msra.mxu0 0.0
        %7801 = vmatprep.subr.mxu0 0.0
        %7802 = vmatpush1.msra.mxu0 0.0
        %7803 = vmatprep.subr.mxu0 0.0
        %7804 = vmatpush1.msra.mxu0 0.0
        %7805 = vmatprep.subr.mxu0 0.0
        %7806 = vmatpush1.msra.mxu0 0.0
        %7807 = vmatprep.subr.mxu0 0.0
        %7808 = vmatpush1.msra.mxu0 0.0
        %7809 = vmatprep.subr.mxu0 0.0
        %7810 = vmatpush1.msra.mxu0 0.0
        %7811 = vmatprep.subr.mxu0 0.0
        %7812 = vmatpush1.msra.mxu0 %v1436
        %7813 = vmatprep.subr.mxu0 0.0
        %7814 = vmatpush1.msra.mxu0 %v1434
        %7815 = vmatprep.subr.mxu0 0.0
        %7816 = vmatpush2.msra.mxu0 0.0
        %7817 = vmatprep.subr.mxu0 0.0
        %7818 = vmatpush2.msra.mxu0 0.0
        %7819 = vmatprep.subr.mxu0 0.0
        %7820 = vmatpush2.msra.mxu0 0.0
        %7821 = vmatprep.subr.mxu0 0.0
        %7822 = vmatpush2.msra.mxu0 0.0
        %7823 = vmatprep.subr.mxu0 0.0
        %7824 = vmatpush2.msra.mxu0 0.0
        %7825 = vmatprep.subr.mxu0 0.0
        %7826 = vmatpush2.msra.mxu0 0.0
        %7827 = vmatprep.subr.mxu0 0.0
        %7828 = vmatpush2.msra.mxu0 0.0
        %7829 = vmatprep.subr.mxu0 0.0
        %7830 = vmatpush2.msra.mxu0 0.0
        %7831 = vmatprep.subr.mxu0 0.0
        %7832 = vmatpush2.msra.mxu0 0.0
        %7833 = vmatprep.subr.mxu0 0.0
        %7834 = vmatpush2.msra.mxu0 0.0
        %7835 = vmatprep.subr.mxu0 0.0
        %7836 = vmatpush2.msra.mxu0 0.0
        %7837 = vmatprep.subr.mxu0 0.0
        %7838 = vmatpush2.msra.mxu0 0.0
        %7839 = vmatprep.subr.mxu0 0.0
        %7840 = vmatpush2.msra.mxu0 0.0
        %7841 = vmatprep.subr.mxu0 0.0
        %7842 = vmatpush2.msra.mxu0 0.0
        %7843 = vmatprep.subr.mxu0 0.0
        %7844 = vmatpush2.msra.mxu0 0.0
        %7845 = vmatprep.subr.mxu0 0.0
        %7846 = vmatpush2.msra.mxu0 0.0
        %7847 = vmatprep.mubr.f32.mxu0 0.0
        %7848 = vmatmul.mubr.f32.gmra.mxu0 %v7778
        %v7849 = vpop.f32.mrf.mxu0
        %v7850 = vadd.f32 0.0, %v7849
        %v7851 = vpop.f32.mrf.mxu0
        %7852 = vmatprep.mubr.f32.mxu0 0.0
        %7853 = vmatmul.mubr.f32.gmra.mxu0 %v7781
        %v7854 = vpop.f32.mrf.mxu0
        %v7855 = vadd.f32 0.0, %v7854
        %v7856 = vpop.f32.mrf.mxu0
        %7857 = vdwg.mxu0
        %v7859 = vsel %vm6614, %v6957, 0
        %v7862 = vsel %vm6614, %v6958, 0
        %7864 = vmatprep.subr.mxu0 0.0
        %7865 = vmatpush1.msra.mxu0 0.0
        %7866 = vmatprep.subr.mxu0 0.0
        %7867 = vmatpush1.msra.mxu0 0.0
        %7868 = vmatprep.subr.mxu0 0.0
        %7869 = vmatpush1.msra.mxu0 0.0
        %7870 = vmatprep.subr.mxu0 0.0
        %7871 = vmatpush1.msra.mxu0 0.0
        %7872 = vmatprep.subr.mxu0 0.0
        %7873 = vmatpush1.msra.mxu0 0.0
        %7874 = vmatprep.subr.mxu0 0.0
        %7875 = vmatpush1.msra.mxu0 0.0
        %7876 = vmatprep.subr.mxu0 0.0
        %7877 = vmatpush1.msra.mxu0 0.0
        %7878 = vmatprep.subr.mxu0 0.0
        %7879 = vmatpush1.msra.mxu0 0.0
        %7880 = vmatprep.subr.mxu0 0.0
        %7881 = vmatpush1.msra.mxu0 0.0
        %7882 = vmatprep.subr.mxu0 0.0
        %7883 = vmatpush1.msra.mxu0 0.0
        %7884 = vmatprep.subr.mxu0 0.0
        %7885 = vmatpush1.msra.mxu0 0.0
        %7886 = vmatprep.subr.mxu0 0.0
        %7887 = vmatpush1.msra.mxu0 0.0
        %7888 = vmatprep.subr.mxu0 0.0
        %7889 = vmatpush1.msra.mxu0 0.0
        %7890 = vmatprep.subr.mxu0 0.0
        %7891 = vmatpush1.msra.mxu0 0.0
        %7892 = vmatprep.subr.mxu0 0.0
        %7893 = vmatpush1.msra.mxu0 %v1442
        %7894 = vmatprep.subr.mxu0 0.0
        %7895 = vmatpush1.msra.mxu0 %v1440
        %7896 = vmatprep.subr.mxu0 0.0
        %7897 = vmatpush2.msra.mxu0 0.0
        %7898 = vmatprep.subr.mxu0 0.0
        %7899 = vmatpush2.msra.mxu0 0.0
        %7900 = vmatprep.subr.mxu0 0.0
        %7901 = vmatpush2.msra.mxu0 0.0
        %7902 = vmatprep.subr.mxu0 0.0
        %7903 = vmatpush2.msra.mxu0 0.0
        %7904 = vmatprep.subr.mxu0 0.0
        %7905 = vmatpush2.msra.mxu0 0.0
        %7906 = vmatprep.subr.mxu0 0.0
        %7907 = vmatpush2.msra.mxu0 0.0
        %7908 = vmatprep.subr.mxu0 0.0
        %7909 = vmatpush2.msra.mxu0 0.0
        %7910 = vmatprep.subr.mxu0 0.0
        %7911 = vmatpush2.msra.mxu0 0.0
        %7912 = vmatprep.subr.mxu0 0.0
        %7913 = vmatpush2.msra.mxu0 0.0
        %7914 = vmatprep.subr.mxu0 0.0
        %7915 = vmatpush2.msra.mxu0 0.0
        %7916 = vmatprep.subr.mxu0 0.0
        %7917 = vmatpush2.msra.mxu0 0.0
        %7918 = vmatprep.subr.mxu0 0.0
        %7919 = vmatpush2.msra.mxu0 0.0
        %7920 = vmatprep.subr.mxu0 0.0
        %7921 = vmatpush2.msra.mxu0 0.0
        %7922 = vmatprep.subr.mxu0 0.0
        %7923 = vmatpush2.msra.mxu0 0.0
        %7924 = vmatprep.subr.mxu0 0.0
        %7925 = vmatpush2.msra.mxu0 0.0
        %7926 = vmatprep.subr.mxu0 0.0
        %7927 = vmatpush2.msra.mxu0 0.0
        %7928 = vmatprep.mubr.f32.mxu0 0.0
        %7929 = vmatmul.mubr.f32.gmra.mxu0 %v7859
        %v7930 = vpop.f32.mrf.mxu0
        %v7931 = vadd.f32 0.0, %v7930
        %v7932 = vpop.f32.mrf.mxu0
        %7933 = vmatprep.mubr.f32.mxu0 0.0
        %7934 = vmatmul.mubr.f32.gmra.mxu0 %v7862
        %v7935 = vpop.f32.mrf.mxu0
        %v7936 = vadd.f32 0.0, %v7935
        %v7937 = vpop.f32.mrf.mxu0
        %7938 = vdwg.mxu0
        %v7940 = vsel %vm6614, %v6959, 0
        %v7943 = vsel %vm6614, %v6960, 0
        %7945 = vmatprep.subr.mxu0 0.0
        %7946 = vmatpush1.msra.mxu0 0.0
        %7947 = vmatprep.subr.mxu0 0.0
        %7948 = vmatpush1.msra.mxu0 0.0
        %7949 = vmatprep.subr.mxu0 0.0
        %7950 = vmatpush1.msra.mxu0 0.0
        %7951 = vmatprep.subr.mxu0 0.0
        %7952 = vmatpush1.msra.mxu0 0.0
        %7953 = vmatprep.subr.mxu0 0.0
        %7954 = vmatpush1.msra.mxu0 0.0
        %7955 = vmatprep.subr.mxu0 0.0
        %7956 = vmatpush1.msra.mxu0 0.0
        %7957 = vmatprep.subr.mxu0 0.0
        %7958 = vmatpush1.msra.mxu0 0.0
        %7959 = vmatprep.subr.mxu0 0.0
        %7960 = vmatpush1.msra.mxu0 0.0
        %7961 = vmatprep.subr.mxu0 0.0
        %7962 = vmatpush1.msra.mxu0 0.0
        %7963 = vmatprep.subr.mxu0 0.0
        %7964 = vmatpush1.msra.mxu0 0.0
        %7965 = vmatprep.subr.mxu0 0.0
        %7966 = vmatpush1.msra.mxu0 0.0
        %7967 = vmatprep.subr.mxu0 0.0
        %7968 = vmatpush1.msra.mxu0 0.0
        %7969 = vmatprep.subr.mxu0 0.0
        %7970 = vmatpush1.msra.mxu0 0.0
        %7971 = vmatprep.subr.mxu0 0.0
        %7972 = vmatpush1.msra.mxu0 0.0
        %7973 = vmatprep.subr.mxu0 0.0
        %7974 = vmatpush1.msra.mxu0 %v1448
        %7975 = vmatprep.subr.mxu0 0.0
        %7976 = vmatpush1.msra.mxu0 %v1446
        %7977 = vmatprep.subr.mxu0 0.0
        %7978 = vmatpush2.msra.mxu0 0.0
        %7979 = vmatprep.subr.mxu0 0.0
        %7980 = vmatpush2.msra.mxu0 0.0
        %7981 = vmatprep.subr.mxu0 0.0
        %7982 = vmatpush2.msra.mxu0 0.0
        %7983 = vmatprep.subr.mxu0 0.0
        %7984 = vmatpush2.msra.mxu0 0.0
        %7985 = vmatprep.subr.mxu0 0.0
        %7986 = vmatpush2.msra.mxu0 0.0
        %7987 = vmatprep.subr.mxu0 0.0
        %7988 = vmatpush2.msra.mxu0 0.0
        %7989 = vmatprep.subr.mxu0 0.0
        %7990 = vmatpush2.msra.mxu0 0.0
        %7991 = vmatprep.subr.mxu0 0.0
        %7992 = vmatpush2.msra.mxu0 0.0
        %7993 = vmatprep.subr.mxu0 0.0
        %7994 = vmatpush2.msra.mxu0 0.0
        %7995 = vmatprep.subr.mxu0 0.0
        %7996 = vmatpush2.msra.mxu0 0.0
        %7997 = vmatprep.subr.mxu0 0.0
        %7998 = vmatpush2.msra.mxu0 0.0
        %7999 = vmatprep.subr.mxu0 0.0
        %8000 = vmatpush2.msra.mxu0 0.0
        %8001 = vmatprep.subr.mxu0 0.0
        %8002 = vmatpush2.msra.mxu0 0.0
        %8003 = vmatprep.subr.mxu0 0.0
        %8004 = vmatpush2.msra.mxu0 0.0
        %8005 = vmatprep.subr.mxu0 0.0
        %8006 = vmatpush2.msra.mxu0 0.0
        %8007 = vmatprep.subr.mxu0 0.0
        %8008 = vmatpush2.msra.mxu0 0.0
        %8009 = vmatprep.mubr.f32.mxu0 0.0
        %8010 = vmatmul.mubr.f32.gmra.mxu0 %v7940
        %v8011 = vpop.f32.mrf.mxu0
        %v8012 = vadd.f32 0.0, %v8011
        %v8013 = vpop.f32.mrf.mxu0
        %8014 = vmatprep.mubr.f32.mxu0 0.0
        %8015 = vmatmul.mubr.f32.gmra.mxu0 %v7943
        %v8016 = vpop.f32.mrf.mxu0
        %v8017 = vadd.f32 0.0, %v8016
        %v8018 = vpop.f32.mrf.mxu0
        %8019 = vdwg.mxu0
        %v8021 = vsel %vm6614, %v6961, 0
        %v8024 = vsel %vm6614, %v6962, 0
        %8026 = vmatprep.subr.mxu0 0.0
        %8027 = vmatpush1.msra.mxu0 0.0
        %8028 = vmatprep.subr.mxu0 0.0
        %8029 = vmatpush1.msra.mxu0 0.0
        %8030 = vmatprep.subr.mxu0 0.0
        %8031 = vmatpush1.msra.mxu0 0.0
        %8032 = vmatprep.subr.mxu0 0.0
        %8033 = vmatpush1.msra.mxu0 0.0
        %8034 = vmatprep.subr.mxu0 0.0
        %8035 = vmatpush1.msra.mxu0 0.0
        %8036 = vmatprep.subr.mxu0 0.0
        %8037 = vmatpush1.msra.mxu0 0.0
        %8038 = vmatprep.subr.mxu0 0.0
        %8039 = vmatpush1.msra.mxu0 0.0
        %8040 = vmatprep.subr.mxu0 0.0
        %8041 = vmatpush1.msra.mxu0 0.0
        %8042 = vmatprep.subr.mxu0 0.0
        %8043 = vmatpush1.msra.mxu0 0.0
        %8044 = vmatprep.subr.mxu0 0.0
        %8045 = vmatpush1.msra.mxu0 0.0
        %8046 = vmatprep.subr.mxu0 0.0
        %8047 = vmatpush1.msra.mxu0 0.0
        %8048 = vmatprep.subr.mxu0 0.0
        %8049 = vmatpush1.msra.mxu0 0.0
        %8050 = vmatprep.subr.mxu0 0.0
        %8051 = vmatpush1.msra.mxu0 0.0
        %8052 = vmatprep.subr.mxu0 0.0
        %8053 = vmatpush1.msra.mxu0 0.0
        %8054 = vmatprep.subr.mxu0 0.0
        %8055 = vmatpush1.msra.mxu0 %v1454
        %8056 = vmatprep.subr.mxu0 0.0
        %8057 = vmatpush1.msra.mxu0 %v1452
        %8058 = vmatprep.subr.mxu0 0.0
        %8059 = vmatpush2.msra.mxu0 0.0
        %8060 = vmatprep.subr.mxu0 0.0
        %8061 = vmatpush2.msra.mxu0 0.0
        %8062 = vmatprep.subr.mxu0 0.0
        %8063 = vmatpush2.msra.mxu0 0.0
        %8064 = vmatprep.subr.mxu0 0.0
        %8065 = vmatpush2.msra.mxu0 0.0
        %8066 = vmatprep.subr.mxu0 0.0
        %8067 = vmatpush2.msra.mxu0 0.0
        %8068 = vmatprep.subr.mxu0 0.0
        %8069 = vmatpush2.msra.mxu0 0.0
        %8070 = vmatprep.subr.mxu0 0.0
        %8071 = vmatpush2.msra.mxu0 0.0
        %8072 = vmatprep.subr.mxu0 0.0
        %8073 = vmatpush2.msra.mxu0 0.0
        %8074 = vmatprep.subr.mxu0 0.0
        %8075 = vmatpush2.msra.mxu0 0.0
        %8076 = vmatprep.subr.mxu0 0.0
        %8077 = vmatpush2.msra.mxu0 0.0
        %8078 = vmatprep.subr.mxu0 0.0
        %8079 = vmatpush2.msra.mxu0 0.0
        %8080 = vmatprep.subr.mxu0 0.0
        %8081 = vmatpush2.msra.mxu0 0.0
        %8082 = vmatprep.subr.mxu0 0.0
        %8083 = vmatpush2.msra.mxu0 0.0
        %8084 = vmatprep.subr.mxu0 0.0
        %8085 = vmatpush2.msra.mxu0 0.0
        %8086 = vmatprep.subr.mxu0 0.0
        %8087 = vmatpush2.msra.mxu0 0.0
        %8088 = vmatprep.subr.mxu0 0.0
        %8089 = vmatpush2.msra.mxu0 0.0
        %8090 = vmatprep.mubr.f32.mxu0 0.0
        %8091 = vmatmul.mubr.f32.gmra.mxu0 %v8021
        %v8092 = vpop.f32.mrf.mxu0
        %v8093 = vadd.f32 0.0, %v8092
        %v8094 = vpop.f32.mrf.mxu0
        %8095 = vmatprep.mubr.f32.mxu0 0.0
        %8096 = vmatmul.mubr.f32.gmra.mxu0 %v8024
        %v8097 = vpop.f32.mrf.mxu0
        %v8098 = vadd.f32 0.0, %v8097
        %v8099 = vpop.f32.mrf.mxu0
        %8100 = vdwg.mxu0
        %v8102 = vsel %vm6614, %v6963, 0
        %v8105 = vsel %vm6614, %v6964, 0
        %8107 = vmatprep.subr.mxu0 0.0
        %8108 = vmatpush1.msra.mxu0 0.0
        %8109 = vmatprep.subr.mxu0 0.0
        %8110 = vmatpush1.msra.mxu0 0.0
        %8111 = vmatprep.subr.mxu0 0.0
        %8112 = vmatpush1.msra.mxu0 0.0
        %8113 = vmatprep.subr.mxu0 0.0
        %8114 = vmatpush1.msra.mxu0 0.0
        %8115 = vmatprep.subr.mxu0 0.0
        %8116 = vmatpush1.msra.mxu0 0.0
        %8117 = vmatprep.subr.mxu0 0.0
        %8118 = vmatpush1.msra.mxu0 0.0
        %8119 = vmatprep.subr.mxu0 0.0
        %8120 = vmatpush1.msra.mxu0 0.0
        %8121 = vmatprep.subr.mxu0 0.0
        %8122 = vmatpush1.msra.mxu0 0.0
        %8123 = vmatprep.subr.mxu0 0.0
        %8124 = vmatpush1.msra.mxu0 0.0
        %8125 = vmatprep.subr.mxu0 0.0
        %8126 = vmatpush1.msra.mxu0 0.0
        %8127 = vmatprep.subr.mxu0 0.0
        %8128 = vmatpush1.msra.mxu0 0.0
        %8129 = vmatprep.subr.mxu0 0.0
        %8130 = vmatpush1.msra.mxu0 0.0
        %8131 = vmatprep.subr.mxu0 0.0
        %8132 = vmatpush1.msra.mxu0 0.0
        %8133 = vmatprep.subr.mxu0 0.0
        %8134 = vmatpush1.msra.mxu0 0.0
        %8135 = vmatprep.subr.mxu0 0.0
        %8136 = vmatpush1.msra.mxu0 %v1460
        %8137 = vmatprep.subr.mxu0 0.0
        %8138 = vmatpush1.msra.mxu0 %v1458
        %8139 = vmatprep.subr.mxu0 0.0
        %8140 = vmatpush2.msra.mxu0 0.0
        %8141 = vmatprep.subr.mxu0 0.0
        %8142 = vmatpush2.msra.mxu0 0.0
        %8143 = vmatprep.subr.mxu0 0.0
        %8144 = vmatpush2.msra.mxu0 0.0
        %8145 = vmatprep.subr.mxu0 0.0
        %8146 = vmatpush2.msra.mxu0 0.0
        %8147 = vmatprep.subr.mxu0 0.0
        %8148 = vmatpush2.msra.mxu0 0.0
        %8149 = vmatprep.subr.mxu0 0.0
        %8150 = vmatpush2.msra.mxu0 0.0
        %8151 = vmatprep.subr.mxu0 0.0
        %8152 = vmatpush2.msra.mxu0 0.0
        %8153 = vmatprep.subr.mxu0 0.0
        %8154 = vmatpush2.msra.mxu0 0.0
        %8155 = vmatprep.subr.mxu0 0.0
        %8156 = vmatpush2.msra.mxu0 0.0
        %8157 = vmatprep.subr.mxu0 0.0
        %8158 = vmatpush2.msra.mxu0 0.0
        %8159 = vmatprep.subr.mxu0 0.0
        %8160 = vmatpush2.msra.mxu0 0.0
        %8161 = vmatprep.subr.mxu0 0.0
        %8162 = vmatpush2.msra.mxu0 0.0
        %8163 = vmatprep.subr.mxu0 0.0
        %8164 = vmatpush2.msra.mxu0 0.0
        %8165 = vmatprep.subr.mxu0 0.0
        %8166 = vmatpush2.msra.mxu0 0.0
        %8167 = vmatprep.subr.mxu0 0.0
        %8168 = vmatpush2.msra.mxu0 0.0
        %8169 = vmatprep.subr.mxu0 0.0
        %8170 = vmatpush2.msra.mxu0 0.0
        %8171 = vmatprep.mubr.f32.mxu0 0.0
        %8172 = vmatmul.mubr.f32.gmra.mxu0 %v8102
        %v8173 = vpop.f32.mrf.mxu0
        %v8174 = vadd.f32 0.0, %v8173
        %v8175 = vpop.f32.mrf.mxu0
        %8176 = vmatprep.mubr.f32.mxu0 0.0
        %8177 = vmatmul.mubr.f32.gmra.mxu0 %v8105
        %v8178 = vpop.f32.mrf.mxu0
        %v8179 = vadd.f32 0.0, %v8178
        %v8180 = vpop.f32.mrf.mxu0
        %8181 = vdwg.mxu0
        %v8183 = vsel %vm6614, %v6965, 0
        %v8186 = vsel %vm6614, %v6966, 0
        %8188 = vmatprep.subr.mxu0 0.0
        %8189 = vmatpush1.msra.mxu0 0.0
        %8190 = vmatprep.subr.mxu0 0.0
        %8191 = vmatpush1.msra.mxu0 0.0
        %8192 = vmatprep.subr.mxu0 0.0
        %8193 = vmatpush1.msra.mxu0 0.0
        %8194 = vmatprep.subr.mxu0 0.0
        %8195 = vmatpush1.msra.mxu0 0.0
        %8196 = vmatprep.subr.mxu0 0.0
        %8197 = vmatpush1.msra.mxu0 0.0
        %8198 = vmatprep.subr.mxu0 0.0
        %8199 = vmatpush1.msra.mxu0 0.0
        %8200 = vmatprep.subr.mxu0 0.0
        %8201 = vmatpush1.msra.mxu0 0.0
        %8202 = vmatprep.subr.mxu0 0.0
        %8203 = vmatpush1.msra.mxu0 0.0
        %8204 = vmatprep.subr.mxu0 0.0
        %8205 = vmatpush1.msra.mxu0 0.0
        %8206 = vmatprep.subr.mxu0 0.0
        %8207 = vmatpush1.msra.mxu0 0.0
        %8208 = vmatprep.subr.mxu0 0.0
        %8209 = vmatpush1.msra.mxu0 0.0
        %8210 = vmatprep.subr.mxu0 0.0
        %8211 = vmatpush1.msra.mxu0 0.0
        %8212 = vmatprep.subr.mxu0 0.0
        %8213 = vmatpush1.msra.mxu0 0.0
        %8214 = vmatprep.subr.mxu0 0.0
        %8215 = vmatpush1.msra.mxu0 0.0
        %8216 = vmatprep.subr.mxu0 0.0
        %8217 = vmatpush1.msra.mxu0 %v1466
        %8218 = vmatprep.subr.mxu0 0.0
        %8219 = vmatpush1.msra.mxu0 %v1464
        %8220 = vmatprep.subr.mxu0 0.0
        %8221 = vmatpush2.msra.mxu0 0.0
        %8222 = vmatprep.subr.mxu0 0.0
        %8223 = vmatpush2.msra.mxu0 0.0
        %8224 = vmatprep.subr.mxu0 0.0
        %8225 = vmatpush2.msra.mxu0 0.0
        %8226 = vmatprep.subr.mxu0 0.0
        %8227 = vmatpush2.msra.mxu0 0.0
        %8228 = vmatprep.subr.mxu0 0.0
        %8229 = vmatpush2.msra.mxu0 0.0
        %8230 = vmatprep.subr.mxu0 0.0
        %8231 = vmatpush2.msra.mxu0 0.0
        %8232 = vmatprep.subr.mxu0 0.0
        %8233 = vmatpush2.msra.mxu0 0.0
        %8234 = vmatprep.subr.mxu0 0.0
        %8235 = vmatpush2.msra.mxu0 0.0
        %8236 = vmatprep.subr.mxu0 0.0
        %8237 = vmatpush2.msra.mxu0 0.0
        %8238 = vmatprep.subr.mxu0 0.0
        %8239 = vmatpush2.msra.mxu0 0.0
        %8240 = vmatprep.subr.mxu0 0.0
        %8241 = vmatpush2.msra.mxu0 0.0
        %8242 = vmatprep.subr.mxu0 0.0
        %8243 = vmatpush2.msra.mxu0 0.0
        %8244 = vmatprep.subr.mxu0 0.0
        %8245 = vmatpush2.msra.mxu0 0.0
        %8246 = vmatprep.subr.mxu0 0.0
        %8247 = vmatpush2.msra.mxu0 0.0
        %8248 = vmatprep.subr.mxu0 0.0
        %8249 = vmatpush2.msra.mxu0 0.0
        %8250 = vmatprep.subr.mxu0 0.0
        %8251 = vmatpush2.msra.mxu0 0.0
        %8252 = vmatprep.mubr.f32.mxu0 0.0
        %8253 = vmatmul.mubr.f32.gmra.mxu0 %v8183
        %v8254 = vpop.f32.mrf.mxu0
        %v8255 = vadd.f32 0.0, %v8254
        %v8256 = vpop.f32.mrf.mxu0
        %8257 = vmatprep.mubr.f32.mxu0 0.0
        %8258 = vmatmul.mubr.f32.gmra.mxu0 %v8186
        %v8259 = vpop.f32.mrf.mxu0
        %v8260 = vadd.f32 0.0, %v8259
        %v8261 = vpop.f32.mrf.mxu0
        %8262 = vdwg.mxu0
        %8265 = vrot.lane.b32.xlu0 %v7121, 6
        %v8266 = vpop.permute.xlu0 %8265
        %8267 = vrot.lane.b32.xlu0 %v7126, 6
        %v8268 = vpop.permute.xlu0 %8267
        %8273 = vrot.lane.b32.xlu0 %v7202, 12
        %v8274 = vpop.permute.xlu0 %8273
        %8275 = vrot.lane.b32.xlu0 %v7207, 12
        %v8276 = vpop.permute.xlu0 %8275
        %8281 = vrot.lane.b32.xlu0 %v7283, 18
        %v8282 = vpop.permute.xlu0 %8281
        %8283 = vrot.lane.b32.xlu0 %v7288, 18
        %v8284 = vpop.permute.xlu0 %8283
        %8289 = vrot.lane.b32.xlu0 %v7364, 24
        %v8290 = vpop.permute.xlu0 %8289
        %8291 = vrot.lane.b32.xlu0 %v7369, 24
        %v8292 = vpop.permute.xlu0 %8291
        %8297 = vrot.lane.b32.xlu0 %v7445, 30
        %v8298 = vpop.permute.xlu0 %8297
        %8299 = vrot.lane.b32.xlu0 %v7450, 30
        %v8300 = vpop.permute.xlu0 %8299
        %8305 = vrot.lane.b32.xlu0 %v7526, 36
        %v8306 = vpop.permute.xlu0 %8305
        %8307 = vrot.lane.b32.xlu0 %v7531, 36
        %v8308 = vpop.permute.xlu0 %8307
        %8313 = vrot.lane.b32.xlu0 %v7607, 42
        %v8314 = vpop.permute.xlu0 %8313
        %8315 = vrot.lane.b32.xlu0 %v7612, 42
        %v8316 = vpop.permute.xlu0 %8315
        %8321 = vrot.lane.b32.xlu0 %v7688, 48
        %v8322 = vpop.permute.xlu0 %8321
        %8323 = vrot.lane.b32.xlu0 %v7693, 48
        %v8324 = vpop.permute.xlu0 %8323
        %8329 = vrot.lane.b32.xlu0 %v7769, 54
        %v8330 = vpop.permute.xlu0 %8329
        %8331 = vrot.lane.b32.xlu0 %v7774, 54
        %v8332 = vpop.permute.xlu0 %8331
        %8337 = vrot.lane.b32.xlu0 %v7850, 60
        %v8338 = vpop.permute.xlu0 %8337
        %8339 = vrot.lane.b32.xlu0 %v7855, 60
        %v8340 = vpop.permute.xlu0 %8339
        %8345 = vrot.lane.b32.xlu0 %v7931, 66
        %v8346 = vpop.permute.xlu0 %8345
        %8347 = vrot.lane.b32.xlu0 %v7936, 66
        %v8348 = vpop.permute.xlu0 %8347
        %8353 = vrot.lane.b32.xlu0 %v8012, 72
        %v8354 = vpop.permute.xlu0 %8353
        %8355 = vrot.lane.b32.xlu0 %v8017, 72
        %v8356 = vpop.permute.xlu0 %8355
        %8361 = vrot.lane.b32.xlu0 %v8093, 78
        %v8362 = vpop.permute.xlu0 %8361
        %8363 = vrot.lane.b32.xlu0 %v8098, 78
        %v8364 = vpop.permute.xlu0 %8363
        %8369 = vrot.lane.b32.xlu0 %v8174, 84
        %v8370 = vpop.permute.xlu0 %8369
        %8371 = vrot.lane.b32.xlu0 %v8179, 84
        %v8372 = vpop.permute.xlu0 %8371
        %8377 = vrot.lane.b32.xlu0 %v8255, 90
        %v8378 = vpop.permute.xlu0 %8377
        %8379 = vrot.lane.b32.xlu0 %v8260, 90
        %v8380 = vpop.permute.xlu0 %8379
        %v8383 = vsel %vm1469, %v7040, %v8266
        %v8384 = vsel %vm1469, %v7045, %v8268
        %vm8385 = vcmask 97280
        %v8386 = vsel %vm8385, %v8383, %v8274
        %v8387 = vsel %vm8385, %v8384, %v8276
        %vm8388 = vcmask 146432
        %v8389 = vsel %vm8388, %v8386, %v8282
        %v8390 = vsel %vm8388, %v8387, %v8284
        %vm8391 = vcmask 195584
        %v8392 = vsel %vm8391, %v8389, %v8290
        %v8393 = vsel %vm8391, %v8390, %v8292
        %vm8394 = vcmask 244736
        %v8395 = vsel %vm8394, %v8392, %v8298
        %v8396 = vsel %vm8394, %v8393, %v8300
        %vm8397 = vcmask 293888
        %v8398 = vsel %vm8397, %v8395, %v8306
        %v8399 = vsel %vm8397, %v8396, %v8308
        %vm8400 = vcmask 343040
        %v8401 = vsel %vm8400, %v8398, %v8314
        %v8402 = vsel %vm8400, %v8399, %v8316
        %vm8403 = vcmask 392192
        %v8404 = vsel %vm8403, %v8401, %v8322
        %v8405 = vsel %vm8403, %v8402, %v8324
        %vm8406 = vcmask 441344
        %v8407 = vsel %vm8406, %v8404, %v8330
        %v8408 = vsel %vm8406, %v8405, %v8332
        %vm8409 = vcmask 490496
        %v8410 = vsel %vm8409, %v8407, %v8338
        %v8411 = vsel %vm8409, %v8408, %v8340
        %vm8412 = vcmask 539648
        %v8413 = vsel %vm8412, %v8410, %v8346
        %v8414 = vsel %vm8412, %v8411, %v8348
        %vm8415 = vcmask 588800
        %v8416 = vsel %vm8415, %v8413, %v8354
        %v8417 = vsel %vm8415, %v8414, %v8356
        %vm8418 = vcmask 637952
        %v8419 = vsel %vm8418, %v8416, %v8362
        %v8420 = vsel %vm8418, %v8417, %v8364
        %vm8421 = vcmask 687104
        %v8422 = vsel %vm8421, %v8419, %v8370
        %v8423 = vsel %vm8421, %v8420, %v8372
        %vm8424 = vcmask 736256
        %v8425 = vsel %vm8424, %v8422, %v8378
        %v8426 = vsel %vm8424, %v8423, %v8380
        %v8427 = vld [vmem:[%s12] sm:$0xff]
        %v8428 = vld [vmem:[%s12 + $0x8] sm:$0xff]
        %v8429 = vld [vmem:[%s12 + $0x10] sm:$0xff]
        %v8430 = vld [vmem:[%s12 + $0x18] sm:$0xff]
        %v8431 = vld [vmem:[%s12 + $0x20] sm:$0xff]
        %v8432 = vld [vmem:[%s12 + $0x28] sm:$0xff]
        %v8433 = vld [vmem:[%s12 + $0x30] sm:$0xff]
        %v8434 = vld [vmem:[%s12 + $0x38] sm:$0xff]
        %v8435 = vld [vmem:[%s12 + $0x40] sm:$0xff]
        %v8436 = vld [vmem:[%s12 + $0x48] sm:$0xff]
        %v8437 = vld [vmem:[%s12 + $0x50] sm:$0xff]
        %v8438 = vld [vmem:[%s12 + $0x58] sm:$0xff]
        %v8439 = vld [vmem:[%s12 + $0x60] sm:$0xff]
        %v8440 = vld [vmem:[%s12 + $0x68] sm:$0xff]
        %v8441 = vld [vmem:[%s12 + $0x70] sm:$0xff]
        %v8442 = vld [vmem:[%s12 + $0x78] sm:$0xff]
        %v8443 = vld [vmem:[%s12 + $0x80] sm:$0xff]
        %v8444 = vld [vmem:[%s12 + $0x88] sm:$0xff]
        %v8445 = vld [vmem:[%s12 + $0x90] sm:$0xff]
        %v8446 = vld [vmem:[%s12 + $0x98] sm:$0xff]
        %v8447 = vld [vmem:[%s12 + $0xa0] sm:$0xff]
        %v8448 = vld [vmem:[%s12 + $0xa8] sm:$0xff]
        %v8449 = vld [vmem:[%s12 + $0xb0] sm:$0xff]
        %v8450 = vld [vmem:[%s12 + $0xb8] sm:$0xff]
        %v8451 = vld [vmem:[%s13] sm:$0x3]
        %v8453 = vlaneseq
        %v8454 = vshrl.u32 %v8453, 7
        %v8455 = vsub.s32 0, %v8454
        %v8456 = vrot.slane %v8451, %v8455
        %v8457 = vlaneseq
        %v8458 = vshrl.u32 %v8457, 7
        %v8459 = vsub.s32 1, %v8458
        %v8460 = vrot.slane %v8451, %v8459
        %vm8463 = vcmask 785408
        %v8465 = vsel %vm8463, %v8425, 0
        %v8468 = vsel %vm8463, %v8426, 0
        %8470 = vmatprep.subr.mxu0 0.0
        %8471 = vmatpush1.msra.mxu0 0.0
        %8472 = vmatprep.subr.mxu0 0.0
        %8473 = vmatpush1.msra.mxu0 0.0
        %8474 = vmatprep.subr.mxu0 0.0
        %8475 = vmatpush1.msra.mxu0 0.0
        %8476 = vmatprep.subr.mxu0 0.0
        %8477 = vmatpush1.msra.mxu0 0.0
        %8478 = vmatprep.subr.mxu0 %v8450
        %8479 = vmatpush1.msra.mxu0 %v8449
        %8480 = vmatprep.subr.mxu0 %v8448
        %8481 = vmatpush1.msra.mxu0 %v8447
        %8482 = vmatprep.subr.mxu0 %v8446
        %8483 = vmatpush1.msra.mxu0 %v8445
        %8484 = vmatprep.subr.mxu0 %v8444
        %8485 = vmatpush1.msra.mxu0 %v8443
        %8486 = vmatprep.subr.mxu0 %v8442
        %8487 = vmatpush1.msra.mxu0 %v8441
        %8488 = vmatprep.subr.mxu0 %v8440
        %8489 = vmatpush1.msra.mxu0 %v8439
        %8490 = vmatprep.subr.mxu0 %v8438
        %8491 = vmatpush1.msra.mxu0 %v8437
        %8492 = vmatprep.subr.mxu0 %v8436
        %8493 = vmatpush1.msra.mxu0 %v8435
        %8494 = vmatprep.subr.mxu0 %v8434
        %8495 = vmatpush1.msra.mxu0 %v8433
        %8496 = vmatprep.subr.mxu0 %v8432
        %8497 = vmatpush1.msra.mxu0 %v8431
        %8498 = vmatprep.subr.mxu0 %v8430
        %8499 = vmatpush1.msra.mxu0 %v8429
        %8500 = vmatprep.subr.mxu0 %v8428
        %8501 = vmatpush1.msra.mxu0 %v8427
        %8502 = vmatprep.subr.mxu0 0.0
        %8503 = vmatpush2.msra.mxu0 0.0
        %8504 = vmatprep.subr.mxu0 0.0
        %8505 = vmatpush2.msra.mxu0 0.0
        %8506 = vmatprep.subr.mxu0 0.0
        %8507 = vmatpush2.msra.mxu0 0.0
        %8508 = vmatprep.subr.mxu0 0.0
        %8509 = vmatpush2.msra.mxu0 0.0
        %8510 = vmatprep.subr.mxu0 0.0
        %8511 = vmatpush2.msra.mxu0 0.0
        %8512 = vmatprep.subr.mxu0 0.0
        %8513 = vmatpush2.msra.mxu0 0.0
        %8514 = vmatprep.subr.mxu0 0.0
        %8515 = vmatpush2.msra.mxu0 0.0
        %8516 = vmatprep.subr.mxu0 0.0
        %8517 = vmatpush2.msra.mxu0 0.0
        %8518 = vmatprep.subr.mxu0 0.0
        %8519 = vmatpush2.msra.mxu0 0.0
        %8520 = vmatprep.subr.mxu0 0.0
        %8521 = vmatpush2.msra.mxu0 0.0
        %8522 = vmatprep.subr.mxu0 0.0
        %8523 = vmatpush2.msra.mxu0 0.0
        %8524 = vmatprep.subr.mxu0 0.0
        %8525 = vmatpush2.msra.mxu0 0.0
        %8526 = vmatprep.subr.mxu0 0.0
        %8527 = vmatpush2.msra.mxu0 0.0
        %8528 = vmatprep.subr.mxu0 0.0
        %8529 = vmatpush2.msra.mxu0 0.0
        %8530 = vmatprep.subr.mxu0 0.0
        %8531 = vmatpush2.msra.mxu0 0.0
        %8532 = vmatprep.subr.mxu0 0.0
        %8533 = vmatpush2.msra.mxu0 0.0
        %8534 = vmatprep.mubr.f32.mxu0 0.0
        %8535 = vmatmul.mubr.f32.gmra.mxu0 %v8465
        %v8536 = vpop.f32.mrf.mxu0
        %v8537 = vadd.f32 %v8456, %v8536
        %v8538 = vpop.f32.mrf.mxu0
        %v8539 = vadd.f32 %v8460, %v8538
        %8540 = vmatprep.mubr.f32.mxu0 0.0
        %8541 = vmatmul.mubr.f32.gmra.mxu0 %v8468
        %v8542 = vpop.f32.mrf.mxu0
        %v8543 = vadd.f32 %v8456, %v8542
        %v8544 = vpop.f32.mrf.mxu0
        %v8545 = vadd.f32 %v8460, %v8544
        %8546 = vdwg.mxu0
        %v8547 = vadd.f32 %v534, %v8537
        %v8548 = vadd.f32 %v535, %v8539
        %v8549 = vadd.f32 %v536, %v8543
        %v8550 = vadd.f32 %v537, %v8545
        %v8551 = vsel %vm562, %v8548, 0.0
        %v8552 = vadd.f32 %v8547, %v8551
        %8553 = vadd.xlane.f32.xlu0 %v8552
        %v8554 = vpop.xlane.xlu0 %8553
        %v8555 = vsel %vm562, %v8550, 0.0
        %v8556 = vadd.f32 %v8549, %v8555
        %8557 = vadd.xlane.f32.xlu0 %v8556
        %v8558 = vpop.xlane.xlu0 %8557
        %v8559 = vrcp.pop 192.0
        %v8560 = vmul.f32 %v8554, %v8559
        %v8561 = vmul.f32 %v8558, %v8559
        %v8562 = vsub.f32 %v8547, %v8560
        %v8563 = vsub.f32 %v8548, %v8560
        %v8564 = vsub.f32 %v8549, %v8561
        %v8565 = vsub.f32 %v8550, %v8561
        %v8566 = vmul.f32 %v8562, %v8562
        %v8567 = vmul.f32 %v8563, %v8563
        %v8568 = vmul.f32 %v8564, %v8564
        %v8569 = vmul.f32 %v8565, %v8565
        %v8570 = vsel %vm562, %v8567, 0.0
        %v8571 = vadd.f32 %v8566, %v8570
        %8572 = vadd.xlane.f32.xlu0 %v8571
        %v8573 = vpop.xlane.xlu0 %8572
        %v8574 = vsel %vm562, %v8569, 0.0
        %v8575 = vadd.f32 %v8568, %v8574
        %8576 = vadd.xlane.f32.xlu0 %v8575
        %v8577 = vpop.xlane.xlu0 %8576
        %v8578 = vmul.f32 %v8573, %v8559
        %v8579 = vmul.f32 %v8577, %v8559
        %v8580 = vadd.f32 %v8578, 1e-09
        %v8581 = vadd.f32 %v8579, 1e-09
        %v8582 = vrsqrt.pop %v8580
        %v8583 = vrsqrt.pop %v8581
        %v8584 = vmul.f32 %v8562, %v8582
        %v8585 = vmul.f32 %v8563, %v8582
        %v8586 = vmul.f32 %v8564, %v8583
        %v8587 = vmul.f32 %v8565, %v8583
        %v8588 = vld [vmem:[%s14] sm:$0x3]
        %v8590 = vlaneseq
        %v8591 = vshrl.u32 %v8590, 7
        %v8592 = vsub.s32 0, %v8591
        %v8593 = vrot.slane %v8588, %v8592
        %v8594 = vlaneseq
        %v8595 = vshrl.u32 %v8594, 7
        %v8596 = vsub.s32 1, %v8595
        %v8597 = vrot.slane %v8588, %v8596
        %v8600 = vmul.f32 %v8584, %v8593
        %v8601 = vmul.f32 %v8585, %v8597
        %v8602 = vmul.f32 %v8586, %v8593
        %v8603 = vmul.f32 %v8587, %v8597
        %v8604 = vld [vmem:[%s15] sm:$0x3]
        %v8606 = vlaneseq
        %v8607 = vshrl.u32 %v8606, 7
        %v8608 = vsub.s32 0, %v8607
        %v8609 = vrot.slane %v8604, %v8608
        %v8610 = vlaneseq
        %v8611 = vshrl.u32 %v8610, 7
        %v8612 = vsub.s32 1, %v8611
        %v8613 = vrot.slane %v8604, %v8612
        %v8616 = vadd.f32 %v8600, %v8609
        %v8617 = vadd.f32 %v8601, %v8613
        %v8618 = vadd.f32 %v8602, %v8609
        %v8619 = vadd.f32 %v8603, %v8613
        %8620 = vst [vmem:[%s525] sm:$0xff] %v8616
        %8621 = vst.msk [vmem:[%s525 + $0x8] sm:$0xff] %vm562, %v8617
        %8622 = vst [vmem:[%s525 + $0x10] sm:$0xff] %v8618
        %8623 = vst.msk [vmem:[%s525 + $0x18] sm:$0xff] %vm562, %v8619
        %s8624 = sand.u32 %s384, 1
        %s8625 = scalar_lea.sflag [#allocation3], %s8624
        %s8626 = sand.u32 %s384, 1
        %s8627 = smul.addr %s8626, 32
        %s8628 = scalar_lea.vmem [#allocation2], %s8627
        // Predicated region
        $region85: #{funnel_attention_pallas.1} parent=83 // pred_check
          %p8629 = pneg %p394
        $region86: #{funnel_attention_pallas.1} parent=83 // pred_check_branch
          %8631 = sbr.rel (%p8629) target = $region88
        $region87: #{funnel_attention_pallas.1} parent=83 // pred_region
          %s8633 = ssub.s32 512, 512
          %8634 = vsyncadd %s8625, %s8633
          %s8635 = smul.addr %s30, 4
          %s8636 = smul.addr %s8635, 128
          %s8637 = scalar_lea.hbm %s16, %s8636
          %s8638 = sshll.u32 %s8628, 4
          %s8639 = int_to_ptr.vmem [resolvable:$true] %s8638
          %8644 = dma.vmem_to_hbm [thread:$0]  %s8639, 512, %s8637, %s8625, 256, 256, 16
        $region88: #{funnel_attention_pallas.1} parent=83 // pred_fallthru
          _
      $region84: #{funnel_attention_pallas.1} parent=5 // pred_fallthru
        _
      %p8645 = scmp.le.s32.totalorder 2, %s25
      // Predicated region
      $region89: #{funnel_attention_pallas.1} parent=5 // pred_check
        %p8646 = pneg %p8645
      $region90: #{funnel_attention_pallas.1} parent=5 // pred_check_branch
        %8648 = sbr.rel (%p8646) target = $region92
      $region91: #{funnel_attention_pallas.1} parent=5 // pred_region
        %s8649 = ssub.s32 %s25, 2
        // Predicated region
        $region93: #{funnel_attention_pallas.1} parent=91 // pred_check
          %p8650 = pneg %p400
        $region94: #{funnel_attention_pallas.1} parent=91 // pred_check_branch
          %8652 = sbr.rel (%p8650) target = $region96
        $region95: #{funnel_attention_pallas.1} parent=91 // pred_region
          %s8653 = sand.u32 %s385, 1
          %s8654 = scalar_lea.sflag [#allocation3], %s8653
          %s8655 = sand.u32 %s385, 1
          %s8656 = smul.addr %s8655, 32
          %s8657 = scalar_lea.vmem [#allocation2], %s8656
          %8658 = dma.done %s8654, 512
        $region96: #{funnel_attention_pallas.1} parent=91 // pred_fallthru
          _
      $region92: #{funnel_attention_pallas.1} parent=5 // pred_fallthru
        _
    $region6: #{funnel_attention_pallas.1} parent=1 // loop_footer
      %s29 = sadd.s32 1, %s25
    $region7: #{funnel_attention_pallas.1} parent=1 // loop_footer_branch
      %24 = sbr.rel target = $region3
    $region8: #{funnel_attention_pallas.1} parent=1 // loop_exit
      _
    %8659 = vsyncpa [#allocation3], 1
    %s8660 = scalar_lea.sflag [#allocation3], 1
    %8661 = vsyncpa %s8660, 1

</llo_original>
